<compile_context>
chip_gen: v6e
topology: v6e:2x2x1
jax: 0.10.0
libtpu: 0.0.40
codegen_flags: <defaults>
</compile_context>

<pallas_src>
import math
import functools

import jax
import jax.numpy as jnp
from jax import lax
from jax.experimental import pallas as pl
from jax.experimental.pallas import tpu as pltpu

# Compute dtype for the large projection matmuls (weights + activation operand).
# Set to jnp.float32 to recover exact f32 numerics.
MATMUL_DTYPE = jnp.bfloat16


# ----------------------------------------------------------------------------
# In-kernel helpers (operate on traced values held in vregs)
# ----------------------------------------------------------------------------
def _ln(x, g, b, eps=1e-5):
    mu = jnp.mean(x, axis=-1, keepdims=True)
    xc = x - mu
    var = jnp.mean(xc * xc, axis=-1, keepdims=True)
    return xc * lax.rsqrt(var + eps) * g + b


def _gelu(x):
    # exact (erf) GELU, matching torch.nn.GELU() default
    return 0.5 * x * (1.0 + lax.erf(x * (1.0 / math.sqrt(2.0))))


# ----------------------------------------------------------------------------
# Fused kernel: one grid step == BS_TILE batch entries (B_TILE sequences) through
# the whole stack (W_proj+PE, all encoder layers, final LN, predictor).
# ----------------------------------------------------------------------------
def _tsti_fused_kernel(
    x_ref, pe_enc_ref, pe_dec_ref,
    w_proj_ref, b_proj_ref,
    w_qkv_ref, b_qkv_ref,
    w_out_ref, b_out_ref,
    g_attn_ref, bt_attn_ref,
    w_ff1_ref, b_ff1_ref,
    w_ff2_ref, b_ff2_ref,
    g_ffn_ref, bt_ffn_ref,
    g_fin_ref, bt_fin_ref,
    w_pred_ref, b_pred_ref,
    out_ref,
    *, n_heads,
):
    bs_t = pe_enc_ref.shape[0]            # batch entries in this block
    bt = x_ref.shape[0]                   # sequences in this block (= bs_t * n_vars)
    n_vars = bt // bs_t
    n_ctxt = x_ref.shape[1]
    tar_len = pe_dec_ref.shape[1]
    d = x_ref.shape[2]
    S = n_ctxt + tar_len
    R = bt * S                            # total rows fed to the big matmuls
    n_layers = w_qkv_ref.shape[0]
    d_k = d // n_heads
    scale = d_k ** (-0.5)

    def mm(a, w, bias):
        # bf16 (or f32) MXU matmul with f32 accumulation; bias is (1, out) f32.
        return jnp.dot(a.astype(w.dtype), w, preferred_element_type=jnp.float32) + bias

    # ---- input projection + positional encodings (traced values, no scratch round-trip)
    x_flat = x_ref[...].reshape(bt * n_ctxt, d)
    x_enc = mm(x_flat, w_proj_ref[...], b_proj_ref[...])                 # (bt*n_ctxt, d) f32
    x_enc = x_enc.reshape(bs_t, n_vars, n_ctxt, d) + pe_enc_ref[...][:, None, :, :]
    pe_dec = jnp.broadcast_to(pe_dec_ref[...][:, None, :, :],
                              (bs_t, n_vars, tar_len, d))                # mask_token already added
    src = jnp.concatenate([x_enc, pe_dec], axis=2).reshape(R, d)         # (R, d) f32

    # Static layer unroll (small n_layers).  For large n_layers switch to lax.fori_loop
    # with dynamic w_*_ref[li] indexing and a VMEM-staged `prev` to bound live ranges.
    prev = None                           # RealFormer residual scores, VMEM/vreg only
    for li in range(n_layers):
        # fused Q|K|V projection on all rows of the block
        qkv = mm(src, w_qkv_ref[li], b_qkv_ref[li])                      # (R, 3d) f32
        q3 = qkv[:, 0:d].reshape(bt, S, d)
        k3 = qkv[:, d:2 * d].reshape(bt, S, d)
        v3 = qkv[:, 2 * d:3 * d].reshape(bt, S, d)

        heads_out = []
        new_prev = []
        for h in range(n_heads):
            lo, hi = h * d_k, (h + 1) * d_k
            qh = q3[:, :, lo:hi]
            kh = k3[:, :, lo:hi]
            vh = v3[:, :, lo:hi]
            # scores: 'bqd,bkd->bqk' batched over the B_TILE sequences (f32, numerics-sensitive)
            sh = lax.dot_general(qh, kh, (((2,), (2,)), ((0,), (0,))),
                                 preferred_element_type=jnp.float32) * scale
            if prev is not None:           # layer 0: skip the add entirely
                sh = sh + prev[h]
            new_prev.append(sh)            # post-scale, prev-accumulated scores (matches ref)
            m = jnp.max(sh, axis=-1, keepdims=True)
            p = jnp.exp(sh - m)
            wts = p * pl.reciprocal(jnp.sum(p, axis=-1, keepdims=True), approx=True)
            # output: 'bqk,bkd->bqd'
            heads_out.append(lax.dot_general(wts, vh, (((2,), (1,)), ((0,), (0,))),
                                             preferred_element_type=jnp.float32))
        prev = new_prev

        # concat heads -> single to_out matmul (no serial per-head accumulation)
        attn = jnp.concatenate(heads_out, axis=-1).reshape(R, d)
        x1 = mm(attn, w_out_ref[li], b_out_ref[li])
        # NOTE: no `src` residual on the attention sublayer — this matches the PyTorch
        # reference (src = norm_attn(dropout(attn_out))).
        x1 = _ln(x1, g_attn_ref[li], bt_attn_ref[li])

        h1 = _gelu(mm(x1, w_ff1_ref[li], b_ff1_ref[li]))
        h2 = mm(h1, w_ff2_ref[li], b_ff2_ref[li])
        src = _ln(x1 + h2, g_ffn_ref[li], bt_ffn_ref[li])

    # ---- keep target positions, final LayerNorm, predictor projection
    tar = src.reshape(bt, S, d)[:, n_ctxt:, :].reshape(bt * tar_len, d)
    tar = _ln(tar, g_fin_ref[...], bt_fin_ref[...])
    out = mm(tar, w_pred_ref[...], b_pred_ref[...])
    out_ref[...] = out.reshape(bt, tar_len, d)


# ----------------------------------------------------------------------------
# Parameter construction (deterministic, matches module __init__ shapes)
# ----------------------------------------------------------------------------
def positional_encoding(q_len, d_model):
    position = jnp.arange(q_len, dtype=jnp.float32)[:, None]
    div_term = jnp.exp(
        jnp.arange(0, d_model, 2, dtype=jnp.float32) * -(math.log(10000.0) / d_model)
    )
    pe = jnp.zeros((q_len, d_model), jnp.float32)
    pe = pe.at[:, 0::2].set(jnp.sin(position * div_term))
    pe = pe.at[:, 1::2].set(jnp.cos(position * div_term))
    return pe


def _init_linear(key, d_in, d_out):
    k1, k2 = jax.random.split(key)
    bound = 1.0 / math.sqrt(d_in)
    w = jax.random.uniform(k1, (d_in, d_out), jnp.float32, -bound, bound)
    b = jax.random.uniform(k2, (d_out,), jnp.float32, -bound, bound)
    return w, b


def init_params(key, config):
    d_model = config["d_model"]
    n_layers = config["n_layers"]
    d_ff = config["d_ff"]
    patch_num = config["ws"] // config["patch_len"]

    keys = jax.random.split(key, n_layers + 4)
    params = {
        "W_proj": _init_linear(keys[0], d_model, d_model),
        "W_pos": positional_encoding(patch_num, d_model),
        "mask_token": jax.random.normal(keys[1], (1, 1, d_model), jnp.float32),
        "norm": (jnp.ones((d_model,), jnp.float32), jnp.zeros((d_model,), jnp.float32)),
        "predictor_proj": _init_linear(keys[2], d_model, d_model),
        "layers": [],
    }
    for li in range(n_layers):
        lk = jax.random.split(keys[3 + li], 6)
        params["layers"].append(
            {
                "W_Q": _init_linear(lk[0], d_model, d_model),
                "W_K": _init_linear(lk[1], d_model, d_model),
                "W_V": _init_linear(lk[2], d_model, d_model),
                "to_out": _init_linear(lk[3], d_model, d_model),
                "ff1": _init_linear(lk[4], d_model, d_ff),
                "ff2": _init_linear(lk[5], d_ff, d_model),
                "norm_attn": (jnp.ones((d_model,), jnp.float32), jnp.zeros((d_model,), jnp.float32)),
                "norm_ffn": (jnp.ones((d_model,), jnp.float32), jnp.zeros((d_model,), jnp.float32)),
            }
        )
    return params


def _choose_bs_tile(bs, rows_per_batch, target_rows=512):
    """Largest divisor of bs whose block has <= target_rows matmul rows (>=256 when possible)."""
    best = 1
    for t in range(1, bs + 1):
        if bs % t == 0 and t * rows_per_batch <= target_rows:
            best = t
    return best


# ----------------------------------------------------------------------------
# Forward pass: index glue in JAX, one fused Pallas kernel for everything else
# ----------------------------------------------------------------------------
def tsti_forward(params, x, mask_enc, mask_dec, *, n_heads):
    bs, n_vars, n_ctxt, d_model = x.shape
    tar_len = mask_dec.shape[1]
    B = bs * n_vars
    S = n_ctxt + tar_len

    x = x.reshape(B, n_ctxt, d_model)

    # positional-encoding gathers (index glue, kept in plain JAX); NO n_vars repeat —
    # broadcast across variables happens inside the kernel.
    pe_tbl = params["W_pos"]                                   # (patch_num, d)
    pe_enc = pe_tbl[mask_enc]                                  # (bs, n_ctxt, d)
    pe_dec = pe_tbl[mask_dec] + params["mask_token"]           # (bs, tar_len, d)

    layers = params["layers"]
    L = len(layers)
    d_ff = layers[0]["ff1"][0].shape[1]
    cdt = MATMUL_DTYPE

    def stack(fn):
        return jnp.stack([fn(lp) for lp in layers], axis=0)

    # fused QKV weights: (L, d, 3d) / (L, 1, 3d); matmul weights in bf16 (f32 accumulation)
    w_qkv = stack(lambda lp: jnp.concatenate(
        [lp["W_Q"][0], lp["W_K"][0], lp["W_V"][0]], axis=1)).astype(cdt)
    b_qkv = stack(lambda lp: jnp.concatenate(
        [lp["W_Q"][1], lp["W_K"][1], lp["W_V"][1]], axis=0).reshape(1, 3 * d_model))
    w_out = stack(lambda lp: lp["to_out"][0]).astype(cdt)
    b_out = stack(lambda lp: lp["to_out"][1].reshape(1, d_model))
    g_attn = stack(lambda lp: lp["norm_attn"][0].reshape(1, d_model))
    bt_attn = stack(lambda lp: lp["norm_attn"][1].reshape(1, d_model))
    w_ff1 = stack(lambda lp: lp["ff1"][0]).astype(cdt)
    b_ff1 = stack(lambda lp: lp["ff1"][1].reshape(1, d_ff))
    w_ff2 = stack(lambda lp: lp["ff2"][0]).astype(cdt)
    b_ff2 = stack(lambda lp: lp["ff2"][1].reshape(1, d_model))
    g_ffn = stack(lambda lp: lp["norm_ffn"][0].reshape(1, d_model))
    bt_ffn = stack(lambda lp: lp["norm_ffn"][1].reshape(1, d_model))

    w_proj = params["W_proj"][0].astype(cdt)
    b_proj = params["W_proj"][1].reshape(1, d_model)
    g_fin = params["norm"][0].reshape(1, d_model)
    bt_fin = params["norm"][1].reshape(1, d_model)
    w_pred = params["predictor_proj"][0].astype(cdt)
    b_pred = params["predictor_proj"][1].reshape(1, d_model)

    # batch tiling: BS_TILE whole batch entries (=> BS_TILE * n_vars sequences) per block
    bs_tile = _choose_bs_tile(bs, n_vars * S)
    bt = bs_tile * n_vars
    grid = (bs // bs_tile,)

    def full(shape):
        n = len(shape)
        return pl.BlockSpec(shape, lambda i, _n=n: (0,) * _n)

    out = pl.pallas_call(
        functools.partial(_tsti_fused_kernel, n_heads=n_heads),
        out_shape=jax.ShapeDtypeStruct((B, tar_len, d_model), jnp.float32),
        grid_spec=pltpu.PrefetchScalarGridSpec(
            num_scalar_prefetch=0,
            grid=grid,
            in_specs=[
                pl.BlockSpec((bt, n_ctxt, d_model), lambda i: (i, 0, 0)),       # x
                pl.BlockSpec((bs_tile, n_ctxt, d_model), lambda i: (i, 0, 0)),  # pe_enc (per bs)
                pl.BlockSpec((bs_tile, tar_len, d_model), lambda i: (i, 0, 0)), # pe_dec (+mask_token)
                full((d_model, d_model)),         # W_proj
                full((1, d_model)),               # b_proj
                full((L, d_model, 3 * d_model)),  # W_qkv (fused)
                full((L, 1, 3 * d_model)),        # b_qkv
                full((L, d_model, d_model)),      # to_out W
                full((L, 1, d_model)),            # to_out b
                full((L, 1, d_model)),            # norm_attn gamma
                full((L, 1, d_model)),            # norm_attn beta
                full((L, d_model, d_ff)),         # ff1 W
                full((L, 1, d_ff)),               # ff1 b
                full((L, d_ff, d_model)),         # ff2 W
                full((L, 1, d_model)),            # ff2 b
                full((L, 1, d_model)),            # norm_ffn gamma
                full((L, 1, d_model)),            # norm_ffn beta
                full((1, d_model)),               # final norm gamma
                full((1, d_model)),               # final norm beta
                full((d_model, d_model)),         # predictor W
                full((1, d_model)),               # predictor b
            ],
            out_specs=pl.BlockSpec((bt, tar_len, d_model), lambda i: (i, 0, 0)),
        ),
        compiler_params=pltpu.CompilerParams(
            dimension_semantics=("parallel",),        # batch groups split across v7x's 2 TCs
            vmem_limit_bytes=64 * 1024 * 1024,        # explicit (v5e default scoped = 16 MiB)
        ),
    )(
        x, pe_enc, pe_dec,
        w_proj, b_proj,
        w_qkv, b_qkv, w_out, b_out, g_attn, bt_attn,
        w_ff1, b_ff1, w_ff2, b_ff2, g_ffn, bt_ffn,
        g_fin, bt_fin, w_pred, b_pred,
    )
    return out.reshape(bs, n_vars, tar_len, d_model)


# ----------------------------------------------------------------------------
if __name__ == "__main__":
    config = dict(ws=64, patch_len=8, d_model=32, n_heads=4, n_layers=2, d_ff=64)
    patch_num = config["ws"] // config["patch_len"]

    key = jax.random.PRNGKey(0)
    kp, kx, ke, kd = jax.random.split(key, 4)
    params = init_params(kp, config)

    bs, n_vars, N_ctxt, tar_len = 2, 3, 5, 3
    x = jax.random.normal(kx, (bs, n_vars, N_ctxt, config["d_model"]), jnp.float32)
    mask_enc = jax.random.randint(ke, (bs, N_ctxt), 0, patch_num, dtype=jnp.int32)
    mask_dec = jax.random.randint(kd, (bs, tar_len), 0, patch_num, dtype=jnp.int32)

    fwd = jax.jit(functools.partial(tsti_forward, n_heads=config["n_heads"]))
    out = fwd(params, x, mask_enc, mask_dec)
    out = jax.block_until_ready(out)

    assert out.shape == (bs, n_vars, tar_len, config["d_model"]), out.shape
    assert jnp.all(jnp.isfinite(out))
    print("KERNEL_OK")
</pallas_src>

<mosaic_0001>
module attributes {stable_mosaic.version = 11 : i64} {
  func.func @_tsti_fused_kernel(%arg0: i32, %arg1: memref<6x5x32xf32, #tpu.memory_space<vmem>>, %arg2: memref<2x5x32xf32, #tpu.memory_space<vmem>>, %arg3: memref<2x3x32xf32, #tpu.memory_space<vmem>>, %arg4: memref<32x32xbf16, #tpu.memory_space<vmem>>, %arg5: memref<1x32xf32, #tpu.memory_space<vmem>>, %arg6: memref<2x32x96xbf16, #tpu.memory_space<vmem>>, %arg7: memref<2x1x96xf32, #tpu.memory_space<vmem>>, %arg8: memref<2x32x32xbf16, #tpu.memory_space<vmem>>, %arg9: memref<2x1x32xf32, #tpu.memory_space<vmem>>, %arg10: memref<2x1x32xf32, #tpu.memory_space<vmem>>, %arg11: memref<2x1x32xf32, #tpu.memory_space<vmem>>, %arg12: memref<2x32x64xbf16, #tpu.memory_space<vmem>>, %arg13: memref<2x1x64xf32, #tpu.memory_space<vmem>>, %arg14: memref<2x64x32xbf16, #tpu.memory_space<vmem>>, %arg15: memref<2x1x32xf32, #tpu.memory_space<vmem>>, %arg16: memref<2x1x32xf32, #tpu.memory_space<vmem>>, %arg17: memref<2x1x32xf32, #tpu.memory_space<vmem>>, %arg18: memref<1x32xf32, #tpu.memory_space<vmem>>, %arg19: memref<1x32xf32, #tpu.memory_space<vmem>>, %arg20: memref<32x32xbf16, #tpu.memory_space<vmem>>, %arg21: memref<1x32xf32, #tpu.memory_space<vmem>>, %arg22: memref<6x3x32xf32, #tpu.memory_space<vmem>>) attributes {dimension_semantics = [#tpu.dimension_semantics<parallel>], iteration_bounds = array<i64: 1>, scalar_prefetch = 0 : i64, scratch_operands = 0 : i64, tpu.core_type = #tpu.core_type<tc>, window_params = [{transform_indices = @transform_0, window_bounds = array<i64: 6, 5, 32>}, {transform_indices = @transform_1, window_bounds = array<i64: 2, 5, 32>}, {transform_indices = @transform_2, window_bounds = array<i64: 2, 3, 32>}, {pipeline_mode = #tpu.pipeline_mode<synchronous>, transform_indices = @transform_3, window_bounds = array<i64: 32, 32>}, {pipeline_mode = #tpu.pipeline_mode<synchronous>, transform_indices = @transform_4, window_bounds = array<i64: 1, 32>}, {pipeline_mode = #tpu.pipeline_mode<synchronous>, transform_indices = @transform_5, window_bounds = array<i64: 2, 32, 96>}, {pipeline_mode = #tpu.pipeline_mode<synchronous>, transform_indices = @transform_6, window_bounds = array<i64: 2, 1, 96>}, {pipeline_mode = #tpu.pipeline_mode<synchronous>, transform_indices = @transform_7, window_bounds = array<i64: 2, 32, 32>}, {pipeline_mode = #tpu.pipeline_mode<synchronous>, transform_indices = @transform_8, window_bounds = array<i64: 2, 1, 32>}, {pipeline_mode = #tpu.pipeline_mode<synchronous>, transform_indices = @transform_9, window_bounds = array<i64: 2, 1, 32>}, {pipeline_mode = #tpu.pipeline_mode<synchronous>, transform_indices = @transform_10, window_bounds = array<i64: 2, 1, 32>}, {pipeline_mode = #tpu.pipeline_mode<synchronous>, transform_indices = @transform_11, window_bounds = array<i64: 2, 32, 64>}, {pipeline_mode = #tpu.pipeline_mode<synchronous>, transform_indices = @transform_12, window_bounds = array<i64: 2, 1, 64>}, {pipeline_mode = #tpu.pipeline_mode<synchronous>, transform_indices = @transform_13, window_bounds = array<i64: 2, 64, 32>}, {pipeline_mode = #tpu.pipeline_mode<synchronous>, transform_indices = @transform_14, window_bounds = array<i64: 2, 1, 32>}, {pipeline_mode = #tpu.pipeline_mode<synchronous>, transform_indices = @transform_15, window_bounds = array<i64: 2, 1, 32>}, {pipeline_mode = #tpu.pipeline_mode<synchronous>, transform_indices = @transform_16, window_bounds = array<i64: 2, 1, 32>}, {pipeline_mode = #tpu.pipeline_mode<synchronous>, transform_indices = @transform_17, window_bounds = array<i64: 1, 32>}, {pipeline_mode = #tpu.pipeline_mode<synchronous>, transform_indices = @transform_18, window_bounds = array<i64: 1, 32>}, {pipeline_mode = #tpu.pipeline_mode<synchronous>, transform_indices = @transform_19, window_bounds = array<i64: 32, 32>}, {pipeline_mode = #tpu.pipeline_mode<synchronous>, transform_indices = @transform_20, window_bounds = array<i64: 1, 32>}, {transform_indices = @transform_21, window_bounds = array<i64: 6, 3, 32>}]} {
    %c0 = arith.constant 0 : index
    %c0_0 = arith.constant 0 : index
    %c0_1 = arith.constant 0 : index
    %0 = vector.load %arg1[%c0, %c0_0, %c0_1] : memref<6x5x32xf32, #tpu.memory_space<vmem>>, vector<6x5x32xf32>
    %1 = vector.shape_cast %0 : vector<6x5x32xf32> to vector<30x32xf32>
    %c0_2 = arith.constant 0 : index
    %c0_3 = arith.constant 0 : index
    %2 = vector.load %arg4[%c0_2, %c0_3] : memref<32x32xbf16, #tpu.memory_space<vmem>>, vector<32x32xbf16>
    %c0_4 = arith.constant 0 : index
    %c0_5 = arith.constant 0 : index
    %3 = vector.load %arg5[%c0_4, %c0_5] : memref<1x32xf32, #tpu.memory_space<vmem>>, vector<1x32xf32>
    %4 = arith.truncf %1 : vector<30x32xf32> to vector<30x32xbf16>
    %cst = arith.constant dense<0.000000e+00> : vector<30x32xf32>
    %5 = tpu.matmul %4, %2, %cst {dimension_numbers = #tpu.dot_dimension_numbers<[1], [0], [0], [1], [0, 0, 1, 1], [], []>} : vector<30x32xbf16>, vector<32x32xbf16>, vector<30x32xf32> -> vector<30x32xf32>
    %6 = vector.broadcast %3 : vector<1x32xf32> to vector<30x32xf32>
    %7 = arith.addf %5, %6 : vector<30x32xf32>
    %8 = vector.shape_cast %7 : vector<30x32xf32> to vector<2x3x5x32xf32>
    %c0_6 = arith.constant 0 : index
    %c0_7 = arith.constant 0 : index
    %c0_8 = arith.constant 0 : index
    %9 = vector.load %arg2[%c0_6, %c0_7, %c0_8] : memref<2x5x32xf32, #tpu.memory_space<vmem>>, vector<2x5x32xf32>
    %10 = vector.shape_cast %9 : vector<2x5x32xf32> to vector<2x1x5x32xf32>
    %11 = vector.broadcast %10 : vector<2x1x5x32xf32> to vector<2x3x5x32xf32>
    %12 = arith.addf %8, %11 : vector<2x3x5x32xf32>
    %c0_9 = arith.constant 0 : index
    %c0_10 = arith.constant 0 : index
    %c0_11 = arith.constant 0 : index
    %13 = vector.load %arg3[%c0_9, %c0_10, %c0_11] : memref<2x3x32xf32, #tpu.memory_space<vmem>>, vector<2x3x32xf32>
    %14 = vector.shape_cast %13 : vector<2x3x32xf32> to vector<2x1x3x32xf32>
    %15 = vector.shape_cast %14 : vector<2x1x3x32xf32> to vector<2x1x3x32xf32>
    %16 = vector.broadcast %15 : vector<2x1x3x32xf32> to vector<2x3x3x32xf32>
    %17 = tpu.concatenate %12, %16 in 2 : vector<2x3x5x32xf32>, vector<2x3x3x32xf32> -> vector<2x3x8x32xf32>
    %18 = vector.shape_cast %17 : vector<2x3x8x32xf32> to vector<48x32xf32>
    %c0_12 = arith.constant 0 : index
    %c0_13 = arith.constant 0 : index
    %c0_14 = arith.constant 0 : index
    %19 = vector.load %arg6[%c0_12, %c0_13, %c0_14] : memref<2x32x96xbf16, #tpu.memory_space<vmem>>, vector<1x32x96xbf16>
    %20 = vector.shape_cast %19 : vector<1x32x96xbf16> to vector<32x96xbf16>
    %c0_15 = arith.constant 0 : index
    %c0_16 = arith.constant 0 : index
    %c0_17 = arith.constant 0 : index
    %21 = vector.load %arg7[%c0_15, %c0_16, %c0_17] : memref<2x1x96xf32, #tpu.memory_space<vmem>>, vector<1x1x96xf32>
    %22 = vector.shape_cast %21 : vector<1x1x96xf32> to vector<1x96xf32>
    %23 = arith.truncf %18 : vector<48x32xf32> to vector<48x32xbf16>
    %cst_18 = arith.constant dense<0.000000e+00> : vector<48x96xf32>
    %24 = tpu.matmul %23, %20, %cst_18 {dimension_numbers = #tpu.dot_dimension_numbers<[1], [0], [0], [1], [0, 0, 1, 1], [], []>} : vector<48x32xbf16>, vector<32x96xbf16>, vector<48x96xf32> -> vector<48x96xf32>
    %25 = vector.broadcast %22 : vector<1x96xf32> to vector<48x96xf32>
    %26 = arith.addf %24, %25 : vector<48x96xf32>
    %27 = vector.extract_strided_slice %26 {offsets = [0, 0], sizes = [48, 32], strides = [1, 1]} : vector<48x96xf32> to vector<48x32xf32>
    %28 = vector.shape_cast %27 : vector<48x32xf32> to vector<6x8x32xf32>
    %29 = vector.extract_strided_slice %26 {offsets = [0, 32], sizes = [48, 32], strides = [1, 1]} : vector<48x96xf32> to vector<48x32xf32>
    %30 = vector.shape_cast %29 : vector<48x32xf32> to vector<6x8x32xf32>
    %31 = vector.extract_strided_slice %26 {offsets = [0, 64], sizes = [48, 32], strides = [1, 1]} : vector<48x96xf32> to vector<48x32xf32>
    %32 = vector.shape_cast %31 : vector<48x32xf32> to vector<6x8x32xf32>
    %33 = vector.extract_strided_slice %28 {offsets = [0, 0, 0], sizes = [6, 8, 8], strides = [1, 1, 1]} : vector<6x8x32xf32> to vector<6x8x8xf32>
    %34 = vector.extract_strided_slice %30 {offsets = [0, 0, 0], sizes = [6, 8, 8], strides = [1, 1, 1]} : vector<6x8x32xf32> to vector<6x8x8xf32>
    %35 = vector.extract_strided_slice %32 {offsets = [0, 0, 0], sizes = [6, 8, 8], strides = [1, 1, 1]} : vector<6x8x32xf32> to vector<6x8x8xf32>
    %cst_19 = arith.constant dense<0.000000e+00> : vector<6x8x8xf32>
    %36 = tpu.matmul %33, %34, %cst_19 {dimension_numbers = #tpu.dot_dimension_numbers<[2], [2], [1], [1], [0, 0, 0, 1, 1, 1], [0], [0]>} : vector<6x8x8xf32>, vector<6x8x8xf32>, vector<6x8x8xf32> -> vector<6x8x8xf32>
    %cst_20 = arith.constant 0.353553385 : f32
    %37 = vector.broadcast %cst_20 : f32 to vector<6x8x8xf32>
    %38 = arith.mulf %36, %37 : vector<6x8x8xf32>
    %cst_21 = arith.constant dense<0xFF800000> : vector<6x8xf32>
    %39 = vector.multi_reduction <maximumf>, %38, %cst_21 [2] : vector<6x8x8xf32> to vector<6x8xf32>
    %40 = vector.shape_cast %39 : vector<6x8xf32> to vector<6x8x1xf32>
    %41 = vector.broadcast %40 : vector<6x8x1xf32> to vector<6x8x8xf32>
    %42 = arith.subf %38, %41 : vector<6x8x8xf32>
    %43 = math.exp %42 : vector<6x8x8xf32>
    %cst_22 = arith.constant dense<0.000000e+00> : vector<6x8xf32>
    %44 = vector.multi_reduction <add>, %43, %cst_22 [2] : vector<6x8x8xf32> to vector<6x8xf32>
    %45 = vector.shape_cast %44 : vector<6x8xf32> to vector<6x8x1xf32>
    %46 = tpu.reciprocal %45 {approx = true} : vector<6x8x1xf32> -> vector<6x8x1xf32>
    %47 = vector.broadcast %46 : vector<6x8x1xf32> to vector<6x8x8xf32>
    %48 = arith.mulf %43, %47 : vector<6x8x8xf32>
    %cst_23 = arith.constant dense<0.000000e+00> : vector<6x8x8xf32>
    %49 = tpu.matmul %48, %35, %cst_23 {dimension_numbers = #tpu.dot_dimension_numbers<[2], [1], [1], [2], [0, 0, 0, 1, 1, 2], [0], [0]>} : vector<6x8x8xf32>, vector<6x8x8xf32>, vector<6x8x8xf32> -> vector<6x8x8xf32>
    %50 = vector.extract_strided_slice %28 {offsets = [0, 0, 8], sizes = [6, 8, 8], strides = [1, 1, 1]} : vector<6x8x32xf32> to vector<6x8x8xf32>
    %51 = vector.extract_strided_slice %30 {offsets = [0, 0, 8], sizes = [6, 8, 8], strides = [1, 1, 1]} : vector<6x8x32xf32> to vector<6x8x8xf32>
    %52 = vector.extract_strided_slice %32 {offsets = [0, 0, 8], sizes = [6, 8, 8], strides = [1, 1, 1]} : vector<6x8x32xf32> to vector<6x8x8xf32>
    %cst_24 = arith.constant dense<0.000000e+00> : vector<6x8x8xf32>
    %53 = tpu.matmul %50, %51, %cst_24 {dimension_numbers = #tpu.dot_dimension_numbers<[2], [2], [1], [1], [0, 0, 0, 1, 1, 1], [0], [0]>} : vector<6x8x8xf32>, vector<6x8x8xf32>, vector<6x8x8xf32> -> vector<6x8x8xf32>
    %cst_25 = arith.constant 0.353553385 : f32
    %54 = vector.broadcast %cst_25 : f32 to vector<6x8x8xf32>
    %55 = arith.mulf %53, %54 : vector<6x8x8xf32>
    %cst_26 = arith.constant dense<0xFF800000> : vector<6x8xf32>
    %56 = vector.multi_reduction <maximumf>, %55, %cst_26 [2] : vector<6x8x8xf32> to vector<6x8xf32>
    %57 = vector.shape_cast %56 : vector<6x8xf32> to vector<6x8x1xf32>
    %58 = vector.broadcast %57 : vector<6x8x1xf32> to vector<6x8x8xf32>
    %59 = arith.subf %55, %58 : vector<6x8x8xf32>
    %60 = math.exp %59 : vector<6x8x8xf32>
    %cst_27 = arith.constant dense<0.000000e+00> : vector<6x8xf32>
    %61 = vector.multi_reduction <add>, %60, %cst_27 [2] : vector<6x8x8xf32> to vector<6x8xf32>
    %62 = vector.shape_cast %61 : vector<6x8xf32> to vector<6x8x1xf32>
    %63 = tpu.reciprocal %62 {approx = true} : vector<6x8x1xf32> -> vector<6x8x1xf32>
    %64 = vector.broadcast %63 : vector<6x8x1xf32> to vector<6x8x8xf32>
    %65 = arith.mulf %60, %64 : vector<6x8x8xf32>
    %cst_28 = arith.constant dense<0.000000e+00> : vector<6x8x8xf32>
    %66 = tpu.matmul %65, %52, %cst_28 {dimension_numbers = #tpu.dot_dimension_numbers<[2], [1], [1], [2], [0, 0, 0, 1, 1, 2], [0], [0]>} : vector<6x8x8xf32>, vector<6x8x8xf32>, vector<6x8x8xf32> -> vector<6x8x8xf32>
    %67 = vector.extract_strided_slice %28 {offsets = [0, 0, 16], sizes = [6, 8, 8], strides = [1, 1, 1]} : vector<6x8x32xf32> to vector<6x8x8xf32>
    %68 = vector.extract_strided_slice %30 {offsets = [0, 0, 16], sizes = [6, 8, 8], strides = [1, 1, 1]} : vector<6x8x32xf32> to vector<6x8x8xf32>
    %69 = vector.extract_strided_slice %32 {offsets = [0, 0, 16], sizes = [6, 8, 8], strides = [1, 1, 1]} : vector<6x8x32xf32> to vector<6x8x8xf32>
    %cst_29 = arith.constant dense<0.000000e+00> : vector<6x8x8xf32>
    %70 = tpu.matmul %67, %68, %cst_29 {dimension_numbers = #tpu.dot_dimension_numbers<[2], [2], [1], [1], [0, 0, 0, 1, 1, 1], [0], [0]>} : vector<6x8x8xf32>, vector<6x8x8xf32>, vector<6x8x8xf32> -> vector<6x8x8xf32>
    %cst_30 = arith.constant 0.353553385 : f32
    %71 = vector.broadcast %cst_30 : f32 to vector<6x8x8xf32>
    %72 = arith.mulf %70, %71 : vector<6x8x8xf32>
    %cst_31 = arith.constant dense<0xFF800000> : vector<6x8xf32>
    %73 = vector.multi_reduction <maximumf>, %72, %cst_31 [2] : vector<6x8x8xf32> to vector<6x8xf32>
    %74 = vector.shape_cast %73 : vector<6x8xf32> to vector<6x8x1xf32>
    %75 = vector.broadcast %74 : vector<6x8x1xf32> to vector<6x8x8xf32>
    %76 = arith.subf %72, %75 : vector<6x8x8xf32>
    %77 = math.exp %76 : vector<6x8x8xf32>
    %cst_32 = arith.constant dense<0.000000e+00> : vector<6x8xf32>
    %78 = vector.multi_reduction <add>, %77, %cst_32 [2] : vector<6x8x8xf32> to vector<6x8xf32>
    %79 = vector.shape_cast %78 : vector<6x8xf32> to vector<6x8x1xf32>
    %80 = tpu.reciprocal %79 {approx = true} : vector<6x8x1xf32> -> vector<6x8x1xf32>
    %81 = vector.broadcast %80 : vector<6x8x1xf32> to vector<6x8x8xf32>
    %82 = arith.mulf %77, %81 : vector<6x8x8xf32>
    %cst_33 = arith.constant dense<0.000000e+00> : vector<6x8x8xf32>
    %83 = tpu.matmul %82, %69, %cst_33 {dimension_numbers = #tpu.dot_dimension_numbers<[2], [1], [1], [2], [0, 0, 0, 1, 1, 2], [0], [0]>} : vector<6x8x8xf32>, vector<6x8x8xf32>, vector<6x8x8xf32> -> vector<6x8x8xf32>
    %84 = vector.extract_strided_slice %28 {offsets = [0, 0, 24], sizes = [6, 8, 8], strides = [1, 1, 1]} : vector<6x8x32xf32> to vector<6x8x8xf32>
    %85 = vector.extract_strided_slice %30 {offsets = [0, 0, 24], sizes = [6, 8, 8], strides = [1, 1, 1]} : vector<6x8x32xf32> to vector<6x8x8xf32>
    %86 = vector.extract_strided_slice %32 {offsets = [0, 0, 24], sizes = [6, 8, 8], strides = [1, 1, 1]} : vector<6x8x32xf32> to vector<6x8x8xf32>
    %cst_34 = arith.constant dense<0.000000e+00> : vector<6x8x8xf32>
    %87 = tpu.matmul %84, %85, %cst_34 {dimension_numbers = #tpu.dot_dimension_numbers<[2], [2], [1], [1], [0, 0, 0, 1, 1, 1], [0], [0]>} : vector<6x8x8xf32>, vector<6x8x8xf32>, vector<6x8x8xf32> -> vector<6x8x8xf32>
    %cst_35 = arith.constant 0.353553385 : f32
    %88 = vector.broadcast %cst_35 : f32 to vector<6x8x8xf32>
    %89 = arith.mulf %87, %88 : vector<6x8x8xf32>
    %cst_36 = arith.constant dense<0xFF800000> : vector<6x8xf32>
    %90 = vector.multi_reduction <maximumf>, %89, %cst_36 [2] : vector<6x8x8xf32> to vector<6x8xf32>
    %91 = vector.shape_cast %90 : vector<6x8xf32> to vector<6x8x1xf32>
    %92 = vector.broadcast %91 : vector<6x8x1xf32> to vector<6x8x8xf32>
    %93 = arith.subf %89, %92 : vector<6x8x8xf32>
    %94 = math.exp %93 : vector<6x8x8xf32>
    %cst_37 = arith.constant dense<0.000000e+00> : vector<6x8xf32>
    %95 = vector.multi_reduction <add>, %94, %cst_37 [2] : vector<6x8x8xf32> to vector<6x8xf32>
    %96 = vector.shape_cast %95 : vector<6x8xf32> to vector<6x8x1xf32>
    %97 = tpu.reciprocal %96 {approx = true} : vector<6x8x1xf32> -> vector<6x8x1xf32>
    %98 = vector.broadcast %97 : vector<6x8x1xf32> to vector<6x8x8xf32>
    %99 = arith.mulf %94, %98 : vector<6x8x8xf32>
    %cst_38 = arith.constant dense<0.000000e+00> : vector<6x8x8xf32>
    %100 = tpu.matmul %99, %86, %cst_38 {dimension_numbers = #tpu.dot_dimension_numbers<[2], [1], [1], [2], [0, 0, 0, 1, 1, 2], [0], [0]>} : vector<6x8x8xf32>, vector<6x8x8xf32>, vector<6x8x8xf32> -> vector<6x8x8xf32>
    %101 = tpu.concatenate %49, %66, %83, %100 in 2 : vector<6x8x8xf32>, vector<6x8x8xf32>, vector<6x8x8xf32>, vector<6x8x8xf32> -> vector<6x8x32xf32>
    %102 = vector.shape_cast %101 : vector<6x8x32xf32> to vector<48x32xf32>
    %c0_39 = arith.constant 0 : index
    %c0_40 = arith.constant 0 : index
    %c0_41 = arith.constant 0 : index
    %103 = vector.load %arg8[%c0_39, %c0_40, %c0_41] : memref<2x32x32xbf16, #tpu.memory_space<vmem>>, vector<1x32x32xbf16>
    %104 = vector.shape_cast %103 : vector<1x32x32xbf16> to vector<32x32xbf16>
    %c0_42 = arith.constant 0 : index
    %c0_43 = arith.constant 0 : index
    %c0_44 = arith.constant 0 : index
    %105 = vector.load %arg9[%c0_42, %c0_43, %c0_44] : memref<2x1x32xf32, #tpu.memory_space<vmem>>, vector<1x1x32xf32>
    %106 = vector.shape_cast %105 : vector<1x1x32xf32> to vector<1x32xf32>
    %107 = arith.truncf %102 : vector<48x32xf32> to vector<48x32xbf16>
    %cst_45 = arith.constant dense<0.000000e+00> : vector<48x32xf32>
    %108 = tpu.matmul %107, %104, %cst_45 {dimension_numbers = #tpu.dot_dimension_numbers<[1], [0], [0], [1], [0, 0, 1, 1], [], []>} : vector<48x32xbf16>, vector<32x32xbf16>, vector<48x32xf32> -> vector<48x32xf32>
    %109 = vector.broadcast %106 : vector<1x32xf32> to vector<48x32xf32>
    %110 = arith.addf %108, %109 : vector<48x32xf32>
    %c0_46 = arith.constant 0 : index
    %c0_47 = arith.constant 0 : index
    %c0_48 = arith.constant 0 : index
    %111 = vector.load %arg10[%c0_46, %c0_47, %c0_48] : memref<2x1x32xf32, #tpu.memory_space<vmem>>, vector<1x1x32xf32>
    %112 = vector.shape_cast %111 : vector<1x1x32xf32> to vector<1x32xf32>
    %c0_49 = arith.constant 0 : index
    %c0_50 = arith.constant 0 : index
    %c0_51 = arith.constant 0 : index
    %113 = vector.load %arg11[%c0_49, %c0_50, %c0_51] : memref<2x1x32xf32, #tpu.memory_space<vmem>>, vector<1x1x32xf32>
    %114 = vector.shape_cast %113 : vector<1x1x32xf32> to vector<1x32xf32>
    %cst_52 = arith.constant dense<0.000000e+00> : vector<48xf32>
    %115 = vector.multi_reduction <add>, %110, %cst_52 [1] : vector<48x32xf32> to vector<48xf32>
    %116 = vector.shape_cast %115 : vector<48xf32> to vector<48x1xf32>
    %cst_53 = arith.constant 3.200000e+01 : f32
    %117 = vector.broadcast %cst_53 : f32 to vector<48x1xf32>
    %118 = arith.divf %116, %117 : vector<48x1xf32>
    %119 = vector.broadcast %118 : vector<48x1xf32> to vector<48x32xf32>
    %120 = arith.subf %110, %119 : vector<48x32xf32>
    %121 = arith.mulf %120, %120 : vector<48x32xf32>
    %cst_54 = arith.constant dense<0.000000e+00> : vector<48xf32>
    %122 = vector.multi_reduction <add>, %121, %cst_54 [1] : vector<48x32xf32> to vector<48xf32>
    %123 = vector.shape_cast %122 : vector<48xf32> to vector<48x1xf32>
    %cst_55 = arith.constant 3.200000e+01 : f32
    %124 = vector.broadcast %cst_55 : f32 to vector<48x1xf32>
    %125 = arith.divf %123, %124 : vector<48x1xf32>
    %cst_56 = arith.constant 9.99999974E-6 : f32
    %126 = vector.broadcast %cst_56 : f32 to vector<48x1xf32>
    %127 = arith.addf %125, %126 : vector<48x1xf32>
    %128 = math.rsqrt %127 : vector<48x1xf32>
    %129 = vector.broadcast %128 : vector<48x1xf32> to vector<48x32xf32>
    %130 = arith.mulf %120, %129 : vector<48x32xf32>
    %131 = vector.broadcast %112 : vector<1x32xf32> to vector<48x32xf32>
    %132 = arith.mulf %130, %131 : vector<48x32xf32>
    %133 = vector.broadcast %114 : vector<1x32xf32> to vector<48x32xf32>
    %134 = arith.addf %132, %133 : vector<48x32xf32>
    %c0_57 = arith.constant 0 : index
    %c0_58 = arith.constant 0 : index
    %c0_59 = arith.constant 0 : index
    %135 = vector.load %arg12[%c0_57, %c0_58, %c0_59] : memref<2x32x64xbf16, #tpu.memory_space<vmem>>, vector<1x32x64xbf16>
    %136 = vector.shape_cast %135 : vector<1x32x64xbf16> to vector<32x64xbf16>
    %c0_60 = arith.constant 0 : index
    %c0_61 = arith.constant 0 : index
    %c0_62 = arith.constant 0 : index
    %137 = vector.load %arg13[%c0_60, %c0_61, %c0_62] : memref<2x1x64xf32, #tpu.memory_space<vmem>>, vector<1x1x64xf32>
    %138 = vector.shape_cast %137 : vector<1x1x64xf32> to vector<1x64xf32>
    %139 = arith.truncf %134 : vector<48x32xf32> to vector<48x32xbf16>
    %cst_63 = arith.constant dense<0.000000e+00> : vector<48x64xf32>
    %140 = tpu.matmul %139, %136, %cst_63 {dimension_numbers = #tpu.dot_dimension_numbers<[1], [0], [0], [1], [0, 0, 1, 1], [], []>} : vector<48x32xbf16>, vector<32x64xbf16>, vector<48x64xf32> -> vector<48x64xf32>
    %141 = vector.broadcast %138 : vector<1x64xf32> to vector<48x64xf32>
    %142 = arith.addf %140, %141 : vector<48x64xf32>
    %cst_64 = arith.constant 5.000000e-01 : f32
    %143 = vector.broadcast %cst_64 : f32 to vector<48x64xf32>
    %144 = arith.mulf %143, %142 : vector<48x64xf32>
    %cst_65 = arith.constant 0.707106769 : f32
    %145 = vector.broadcast %cst_65 : f32 to vector<48x64xf32>
    %146 = arith.mulf %142, %145 : vector<48x64xf32>
    %147 = math.erf %146 : vector<48x64xf32>
    %cst_66 = arith.constant 1.000000e+00 : f32
    %148 = vector.broadcast %cst_66 : f32 to vector<48x64xf32>
    %149 = arith.addf %148, %147 : vector<48x64xf32>
    %150 = arith.mulf %144, %149 : vector<48x64xf32>
    %c0_67 = arith.constant 0 : index
    %c0_68 = arith.constant 0 : index
    %c0_69 = arith.constant 0 : index
    %151 = vector.load %arg14[%c0_67, %c0_68, %c0_69] : memref<2x64x32xbf16, #tpu.memory_space<vmem>>, vector<1x64x32xbf16>
    %152 = vector.shape_cast %151 : vector<1x64x32xbf16> to vector<64x32xbf16>
    %c0_70 = arith.constant 0 : index
    %c0_71 = arith.constant 0 : index
    %c0_72 = arith.constant 0 : index
    %153 = vector.load %arg15[%c0_70, %c0_71, %c0_72] : memref<2x1x32xf32, #tpu.memory_space<vmem>>, vector<1x1x32xf32>
    %154 = vector.shape_cast %153 : vector<1x1x32xf32> to vector<1x32xf32>
    %155 = arith.truncf %150 : vector<48x64xf32> to vector<48x64xbf16>
    %cst_73 = arith.constant dense<0.000000e+00> : vector<48x32xf32>
    %156 = tpu.matmul %155, %152, %cst_73 {dimension_numbers = #tpu.dot_dimension_numbers<[1], [0], [0], [1], [0, 0, 1, 1], [], []>} : vector<48x64xbf16>, vector<64x32xbf16>, vector<48x32xf32> -> vector<48x32xf32>
    %157 = vector.broadcast %154 : vector<1x32xf32> to vector<48x32xf32>
    %158 = arith.addf %156, %157 : vector<48x32xf32>
    %159 = arith.addf %134, %158 : vector<48x32xf32>
    %c0_74 = arith.constant 0 : index
    %c0_75 = arith.constant 0 : index
    %c0_76 = arith.constant 0 : index
    %160 = vector.load %arg16[%c0_74, %c0_75, %c0_76] : memref<2x1x32xf32, #tpu.memory_space<vmem>>, vector<1x1x32xf32>
    %161 = vector.shape_cast %160 : vector<1x1x32xf32> to vector<1x32xf32>
    %c0_77 = arith.constant 0 : index
    %c0_78 = arith.constant 0 : index
    %c0_79 = arith.constant 0 : index
    %162 = vector.load %arg17[%c0_77, %c0_78, %c0_79] : memref<2x1x32xf32, #tpu.memory_space<vmem>>, vector<1x1x32xf32>
    %163 = vector.shape_cast %162 : vector<1x1x32xf32> to vector<1x32xf32>
    %cst_80 = arith.constant dense<0.000000e+00> : vector<48xf32>
    %164 = vector.multi_reduction <add>, %159, %cst_80 [1] : vector<48x32xf32> to vector<48xf32>
    %165 = vector.shape_cast %164 : vector<48xf32> to vector<48x1xf32>
    %cst_81 = arith.constant 3.200000e+01 : f32
    %166 = vector.broadcast %cst_81 : f32 to vector<48x1xf32>
    %167 = arith.divf %165, %166 : vector<48x1xf32>
    %168 = vector.broadcast %167 : vector<48x1xf32> to vector<48x32xf32>
    %169 = arith.subf %159, %168 : vector<48x32xf32>
    %170 = arith.mulf %169, %169 : vector<48x32xf32>
    %cst_82 = arith.constant dense<0.000000e+00> : vector<48xf32>
    %171 = vector.multi_reduction <add>, %170, %cst_82 [1] : vector<48x32xf32> to vector<48xf32>
    %172 = vector.shape_cast %171 : vector<48xf32> to vector<48x1xf32>
    %cst_83 = arith.constant 3.200000e+01 : f32
    %173 = vector.broadcast %cst_83 : f32 to vector<48x1xf32>
    %174 = arith.divf %172, %173 : vector<48x1xf32>
    %cst_84 = arith.constant 9.99999974E-6 : f32
    %175 = vector.broadcast %cst_84 : f32 to vector<48x1xf32>
    %176 = arith.addf %174, %175 : vector<48x1xf32>
    %177 = math.rsqrt %176 : vector<48x1xf32>
    %178 = vector.broadcast %177 : vector<48x1xf32> to vector<48x32xf32>
    %179 = arith.mulf %169, %178 : vector<48x32xf32>
    %180 = vector.broadcast %161 : vector<1x32xf32> to vector<48x32xf32>
    %181 = arith.mulf %179, %180 : vector<48x32xf32>
    %182 = vector.broadcast %163 : vector<1x32xf32> to vector<48x32xf32>
    %183 = arith.addf %181, %182 : vector<48x32xf32>
    %c1 = arith.constant 1 : index
    %c0_85 = arith.constant 0 : index
    %c0_86 = arith.constant 0 : index
    %184 = vector.load %arg6[%c1, %c0_85, %c0_86] : memref<2x32x96xbf16, #tpu.memory_space<vmem>>, vector<1x32x96xbf16>
    %185 = vector.shape_cast %184 : vector<1x32x96xbf16> to vector<32x96xbf16>
    %c1_87 = arith.constant 1 : index
    %c0_88 = arith.constant 0 : index
    %c0_89 = arith.constant 0 : index
    %186 = vector.load %arg7[%c1_87, %c0_88, %c0_89] : memref<2x1x96xf32, #tpu.memory_space<vmem>>, vector<1x1x96xf32>
    %187 = vector.shape_cast %186 : vector<1x1x96xf32> to vector<1x96xf32>
    %188 = arith.truncf %183 : vector<48x32xf32> to vector<48x32xbf16>
    %cst_90 = arith.constant dense<0.000000e+00> : vector<48x96xf32>
    %189 = tpu.matmul %188, %185, %cst_90 {dimension_numbers = #tpu.dot_dimension_numbers<[1], [0], [0], [1], [0, 0, 1, 1], [], []>} : vector<48x32xbf16>, vector<32x96xbf16>, vector<48x96xf32> -> vector<48x96xf32>
    %190 = vector.broadcast %187 : vector<1x96xf32> to vector<48x96xf32>
    %191 = arith.addf %189, %190 : vector<48x96xf32>
    %192 = vector.extract_strided_slice %191 {offsets = [0, 0], sizes = [48, 32], strides = [1, 1]} : vector<48x96xf32> to vector<48x32xf32>
    %193 = vector.shape_cast %192 : vector<48x32xf32> to vector<6x8x32xf32>
    %194 = vector.extract_strided_slice %191 {offsets = [0, 32], sizes = [48, 32], strides = [1, 1]} : vector<48x96xf32> to vector<48x32xf32>
    %195 = vector.shape_cast %194 : vector<48x32xf32> to vector<6x8x32xf32>
    %196 = vector.extract_strided_slice %191 {offsets = [0, 64], sizes = [48, 32], strides = [1, 1]} : vector<48x96xf32> to vector<48x32xf32>
    %197 = vector.shape_cast %196 : vector<48x32xf32> to vector<6x8x32xf32>
    %198 = vector.extract_strided_slice %193 {offsets = [0, 0, 0], sizes = [6, 8, 8], strides = [1, 1, 1]} : vector<6x8x32xf32> to vector<6x8x8xf32>
    %199 = vector.extract_strided_slice %195 {offsets = [0, 0, 0], sizes = [6, 8, 8], strides = [1, 1, 1]} : vector<6x8x32xf32> to vector<6x8x8xf32>
    %200 = vector.extract_strided_slice %197 {offsets = [0, 0, 0], sizes = [6, 8, 8], strides = [1, 1, 1]} : vector<6x8x32xf32> to vector<6x8x8xf32>
    %cst_91 = arith.constant dense<0.000000e+00> : vector<6x8x8xf32>
    %201 = tpu.matmul %198, %199, %cst_91 {dimension_numbers = #tpu.dot_dimension_numbers<[2], [2], [1], [1], [0, 0, 0, 1, 1, 1], [0], [0]>} : vector<6x8x8xf32>, vector<6x8x8xf32>, vector<6x8x8xf32> -> vector<6x8x8xf32>
    %cst_92 = arith.constant 0.353553385 : f32
    %202 = vector.broadcast %cst_92 : f32 to vector<6x8x8xf32>
    %203 = arith.mulf %201, %202 : vector<6x8x8xf32>
    %204 = arith.addf %203, %38 : vector<6x8x8xf32>
    %cst_93 = arith.constant dense<0xFF800000> : vector<6x8xf32>
    %205 = vector.multi_reduction <maximumf>, %204, %cst_93 [2] : vector<6x8x8xf32> to vector<6x8xf32>
    %206 = vector.shape_cast %205 : vector<6x8xf32> to vector<6x8x1xf32>
    %207 = vector.broadcast %206 : vector<6x8x1xf32> to vector<6x8x8xf32>
    %208 = arith.subf %204, %207 : vector<6x8x8xf32>
    %209 = math.exp %208 : vector<6x8x8xf32>
    %cst_94 = arith.constant dense<0.000000e+00> : vector<6x8xf32>
    %210 = vector.multi_reduction <add>, %209, %cst_94 [2] : vector<6x8x8xf32> to vector<6x8xf32>
    %211 = vector.shape_cast %210 : vector<6x8xf32> to vector<6x8x1xf32>
    %212 = tpu.reciprocal %211 {approx = true} : vector<6x8x1xf32> -> vector<6x8x1xf32>
    %213 = vector.broadcast %212 : vector<6x8x1xf32> to vector<6x8x8xf32>
    %214 = arith.mulf %209, %213 : vector<6x8x8xf32>
    %cst_95 = arith.constant dense<0.000000e+00> : vector<6x8x8xf32>
    %215 = tpu.matmul %214, %200, %cst_95 {dimension_numbers = #tpu.dot_dimension_numbers<[2], [1], [1], [2], [0, 0, 0, 1, 1, 2], [0], [0]>} : vector<6x8x8xf32>, vector<6x8x8xf32>, vector<6x8x8xf32> -> vector<6x8x8xf32>
    %216 = vector.extract_strided_slice %193 {offsets = [0, 0, 8], sizes = [6, 8, 8], strides = [1, 1, 1]} : vector<6x8x32xf32> to vector<6x8x8xf32>
    %217 = vector.extract_strided_slice %195 {offsets = [0, 0, 8], sizes = [6, 8, 8], strides = [1, 1, 1]} : vector<6x8x32xf32> to vector<6x8x8xf32>
    %218 = vector.extract_strided_slice %197 {offsets = [0, 0, 8], sizes = [6, 8, 8], strides = [1, 1, 1]} : vector<6x8x32xf32> to vector<6x8x8xf32>
    %cst_96 = arith.constant dense<0.000000e+00> : vector<6x8x8xf32>
    %219 = tpu.matmul %216, %217, %cst_96 {dimension_numbers = #tpu.dot_dimension_numbers<[2], [2], [1], [1], [0, 0, 0, 1, 1, 1], [0], [0]>} : vector<6x8x8xf32>, vector<6x8x8xf32>, vector<6x8x8xf32> -> vector<6x8x8xf32>
    %cst_97 = arith.constant 0.353553385 : f32
    %220 = vector.broadcast %cst_97 : f32 to vector<6x8x8xf32>
    %221 = arith.mulf %219, %220 : vector<6x8x8xf32>
    %222 = arith.addf %221, %55 : vector<6x8x8xf32>
    %cst_98 = arith.constant dense<0xFF800000> : vector<6x8xf32>
    %223 = vector.multi_reduction <maximumf>, %222, %cst_98 [2] : vector<6x8x8xf32> to vector<6x8xf32>
    %224 = vector.shape_cast %223 : vector<6x8xf32> to vector<6x8x1xf32>
    %225 = vector.broadcast %224 : vector<6x8x1xf32> to vector<6x8x8xf32>
    %226 = arith.subf %222, %225 : vector<6x8x8xf32>
    %227 = math.exp %226 : vector<6x8x8xf32>
    %cst_99 = arith.constant dense<0.000000e+00> : vector<6x8xf32>
    %228 = vector.multi_reduction <add>, %227, %cst_99 [2] : vector<6x8x8xf32> to vector<6x8xf32>
    %229 = vector.shape_cast %228 : vector<6x8xf32> to vector<6x8x1xf32>
    %230 = tpu.reciprocal %229 {approx = true} : vector<6x8x1xf32> -> vector<6x8x1xf32>
    %231 = vector.broadcast %230 : vector<6x8x1xf32> to vector<6x8x8xf32>
    %232 = arith.mulf %227, %231 : vector<6x8x8xf32>
    %cst_100 = arith.constant dense<0.000000e+00> : vector<6x8x8xf32>
    %233 = tpu.matmul %232, %218, %cst_100 {dimension_numbers = #tpu.dot_dimension_numbers<[2], [1], [1], [2], [0, 0, 0, 1, 1, 2], [0], [0]>} : vector<6x8x8xf32>, vector<6x8x8xf32>, vector<6x8x8xf32> -> vector<6x8x8xf32>
    %234 = vector.extract_strided_slice %193 {offsets = [0, 0, 16], sizes = [6, 8, 8], strides = [1, 1, 1]} : vector<6x8x32xf32> to vector<6x8x8xf32>
    %235 = vector.extract_strided_slice %195 {offsets = [0, 0, 16], sizes = [6, 8, 8], strides = [1, 1, 1]} : vector<6x8x32xf32> to vector<6x8x8xf32>
    %236 = vector.extract_strided_slice %197 {offsets = [0, 0, 16], sizes = [6, 8, 8], strides = [1, 1, 1]} : vector<6x8x32xf32> to vector<6x8x8xf32>
    %cst_101 = arith.constant dense<0.000000e+00> : vector<6x8x8xf32>
    %237 = tpu.matmul %234, %235, %cst_101 {dimension_numbers = #tpu.dot_dimension_numbers<[2], [2], [1], [1], [0, 0, 0, 1, 1, 1], [0], [0]>} : vector<6x8x8xf32>, vector<6x8x8xf32>, vector<6x8x8xf32> -> vector<6x8x8xf32>
    %cst_102 = arith.constant 0.353553385 : f32
    %238 = vector.broadcast %cst_102 : f32 to vector<6x8x8xf32>
    %239 = arith.mulf %237, %238 : vector<6x8x8xf32>
    %240 = arith.addf %239, %72 : vector<6x8x8xf32>
    %cst_103 = arith.constant dense<0xFF800000> : vector<6x8xf32>
    %241 = vector.multi_reduction <maximumf>, %240, %cst_103 [2] : vector<6x8x8xf32> to vector<6x8xf32>
    %242 = vector.shape_cast %241 : vector<6x8xf32> to vector<6x8x1xf32>
    %243 = vector.broadcast %242 : vector<6x8x1xf32> to vector<6x8x8xf32>
    %244 = arith.subf %240, %243 : vector<6x8x8xf32>
    %245 = math.exp %244 : vector<6x8x8xf32>
    %cst_104 = arith.constant dense<0.000000e+00> : vector<6x8xf32>
    %246 = vector.multi_reduction <add>, %245, %cst_104 [2] : vector<6x8x8xf32> to vector<6x8xf32>
    %247 = vector.shape_cast %246 : vector<6x8xf32> to vector<6x8x1xf32>
    %248 = tpu.reciprocal %247 {approx = true} : vector<6x8x1xf32> -> vector<6x8x1xf32>
    %249 = vector.broadcast %248 : vector<6x8x1xf32> to vector<6x8x8xf32>
    %250 = arith.mulf %245, %249 : vector<6x8x8xf32>
    %cst_105 = arith.constant dense<0.000000e+00> : vector<6x8x8xf32>
    %251 = tpu.matmul %250, %236, %cst_105 {dimension_numbers = #tpu.dot_dimension_numbers<[2], [1], [1], [2], [0, 0, 0, 1, 1, 2], [0], [0]>} : vector<6x8x8xf32>, vector<6x8x8xf32>, vector<6x8x8xf32> -> vector<6x8x8xf32>
    %252 = vector.extract_strided_slice %193 {offsets = [0, 0, 24], sizes = [6, 8, 8], strides = [1, 1, 1]} : vector<6x8x32xf32> to vector<6x8x8xf32>
    %253 = vector.extract_strided_slice %195 {offsets = [0, 0, 24], sizes = [6, 8, 8], strides = [1, 1, 1]} : vector<6x8x32xf32> to vector<6x8x8xf32>
    %254 = vector.extract_strided_slice %197 {offsets = [0, 0, 24], sizes = [6, 8, 8], strides = [1, 1, 1]} : vector<6x8x32xf32> to vector<6x8x8xf32>
    %cst_106 = arith.constant dense<0.000000e+00> : vector<6x8x8xf32>
    %255 = tpu.matmul %252, %253, %cst_106 {dimension_numbers = #tpu.dot_dimension_numbers<[2], [2], [1], [1], [0, 0, 0, 1, 1, 1], [0], [0]>} : vector<6x8x8xf32>, vector<6x8x8xf32>, vector<6x8x8xf32> -> vector<6x8x8xf32>
    %cst_107 = arith.constant 0.353553385 : f32
    %256 = vector.broadcast %cst_107 : f32 to vector<6x8x8xf32>
    %257 = arith.mulf %255, %256 : vector<6x8x8xf32>
    %258 = arith.addf %257, %89 : vector<6x8x8xf32>
    %cst_108 = arith.constant dense<0xFF800000> : vector<6x8xf32>
    %259 = vector.multi_reduction <maximumf>, %258, %cst_108 [2] : vector<6x8x8xf32> to vector<6x8xf32>
    %260 = vector.shape_cast %259 : vector<6x8xf32> to vector<6x8x1xf32>
    %261 = vector.broadcast %260 : vector<6x8x1xf32> to vector<6x8x8xf32>
    %262 = arith.subf %258, %261 : vector<6x8x8xf32>
    %263 = math.exp %262 : vector<6x8x8xf32>
    %cst_109 = arith.constant dense<0.000000e+00> : vector<6x8xf32>
    %264 = vector.multi_reduction <add>, %263, %cst_109 [2] : vector<6x8x8xf32> to vector<6x8xf32>
    %265 = vector.shape_cast %264 : vector<6x8xf32> to vector<6x8x1xf32>
    %266 = tpu.reciprocal %265 {approx = true} : vector<6x8x1xf32> -> vector<6x8x1xf32>
    %267 = vector.broadcast %266 : vector<6x8x1xf32> to vector<6x8x8xf32>
    %268 = arith.mulf %263, %267 : vector<6x8x8xf32>
    %cst_110 = arith.constant dense<0.000000e+00> : vector<6x8x8xf32>
    %269 = tpu.matmul %268, %254, %cst_110 {dimension_numbers = #tpu.dot_dimension_numbers<[2], [1], [1], [2], [0, 0, 0, 1, 1, 2], [0], [0]>} : vector<6x8x8xf32>, vector<6x8x8xf32>, vector<6x8x8xf32> -> vector<6x8x8xf32>
    %270 = tpu.concatenate %215, %233, %251, %269 in 2 : vector<6x8x8xf32>, vector<6x8x8xf32>, vector<6x8x8xf32>, vector<6x8x8xf32> -> vector<6x8x32xf32>
    %271 = vector.shape_cast %270 : vector<6x8x32xf32> to vector<48x32xf32>
    %c1_111 = arith.constant 1 : index
    %c0_112 = arith.constant 0 : index
    %c0_113 = arith.constant 0 : index
    %272 = vector.load %arg8[%c1_111, %c0_112, %c0_113] : memref<2x32x32xbf16, #tpu.memory_space<vmem>>, vector<1x32x32xbf16>
    %273 = vector.shape_cast %272 : vector<1x32x32xbf16> to vector<32x32xbf16>
    %c1_114 = arith.constant 1 : index
    %c0_115 = arith.constant 0 : index
    %c0_116 = arith.constant 0 : index
    %274 = vector.load %arg9[%c1_114, %c0_115, %c0_116] : memref<2x1x32xf32, #tpu.memory_space<vmem>>, vector<1x1x32xf32>
    %275 = vector.shape_cast %274 : vector<1x1x32xf32> to vector<1x32xf32>
    %276 = arith.truncf %271 : vector<48x32xf32> to vector<48x32xbf16>
    %cst_117 = arith.constant dense<0.000000e+00> : vector<48x32xf32>
    %277 = tpu.matmul %276, %273, %cst_117 {dimension_numbers = #tpu.dot_dimension_numbers<[1], [0], [0], [1], [0, 0, 1, 1], [], []>} : vector<48x32xbf16>, vector<32x32xbf16>, vector<48x32xf32> -> vector<48x32xf32>
    %278 = vector.broadcast %275 : vector<1x32xf32> to vector<48x32xf32>
    %279 = arith.addf %277, %278 : vector<48x32xf32>
    %c1_118 = arith.constant 1 : index
    %c0_119 = arith.constant 0 : index
    %c0_120 = arith.constant 0 : index
    %280 = vector.load %arg10[%c1_118, %c0_119, %c0_120] : memref<2x1x32xf32, #tpu.memory_space<vmem>>, vector<1x1x32xf32>
    %281 = vector.shape_cast %280 : vector<1x1x32xf32> to vector<1x32xf32>
    %c1_121 = arith.constant 1 : index
    %c0_122 = arith.constant 0 : index
    %c0_123 = arith.constant 0 : index
    %282 = vector.load %arg11[%c1_121, %c0_122, %c0_123] : memref<2x1x32xf32, #tpu.memory_space<vmem>>, vector<1x1x32xf32>
    %283 = vector.shape_cast %282 : vector<1x1x32xf32> to vector<1x32xf32>
    %cst_124 = arith.constant dense<0.000000e+00> : vector<48xf32>
    %284 = vector.multi_reduction <add>, %279, %cst_124 [1] : vector<48x32xf32> to vector<48xf32>
    %285 = vector.shape_cast %284 : vector<48xf32> to vector<48x1xf32>
    %cst_125 = arith.constant 3.200000e+01 : f32
    %286 = vector.broadcast %cst_125 : f32 to vector<48x1xf32>
    %287 = arith.divf %285, %286 : vector<48x1xf32>
    %288 = vector.broadcast %287 : vector<48x1xf32> to vector<48x32xf32>
    %289 = arith.subf %279, %288 : vector<48x32xf32>
    %290 = arith.mulf %289, %289 : vector<48x32xf32>
    %cst_126 = arith.constant dense<0.000000e+00> : vector<48xf32>
    %291 = vector.multi_reduction <add>, %290, %cst_126 [1] : vector<48x32xf32> to vector<48xf32>
    %292 = vector.shape_cast %291 : vector<48xf32> to vector<48x1xf32>
    %cst_127 = arith.constant 3.200000e+01 : f32
    %293 = vector.broadcast %cst_127 : f32 to vector<48x1xf32>
    %294 = arith.divf %292, %293 : vector<48x1xf32>
    %cst_128 = arith.constant 9.99999974E-6 : f32
    %295 = vector.broadcast %cst_128 : f32 to vector<48x1xf32>
    %296 = arith.addf %294, %295 : vector<48x1xf32>
    %297 = math.rsqrt %296 : vector<48x1xf32>
    %298 = vector.broadcast %297 : vector<48x1xf32> to vector<48x32xf32>
    %299 = arith.mulf %289, %298 : vector<48x32xf32>
    %300 = vector.broadcast %281 : vector<1x32xf32> to vector<48x32xf32>
    %301 = arith.mulf %299, %300 : vector<48x32xf32>
    %302 = vector.broadcast %283 : vector<1x32xf32> to vector<48x32xf32>
    %303 = arith.addf %301, %302 : vector<48x32xf32>
    %c1_129 = arith.constant 1 : index
    %c0_130 = arith.constant 0 : index
    %c0_131 = arith.constant 0 : index
    %304 = vector.load %arg12[%c1_129, %c0_130, %c0_131] : memref<2x32x64xbf16, #tpu.memory_space<vmem>>, vector<1x32x64xbf16>
    %305 = vector.shape_cast %304 : vector<1x32x64xbf16> to vector<32x64xbf16>
    %c1_132 = arith.constant 1 : index
    %c0_133 = arith.constant 0 : index
    %c0_134 = arith.constant 0 : index
    %306 = vector.load %arg13[%c1_132, %c0_133, %c0_134] : memref<2x1x64xf32, #tpu.memory_space<vmem>>, vector<1x1x64xf32>
    %307 = vector.shape_cast %306 : vector<1x1x64xf32> to vector<1x64xf32>
    %308 = arith.truncf %303 : vector<48x32xf32> to vector<48x32xbf16>
    %cst_135 = arith.constant dense<0.000000e+00> : vector<48x64xf32>
    %309 = tpu.matmul %308, %305, %cst_135 {dimension_numbers = #tpu.dot_dimension_numbers<[1], [0], [0], [1], [0, 0, 1, 1], [], []>} : vector<48x32xbf16>, vector<32x64xbf16>, vector<48x64xf32> -> vector<48x64xf32>
    %310 = vector.broadcast %307 : vector<1x64xf32> to vector<48x64xf32>
    %311 = arith.addf %309, %310 : vector<48x64xf32>
    %cst_136 = arith.constant 5.000000e-01 : f32
    %312 = vector.broadcast %cst_136 : f32 to vector<48x64xf32>
    %313 = arith.mulf %312, %311 : vector<48x64xf32>
    %cst_137 = arith.constant 0.707106769 : f32
    %314 = vector.broadcast %cst_137 : f32 to vector<48x64xf32>
    %315 = arith.mulf %311, %314 : vector<48x64xf32>
    %316 = math.erf %315 : vector<48x64xf32>
    %cst_138 = arith.constant 1.000000e+00 : f32
    %317 = vector.broadcast %cst_138 : f32 to vector<48x64xf32>
    %318 = arith.addf %317, %316 : vector<48x64xf32>
    %319 = arith.mulf %313, %318 : vector<48x64xf32>
    %c1_139 = arith.constant 1 : index
    %c0_140 = arith.constant 0 : index
    %c0_141 = arith.constant 0 : index
    %320 = vector.load %arg14[%c1_139, %c0_140, %c0_141] : memref<2x64x32xbf16, #tpu.memory_space<vmem>>, vector<1x64x32xbf16>
    %321 = vector.shape_cast %320 : vector<1x64x32xbf16> to vector<64x32xbf16>
    %c1_142 = arith.constant 1 : index
    %c0_143 = arith.constant 0 : index
    %c0_144 = arith.constant 0 : index
    %322 = vector.load %arg15[%c1_142, %c0_143, %c0_144] : memref<2x1x32xf32, #tpu.memory_space<vmem>>, vector<1x1x32xf32>
    %323 = vector.shape_cast %322 : vector<1x1x32xf32> to vector<1x32xf32>
    %324 = arith.truncf %319 : vector<48x64xf32> to vector<48x64xbf16>
    %cst_145 = arith.constant dense<0.000000e+00> : vector<48x32xf32>
    %325 = tpu.matmul %324, %321, %cst_145 {dimension_numbers = #tpu.dot_dimension_numbers<[1], [0], [0], [1], [0, 0, 1, 1], [], []>} : vector<48x64xbf16>, vector<64x32xbf16>, vector<48x32xf32> -> vector<48x32xf32>
    %326 = vector.broadcast %323 : vector<1x32xf32> to vector<48x32xf32>
    %327 = arith.addf %325, %326 : vector<48x32xf32>
    %328 = arith.addf %303, %327 : vector<48x32xf32>
    %c1_146 = arith.constant 1 : index
    %c0_147 = arith.constant 0 : index
    %c0_148 = arith.constant 0 : index
    %329 = vector.load %arg16[%c1_146, %c0_147, %c0_148] : memref<2x1x32xf32, #tpu.memory_space<vmem>>, vector<1x1x32xf32>
    %330 = vector.shape_cast %329 : vector<1x1x32xf32> to vector<1x32xf32>
    %c1_149 = arith.constant 1 : index
    %c0_150 = arith.constant 0 : index
    %c0_151 = arith.constant 0 : index
    %331 = vector.load %arg17[%c1_149, %c0_150, %c0_151] : memref<2x1x32xf32, #tpu.memory_space<vmem>>, vector<1x1x32xf32>
    %332 = vector.shape_cast %331 : vector<1x1x32xf32> to vector<1x32xf32>
    %cst_152 = arith.constant dense<0.000000e+00> : vector<48xf32>
    %333 = vector.multi_reduction <add>, %328, %cst_152 [1] : vector<48x32xf32> to vector<48xf32>
    %334 = vector.shape_cast %333 : vector<48xf32> to vector<48x1xf32>
    %cst_153 = arith.constant 3.200000e+01 : f32
    %335 = vector.broadcast %cst_153 : f32 to vector<48x1xf32>
    %336 = arith.divf %334, %335 : vector<48x1xf32>
    %337 = vector.broadcast %336 : vector<48x1xf32> to vector<48x32xf32>
    %338 = arith.subf %328, %337 : vector<48x32xf32>
    %339 = arith.mulf %338, %338 : vector<48x32xf32>
    %cst_154 = arith.constant dense<0.000000e+00> : vector<48xf32>
    %340 = vector.multi_reduction <add>, %339, %cst_154 [1] : vector<48x32xf32> to vector<48xf32>
    %341 = vector.shape_cast %340 : vector<48xf32> to vector<48x1xf32>
    %cst_155 = arith.constant 3.200000e+01 : f32
    %342 = vector.broadcast %cst_155 : f32 to vector<48x1xf32>
    %343 = arith.divf %341, %342 : vector<48x1xf32>
    %cst_156 = arith.constant 9.99999974E-6 : f32
    %344 = vector.broadcast %cst_156 : f32 to vector<48x1xf32>
    %345 = arith.addf %343, %344 : vector<48x1xf32>
    %346 = math.rsqrt %345 : vector<48x1xf32>
    %347 = vector.broadcast %346 : vector<48x1xf32> to vector<48x32xf32>
    %348 = arith.mulf %338, %347 : vector<48x32xf32>
    %349 = vector.broadcast %330 : vector<1x32xf32> to vector<48x32xf32>
    %350 = arith.mulf %348, %349 : vector<48x32xf32>
    %351 = vector.broadcast %332 : vector<1x32xf32> to vector<48x32xf32>
    %352 = arith.addf %350, %351 : vector<48x32xf32>
    %353 = vector.shape_cast %352 : vector<48x32xf32> to vector<6x8x32xf32>
    %354 = vector.extract_strided_slice %353 {offsets = [0, 5, 0], sizes = [6, 3, 32], strides = [1, 1, 1]} : vector<6x8x32xf32> to vector<6x3x32xf32>
    %355 = vector.shape_cast %354 : vector<6x3x32xf32> to vector<18x32xf32>
    %c0_157 = arith.constant 0 : index
    %c0_158 = arith.constant 0 : index
    %356 = vector.load %arg18[%c0_157, %c0_158] : memref<1x32xf32, #tpu.memory_space<vmem>>, vector<1x32xf32>
    %c0_159 = arith.constant 0 : index
    %c0_160 = arith.constant 0 : index
    %357 = vector.load %arg19[%c0_159, %c0_160] : memref<1x32xf32, #tpu.memory_space<vmem>>, vector<1x32xf32>
    %cst_161 = arith.constant dense<0.000000e+00> : vector<18xf32>
    %358 = vector.multi_reduction <add>, %355, %cst_161 [1] : vector<18x32xf32> to vector<18xf32>
    %359 = vector.shape_cast %358 : vector<18xf32> to vector<18x1xf32>
    %cst_162 = arith.constant 3.200000e+01 : f32
    %360 = vector.broadcast %cst_162 : f32 to vector<18x1xf32>
    %361 = arith.divf %359, %360 : vector<18x1xf32>
    %362 = vector.broadcast %361 : vector<18x1xf32> to vector<18x32xf32>
    %363 = arith.subf %355, %362 : vector<18x32xf32>
    %364 = arith.mulf %363, %363 : vector<18x32xf32>
    %cst_163 = arith.constant dense<0.000000e+00> : vector<18xf32>
    %365 = vector.multi_reduction <add>, %364, %cst_163 [1] : vector<18x32xf32> to vector<18xf32>
    %366 = vector.shape_cast %365 : vector<18xf32> to vector<18x1xf32>
    %cst_164 = arith.constant 3.200000e+01 : f32
    %367 = vector.broadcast %cst_164 : f32 to vector<18x1xf32>
    %368 = arith.divf %366, %367 : vector<18x1xf32>
    %cst_165 = arith.constant 9.99999974E-6 : f32
    %369 = vector.broadcast %cst_165 : f32 to vector<18x1xf32>
    %370 = arith.addf %368, %369 : vector<18x1xf32>
    %371 = math.rsqrt %370 : vector<18x1xf32>
    %372 = vector.broadcast %371 : vector<18x1xf32> to vector<18x32xf32>
    %373 = arith.mulf %363, %372 : vector<18x32xf32>
    %374 = vector.broadcast %356 : vector<1x32xf32> to vector<18x32xf32>
    %375 = arith.mulf %373, %374 : vector<18x32xf32>
    %376 = vector.broadcast %357 : vector<1x32xf32> to vector<18x32xf32>
    %377 = arith.addf %375, %376 : vector<18x32xf32>
    %c0_166 = arith.constant 0 : index
    %c0_167 = arith.constant 0 : index
    %378 = vector.load %arg20[%c0_166, %c0_167] : memref<32x32xbf16, #tpu.memory_space<vmem>>, vector<32x32xbf16>
    %c0_168 = arith.constant 0 : index
    %c0_169 = arith.constant 0 : index
    %379 = vector.load %arg21[%c0_168, %c0_169] : memref<1x32xf32, #tpu.memory_space<vmem>>, vector<1x32xf32>
    %380 = arith.truncf %377 : vector<18x32xf32> to vector<18x32xbf16>
    %cst_170 = arith.constant dense<0.000000e+00> : vector<18x32xf32>
    %381 = tpu.matmul %380, %378, %cst_170 {dimension_numbers = #tpu.dot_dimension_numbers<[1], [0], [0], [1], [0, 0, 1, 1], [], []>} : vector<18x32xbf16>, vector<32x32xbf16>, vector<18x32xf32> -> vector<18x32xf32>
    %382 = vector.broadcast %379 : vector<1x32xf32> to vector<18x32xf32>
    %383 = arith.addf %381, %382 : vector<18x32xf32>
    %384 = vector.shape_cast %383 : vector<18x32xf32> to vector<6x3x32xf32>
    %c0_171 = arith.constant 0 : index
    %c0_172 = arith.constant 0 : index
    %c0_173 = arith.constant 0 : index
    %385 = vector.load %arg22[%c0_171, %c0_172, %c0_173] : memref<6x3x32xf32, #tpu.memory_space<vmem>>, vector<6x3x32xf32>
    tpu.vector_store %arg22[%c0_171, %c0_172, %c0_173], %384 {strides = array<i32>} : memref<6x3x32xf32, #tpu.memory_space<vmem>>, vector<6x3x32xf32>,
    return
  }
  func.func @transform_0(%arg0: i32) -> (i32, i32, i32) {
    %c0_i32 = arith.constant 0 : i32
    %c0_i32_0 = arith.constant 0 : i32
    %c0_i32_1 = arith.constant 0 : i32
    return %arg0, %c0_i32, %c0_i32_0 : i32, i32, i32
  }
  func.func @transform_1(%arg0: i32) -> (i32, i32, i32) {
    %c0_i32 = arith.constant 0 : i32
    %c0_i32_0 = arith.constant 0 : i32
    %c0_i32_1 = arith.constant 0 : i32
    return %arg0, %c0_i32, %c0_i32_0 : i32, i32, i32
  }
  func.func @transform_2(%arg0: i32) -> (i32, i32, i32) {
    %c0_i32 = arith.constant 0 : i32
    %c0_i32_0 = arith.constant 0 : i32
    %c0_i32_1 = arith.constant 0 : i32
    return %arg0, %c0_i32, %c0_i32_0 : i32, i32, i32
  }
  func.func @transform_3(%arg0: i32) -> (i32, i32) {
    %c0_i32 = arith.constant 0 : i32
    %c0_i32_0 = arith.constant 0 : i32
    %c0_i32_1 = arith.constant 0 : i32
    return %c0_i32, %c0_i32_0 : i32, i32
  }
  func.func @transform_4(%arg0: i32) -> (i32, i32) {
    %c0_i32 = arith.constant 0 : i32
    %c0_i32_0 = arith.constant 0 : i32
    %c0_i32_1 = arith.constant 0 : i32
    return %c0_i32, %c0_i32_0 : i32, i32
  }
  func.func @transform_5(%arg0: i32) -> (i32, i32, i32) {
    %c0_i32 = arith.constant 0 : i32
    %c0_i32_0 = arith.constant 0 : i32
    %c0_i32_1 = arith.constant 0 : i32
    %c0_i32_2 = arith.constant 0 : i32
    return %c0_i32, %c0_i32_0, %c0_i32_1 : i32, i32, i32
  }
  func.func @transform_6(%arg0: i32) -> (i32, i32, i32) {
    %c0_i32 = arith.constant 0 : i32
    %c0_i32_0 = arith.constant 0 : i32
    %c0_i32_1 = arith.constant 0 : i32
    %c0_i32_2 = arith.constant 0 : i32
    return %c0_i32, %c0_i32_0, %c0_i32_1 : i32, i32, i32
  }
  func.func @transform_7(%arg0: i32) -> (i32, i32, i32) {
    %c0_i32 = arith.constant 0 : i32
    %c0_i32_0 = arith.constant 0 : i32
    %c0_i32_1 = arith.constant 0 : i32
    %c0_i32_2 = arith.constant 0 : i32
    return %c0_i32, %c0_i32_0, %c0_i32_1 : i32, i32, i32
  }
  func.func @transform_8(%arg0: i32) -> (i32, i32, i32) {
    %c0_i32 = arith.constant 0 : i32
    %c0_i32_0 = arith.constant 0 : i32
    %c0_i32_1 = arith.constant 0 : i32
    %c0_i32_2 = arith.constant 0 : i32
    return %c0_i32, %c0_i32_0, %c0_i32_1 : i32, i32, i32
  }
  func.func @transform_9(%arg0: i32) -> (i32, i32, i32) {
    %c0_i32 = arith.constant 0 : i32
    %c0_i32_0 = arith.constant 0 : i32
    %c0_i32_1 = arith.constant 0 : i32
    %c0_i32_2 = arith.constant 0 : i32
    return %c0_i32, %c0_i32_0, %c0_i32_1 : i32, i32, i32
  }
  func.func @transform_10(%arg0: i32) -> (i32, i32, i32) {
    %c0_i32 = arith.constant 0 : i32
    %c0_i32_0 = arith.constant 0 : i32
    %c0_i32_1 = arith.constant 0 : i32
    %c0_i32_2 = arith.constant 0 : i32
    return %c0_i32, %c0_i32_0, %c0_i32_1 : i32, i32, i32
  }
  func.func @transform_11(%arg0: i32) -> (i32, i32, i32) {
    %c0_i32 = arith.constant 0 : i32
    %c0_i32_0 = arith.constant 0 : i32
    %c0_i32_1 = arith.constant 0 : i32
    %c0_i32_2 = arith.constant 0 : i32
    return %c0_i32, %c0_i32_0, %c0_i32_1 : i32, i32, i32
  }
  func.func @transform_12(%arg0: i32) -> (i32, i32, i32) {
    %c0_i32 = arith.constant 0 : i32
    %c0_i32_0 = arith.constant 0 : i32
    %c0_i32_1 = arith.constant 0 : i32
    %c0_i32_2 = arith.constant 0 : i32
    return %c0_i32, %c0_i32_0, %c0_i32_1 : i32, i32, i32
  }
  func.func @transform_13(%arg0: i32) -> (i32, i32, i32) {
    %c0_i32 = arith.constant 0 : i32
    %c0_i32_0 = arith.constant 0 : i32
    %c0_i32_1 = arith.constant 0 : i32
    %c0_i32_2 = arith.constant 0 : i32
    return %c0_i32, %c0_i32_0, %c0_i32_1 : i32, i32, i32
  }
  func.func @transform_14(%arg0: i32) -> (i32, i32, i32) {
    %c0_i32 = arith.constant 0 : i32
    %c0_i32_0 = arith.constant 0 : i32
    %c0_i32_1 = arith.constant 0 : i32
    %c0_i32_2 = arith.constant 0 : i32
    return %c0_i32, %c0_i32_0, %c0_i32_1 : i32, i32, i32
  }
  func.func @transform_15(%arg0: i32) -> (i32, i32, i32) {
    %c0_i32 = arith.constant 0 : i32
    %c0_i32_0 = arith.constant 0 : i32
    %c0_i32_1 = arith.constant 0 : i32
    %c0_i32_2 = arith.constant 0 : i32
    return %c0_i32, %c0_i32_0, %c0_i32_1 : i32, i32, i32
  }
  func.func @transform_16(%arg0: i32) -> (i32, i32, i32) {
    %c0_i32 = arith.constant 0 : i32
    %c0_i32_0 = arith.constant 0 : i32
    %c0_i32_1 = arith.constant 0 : i32
    %c0_i32_2 = arith.constant 0 : i32
    return %c0_i32, %c0_i32_0, %c0_i32_1 : i32, i32, i32
  }
  func.func @transform_17(%arg0: i32) -> (i32, i32) {
    %c0_i32 = arith.constant 0 : i32
    %c0_i32_0 = arith.constant 0 : i32
    %c0_i32_1 = arith.constant 0 : i32
    return %c0_i32, %c0_i32_0 : i32, i32
  }
  func.func @transform_18(%arg0: i32) -> (i32, i32) {
    %c0_i32 = arith.constant 0 : i32
    %c0_i32_0 = arith.constant 0 : i32
    %c0_i32_1 = arith.constant 0 : i32
    return %c0_i32, %c0_i32_0 : i32, i32
  }
  func.func @transform_19(%arg0: i32) -> (i32, i32) {
    %c0_i32 = arith.constant 0 : i32
    %c0_i32_0 = arith.constant 0 : i32
    %c0_i32_1 = arith.constant 0 : i32
    return %c0_i32, %c0_i32_0 : i32, i32
  }
  func.func @transform_20(%arg0: i32) -> (i32, i32) {
    %c0_i32 = arith.constant 0 : i32
    %c0_i32_0 = arith.constant 0 : i32
    %c0_i32_1 = arith.constant 0 : i32
    return %c0_i32, %c0_i32_0 : i32, i32
  }
  func.func @transform_21(%arg0: i32) -> (i32, i32, i32) {
    %c0_i32 = arith.constant 0 : i32
    %c0_i32_0 = arith.constant 0 : i32
    %c0_i32_1 = arith.constant 0 : i32
    return %arg0, %c0_i32, %c0_i32_0 : i32, i32, i32
  }
}

</mosaic_0001>

<llo_original>
// kernel: tsti_forward.1
$region0: #{tsti_forward.1}
  #allocation0 [shape = 'u32[]', space=smem, size = 0x4, offset = 0x4, fixed_abs, tag = 'smem constant byte address 0x4 - core index']
  #allocation1 [shape = 'u32[144,128]{1,0:T(1,128)}', space=vmem, size = 0x12000, scoped, tag = 'internal scratch']
  %s0 = inlined_call_operand.vmem [shape: f32[6,5,32], index: 0, kind: input, shape index: {}]
  %s1 = inlined_call_operand.vmem [shape: f32[2,5,32], index: 1, kind: input, shape index: {}]
  %s2 = inlined_call_operand.vmem [shape: f32[2,3,32], index: 2, kind: input, shape index: {}]
  %s3 = inlined_call_operand.vmem [shape: bf16[32,32], index: 3, kind: input, shape index: {}]
  %s4 = inlined_call_operand.vmem [shape: f32[1,32], index: 4, kind: input, shape index: {}]
  %s5 = inlined_call_operand.vmem [shape: bf16[2,32,96], index: 5, kind: input, shape index: {}]
  %s6 = inlined_call_operand.vmem [shape: f32[2,1,96], index: 6, kind: input, shape index: {}]
  %s7 = inlined_call_operand.vmem [shape: bf16[2,32,32], index: 7, kind: input, shape index: {}]
  %s8 = inlined_call_operand.vmem [shape: f32[2,1,32], index: 8, kind: input, shape index: {}]
  %s9 = inlined_call_operand.vmem [shape: f32[2,1,32], index: 9, kind: input, shape index: {}]
  %s10 = inlined_call_operand.vmem [shape: f32[2,1,32], index: 10, kind: input, shape index: {}]
  %s11 = inlined_call_operand.vmem [shape: bf16[2,32,64], index: 11, kind: input, shape index: {}]
  %s12 = inlined_call_operand.vmem [shape: f32[2,1,64], index: 12, kind: input, shape index: {}]
  %s13 = inlined_call_operand.vmem [shape: bf16[2,64,32], index: 13, kind: input, shape index: {}]
  %s14 = inlined_call_operand.vmem [shape: f32[2,1,32], index: 14, kind: input, shape index: {}]
  %s15 = inlined_call_operand.vmem [shape: f32[2,1,32], index: 15, kind: input, shape index: {}]
  %s16 = inlined_call_operand.vmem [shape: f32[2,1,32], index: 16, kind: input, shape index: {}]
  %s17 = inlined_call_operand.vmem [shape: f32[1,32], index: 17, kind: input, shape index: {}]
  %s18 = inlined_call_operand.vmem [shape: f32[1,32], index: 18, kind: input, shape index: {}]
  %s19 = inlined_call_operand.vmem [shape: bf16[32,32], index: 19, kind: input, shape index: {}]
  %s20 = inlined_call_operand.vmem [shape: f32[1,32], index: 20, kind: input, shape index: {}]
  %s21 = inlined_call_operand.vmem [shape: f32[6,3,32], index: 21, kind: output, shape index: {}]
  %s22 = sld [smem:[#allocation0]]
  $region94: #{tsti_forward.1} parent=0
    _
  %s24 = ssub.s32 1, %s22
  %s25 = scalar_select 0, %s24, %s22
  // Predicated region
  $region2: #{tsti_forward.1} parent=0 // pred_check
    _
  $region3: #{tsti_forward.1} parent=0 // pred_check_branch
    %27 = sbr.rel (0) target = $region5
  $region4: #{tsti_forward.1} parent=0 // pred_region
    _
  $region5: #{tsti_forward.1} parent=0 // pred_fallthru
    _
  // Predicated region
  $region6: #{tsti_forward.1} parent=0 // pred_check
    _
  $region7: #{tsti_forward.1} parent=0 // pred_check_branch
    %29 = sbr.rel (0) target = $region9
  $region8: #{tsti_forward.1} parent=0 // pred_region
    _
  $region9: #{tsti_forward.1} parent=0 // pred_fallthru
    _
  // Predicated region
  $region10: #{tsti_forward.1} parent=0 // pred_check
    _
  $region11: #{tsti_forward.1} parent=0 // pred_check_branch
    %31 = sbr.rel (0) target = $region13
  $region12: #{tsti_forward.1} parent=0 // pred_region
    _
  $region13: #{tsti_forward.1} parent=0 // pred_fallthru
    _
  // Predicated region
  $region14: #{tsti_forward.1} parent=0 // pred_check
    _
  $region15: #{tsti_forward.1} parent=0 // pred_check_branch
    %33 = sbr.rel (0) target = $region17
  $region16: #{tsti_forward.1} parent=0 // pred_region
    _
  $region17: #{tsti_forward.1} parent=0 // pred_fallthru
    _
  // Predicated region
  $region18: #{tsti_forward.1} parent=0 // pred_check
    _
  $region19: #{tsti_forward.1} parent=0 // pred_check_branch
    %35 = sbr.rel (0) target = $region21
  $region20: #{tsti_forward.1} parent=0 // pred_region
    _
  $region21: #{tsti_forward.1} parent=0 // pred_fallthru
    _
  // Predicated region
  $region22: #{tsti_forward.1} parent=0 // pred_check
    _
  $region23: #{tsti_forward.1} parent=0 // pred_check_branch
    %37 = sbr.rel (0) target = $region25
  $region24: #{tsti_forward.1} parent=0 // pred_region
    _
  $region25: #{tsti_forward.1} parent=0 // pred_fallthru
    _
  // Predicated region
  $region26: #{tsti_forward.1} parent=0 // pred_check
    _
  $region27: #{tsti_forward.1} parent=0 // pred_check_branch
    %39 = sbr.rel (0) target = $region29
  $region28: #{tsti_forward.1} parent=0 // pred_region
    _
  $region29: #{tsti_forward.1} parent=0 // pred_fallthru
    _
  // Predicated region
  $region30: #{tsti_forward.1} parent=0 // pred_check
    _
  $region31: #{tsti_forward.1} parent=0 // pred_check_branch
    %41 = sbr.rel (0) target = $region33
  $region32: #{tsti_forward.1} parent=0 // pred_region
    _
  $region33: #{tsti_forward.1} parent=0 // pred_fallthru
    _
  // Predicated region
  $region34: #{tsti_forward.1} parent=0 // pred_check
    _
  $region35: #{tsti_forward.1} parent=0 // pred_check_branch
    %43 = sbr.rel (0) target = $region37
  $region36: #{tsti_forward.1} parent=0 // pred_region
    _
  $region37: #{tsti_forward.1} parent=0 // pred_fallthru
    _
  // Predicated region
  $region38: #{tsti_forward.1} parent=0 // pred_check
    _
  $region39: #{tsti_forward.1} parent=0 // pred_check_branch
    %45 = sbr.rel (0) target = $region41
  $region40: #{tsti_forward.1} parent=0 // pred_region
    _
  $region41: #{tsti_forward.1} parent=0 // pred_fallthru
    _
  // Predicated region
  $region42: #{tsti_forward.1} parent=0 // pred_check
    _
  $region43: #{tsti_forward.1} parent=0 // pred_check_branch
    %47 = sbr.rel (0) target = $region45
  $region44: #{tsti_forward.1} parent=0 // pred_region
    _
  $region45: #{tsti_forward.1} parent=0 // pred_fallthru
    _
  // Predicated region
  $region46: #{tsti_forward.1} parent=0 // pred_check
    _
  $region47: #{tsti_forward.1} parent=0 // pred_check_branch
    %49 = sbr.rel (0) target = $region49
  $region48: #{tsti_forward.1} parent=0 // pred_region
    _
  $region49: #{tsti_forward.1} parent=0 // pred_fallthru
    _
  // Predicated region
  $region50: #{tsti_forward.1} parent=0 // pred_check
    _
  $region51: #{tsti_forward.1} parent=0 // pred_check_branch
    %51 = sbr.rel (0) target = $region53
  $region52: #{tsti_forward.1} parent=0 // pred_region
    _
  $region53: #{tsti_forward.1} parent=0 // pred_fallthru
    _
  // Predicated region
  $region54: #{tsti_forward.1} parent=0 // pred_check
    _
  $region55: #{tsti_forward.1} parent=0 // pred_check_branch
    %53 = sbr.rel (0) target = $region57
  $region56: #{tsti_forward.1} parent=0 // pred_region
    _
  $region57: #{tsti_forward.1} parent=0 // pred_fallthru
    _
  // Predicated region
  $region58: #{tsti_forward.1} parent=0 // pred_check
    _
  $region59: #{tsti_forward.1} parent=0 // pred_check_branch
    %55 = sbr.rel (0) target = $region61
  $region60: #{tsti_forward.1} parent=0 // pred_region
    _
  $region61: #{tsti_forward.1} parent=0 // pred_fallthru
    _
  // Predicated region
  $region62: #{tsti_forward.1} parent=0 // pred_check
    _
  $region63: #{tsti_forward.1} parent=0 // pred_check_branch
    %57 = sbr.rel (0) target = $region65
  $region64: #{tsti_forward.1} parent=0 // pred_region
    _
  $region65: #{tsti_forward.1} parent=0 // pred_fallthru
    _
  // Predicated region
  $region66: #{tsti_forward.1} parent=0 // pred_check
    _
  $region67: #{tsti_forward.1} parent=0 // pred_check_branch
    %59 = sbr.rel (0) target = $region69
  $region68: #{tsti_forward.1} parent=0 // pred_region
    _
  $region69: #{tsti_forward.1} parent=0 // pred_fallthru
    _
  // Predicated region
  $region70: #{tsti_forward.1} parent=0 // pred_check
    _
  $region71: #{tsti_forward.1} parent=0 // pred_check_branch
    %61 = sbr.rel (0) target = $region73
  $region72: #{tsti_forward.1} parent=0 // pred_region
    _
  $region73: #{tsti_forward.1} parent=0 // pred_fallthru
    _
  // Predicated region
  $region74: #{tsti_forward.1} parent=0 // pred_check
    _
  $region75: #{tsti_forward.1} parent=0 // pred_check_branch
    %63 = sbr.rel (0) target = $region77
  $region76: #{tsti_forward.1} parent=0 // pred_region
    _
  $region77: #{tsti_forward.1} parent=0 // pred_fallthru
    _
  // Predicated region
  $region78: #{tsti_forward.1} parent=0 // pred_check
    _
  $region79: #{tsti_forward.1} parent=0 // pred_check_branch
    %65 = sbr.rel (0) target = $region81
  $region80: #{tsti_forward.1} parent=0 // pred_region
    _
  $region81: #{tsti_forward.1} parent=0 // pred_fallthru
    _
  // Predicated region
  $region82: #{tsti_forward.1} parent=0 // pred_check
    _
  $region83: #{tsti_forward.1} parent=0 // pred_check_branch
    %67 = sbr.rel (0) target = $region85
  $region84: #{tsti_forward.1} parent=0 // pred_region
    _
  $region85: #{tsti_forward.1} parent=0 // pred_fallthru
    _
  %v69 = vld [vmem:[%s0] sm:$0x1f]
  %v70 = vld [vmem:[%s0 + $0x8] sm:$0x1f]
  %v71 = vld [vmem:[%s0 + $0x10] sm:$0x1f]
  %v72 = vld [vmem:[%s0 + $0x18] sm:$0x1f]
  %v73 = vld [vmem:[%s0 + $0x20] sm:$0x1f]
  %v74 = vld [vmem:[%s0 + $0x28] sm:$0x1f]
  %v81 = vcombine.high %v69, %v69
  %v83 = vunpack.c.l.s4 1966171168
  %v84 = vunpack.c.0.s8 %v83
  %v85 = vlaneseq
  %v86 = vshrl.u32 %v85, 7
  %v87 = vsub.s32 %v84, %v86
  %v88 = vrot.slane %v69, %v87
  %v90 = vunpack.c.l.s4 1966171168
  %v91 = vunpack.c.0.s8 %v90
  %v92 = vlaneseq
  %v93 = vshrl.u32 %v92, 7
  %v94 = vsub.s32 %v91, %v93
  %v95 = vrot.slane %v81, %v94
  %v96 = vcombine.high %v88, %v88
  %v98 = vunpack.c.l.s4 1966171168
  %v99 = vunpack.c.0.s8 %v98
  %v100 = vlaneseq
  %v101 = vshrl.u32 %v100, 7
  %v102 = vsub.s32 %v99, %v101
  %v103 = vrot.slane %v88, %v102
  %v105 = vunpack.c.l.s4 1966171168
  %v106 = vunpack.c.0.s8 %v105
  %v107 = vlaneseq
  %v108 = vshrl.u32 %v107, 7
  %v109 = vsub.s32 %v106, %v108
  %v110 = vrot.slane %v95, %v109
  %v112 = vunpack.c.l.s4 1966171168
  %v113 = vunpack.c.0.s8 %v112
  %v114 = vlaneseq
  %v115 = vshrl.u32 %v114, 7
  %v116 = vsub.s32 %v113, %v115
  %v117 = vrot.slane %v96, %v116
  %v118 = vcombine.high %v103, %v103
  %v119 = vcombine.high %v117, %v117
  %v120 = vcombine.high %v70, %v70
  %v122 = vunpack.c.l.s4 1966171168
  %v123 = vunpack.c.0.s8 %v122
  %v124 = vlaneseq
  %v125 = vshrl.u32 %v124, 7
  %v126 = vsub.s32 %v123, %v125
  %v127 = vrot.slane %v70, %v126
  %v129 = vunpack.c.l.s4 1966171168
  %v130 = vunpack.c.0.s8 %v129
  %v131 = vlaneseq
  %v132 = vshrl.u32 %v131, 7
  %v133 = vsub.s32 %v130, %v132
  %v134 = vrot.slane %v120, %v133
  %v135 = vcombine.high %v127, %v127
  %v137 = vunpack.c.l.s4 1966171168
  %v138 = vunpack.c.0.s8 %v137
  %v139 = vlaneseq
  %v140 = vshrl.u32 %v139, 7
  %v141 = vsub.s32 %v138, %v140
  %v142 = vrot.slane %v127, %v141
  %v144 = vunpack.c.l.s4 1966171168
  %v145 = vunpack.c.0.s8 %v144
  %v146 = vlaneseq
  %v147 = vshrl.u32 %v146, 7
  %v148 = vsub.s32 %v145, %v147
  %v149 = vrot.slane %v134, %v148
  %v151 = vunpack.c.l.s4 1966171168
  %v152 = vunpack.c.0.s8 %v151
  %v153 = vlaneseq
  %v154 = vshrl.u32 %v153, 7
  %v155 = vsub.s32 %v152, %v154
  %v156 = vrot.slane %v135, %v155
  %v157 = vcombine.high %v142, %v142
  %v158 = vcombine.high %v156, %v156
  %v159 = vcombine.high %v71, %v71
  %v161 = vunpack.c.l.s4 1966171168
  %v162 = vunpack.c.0.s8 %v161
  %v163 = vlaneseq
  %v164 = vshrl.u32 %v163, 7
  %v165 = vsub.s32 %v162, %v164
  %v166 = vrot.slane %v71, %v165
  %v168 = vunpack.c.l.s4 1966171168
  %v169 = vunpack.c.0.s8 %v168
  %v170 = vlaneseq
  %v171 = vshrl.u32 %v170, 7
  %v172 = vsub.s32 %v169, %v171
  %v173 = vrot.slane %v159, %v172
  %v174 = vcombine.high %v166, %v166
  %v176 = vunpack.c.l.s4 1966171168
  %v177 = vunpack.c.0.s8 %v176
  %v178 = vlaneseq
  %v179 = vshrl.u32 %v178, 7
  %v180 = vsub.s32 %v177, %v179
  %v181 = vrot.slane %v166, %v180
  %v183 = vunpack.c.l.s4 1966171168
  %v184 = vunpack.c.0.s8 %v183
  %v185 = vlaneseq
  %v186 = vshrl.u32 %v185, 7
  %v187 = vsub.s32 %v184, %v186
  %v188 = vrot.slane %v173, %v187
  %v190 = vunpack.c.l.s4 1966171168
  %v191 = vunpack.c.0.s8 %v190
  %v192 = vlaneseq
  %v193 = vshrl.u32 %v192, 7
  %v194 = vsub.s32 %v191, %v193
  %v195 = vrot.slane %v174, %v194
  %v196 = vcombine.high %v181, %v181
  %v197 = vcombine.high %v195, %v195
  %v198 = vcombine.high %v72, %v72
  %v200 = vunpack.c.l.s4 1966171168
  %v201 = vunpack.c.0.s8 %v200
  %v202 = vlaneseq
  %v203 = vshrl.u32 %v202, 7
  %v204 = vsub.s32 %v201, %v203
  %v205 = vrot.slane %v72, %v204
  %v207 = vunpack.c.l.s4 1966171168
  %v208 = vunpack.c.0.s8 %v207
  %v209 = vlaneseq
  %v210 = vshrl.u32 %v209, 7
  %v211 = vsub.s32 %v208, %v210
  %v212 = vrot.slane %v198, %v211
  %v213 = vcombine.high %v205, %v205
  %v215 = vunpack.c.l.s4 1966171168
  %v216 = vunpack.c.0.s8 %v215
  %v217 = vlaneseq
  %v218 = vshrl.u32 %v217, 7
  %v219 = vsub.s32 %v216, %v218
  %v220 = vrot.slane %v205, %v219
  %v222 = vunpack.c.l.s4 1966171168
  %v223 = vunpack.c.0.s8 %v222
  %v224 = vlaneseq
  %v225 = vshrl.u32 %v224, 7
  %v226 = vsub.s32 %v223, %v225
  %v227 = vrot.slane %v212, %v226
  %v229 = vunpack.c.l.s4 1966171168
  %v230 = vunpack.c.0.s8 %v229
  %v231 = vlaneseq
  %v232 = vshrl.u32 %v231, 7
  %v233 = vsub.s32 %v230, %v232
  %v234 = vrot.slane %v213, %v233
  %v235 = vcombine.high %v220, %v220
  %v236 = vcombine.high %v234, %v234
  %v237 = vcombine.high %v73, %v73
  %v239 = vunpack.c.l.s4 1966171168
  %v240 = vunpack.c.0.s8 %v239
  %v241 = vlaneseq
  %v242 = vshrl.u32 %v241, 7
  %v243 = vsub.s32 %v240, %v242
  %v244 = vrot.slane %v73, %v243
  %v246 = vunpack.c.l.s4 1966171168
  %v247 = vunpack.c.0.s8 %v246
  %v248 = vlaneseq
  %v249 = vshrl.u32 %v248, 7
  %v250 = vsub.s32 %v247, %v249
  %v251 = vrot.slane %v237, %v250
  %v252 = vcombine.high %v244, %v244
  %v254 = vunpack.c.l.s4 1966171168
  %v255 = vunpack.c.0.s8 %v254
  %v256 = vlaneseq
  %v257 = vshrl.u32 %v256, 7
  %v258 = vsub.s32 %v255, %v257
  %v259 = vrot.slane %v244, %v258
  %v261 = vunpack.c.l.s4 1966171168
  %v262 = vunpack.c.0.s8 %v261
  %v263 = vlaneseq
  %v264 = vshrl.u32 %v263, 7
  %v265 = vsub.s32 %v262, %v264
  %v266 = vrot.slane %v251, %v265
  %v268 = vunpack.c.l.s4 1966171168
  %v269 = vunpack.c.0.s8 %v268
  %v270 = vlaneseq
  %v271 = vshrl.u32 %v270, 7
  %v272 = vsub.s32 %v269, %v271
  %v273 = vrot.slane %v252, %v272
  %v274 = vcombine.high %v259, %v259
  %v275 = vcombine.high %v273, %v273
  %v276 = vcombine.high %v74, %v74
  %v278 = vunpack.c.l.s4 1966171168
  %v279 = vunpack.c.0.s8 %v278
  %v280 = vlaneseq
  %v281 = vshrl.u32 %v280, 7
  %v282 = vsub.s32 %v279, %v281
  %v283 = vrot.slane %v74, %v282
  %v285 = vunpack.c.l.s4 1966171168
  %v286 = vunpack.c.0.s8 %v285
  %v287 = vlaneseq
  %v288 = vshrl.u32 %v287, 7
  %v289 = vsub.s32 %v286, %v288
  %v290 = vrot.slane %v276, %v289
  %v291 = vcombine.high %v283, %v283
  %v293 = vunpack.c.l.s4 1966171168
  %v294 = vunpack.c.0.s8 %v293
  %v295 = vlaneseq
  %v296 = vshrl.u32 %v295, 7
  %v297 = vsub.s32 %v294, %v296
  %v298 = vrot.slane %v283, %v297
  %v300 = vunpack.c.l.s4 1966171168
  %v301 = vunpack.c.0.s8 %v300
  %v302 = vlaneseq
  %v303 = vshrl.u32 %v302, 7
  %v304 = vsub.s32 %v301, %v303
  %v305 = vrot.slane %v290, %v304
  %v307 = vunpack.c.l.s4 1966171168
  %v308 = vunpack.c.0.s8 %v307
  %v309 = vlaneseq
  %v310 = vshrl.u32 %v309, 7
  %v311 = vsub.s32 %v308, %v310
  %v312 = vrot.slane %v291, %v311
  %v313 = vcombine.high %v298, %v298
  %v314 = vcombine.high %v312, %v312
  %v315 = vld [vmem:[%s3] sm:$0xf]
  %v316 = vld [vmem:[%s3 + $0x4] sm:$0xf]
  %v317 = vld [vmem:[%s3 + $0x8] sm:$0xf]
  %v318 = vld [vmem:[%s3 + $0xc] sm:$0xf]
  %v319 = vld [vmem:[%s4] sm:$0x1]
  %v320 = vcombine.low %v103, %v117
  %v321 = vcombine.low %v118, %v119
  %v322 = vcombine.low %v110, %v142
  %v323 = vcombine.low %v156, %v157
  %v325 = vunpack.c.l.s4 1966171168
  %v326 = vunpack.c.0.s8 %v325
  %v327 = vlaneseq
  %v328 = vshrl.u32 %v327, 7
  %v329 = vsub.s32 %v326, %v328
  %v330 = vrot.slane %v320, %v329
  %v332 = vunpack.c.l.s4 1966171168
  %v333 = vunpack.c.0.s8 %v332
  %v334 = vlaneseq
  %v335 = vshrl.u32 %v334, 7
  %v336 = vsub.s32 %v333, %v335
  %v337 = vrot.slane %v321, %v336
  %v339 = vunpack.c.l.s4 1966171168
  %v340 = vunpack.c.0.s8 %v339
  %v341 = vlaneseq
  %v342 = vshrl.u32 %v341, 7
  %v343 = vsub.s32 %v340, %v342
  %v344 = vrot.slane %v322, %v343
  %v346 = vunpack.c.l.s4 1966171168
  %v347 = vunpack.c.0.s8 %v346
  %v348 = vlaneseq
  %v349 = vshrl.u32 %v348, 7
  %v350 = vsub.s32 %v347, %v349
  %v351 = vrot.slane %v323, %v350
  %v352 = vcombine.low %v330, %v337
  %v353 = vcombine.low %v344, %v351
  %v355 = vunpack.c.l.s4 1966171168
  %v356 = vunpack.c.0.s8 %v355
  %v357 = vlaneseq
  %v358 = vshrl.u32 %v357, 7
  %v359 = vsub.s32 %v356, %v358
  %v360 = vrot.slane %v352, %v359
  %v362 = vunpack.c.l.s4 1966171168
  %v363 = vunpack.c.0.s8 %v362
  %v364 = vlaneseq
  %v365 = vshrl.u32 %v364, 7
  %v366 = vsub.s32 %v363, %v365
  %v367 = vrot.slane %v353, %v366
  %v368 = vcombine.low %v360, %v367
  %v369 = vcombine.low %v158, %v149
  %v370 = vcombine.low %v181, %v195
  %v371 = vcombine.low %v196, %v197
  %v372 = vcombine.low %v188, %v220
  %v374 = vunpack.c.l.s4 1966171168
  %v375 = vunpack.c.0.s8 %v374
  %v376 = vlaneseq
  %v377 = vshrl.u32 %v376, 7
  %v378 = vsub.s32 %v375, %v377
  %v379 = vrot.slane %v369, %v378
  %v381 = vunpack.c.l.s4 1966171168
  %v382 = vunpack.c.0.s8 %v381
  %v383 = vlaneseq
  %v384 = vshrl.u32 %v383, 7
  %v385 = vsub.s32 %v382, %v384
  %v386 = vrot.slane %v370, %v385
  %v388 = vunpack.c.l.s4 1966171168
  %v389 = vunpack.c.0.s8 %v388
  %v390 = vlaneseq
  %v391 = vshrl.u32 %v390, 7
  %v392 = vsub.s32 %v389, %v391
  %v393 = vrot.slane %v371, %v392
  %v395 = vunpack.c.l.s4 1966171168
  %v396 = vunpack.c.0.s8 %v395
  %v397 = vlaneseq
  %v398 = vshrl.u32 %v397, 7
  %v399 = vsub.s32 %v396, %v398
  %v400 = vrot.slane %v372, %v399
  %v401 = vcombine.low %v379, %v386
  %v402 = vcombine.low %v393, %v400
  %v404 = vunpack.c.l.s4 1966171168
  %v405 = vunpack.c.0.s8 %v404
  %v406 = vlaneseq
  %v407 = vshrl.u32 %v406, 7
  %v408 = vsub.s32 %v405, %v407
  %v409 = vrot.slane %v401, %v408
  %v411 = vunpack.c.l.s4 1966171168
  %v412 = vunpack.c.0.s8 %v411
  %v413 = vlaneseq
  %v414 = vshrl.u32 %v413, 7
  %v415 = vsub.s32 %v412, %v414
  %v416 = vrot.slane %v402, %v415
  %v417 = vcombine.low %v409, %v416
  %v418 = vcombine.low %v234, %v235
  %v419 = vcombine.low %v236, %v227
  %v420 = vcombine.low %v259, %v273
  %v421 = vcombine.low %v274, %v275
  %v423 = vunpack.c.l.s4 1966171168
  %v424 = vunpack.c.0.s8 %v423
  %v425 = vlaneseq
  %v426 = vshrl.u32 %v425, 7
  %v427 = vsub.s32 %v424, %v426
  %v428 = vrot.slane %v418, %v427
  %v430 = vunpack.c.l.s4 1966171168
  %v431 = vunpack.c.0.s8 %v430
  %v432 = vlaneseq
  %v433 = vshrl.u32 %v432, 7
  %v434 = vsub.s32 %v431, %v433
  %v435 = vrot.slane %v419, %v434
  %v437 = vunpack.c.l.s4 1966171168
  %v438 = vunpack.c.0.s8 %v437
  %v439 = vlaneseq
  %v440 = vshrl.u32 %v439, 7
  %v441 = vsub.s32 %v438, %v440
  %v442 = vrot.slane %v420, %v441
  %v444 = vunpack.c.l.s4 1966171168
  %v445 = vunpack.c.0.s8 %v444
  %v446 = vlaneseq
  %v447 = vshrl.u32 %v446, 7
  %v448 = vsub.s32 %v445, %v447
  %v449 = vrot.slane %v421, %v448
  %v450 = vcombine.low %v428, %v435
  %v451 = vcombine.low %v442, %v449
  %v453 = vunpack.c.l.s4 1966171168
  %v454 = vunpack.c.0.s8 %v453
  %v455 = vlaneseq
  %v456 = vshrl.u32 %v455, 7
  %v457 = vsub.s32 %v454, %v456
  %v458 = vrot.slane %v450, %v457
  %v460 = vunpack.c.l.s4 1966171168
  %v461 = vunpack.c.0.s8 %v460
  %v462 = vlaneseq
  %v463 = vshrl.u32 %v462, 7
  %v464 = vsub.s32 %v461, %v463
  %v465 = vrot.slane %v451, %v464
  %v466 = vcombine.low %v458, %v465
  %v467 = vcombine.low %v266, %v298
  %v468 = vcombine.low %v312, %v313
  %v469 = vcombine.low %v314, %v305
  %v471 = vunpack.c.l.s4 1966171168
  %v472 = vunpack.c.0.s8 %v471
  %v473 = vlaneseq
  %v474 = vshrl.u32 %v473, 7
  %v475 = vsub.s32 %v472, %v474
  %v476 = vrot.slane %v467, %v475
  %v478 = vunpack.c.l.s4 1966171168
  %v479 = vunpack.c.0.s8 %v478
  %v480 = vlaneseq
  %v481 = vshrl.u32 %v480, 7
  %v482 = vsub.s32 %v479, %v481
  %v483 = vrot.slane %v468, %v482
  %v485 = vunpack.c.l.s4 1966171168
  %v486 = vunpack.c.0.s8 %v485
  %v487 = vlaneseq
  %v488 = vshrl.u32 %v487, 7
  %v489 = vsub.s32 %v486, %v488
  %v490 = vrot.slane %v469, %v489
  %v491 = vcombine.low %v476, %v483
  %v493 = vunpack.c.l.s4 1966171168
  %v494 = vunpack.c.0.s8 %v493
  %v495 = vlaneseq
  %v496 = vshrl.u32 %v495, 7
  %v497 = vsub.s32 %v494, %v496
  %v498 = vrot.slane %v491, %v497
  %v500 = vunpack.c.l.s4 1966171168
  %v501 = vunpack.c.0.s8 %v500
  %v502 = vlaneseq
  %v503 = vshrl.u32 %v502, 7
  %v504 = vsub.s32 %v501, %v503
  %v505 = vrot.slane %v490, %v504
  %v506 = vcombine.low %v498, %v505
  %v511 = vpack.c.bf16 %v417, %v368
  %v512 = vpack.c.bf16 %v506, %v466
  %v514 = vlaneseq
  %v515 = vshrl.u32 %v514, 7
  %v516 = vsub.s32 0, %v515
  %v517 = vrot.slane %v319, %v516
  %v523 = vunpack.c.l.b16 %v315
  %v524 = vunpack.c.l.b16 %v316
  %v525 = vunpack.c.l.b16 %v317
  %v526 = vunpack.c.l.b16 %v318
  %v527 = vpack.c.b16 %v524, %v523
  %v528 = vpack.c.b16 %v526, %v525
  %vm531 = vcmask 261120
  %v533 = vsel %vm531, %v511, 0
  %v536 = vsel %vm531, %v512, 0
  %538 = vmatprep.subr.bf16.mxu0 0
  %539 = vmatpush1.bf16.msra.mxu0 0
  %540 = vmatprep.subr.bf16.mxu0 0
  %541 = vmatpush1.bf16.msra.mxu0 0
  %542 = vmatprep.subr.bf16.mxu0 0
  %543 = vmatpush1.bf16.msra.mxu0 0
  %544 = vmatprep.subr.bf16.mxu0 0
  %545 = vmatpush1.bf16.msra.mxu0 0
  %546 = vmatprep.subr.bf16.mxu0 0
  %547 = vmatpush1.bf16.msra.mxu0 0
  %548 = vmatprep.subr.bf16.mxu0 0
  %549 = vmatpush1.bf16.msra.mxu0 0
  %550 = vmatprep.subr.bf16.mxu0 0
  %551 = vmatpush1.bf16.msra.mxu0 %v528
  %552 = vmatprep.subr.bf16.mxu0 0
  %553 = vmatpush1.bf16.msra.mxu0 %v527
  %554 = vmatprep.subr.bf16.mxu0 0
  %555 = vmatpush2.bf16.msra.mxu0 0
  %556 = vmatprep.subr.bf16.mxu0 0
  %557 = vmatpush2.bf16.msra.mxu0 0
  %558 = vmatprep.subr.bf16.mxu0 0
  %559 = vmatpush2.bf16.msra.mxu0 0
  %560 = vmatprep.subr.bf16.mxu0 0
  %561 = vmatpush2.bf16.msra.mxu0 0
  %562 = vmatprep.subr.bf16.mxu0 0
  %563 = vmatpush2.bf16.msra.mxu0 0
  %564 = vmatprep.subr.bf16.mxu0 0
  %565 = vmatpush2.bf16.msra.mxu0 0
  %566 = vmatprep.subr.bf16.mxu0 0
  %567 = vmatpush2.bf16.msra.mxu0 0
  %568 = vmatprep.subr.bf16.mxu0 0
  %569 = vmatpush2.bf16.msra.mxu0 0
  %570 = vmatprep.mubr.bf16.mxu0 0
  %571 = vmatmul.mubr.bf16.gmra.mxu0 %v533
  %v572 = vpop.f32.mrf.mxu0
  %v573 = vadd.f32 %v517, %v572
  %v574 = vpop.f32.mrf.mxu0
  %v575 = vpop.f32.mrf.mxu0
  %v576 = vadd.f32 %v517, %v575
  %v577 = vpop.f32.mrf.mxu0
  %578 = vmatprep.mubr.bf16.mxu0 0
  %579 = vmatmul.mubr.bf16.gmra.mxu0 %v536
  %v580 = vpop.f32.mrf.mxu0
  %v581 = vadd.f32 %v517, %v580
  %v582 = vpop.f32.mrf.mxu0
  %v583 = vpop.f32.mrf.mxu0
  %v584 = vadd.f32 %v517, %v583
  %v585 = vpop.f32.mrf.mxu0
  %586 = vdwg.mxu0
  %v591 = vcombine.high %v573, %v573
  %v593 = vunpack.c.l.s4 1966171168
  %v594 = vunpack.c.0.s8 %v593
  %v595 = vlaneseq
  %v596 = vshrl.u32 %v595, 7
  %v597 = vsub.s32 %v594, %v596
  %v598 = vrot.slane %v573, %v597
  %v600 = vunpack.c.l.s4 1966171168
  %v601 = vunpack.c.0.s8 %v600
  %v602 = vlaneseq
  %v603 = vshrl.u32 %v602, 7
  %v604 = vsub.s32 %v601, %v603
  %v605 = vrot.slane %v591, %v604
  %v606 = vcombine.high %v598, %v598
  %v607 = vcombine.high %v605, %v605
  %v609 = vunpack.c.l.s4 1966171168
  %v610 = vunpack.c.0.s8 %v609
  %v611 = vlaneseq
  %v612 = vshrl.u32 %v611, 7
  %v613 = vsub.s32 %v610, %v612
  %v614 = vrot.slane %v598, %v613
  %v616 = vunpack.c.l.s4 1966171168
  %v617 = vunpack.c.0.s8 %v616
  %v618 = vlaneseq
  %v619 = vshrl.u32 %v618, 7
  %v620 = vsub.s32 %v617, %v619
  %v621 = vrot.slane %v605, %v620
  %v623 = vunpack.c.l.s4 1966171168
  %v624 = vunpack.c.0.s8 %v623
  %v625 = vlaneseq
  %v626 = vshrl.u32 %v625, 7
  %v627 = vsub.s32 %v624, %v626
  %v628 = vrot.slane %v606, %v627
  %v630 = vunpack.c.l.s4 1966171168
  %v631 = vunpack.c.0.s8 %v630
  %v632 = vlaneseq
  %v633 = vshrl.u32 %v632, 7
  %v634 = vsub.s32 %v631, %v633
  %v635 = vrot.slane %v607, %v634
  %v636 = vcombine.high %v614, %v614
  %v637 = vcombine.high %v621, %v621
  %v638 = vcombine.high %v628, %v628
  %v639 = vcombine.high %v635, %v635
  %v640 = vcombine.high %v576, %v576
  %v642 = vunpack.c.l.s4 1966171168
  %v643 = vunpack.c.0.s8 %v642
  %v644 = vlaneseq
  %v645 = vshrl.u32 %v644, 7
  %v646 = vsub.s32 %v643, %v645
  %v647 = vrot.slane %v576, %v646
  %v649 = vunpack.c.l.s4 1966171168
  %v650 = vunpack.c.0.s8 %v649
  %v651 = vlaneseq
  %v652 = vshrl.u32 %v651, 7
  %v653 = vsub.s32 %v650, %v652
  %v654 = vrot.slane %v640, %v653
  %v655 = vcombine.high %v647, %v647
  %v656 = vcombine.high %v654, %v654
  %v658 = vunpack.c.l.s4 1966171168
  %v659 = vunpack.c.0.s8 %v658
  %v660 = vlaneseq
  %v661 = vshrl.u32 %v660, 7
  %v662 = vsub.s32 %v659, %v661
  %v663 = vrot.slane %v647, %v662
  %v665 = vunpack.c.l.s4 1966171168
  %v666 = vunpack.c.0.s8 %v665
  %v667 = vlaneseq
  %v668 = vshrl.u32 %v667, 7
  %v669 = vsub.s32 %v666, %v668
  %v670 = vrot.slane %v654, %v669
  %v672 = vunpack.c.l.s4 1966171168
  %v673 = vunpack.c.0.s8 %v672
  %v674 = vlaneseq
  %v675 = vshrl.u32 %v674, 7
  %v676 = vsub.s32 %v673, %v675
  %v677 = vrot.slane %v655, %v676
  %v679 = vunpack.c.l.s4 1966171168
  %v680 = vunpack.c.0.s8 %v679
  %v681 = vlaneseq
  %v682 = vshrl.u32 %v681, 7
  %v683 = vsub.s32 %v680, %v682
  %v684 = vrot.slane %v656, %v683
  %v685 = vcombine.high %v663, %v663
  %v686 = vcombine.high %v670, %v670
  %v687 = vcombine.high %v677, %v677
  %v688 = vcombine.high %v684, %v684
  %v689 = vcombine.high %v581, %v581
  %v691 = vunpack.c.l.s4 1966171168
  %v692 = vunpack.c.0.s8 %v691
  %v693 = vlaneseq
  %v694 = vshrl.u32 %v693, 7
  %v695 = vsub.s32 %v692, %v694
  %v696 = vrot.slane %v581, %v695
  %v698 = vunpack.c.l.s4 1966171168
  %v699 = vunpack.c.0.s8 %v698
  %v700 = vlaneseq
  %v701 = vshrl.u32 %v700, 7
  %v702 = vsub.s32 %v699, %v701
  %v703 = vrot.slane %v689, %v702
  %v704 = vcombine.high %v696, %v696
  %v705 = vcombine.high %v703, %v703
  %v707 = vunpack.c.l.s4 1966171168
  %v708 = vunpack.c.0.s8 %v707
  %v709 = vlaneseq
  %v710 = vshrl.u32 %v709, 7
  %v711 = vsub.s32 %v708, %v710
  %v712 = vrot.slane %v696, %v711
  %v714 = vunpack.c.l.s4 1966171168
  %v715 = vunpack.c.0.s8 %v714
  %v716 = vlaneseq
  %v717 = vshrl.u32 %v716, 7
  %v718 = vsub.s32 %v715, %v717
  %v719 = vrot.slane %v703, %v718
  %v721 = vunpack.c.l.s4 1966171168
  %v722 = vunpack.c.0.s8 %v721
  %v723 = vlaneseq
  %v724 = vshrl.u32 %v723, 7
  %v725 = vsub.s32 %v722, %v724
  %v726 = vrot.slane %v704, %v725
  %v728 = vunpack.c.l.s4 1966171168
  %v729 = vunpack.c.0.s8 %v728
  %v730 = vlaneseq
  %v731 = vshrl.u32 %v730, 7
  %v732 = vsub.s32 %v729, %v731
  %v733 = vrot.slane %v705, %v732
  %v734 = vcombine.high %v712, %v712
  %v735 = vcombine.high %v719, %v719
  %v736 = vcombine.high %v726, %v726
  %v737 = vcombine.high %v733, %v733
  %v738 = vcombine.high %v584, %v584
  %v740 = vunpack.c.l.s4 1966171168
  %v741 = vunpack.c.0.s8 %v740
  %v742 = vlaneseq
  %v743 = vshrl.u32 %v742, 7
  %v744 = vsub.s32 %v741, %v743
  %v745 = vrot.slane %v584, %v744
  %v747 = vunpack.c.l.s4 1966171168
  %v748 = vunpack.c.0.s8 %v747
  %v749 = vlaneseq
  %v750 = vshrl.u32 %v749, 7
  %v751 = vsub.s32 %v748, %v750
  %v752 = vrot.slane %v738, %v751
  %v753 = vcombine.high %v745, %v745
  %v754 = vcombine.high %v752, %v752
  %v756 = vunpack.c.l.s4 1966171168
  %v757 = vunpack.c.0.s8 %v756
  %v758 = vlaneseq
  %v759 = vshrl.u32 %v758, 7
  %v760 = vsub.s32 %v757, %v759
  %v761 = vrot.slane %v745, %v760
  %v763 = vunpack.c.l.s4 1966171168
  %v764 = vunpack.c.0.s8 %v763
  %v765 = vlaneseq
  %v766 = vshrl.u32 %v765, 7
  %v767 = vsub.s32 %v764, %v766
  %v768 = vrot.slane %v752, %v767
  %v770 = vunpack.c.l.s4 1966171168
  %v771 = vunpack.c.0.s8 %v770
  %v772 = vlaneseq
  %v773 = vshrl.u32 %v772, 7
  %v774 = vsub.s32 %v771, %v773
  %v775 = vrot.slane %v753, %v774
  %v777 = vunpack.c.l.s4 1966171168
  %v778 = vunpack.c.0.s8 %v777
  %v779 = vlaneseq
  %v780 = vshrl.u32 %v779, 7
  %v781 = vsub.s32 %v778, %v780
  %v782 = vrot.slane %v754, %v781
  %v783 = vcombine.high %v761, %v761
  %v784 = vcombine.high %v775, %v775
  %v815 = vld [vmem:[%s1] sm:$0x1f]
  %v816 = vld [vmem:[%s1 + $0x8] sm:$0x1f]
  %v819 = vcombine.high %v815, %v815
  %v821 = vunpack.c.l.s4 1966171168
  %v822 = vunpack.c.0.s8 %v821
  %v823 = vlaneseq
  %v824 = vshrl.u32 %v823, 7
  %v825 = vsub.s32 %v822, %v824
  %v826 = vrot.slane %v815, %v825
  %v828 = vunpack.c.l.s4 1966171168
  %v829 = vunpack.c.0.s8 %v828
  %v830 = vlaneseq
  %v831 = vshrl.u32 %v830, 7
  %v832 = vsub.s32 %v829, %v831
  %v833 = vrot.slane %v819, %v832
  %v834 = vcombine.high %v826, %v826
  %v836 = vunpack.c.l.s4 1966171168
  %v837 = vunpack.c.0.s8 %v836
  %v838 = vlaneseq
  %v839 = vshrl.u32 %v838, 7
  %v840 = vsub.s32 %v837, %v839
  %v841 = vrot.slane %v826, %v840
  %v843 = vunpack.c.l.s4 1966171168
  %v844 = vunpack.c.0.s8 %v843
  %v845 = vlaneseq
  %v846 = vshrl.u32 %v845, 7
  %v847 = vsub.s32 %v844, %v846
  %v848 = vrot.slane %v833, %v847
  %v850 = vunpack.c.l.s4 1966171168
  %v851 = vunpack.c.0.s8 %v850
  %v852 = vlaneseq
  %v853 = vshrl.u32 %v852, 7
  %v854 = vsub.s32 %v851, %v853
  %v855 = vrot.slane %v834, %v854
  %v856 = vcombine.high %v841, %v841
  %v857 = vcombine.high %v855, %v855
  %v858 = vcombine.high %v816, %v816
  %v860 = vunpack.c.l.s4 1966171168
  %v861 = vunpack.c.0.s8 %v860
  %v862 = vlaneseq
  %v863 = vshrl.u32 %v862, 7
  %v864 = vsub.s32 %v861, %v863
  %v865 = vrot.slane %v816, %v864
  %v867 = vunpack.c.l.s4 1966171168
  %v868 = vunpack.c.0.s8 %v867
  %v869 = vlaneseq
  %v870 = vshrl.u32 %v869, 7
  %v871 = vsub.s32 %v868, %v870
  %v872 = vrot.slane %v858, %v871
  %v873 = vcombine.high %v865, %v865
  %v875 = vunpack.c.l.s4 1966171168
  %v876 = vunpack.c.0.s8 %v875
  %v877 = vlaneseq
  %v878 = vshrl.u32 %v877, 7
  %v879 = vsub.s32 %v876, %v878
  %v880 = vrot.slane %v865, %v879
  %v882 = vunpack.c.l.s4 1966171168
  %v883 = vunpack.c.0.s8 %v882
  %v884 = vlaneseq
  %v885 = vshrl.u32 %v884, 7
  %v886 = vsub.s32 %v883, %v885
  %v887 = vrot.slane %v872, %v886
  %v889 = vunpack.c.l.s4 1966171168
  %v890 = vunpack.c.0.s8 %v889
  %v891 = vlaneseq
  %v892 = vshrl.u32 %v891, 7
  %v893 = vsub.s32 %v890, %v892
  %v894 = vrot.slane %v873, %v893
  %v895 = vcombine.high %v880, %v880
  %v896 = vcombine.high %v894, %v894
  %v907 = vadd.f32 %v614, %v841
  %v908 = vadd.f32 %v628, %v855
  %v909 = vadd.f32 %v636, %v856
  %v910 = vadd.f32 %v638, %v857
  %v911 = vadd.f32 %v621, %v848
  %v912 = vadd.f32 %v635, %v841
  %v913 = vadd.f32 %v637, %v855
  %v914 = vadd.f32 %v639, %v856
  %v915 = vadd.f32 %v663, %v857
  %v916 = vadd.f32 %v677, %v848
  %v917 = vadd.f32 %v685, %v841
  %v918 = vadd.f32 %v687, %v855
  %v919 = vadd.f32 %v670, %v856
  %v920 = vadd.f32 %v684, %v857
  %v921 = vadd.f32 %v686, %v848
  %v922 = vadd.f32 %v688, %v880
  %v923 = vadd.f32 %v712, %v894
  %v924 = vadd.f32 %v726, %v895
  %v925 = vadd.f32 %v734, %v896
  %v926 = vadd.f32 %v736, %v887
  %v927 = vadd.f32 %v719, %v880
  %v928 = vadd.f32 %v733, %v894
  %v929 = vadd.f32 %v735, %v895
  %v930 = vadd.f32 %v737, %v896
  %v931 = vadd.f32 %v761, %v887
  %v932 = vadd.f32 %v775, %v880
  %v933 = vadd.f32 %v783, %v894
  %v934 = vadd.f32 %v784, %v895
  %v935 = vadd.f32 %v768, %v896
  %v936 = vadd.f32 %v782, %v887
  %v937 = vld [vmem:[%s2] sm:$0x7]
  %v938 = vld [vmem:[%s2 + $0x4] sm:$0x7]
  %v969 = vcombine.low %v907, %v908
  %v970 = vcombine.low %v909, %v910
  %v972 = vunpack.c.l.s4 1966171168
  %v973 = vunpack.c.0.s8 %v972
  %v974 = vlaneseq
  %v975 = vshrl.u32 %v974, 7
  %v976 = vsub.s32 %v973, %v975
  %v977 = vrot.slane %v969, %v976
  %v979 = vunpack.c.l.s4 1966171168
  %v980 = vunpack.c.0.s8 %v979
  %v981 = vlaneseq
  %v982 = vshrl.u32 %v981, 7
  %v983 = vsub.s32 %v980, %v982
  %v984 = vrot.slane %v970, %v983
  %v986 = vunpack.c.l.s4 1966171168
  %v987 = vunpack.c.0.s8 %v986
  %v988 = vlaneseq
  %v989 = vshrl.u32 %v988, 7
  %v990 = vsub.s32 %v987, %v989
  %v991 = vrot.slane %v911, %v990
  %v992 = vcombine.low %v977, %v984
  %v994 = vunpack.c.l.s4 1966171168
  %v995 = vunpack.c.0.s8 %v994
  %v996 = vlaneseq
  %v997 = vshrl.u32 %v996, 7
  %v998 = vsub.s32 %v995, %v997
  %v999 = vrot.slane %v992, %v998
  %v1001 = vunpack.c.l.s4 1966171168
  %v1002 = vunpack.c.0.s8 %v1001
  %v1003 = vlaneseq
  %v1004 = vshrl.u32 %v1003, 7
  %v1005 = vsub.s32 %v1002, %v1004
  %v1006 = vrot.slane %v991, %v1005
  %v1007 = vcombine.low %v999, %v1006
  %v1008 = vcombine.low %v912, %v913
  %v1009 = vcombine.low %v914, %v915
  %v1011 = vunpack.c.l.s4 1966171168
  %v1012 = vunpack.c.0.s8 %v1011
  %v1013 = vlaneseq
  %v1014 = vshrl.u32 %v1013, 7
  %v1015 = vsub.s32 %v1012, %v1014
  %v1016 = vrot.slane %v1008, %v1015
  %v1018 = vunpack.c.l.s4 1966171168
  %v1019 = vunpack.c.0.s8 %v1018
  %v1020 = vlaneseq
  %v1021 = vshrl.u32 %v1020, 7
  %v1022 = vsub.s32 %v1019, %v1021
  %v1023 = vrot.slane %v1009, %v1022
  %v1025 = vunpack.c.l.s4 1966171168
  %v1026 = vunpack.c.0.s8 %v1025
  %v1027 = vlaneseq
  %v1028 = vshrl.u32 %v1027, 7
  %v1029 = vsub.s32 %v1026, %v1028
  %v1030 = vrot.slane %v916, %v1029
  %v1031 = vcombine.low %v1016, %v1023
  %v1033 = vunpack.c.l.s4 1966171168
  %v1034 = vunpack.c.0.s8 %v1033
  %v1035 = vlaneseq
  %v1036 = vshrl.u32 %v1035, 7
  %v1037 = vsub.s32 %v1034, %v1036
  %v1038 = vrot.slane %v1031, %v1037
  %v1040 = vunpack.c.l.s4 1966171168
  %v1041 = vunpack.c.0.s8 %v1040
  %v1042 = vlaneseq
  %v1043 = vshrl.u32 %v1042, 7
  %v1044 = vsub.s32 %v1041, %v1043
  %v1045 = vrot.slane %v1030, %v1044
  %v1046 = vcombine.low %v1038, %v1045
  %v1047 = vcombine.low %v917, %v918
  %v1048 = vcombine.low %v919, %v920
  %v1050 = vunpack.c.l.s4 1966171168
  %v1051 = vunpack.c.0.s8 %v1050
  %v1052 = vlaneseq
  %v1053 = vshrl.u32 %v1052, 7
  %v1054 = vsub.s32 %v1051, %v1053
  %v1055 = vrot.slane %v1047, %v1054
  %v1057 = vunpack.c.l.s4 1966171168
  %v1058 = vunpack.c.0.s8 %v1057
  %v1059 = vlaneseq
  %v1060 = vshrl.u32 %v1059, 7
  %v1061 = vsub.s32 %v1058, %v1060
  %v1062 = vrot.slane %v1048, %v1061
  %v1064 = vunpack.c.l.s4 1966171168
  %v1065 = vunpack.c.0.s8 %v1064
  %v1066 = vlaneseq
  %v1067 = vshrl.u32 %v1066, 7
  %v1068 = vsub.s32 %v1065, %v1067
  %v1069 = vrot.slane %v921, %v1068
  %v1070 = vcombine.low %v1055, %v1062
  %v1072 = vunpack.c.l.s4 1966171168
  %v1073 = vunpack.c.0.s8 %v1072
  %v1074 = vlaneseq
  %v1075 = vshrl.u32 %v1074, 7
  %v1076 = vsub.s32 %v1073, %v1075
  %v1077 = vrot.slane %v1070, %v1076
  %v1079 = vunpack.c.l.s4 1966171168
  %v1080 = vunpack.c.0.s8 %v1079
  %v1081 = vlaneseq
  %v1082 = vshrl.u32 %v1081, 7
  %v1083 = vsub.s32 %v1080, %v1082
  %v1084 = vrot.slane %v1069, %v1083
  %v1085 = vcombine.low %v1077, %v1084
  %v1086 = vcombine.low %v922, %v923
  %v1087 = vcombine.low %v924, %v925
  %v1089 = vunpack.c.l.s4 1966171168
  %v1090 = vunpack.c.0.s8 %v1089
  %v1091 = vlaneseq
  %v1092 = vshrl.u32 %v1091, 7
  %v1093 = vsub.s32 %v1090, %v1092
  %v1094 = vrot.slane %v1086, %v1093
  %v1096 = vunpack.c.l.s4 1966171168
  %v1097 = vunpack.c.0.s8 %v1096
  %v1098 = vlaneseq
  %v1099 = vshrl.u32 %v1098, 7
  %v1100 = vsub.s32 %v1097, %v1099
  %v1101 = vrot.slane %v1087, %v1100
  %v1103 = vunpack.c.l.s4 1966171168
  %v1104 = vunpack.c.0.s8 %v1103
  %v1105 = vlaneseq
  %v1106 = vshrl.u32 %v1105, 7
  %v1107 = vsub.s32 %v1104, %v1106
  %v1108 = vrot.slane %v926, %v1107
  %v1109 = vcombine.low %v1094, %v1101
  %v1111 = vunpack.c.l.s4 1966171168
  %v1112 = vunpack.c.0.s8 %v1111
  %v1113 = vlaneseq
  %v1114 = vshrl.u32 %v1113, 7
  %v1115 = vsub.s32 %v1112, %v1114
  %v1116 = vrot.slane %v1109, %v1115
  %v1118 = vunpack.c.l.s4 1966171168
  %v1119 = vunpack.c.0.s8 %v1118
  %v1120 = vlaneseq
  %v1121 = vshrl.u32 %v1120, 7
  %v1122 = vsub.s32 %v1119, %v1121
  %v1123 = vrot.slane %v1108, %v1122
  %v1124 = vcombine.low %v1116, %v1123
  %v1125 = vcombine.low %v927, %v928
  %v1126 = vcombine.low %v929, %v930
  %v1128 = vunpack.c.l.s4 1966171168
  %v1129 = vunpack.c.0.s8 %v1128
  %v1130 = vlaneseq
  %v1131 = vshrl.u32 %v1130, 7
  %v1132 = vsub.s32 %v1129, %v1131
  %v1133 = vrot.slane %v1125, %v1132
  %v1135 = vunpack.c.l.s4 1966171168
  %v1136 = vunpack.c.0.s8 %v1135
  %v1137 = vlaneseq
  %v1138 = vshrl.u32 %v1137, 7
  %v1139 = vsub.s32 %v1136, %v1138
  %v1140 = vrot.slane %v1126, %v1139
  %v1142 = vunpack.c.l.s4 1966171168
  %v1143 = vunpack.c.0.s8 %v1142
  %v1144 = vlaneseq
  %v1145 = vshrl.u32 %v1144, 7
  %v1146 = vsub.s32 %v1143, %v1145
  %v1147 = vrot.slane %v931, %v1146
  %v1148 = vcombine.low %v1133, %v1140
  %v1150 = vunpack.c.l.s4 1966171168
  %v1151 = vunpack.c.0.s8 %v1150
  %v1152 = vlaneseq
  %v1153 = vshrl.u32 %v1152, 7
  %v1154 = vsub.s32 %v1151, %v1153
  %v1155 = vrot.slane %v1148, %v1154
  %v1157 = vunpack.c.l.s4 1966171168
  %v1158 = vunpack.c.0.s8 %v1157
  %v1159 = vlaneseq
  %v1160 = vshrl.u32 %v1159, 7
  %v1161 = vsub.s32 %v1158, %v1160
  %v1162 = vrot.slane %v1147, %v1161
  %v1163 = vcombine.low %v1155, %v1162
  %v1164 = vcombine.low %v932, %v933
  %v1165 = vcombine.low %v934, %v935
  %v1167 = vunpack.c.l.s4 1966171168
  %v1168 = vunpack.c.0.s8 %v1167
  %v1169 = vlaneseq
  %v1170 = vshrl.u32 %v1169, 7
  %v1171 = vsub.s32 %v1168, %v1170
  %v1172 = vrot.slane %v1164, %v1171
  %v1174 = vunpack.c.l.s4 1966171168
  %v1175 = vunpack.c.0.s8 %v1174
  %v1176 = vlaneseq
  %v1177 = vshrl.u32 %v1176, 7
  %v1178 = vsub.s32 %v1175, %v1177
  %v1179 = vrot.slane %v1165, %v1178
  %v1181 = vunpack.c.l.s4 1966171168
  %v1182 = vunpack.c.0.s8 %v1181
  %v1183 = vlaneseq
  %v1184 = vshrl.u32 %v1183, 7
  %v1185 = vsub.s32 %v1182, %v1184
  %v1186 = vrot.slane %v936, %v1185
  %v1187 = vcombine.low %v1172, %v1179
  %v1189 = vunpack.c.l.s4 1966171168
  %v1190 = vunpack.c.0.s8 %v1189
  %v1191 = vlaneseq
  %v1192 = vshrl.u32 %v1191, 7
  %v1193 = vsub.s32 %v1190, %v1192
  %v1194 = vrot.slane %v1187, %v1193
  %v1196 = vunpack.c.l.s4 1966171168
  %v1197 = vunpack.c.0.s8 %v1196
  %v1198 = vlaneseq
  %v1199 = vshrl.u32 %v1198, 7
  %v1200 = vsub.s32 %v1197, %v1199
  %v1201 = vrot.slane %v1186, %v1200
  %v1202 = vcombine.low %v1194, %v1201
  %v1211 = vrot.slane %v937, 3
  %v1212 = vrot.slane %v938, 3
  %vm1215 = vcmask 1044480
  %v1216 = vsel %vm1215, %v1007, %v1211
  %v1217 = vsel %vm1215, %v1046, %v1211
  %v1218 = vsel %vm1215, %v1085, %v1211
  %v1219 = vsel %vm1215, %v1124, %v1212
  %v1220 = vsel %vm1215, %v1163, %v1212
  %v1221 = vsel %vm1215, %v1202, %v1212
  %v1222 = vld [vmem:[%s5] sm:$0xf]
  %v1223 = vld [vmem:[%s5 + $0x4] sm:$0xf]
  %v1224 = vld [vmem:[%s5 + $0x8] sm:$0xf]
  %v1225 = vld [vmem:[%s5 + $0xc] sm:$0xf]
  %v1226 = vld [vmem:[%s6] sm:$0x1]
  %v1227 = vpack.c.bf16 %v1217, %v1216
  %v1228 = vpack.c.bf16 %v1219, %v1218
  %v1229 = vpack.c.bf16 %v1221, %v1220
  %v1231 = vlaneseq
  %v1232 = vshrl.u32 %v1231, 7
  %v1233 = vsub.s32 0, %v1232
  %v1234 = vrot.slane %v1226, %v1233
  %v1240 = vunpack.c.l.b16 %v1222
  %v1241 = vunpack.c.l.b16 %v1223
  %v1242 = vunpack.c.l.b16 %v1224
  %v1243 = vunpack.c.l.b16 %v1225
  %v1244 = vpack.c.b16 %v1241, %v1240
  %v1245 = vpack.c.b16 %v1243, %v1242
  %v1249 = vsel %vm531, %v1227, 0
  %v1252 = vsel %vm531, %v1228, 0
  %v1255 = vsel %vm531, %v1229, 0
  %1257 = vmatprep.subr.bf16.mxu0 0
  %1258 = vmatpush1.bf16.msra.mxu0 0
  %1259 = vmatprep.subr.bf16.mxu0 0
  %1260 = vmatpush1.bf16.msra.mxu0 0
  %1261 = vmatprep.subr.bf16.mxu0 0
  %1262 = vmatpush1.bf16.msra.mxu0 0
  %1263 = vmatprep.subr.bf16.mxu0 0
  %1264 = vmatpush1.bf16.msra.mxu0 0
  %1265 = vmatprep.subr.bf16.mxu0 0
  %1266 = vmatpush1.bf16.msra.mxu0 0
  %1267 = vmatprep.subr.bf16.mxu0 0
  %1268 = vmatpush1.bf16.msra.mxu0 0
  %1269 = vmatprep.subr.bf16.mxu0 0
  %1270 = vmatpush1.bf16.msra.mxu0 %v1245
  %1271 = vmatprep.subr.bf16.mxu0 0
  %1272 = vmatpush1.bf16.msra.mxu0 %v1244
  %1273 = vmatprep.subr.bf16.mxu0 0
  %1274 = vmatpush2.bf16.msra.mxu0 0
  %1275 = vmatprep.subr.bf16.mxu0 0
  %1276 = vmatpush2.bf16.msra.mxu0 0
  %1277 = vmatprep.subr.bf16.mxu0 0
  %1278 = vmatpush2.bf16.msra.mxu0 0
  %1279 = vmatprep.subr.bf16.mxu0 0
  %1280 = vmatpush2.bf16.msra.mxu0 0
  %1281 = vmatprep.subr.bf16.mxu0 0
  %1282 = vmatpush2.bf16.msra.mxu0 0
  %1283 = vmatprep.subr.bf16.mxu0 0
  %1284 = vmatpush2.bf16.msra.mxu0 0
  %1285 = vmatprep.subr.bf16.mxu0 0
  %1286 = vmatpush2.bf16.msra.mxu0 0
  %1287 = vmatprep.subr.bf16.mxu0 0
  %1288 = vmatpush2.bf16.msra.mxu0 0
  %1289 = vmatprep.mubr.bf16.mxu0 0
  %1290 = vmatmul.mubr.bf16.gmra.mxu0 %v1249
  %v1291 = vpop.f32.mrf.mxu0
  %v1292 = vadd.f32 %v1234, %v1291
  %v1293 = vpop.f32.mrf.mxu0
  %v1294 = vpop.f32.mrf.mxu0
  %v1295 = vadd.f32 %v1234, %v1294
  %v1296 = vpop.f32.mrf.mxu0
  %1297 = vmatprep.mubr.bf16.mxu0 0
  %1298 = vmatmul.mubr.bf16.gmra.mxu0 %v1252
  %v1299 = vpop.f32.mrf.mxu0
  %v1300 = vadd.f32 %v1234, %v1299
  %v1301 = vpop.f32.mrf.mxu0
  %v1302 = vpop.f32.mrf.mxu0
  %v1303 = vadd.f32 %v1234, %v1302
  %v1304 = vpop.f32.mrf.mxu0
  %1305 = vmatprep.mubr.bf16.mxu0 0
  %1306 = vmatmul.mubr.bf16.gmra.mxu0 %v1255
  %v1307 = vpop.f32.mrf.mxu0
  %v1308 = vadd.f32 %v1234, %v1307
  %v1309 = vpop.f32.mrf.mxu0
  %v1310 = vpop.f32.mrf.mxu0
  %v1311 = vadd.f32 %v1234, %v1310
  %v1312 = vpop.f32.mrf.mxu0
  %1313 = vdwg.mxu0
  %1315 = vrot.lane.b32.xlu0 %v1292, 96
  %v1316 = vpop.permute.xlu0 %1315
  %vm1317 = vcmask 64512
  %v1318 = vsel %vm1317, %v1292, 0
  %v1320 = vsel %vm1317, %v1316, 0
  %1322 = vmatprep.subr.mxu0 0.0
  %1323 = vmatpush1.xpose.msra.mxu0 0.0
  %1324 = vmatprep.subr.mxu0 0.0
  %1325 = vmatpush1.xpose.msra.mxu0 0.0
  %1326 = vmatprep.subr.mxu0 0.0
  %1327 = vmatpush1.xpose.msra.mxu0 0.0
  %1328 = vmatprep.subr.mxu0 0.0
  %1329 = vmatpush1.xpose.msra.mxu0 0.0
  %1330 = vmatprep.subr.mxu0 0.0
  %1331 = vmatpush1.xpose.msra.mxu0 0.0
  %1332 = vmatprep.subr.mxu0 0.0
  %1333 = vmatpush1.xpose.msra.mxu0 0.0
  %1334 = vmatprep.subr.mxu0 0.0
  %1335 = vmatpush1.xpose.msra.mxu0 0.0
  %1336 = vmatprep.subr.mxu0 0.0
  %1337 = vmatpush1.xpose.msra.mxu0 0.0
  %1338 = vmatprep.subr.mxu0 0.0
  %1339 = vmatpush1.xpose.msra.mxu0 0.0
  %1340 = vmatprep.subr.mxu0 0.0
  %1341 = vmatpush1.xpose.msra.mxu0 0.0
  %1342 = vmatprep.subr.mxu0 0.0
  %1343 = vmatpush1.xpose.msra.mxu0 0.0
  %1344 = vmatprep.subr.mxu0 0.0
  %1345 = vmatpush1.xpose.msra.mxu0 0.0
  %1346 = vmatprep.subr.mxu0 0.0
  %1347 = vmatpush1.xpose.msra.mxu0 0.0
  %1348 = vmatprep.subr.mxu0 0.0
  %1349 = vmatpush1.xpose.msra.mxu0 0.0
  %1350 = vmatprep.subr.mxu0 0.0
  %1351 = vmatpush1.xpose.msra.mxu0 0.0
  %1352 = vmatprep.subr.mxu0 0.0
  %1353 = vmatpush1.xpose.msra.mxu0 %v1320
  %1354 = vmatprep.subr.mxu0 0.0
  %1355 = vmatpush2.xpose.msra.mxu0 0.0
  %1356 = vmatprep.subr.mxu0 0.0
  %1357 = vmatpush2.xpose.msra.mxu0 0.0
  %1358 = vmatprep.subr.mxu0 0.0
  %1359 = vmatpush2.xpose.msra.mxu0 0.0
  %1360 = vmatprep.subr.mxu0 0.0
  %1361 = vmatpush2.xpose.msra.mxu0 0.0
  %1362 = vmatprep.subr.mxu0 0.0
  %1363 = vmatpush2.xpose.msra.mxu0 0.0
  %1364 = vmatprep.subr.mxu0 0.0
  %1365 = vmatpush2.xpose.msra.mxu0 0.0
  %1366 = vmatprep.subr.mxu0 0.0
  %1367 = vmatpush2.xpose.msra.mxu0 0.0
  %1368 = vmatprep.subr.mxu0 0.0
  %1369 = vmatpush2.xpose.msra.mxu0 0.0
  %1370 = vmatprep.subr.mxu0 0.0
  %1371 = vmatpush2.xpose.msra.mxu0 0.0
  %1372 = vmatprep.subr.mxu0 0.0
  %1373 = vmatpush2.xpose.msra.mxu0 0.0
  %1374 = vmatprep.subr.mxu0 0.0
  %1375 = vmatpush2.xpose.msra.mxu0 0.0
  %1376 = vmatprep.subr.mxu0 0.0
  %1377 = vmatpush2.xpose.msra.mxu0 0.0
  %1378 = vmatprep.subr.mxu0 0.0
  %1379 = vmatpush2.xpose.msra.mxu0 0.0
  %1380 = vmatprep.subr.mxu0 0.0
  %1381 = vmatpush2.xpose.msra.mxu0 0.0
  %1382 = vmatprep.subr.mxu0 0.0
  %1383 = vmatpush2.xpose.msra.mxu0 0.0
  %1384 = vmatprep.subr.mxu0 0.0
  %1385 = vmatpush2.xpose.msra.mxu0 0.0
  %1386 = vmatprep.mubr.f32.mxu0 0.0
  %1387 = vmatmul.mubr.f32.gmra.mxu0 %v1318
  %v1388 = vpop.f32.mrf.mxu0
  %v1389 = vadd.f32 0.0, %v1388
  %v1390 = vpop.f32.mrf.mxu0
  %1391 = vdwg.mxu0
  %1393 = vrot.lane.b32.xlu0 %v1295, 96
  %v1394 = vpop.permute.xlu0 %1393
  %v1395 = vsel %vm1317, %v1295, 0
  %v1397 = vsel %vm1317, %v1394, 0
  %1399 = vmatprep.subr.mxu0 0.0
  %1400 = vmatpush1.xpose.msra.mxu0 0.0
  %1401 = vmatprep.subr.mxu0 0.0
  %1402 = vmatpush1.xpose.msra.mxu0 0.0
  %1403 = vmatprep.subr.mxu0 0.0
  %1404 = vmatpush1.xpose.msra.mxu0 0.0
  %1405 = vmatprep.subr.mxu0 0.0
  %1406 = vmatpush1.xpose.msra.mxu0 0.0
  %1407 = vmatprep.subr.mxu0 0.0
  %1408 = vmatpush1.xpose.msra.mxu0 0.0
  %1409 = vmatprep.subr.mxu0 0.0
  %1410 = vmatpush1.xpose.msra.mxu0 0.0
  %1411 = vmatprep.subr.mxu0 0.0
  %1412 = vmatpush1.xpose.msra.mxu0 0.0
  %1413 = vmatprep.subr.mxu0 0.0
  %1414 = vmatpush1.xpose.msra.mxu0 0.0
  %1415 = vmatprep.subr.mxu0 0.0
  %1416 = vmatpush1.xpose.msra.mxu0 0.0
  %1417 = vmatprep.subr.mxu0 0.0
  %1418 = vmatpush1.xpose.msra.mxu0 0.0
  %1419 = vmatprep.subr.mxu0 0.0
  %1420 = vmatpush1.xpose.msra.mxu0 0.0
  %1421 = vmatprep.subr.mxu0 0.0
  %1422 = vmatpush1.xpose.msra.mxu0 0.0
  %1423 = vmatprep.subr.mxu0 0.0
  %1424 = vmatpush1.xpose.msra.mxu0 0.0
  %1425 = vmatprep.subr.mxu0 0.0
  %1426 = vmatpush1.xpose.msra.mxu0 0.0
  %1427 = vmatprep.subr.mxu0 0.0
  %1428 = vmatpush1.xpose.msra.mxu0 0.0
  %1429 = vmatprep.subr.mxu0 0.0
  %1430 = vmatpush1.xpose.msra.mxu0 %v1397
  %1431 = vmatprep.subr.mxu0 0.0
  %1432 = vmatpush2.xpose.msra.mxu0 0.0
  %1433 = vmatprep.subr.mxu0 0.0
  %1434 = vmatpush2.xpose.msra.mxu0 0.0
  %1435 = vmatprep.subr.mxu0 0.0
  %1436 = vmatpush2.xpose.msra.mxu0 0.0
  %1437 = vmatprep.subr.mxu0 0.0
  %1438 = vmatpush2.xpose.msra.mxu0 0.0
  %1439 = vmatprep.subr.mxu0 0.0
  %1440 = vmatpush2.xpose.msra.mxu0 0.0
  %1441 = vmatprep.subr.mxu0 0.0
  %1442 = vmatpush2.xpose.msra.mxu0 0.0
  %1443 = vmatprep.subr.mxu0 0.0
  %1444 = vmatpush2.xpose.msra.mxu0 0.0
  %1445 = vmatprep.subr.mxu0 0.0
  %1446 = vmatpush2.xpose.msra.mxu0 0.0
  %1447 = vmatprep.subr.mxu0 0.0
  %1448 = vmatpush2.xpose.msra.mxu0 0.0
  %1449 = vmatprep.subr.mxu0 0.0
  %1450 = vmatpush2.xpose.msra.mxu0 0.0
  %1451 = vmatprep.subr.mxu0 0.0
  %1452 = vmatpush2.xpose.msra.mxu0 0.0
  %1453 = vmatprep.subr.mxu0 0.0
  %1454 = vmatpush2.xpose.msra.mxu0 0.0
  %1455 = vmatprep.subr.mxu0 0.0
  %1456 = vmatpush2.xpose.msra.mxu0 0.0
  %1457 = vmatprep.subr.mxu0 0.0
  %1458 = vmatpush2.xpose.msra.mxu0 0.0
  %1459 = vmatprep.subr.mxu0 0.0
  %1460 = vmatpush2.xpose.msra.mxu0 0.0
  %1461 = vmatprep.subr.mxu0 0.0
  %1462 = vmatpush2.xpose.msra.mxu0 0.0
  %1463 = vmatprep.mubr.f32.mxu0 0.0
  %1464 = vmatmul.mubr.f32.gmra.mxu0 %v1395
  %v1465 = vpop.f32.mrf.mxu0
  %v1466 = vadd.f32 0.0, %v1465
  %v1467 = vpop.f32.mrf.mxu0
  %1468 = vdwg.mxu0
  %1470 = vrot.lane.b32.xlu0 %v1300, 96
  %v1471 = vpop.permute.xlu0 %1470
  %v1472 = vsel %vm1317, %v1300, 0
  %v1474 = vsel %vm1317, %v1471, 0
  %1476 = vmatprep.subr.mxu0 0.0
  %1477 = vmatpush1.xpose.msra.mxu0 0.0
  %1478 = vmatprep.subr.mxu0 0.0
  %1479 = vmatpush1.xpose.msra.mxu0 0.0
  %1480 = vmatprep.subr.mxu0 0.0
  %1481 = vmatpush1.xpose.msra.mxu0 0.0
  %1482 = vmatprep.subr.mxu0 0.0
  %1483 = vmatpush1.xpose.msra.mxu0 0.0
  %1484 = vmatprep.subr.mxu0 0.0
  %1485 = vmatpush1.xpose.msra.mxu0 0.0
  %1486 = vmatprep.subr.mxu0 0.0
  %1487 = vmatpush1.xpose.msra.mxu0 0.0
  %1488 = vmatprep.subr.mxu0 0.0
  %1489 = vmatpush1.xpose.msra.mxu0 0.0
  %1490 = vmatprep.subr.mxu0 0.0
  %1491 = vmatpush1.xpose.msra.mxu0 0.0
  %1492 = vmatprep.subr.mxu0 0.0
  %1493 = vmatpush1.xpose.msra.mxu0 0.0
  %1494 = vmatprep.subr.mxu0 0.0
  %1495 = vmatpush1.xpose.msra.mxu0 0.0
  %1496 = vmatprep.subr.mxu0 0.0
  %1497 = vmatpush1.xpose.msra.mxu0 0.0
  %1498 = vmatprep.subr.mxu0 0.0
  %1499 = vmatpush1.xpose.msra.mxu0 0.0
  %1500 = vmatprep.subr.mxu0 0.0
  %1501 = vmatpush1.xpose.msra.mxu0 0.0
  %1502 = vmatprep.subr.mxu0 0.0
  %1503 = vmatpush1.xpose.msra.mxu0 0.0
  %1504 = vmatprep.subr.mxu0 0.0
  %1505 = vmatpush1.xpose.msra.mxu0 0.0
  %1506 = vmatprep.subr.mxu0 0.0
  %1507 = vmatpush1.xpose.msra.mxu0 %v1474
  %1508 = vmatprep.subr.mxu0 0.0
  %1509 = vmatpush2.xpose.msra.mxu0 0.0
  %1510 = vmatprep.subr.mxu0 0.0
  %1511 = vmatpush2.xpose.msra.mxu0 0.0
  %1512 = vmatprep.subr.mxu0 0.0
  %1513 = vmatpush2.xpose.msra.mxu0 0.0
  %1514 = vmatprep.subr.mxu0 0.0
  %1515 = vmatpush2.xpose.msra.mxu0 0.0
  %1516 = vmatprep.subr.mxu0 0.0
  %1517 = vmatpush2.xpose.msra.mxu0 0.0
  %1518 = vmatprep.subr.mxu0 0.0
  %1519 = vmatpush2.xpose.msra.mxu0 0.0
  %1520 = vmatprep.subr.mxu0 0.0
  %1521 = vmatpush2.xpose.msra.mxu0 0.0
  %1522 = vmatprep.subr.mxu0 0.0
  %1523 = vmatpush2.xpose.msra.mxu0 0.0
  %1524 = vmatprep.subr.mxu0 0.0
  %1525 = vmatpush2.xpose.msra.mxu0 0.0
  %1526 = vmatprep.subr.mxu0 0.0
  %1527 = vmatpush2.xpose.msra.mxu0 0.0
  %1528 = vmatprep.subr.mxu0 0.0
  %1529 = vmatpush2.xpose.msra.mxu0 0.0
  %1530 = vmatprep.subr.mxu0 0.0
  %1531 = vmatpush2.xpose.msra.mxu0 0.0
  %1532 = vmatprep.subr.mxu0 0.0
  %1533 = vmatpush2.xpose.msra.mxu0 0.0
  %1534 = vmatprep.subr.mxu0 0.0
  %1535 = vmatpush2.xpose.msra.mxu0 0.0
  %1536 = vmatprep.subr.mxu0 0.0
  %1537 = vmatpush2.xpose.msra.mxu0 0.0
  %1538 = vmatprep.subr.mxu0 0.0
  %1539 = vmatpush2.xpose.msra.mxu0 0.0
  %1540 = vmatprep.mubr.f32.mxu0 0.0
  %1541 = vmatmul.mubr.f32.gmra.mxu0 %v1472
  %v1542 = vpop.f32.mrf.mxu0
  %v1543 = vadd.f32 0.0, %v1542
  %v1544 = vpop.f32.mrf.mxu0
  %1545 = vdwg.mxu0
  %1547 = vrot.lane.b32.xlu0 %v1303, 96
  %v1548 = vpop.permute.xlu0 %1547
  %v1549 = vsel %vm1317, %v1303, 0
  %v1551 = vsel %vm1317, %v1548, 0
  %1553 = vmatprep.subr.mxu0 0.0
  %1554 = vmatpush1.xpose.msra.mxu0 0.0
  %1555 = vmatprep.subr.mxu0 0.0
  %1556 = vmatpush1.xpose.msra.mxu0 0.0
  %1557 = vmatprep.subr.mxu0 0.0
  %1558 = vmatpush1.xpose.msra.mxu0 0.0
  %1559 = vmatprep.subr.mxu0 0.0
  %1560 = vmatpush1.xpose.msra.mxu0 0.0
  %1561 = vmatprep.subr.mxu0 0.0
  %1562 = vmatpush1.xpose.msra.mxu0 0.0
  %1563 = vmatprep.subr.mxu0 0.0
  %1564 = vmatpush1.xpose.msra.mxu0 0.0
  %1565 = vmatprep.subr.mxu0 0.0
  %1566 = vmatpush1.xpose.msra.mxu0 0.0
  %1567 = vmatprep.subr.mxu0 0.0
  %1568 = vmatpush1.xpose.msra.mxu0 0.0
  %1569 = vmatprep.subr.mxu0 0.0
  %1570 = vmatpush1.xpose.msra.mxu0 0.0
  %1571 = vmatprep.subr.mxu0 0.0
  %1572 = vmatpush1.xpose.msra.mxu0 0.0
  %1573 = vmatprep.subr.mxu0 0.0
  %1574 = vmatpush1.xpose.msra.mxu0 0.0
  %1575 = vmatprep.subr.mxu0 0.0
  %1576 = vmatpush1.xpose.msra.mxu0 0.0
  %1577 = vmatprep.subr.mxu0 0.0
  %1578 = vmatpush1.xpose.msra.mxu0 0.0
  %1579 = vmatprep.subr.mxu0 0.0
  %1580 = vmatpush1.xpose.msra.mxu0 0.0
  %1581 = vmatprep.subr.mxu0 0.0
  %1582 = vmatpush1.xpose.msra.mxu0 0.0
  %1583 = vmatprep.subr.mxu0 0.0
  %1584 = vmatpush1.xpose.msra.mxu0 %v1551
  %1585 = vmatprep.subr.mxu0 0.0
  %1586 = vmatpush2.xpose.msra.mxu0 0.0
  %1587 = vmatprep.subr.mxu0 0.0
  %1588 = vmatpush2.xpose.msra.mxu0 0.0
  %1589 = vmatprep.subr.mxu0 0.0
  %1590 = vmatpush2.xpose.msra.mxu0 0.0
  %1591 = vmatprep.subr.mxu0 0.0
  %1592 = vmatpush2.xpose.msra.mxu0 0.0
  %1593 = vmatprep.subr.mxu0 0.0
  %1594 = vmatpush2.xpose.msra.mxu0 0.0
  %1595 = vmatprep.subr.mxu0 0.0
  %1596 = vmatpush2.xpose.msra.mxu0 0.0
  %1597 = vmatprep.subr.mxu0 0.0
  %1598 = vmatpush2.xpose.msra.mxu0 0.0
  %1599 = vmatprep.subr.mxu0 0.0
  %1600 = vmatpush2.xpose.msra.mxu0 0.0
  %1601 = vmatprep.subr.mxu0 0.0
  %1602 = vmatpush2.xpose.msra.mxu0 0.0
  %1603 = vmatprep.subr.mxu0 0.0
  %1604 = vmatpush2.xpose.msra.mxu0 0.0
  %1605 = vmatprep.subr.mxu0 0.0
  %1606 = vmatpush2.xpose.msra.mxu0 0.0
  %1607 = vmatprep.subr.mxu0 0.0
  %1608 = vmatpush2.xpose.msra.mxu0 0.0
  %1609 = vmatprep.subr.mxu0 0.0
  %1610 = vmatpush2.xpose.msra.mxu0 0.0
  %1611 = vmatprep.subr.mxu0 0.0
  %1612 = vmatpush2.xpose.msra.mxu0 0.0
  %1613 = vmatprep.subr.mxu0 0.0
  %1614 = vmatpush2.xpose.msra.mxu0 0.0
  %1615 = vmatprep.subr.mxu0 0.0
  %1616 = vmatpush2.xpose.msra.mxu0 0.0
  %1617 = vmatprep.mubr.f32.mxu0 0.0
  %1618 = vmatmul.mubr.f32.gmra.mxu0 %v1549
  %v1619 = vpop.f32.mrf.mxu0
  %v1620 = vadd.f32 0.0, %v1619
  %v1621 = vpop.f32.mrf.mxu0
  %1622 = vdwg.mxu0
  %1624 = vrot.lane.b32.xlu0 %v1308, 96
  %v1625 = vpop.permute.xlu0 %1624
  %v1626 = vsel %vm1317, %v1308, 0
  %v1628 = vsel %vm1317, %v1625, 0
  %1630 = vmatprep.subr.mxu0 0.0
  %1631 = vmatpush1.xpose.msra.mxu0 0.0
  %1632 = vmatprep.subr.mxu0 0.0
  %1633 = vmatpush1.xpose.msra.mxu0 0.0
  %1634 = vmatprep.subr.mxu0 0.0
  %1635 = vmatpush1.xpose.msra.mxu0 0.0
  %1636 = vmatprep.subr.mxu0 0.0
  %1637 = vmatpush1.xpose.msra.mxu0 0.0
  %1638 = vmatprep.subr.mxu0 0.0
  %1639 = vmatpush1.xpose.msra.mxu0 0.0
  %1640 = vmatprep.subr.mxu0 0.0
  %1641 = vmatpush1.xpose.msra.mxu0 0.0
  %1642 = vmatprep.subr.mxu0 0.0
  %1643 = vmatpush1.xpose.msra.mxu0 0.0
  %1644 = vmatprep.subr.mxu0 0.0
  %1645 = vmatpush1.xpose.msra.mxu0 0.0
  %1646 = vmatprep.subr.mxu0 0.0
  %1647 = vmatpush1.xpose.msra.mxu0 0.0
  %1648 = vmatprep.subr.mxu0 0.0
  %1649 = vmatpush1.xpose.msra.mxu0 0.0
  %1650 = vmatprep.subr.mxu0 0.0
  %1651 = vmatpush1.xpose.msra.mxu0 0.0
  %1652 = vmatprep.subr.mxu0 0.0
  %1653 = vmatpush1.xpose.msra.mxu0 0.0
  %1654 = vmatprep.subr.mxu0 0.0
  %1655 = vmatpush1.xpose.msra.mxu0 0.0
  %1656 = vmatprep.subr.mxu0 0.0
  %1657 = vmatpush1.xpose.msra.mxu0 0.0
  %1658 = vmatprep.subr.mxu0 0.0
  %1659 = vmatpush1.xpose.msra.mxu0 0.0
  %1660 = vmatprep.subr.mxu0 0.0
  %1661 = vmatpush1.xpose.msra.mxu0 %v1628
  %1662 = vmatprep.subr.mxu0 0.0
  %1663 = vmatpush2.xpose.msra.mxu0 0.0
  %1664 = vmatprep.subr.mxu0 0.0
  %1665 = vmatpush2.xpose.msra.mxu0 0.0
  %1666 = vmatprep.subr.mxu0 0.0
  %1667 = vmatpush2.xpose.msra.mxu0 0.0
  %1668 = vmatprep.subr.mxu0 0.0
  %1669 = vmatpush2.xpose.msra.mxu0 0.0
  %1670 = vmatprep.subr.mxu0 0.0
  %1671 = vmatpush2.xpose.msra.mxu0 0.0
  %1672 = vmatprep.subr.mxu0 0.0
  %1673 = vmatpush2.xpose.msra.mxu0 0.0
  %1674 = vmatprep.subr.mxu0 0.0
  %1675 = vmatpush2.xpose.msra.mxu0 0.0
  %1676 = vmatprep.subr.mxu0 0.0
  %1677 = vmatpush2.xpose.msra.mxu0 0.0
  %1678 = vmatprep.subr.mxu0 0.0
  %1679 = vmatpush2.xpose.msra.mxu0 0.0
  %1680 = vmatprep.subr.mxu0 0.0
  %1681 = vmatpush2.xpose.msra.mxu0 0.0
  %1682 = vmatprep.subr.mxu0 0.0
  %1683 = vmatpush2.xpose.msra.mxu0 0.0
  %1684 = vmatprep.subr.mxu0 0.0
  %1685 = vmatpush2.xpose.msra.mxu0 0.0
  %1686 = vmatprep.subr.mxu0 0.0
  %1687 = vmatpush2.xpose.msra.mxu0 0.0
  %1688 = vmatprep.subr.mxu0 0.0
  %1689 = vmatpush2.xpose.msra.mxu0 0.0
  %1690 = vmatprep.subr.mxu0 0.0
  %1691 = vmatpush2.xpose.msra.mxu0 0.0
  %1692 = vmatprep.subr.mxu0 0.0
  %1693 = vmatpush2.xpose.msra.mxu0 0.0
  %1694 = vmatprep.mubr.f32.mxu0 0.0
  %1695 = vmatmul.mubr.f32.gmra.mxu0 %v1626
  %v1696 = vpop.f32.mrf.mxu0
  %v1697 = vadd.f32 0.0, %v1696
  %v1698 = vpop.f32.mrf.mxu0
  %1699 = vdwg.mxu0
  %1701 = vrot.lane.b32.xlu0 %v1311, 96
  %v1702 = vpop.permute.xlu0 %1701
  %v1703 = vsel %vm1317, %v1311, 0
  %v1705 = vsel %vm1317, %v1702, 0
  %1707 = vmatprep.subr.mxu0 0.0
  %1708 = vmatpush1.xpose.msra.mxu0 0.0
  %1709 = vmatprep.subr.mxu0 0.0
  %1710 = vmatpush1.xpose.msra.mxu0 0.0
  %1711 = vmatprep.subr.mxu0 0.0
  %1712 = vmatpush1.xpose.msra.mxu0 0.0
  %1713 = vmatprep.subr.mxu0 0.0
  %1714 = vmatpush1.xpose.msra.mxu0 0.0
  %1715 = vmatprep.subr.mxu0 0.0
  %1716 = vmatpush1.xpose.msra.mxu0 0.0
  %1717 = vmatprep.subr.mxu0 0.0
  %1718 = vmatpush1.xpose.msra.mxu0 0.0
  %1719 = vmatprep.subr.mxu0 0.0
  %1720 = vmatpush1.xpose.msra.mxu0 0.0
  %1721 = vmatprep.subr.mxu0 0.0
  %1722 = vmatpush1.xpose.msra.mxu0 0.0
  %1723 = vmatprep.subr.mxu0 0.0
  %1724 = vmatpush1.xpose.msra.mxu0 0.0
  %1725 = vmatprep.subr.mxu0 0.0
  %1726 = vmatpush1.xpose.msra.mxu0 0.0
  %1727 = vmatprep.subr.mxu0 0.0
  %1728 = vmatpush1.xpose.msra.mxu0 0.0
  %1729 = vmatprep.subr.mxu0 0.0
  %1730 = vmatpush1.xpose.msra.mxu0 0.0
  %1731 = vmatprep.subr.mxu0 0.0
  %1732 = vmatpush1.xpose.msra.mxu0 0.0
  %1733 = vmatprep.subr.mxu0 0.0
  %1734 = vmatpush1.xpose.msra.mxu0 0.0
  %1735 = vmatprep.subr.mxu0 0.0
  %1736 = vmatpush1.xpose.msra.mxu0 0.0
  %1737 = vmatprep.subr.mxu0 0.0
  %1738 = vmatpush1.xpose.msra.mxu0 %v1705
  %1739 = vmatprep.subr.mxu0 0.0
  %1740 = vmatpush2.xpose.msra.mxu0 0.0
  %1741 = vmatprep.subr.mxu0 0.0
  %1742 = vmatpush2.xpose.msra.mxu0 0.0
  %1743 = vmatprep.subr.mxu0 0.0
  %1744 = vmatpush2.xpose.msra.mxu0 0.0
  %1745 = vmatprep.subr.mxu0 0.0
  %1746 = vmatpush2.xpose.msra.mxu0 0.0
  %1747 = vmatprep.subr.mxu0 0.0
  %1748 = vmatpush2.xpose.msra.mxu0 0.0
  %1749 = vmatprep.subr.mxu0 0.0
  %1750 = vmatpush2.xpose.msra.mxu0 0.0
  %1751 = vmatprep.subr.mxu0 0.0
  %1752 = vmatpush2.xpose.msra.mxu0 0.0
  %1753 = vmatprep.subr.mxu0 0.0
  %1754 = vmatpush2.xpose.msra.mxu0 0.0
  %1755 = vmatprep.subr.mxu0 0.0
  %1756 = vmatpush2.xpose.msra.mxu0 0.0
  %1757 = vmatprep.subr.mxu0 0.0
  %1758 = vmatpush2.xpose.msra.mxu0 0.0
  %1759 = vmatprep.subr.mxu0 0.0
  %1760 = vmatpush2.xpose.msra.mxu0 0.0
  %1761 = vmatprep.subr.mxu0 0.0
  %1762 = vmatpush2.xpose.msra.mxu0 0.0
  %1763 = vmatprep.subr.mxu0 0.0
  %1764 = vmatpush2.xpose.msra.mxu0 0.0
  %1765 = vmatprep.subr.mxu0 0.0
  %1766 = vmatpush2.xpose.msra.mxu0 0.0
  %1767 = vmatprep.subr.mxu0 0.0
  %1768 = vmatpush2.xpose.msra.mxu0 0.0
  %1769 = vmatprep.subr.mxu0 0.0
  %1770 = vmatpush2.xpose.msra.mxu0 0.0
  %1771 = vmatprep.mubr.f32.mxu0 0.0
  %1772 = vmatmul.mubr.f32.gmra.mxu0 %v1703
  %v1773 = vpop.f32.mrf.mxu0
  %v1774 = vadd.f32 0.0, %v1773
  %v1775 = vpop.f32.mrf.mxu0
  %1776 = vdwg.mxu0
  %v1777 = vmul.f32 %v1389, 0.35355338
  %v1778 = vmul.f32 %v1466, 0.35355338
  %v1779 = vmul.f32 %v1543, 0.35355338
  %v1780 = vmul.f32 %v1620, 0.35355338
  %v1781 = vmul.f32 %v1697, 0.35355338
  %v1782 = vmul.f32 %v1774, 0.35355338
  %v1783 = vsel %vm1317, %v1777, -inf
  %1784 = vmax.xlane.f32.xlu0 %v1783
  %v1785 = vpop.xlane.xlu0 %1784
  %v1786 = vsel %vm1317, %v1778, -inf
  %1787 = vmax.xlane.f32.xlu0 %v1786
  %v1788 = vpop.xlane.xlu0 %1787
  %v1789 = vsel %vm1317, %v1779, -inf
  %1790 = vmax.xlane.f32.xlu0 %v1789
  %v1791 = vpop.xlane.xlu0 %1790
  %v1792 = vsel %vm1317, %v1780, -inf
  %1793 = vmax.xlane.f32.xlu0 %v1792
  %v1794 = vpop.xlane.xlu0 %1793
  %v1795 = vsel %vm1317, %v1781, -inf
  %1796 = vmax.xlane.f32.xlu0 %v1795
  %v1797 = vpop.xlane.xlu0 %1796
  %v1798 = vsel %vm1317, %v1782, -inf
  %1799 = vmax.xlane.f32.xlu0 %v1798
  %v1800 = vpop.xlane.xlu0 %1799
  %v1801 = vsub.f32 %v1777, %v1785
  %v1802 = vsub.f32 %v1778, %v1788
  %v1803 = vsub.f32 %v1779, %v1791
  %v1804 = vsub.f32 %v1780, %v1794
  %v1805 = vsub.f32 %v1781, %v1797
  %v1806 = vsub.f32 %v1782, %v1800
  %v1807 = vmul.f32 %v1801, 1.442695
  %v1808 = vpow.pop %v1807
  %v1809 = vmul.f32 %v1802, 1.442695
  %v1810 = vpow.pop %v1809
  %v1811 = vmul.f32 %v1803, 1.442695
  %v1812 = vpow.pop %v1811
  %v1813 = vmul.f32 %v1804, 1.442695
  %v1814 = vpow.pop %v1813
  %v1815 = vmul.f32 %v1805, 1.442695
  %v1816 = vpow.pop %v1815
  %v1817 = vmul.f32 %v1806, 1.442695
  %v1818 = vpow.pop %v1817
  %v1819 = vsel %vm1317, %v1808, 0.0
  %1820 = vadd.xlane.f32.xlu0 %v1819
  %v1821 = vpop.xlane.xlu0 %1820
  %v1822 = vsel %vm1317, %v1810, 0.0
  %1823 = vadd.xlane.f32.xlu0 %v1822
  %v1824 = vpop.xlane.xlu0 %1823
  %v1825 = vsel %vm1317, %v1812, 0.0
  %1826 = vadd.xlane.f32.xlu0 %v1825
  %v1827 = vpop.xlane.xlu0 %1826
  %v1828 = vsel %vm1317, %v1814, 0.0
  %1829 = vadd.xlane.f32.xlu0 %v1828
  %v1830 = vpop.xlane.xlu0 %1829
  %v1831 = vsel %vm1317, %v1816, 0.0
  %1832 = vadd.xlane.f32.xlu0 %v1831
  %v1833 = vpop.xlane.xlu0 %1832
  %v1834 = vsel %vm1317, %v1818, 0.0
  %1835 = vadd.xlane.f32.xlu0 %v1834
  %v1836 = vpop.xlane.xlu0 %1835
  %v1837 = vrcp.pop %v1821
  %v1838 = vrcp.pop %v1824
  %v1839 = vrcp.pop %v1827
  %v1840 = vrcp.pop %v1830
  %v1841 = vrcp.pop %v1833
  %v1842 = vrcp.pop %v1836
  %v1843 = vmul.f32 %v1808, %v1837
  %v1844 = vmul.f32 %v1810, %v1838
  %v1845 = vmul.f32 %v1812, %v1839
  %v1846 = vmul.f32 %v1814, %v1840
  %v1847 = vmul.f32 %v1816, %v1841
  %v1848 = vmul.f32 %v1818, %v1842
  %1849 = vrot.lane.b32.xlu0 %v1292, 64
  %v1850 = vpop.permute.xlu0 %1849
  %v1853 = vsel %vm1317, %v1843, 0
  %1855 = vmatprep.subr.mxu0 0.0
  %1856 = vmatpush1.msra.mxu0 0.0
  %1857 = vmatprep.subr.mxu0 0.0
  %1858 = vmatpush1.msra.mxu0 0.0
  %1859 = vmatprep.subr.mxu0 0.0
  %1860 = vmatpush1.msra.mxu0 0.0
  %1861 = vmatprep.subr.mxu0 0.0
  %1862 = vmatpush1.msra.mxu0 0.0
  %1863 = vmatprep.subr.mxu0 0.0
  %1864 = vmatpush1.msra.mxu0 0.0
  %1865 = vmatprep.subr.mxu0 0.0
  %1866 = vmatpush1.msra.mxu0 0.0
  %1867 = vmatprep.subr.mxu0 0.0
  %1868 = vmatpush1.msra.mxu0 0.0
  %1869 = vmatprep.subr.mxu0 0.0
  %1870 = vmatpush1.msra.mxu0 0.0
  %1871 = vmatprep.subr.mxu0 0.0
  %1872 = vmatpush1.msra.mxu0 0.0
  %1873 = vmatprep.subr.mxu0 0.0
  %1874 = vmatpush1.msra.mxu0 0.0
  %1875 = vmatprep.subr.mxu0 0.0
  %1876 = vmatpush1.msra.mxu0 0.0
  %1877 = vmatprep.subr.mxu0 0.0
  %1878 = vmatpush1.msra.mxu0 0.0
  %1879 = vmatprep.subr.mxu0 0.0
  %1880 = vmatpush1.msra.mxu0 0.0
  %1881 = vmatprep.subr.mxu0 0.0
  %1882 = vmatpush1.msra.mxu0 0.0
  %1883 = vmatprep.subr.mxu0 0.0
  %1884 = vmatpush1.msra.mxu0 0.0
  %1885 = vmatprep.subr.mxu0 0.0
  %1886 = vmatpush1.msra.mxu0 %v1850
  %1887 = vmatprep.subr.mxu0 0.0
  %1888 = vmatpush2.msra.mxu0 0.0
  %1889 = vmatprep.subr.mxu0 0.0
  %1890 = vmatpush2.msra.mxu0 0.0
  %1891 = vmatprep.subr.mxu0 0.0
  %1892 = vmatpush2.msra.mxu0 0.0
  %1893 = vmatprep.subr.mxu0 0.0
  %1894 = vmatpush2.msra.mxu0 0.0
  %1895 = vmatprep.subr.mxu0 0.0
  %1896 = vmatpush2.msra.mxu0 0.0
  %1897 = vmatprep.subr.mxu0 0.0
  %1898 = vmatpush2.msra.mxu0 0.0
  %1899 = vmatprep.subr.mxu0 0.0
  %1900 = vmatpush2.msra.mxu0 0.0
  %1901 = vmatprep.subr.mxu0 0.0
  %1902 = vmatpush2.msra.mxu0 0.0
  %1903 = vmatprep.subr.mxu0 0.0
  %1904 = vmatpush2.msra.mxu0 0.0
  %1905 = vmatprep.subr.mxu0 0.0
  %1906 = vmatpush2.msra.mxu0 0.0
  %1907 = vmatprep.subr.mxu0 0.0
  %1908 = vmatpush2.msra.mxu0 0.0
  %1909 = vmatprep.subr.mxu0 0.0
  %1910 = vmatpush2.msra.mxu0 0.0
  %1911 = vmatprep.subr.mxu0 0.0
  %1912 = vmatpush2.msra.mxu0 0.0
  %1913 = vmatprep.subr.mxu0 0.0
  %1914 = vmatpush2.msra.mxu0 0.0
  %1915 = vmatprep.subr.mxu0 0.0
  %1916 = vmatpush2.msra.mxu0 0.0
  %1917 = vmatprep.subr.mxu0 0.0
  %1918 = vmatpush2.msra.mxu0 0.0
  %1919 = vmatprep.mubr.f32.mxu0 0.0
  %1920 = vmatmul.mubr.f32.gmra.mxu0 %v1853
  %v1921 = vpop.f32.mrf.mxu0
  %v1922 = vadd.f32 0.0, %v1921
  %v1923 = vpop.f32.mrf.mxu0
  %1924 = vdwg.mxu0
  %1925 = vrot.lane.b32.xlu0 %v1295, 64
  %v1926 = vpop.permute.xlu0 %1925
  %v1929 = vsel %vm1317, %v1844, 0
  %1931 = vmatprep.subr.mxu0 0.0
  %1932 = vmatpush1.msra.mxu0 0.0
  %1933 = vmatprep.subr.mxu0 0.0
  %1934 = vmatpush1.msra.mxu0 0.0
  %1935 = vmatprep.subr.mxu0 0.0
  %1936 = vmatpush1.msra.mxu0 0.0
  %1937 = vmatprep.subr.mxu0 0.0
  %1938 = vmatpush1.msra.mxu0 0.0
  %1939 = vmatprep.subr.mxu0 0.0
  %1940 = vmatpush1.msra.mxu0 0.0
  %1941 = vmatprep.subr.mxu0 0.0
  %1942 = vmatpush1.msra.mxu0 0.0
  %1943 = vmatprep.subr.mxu0 0.0
  %1944 = vmatpush1.msra.mxu0 0.0
  %1945 = vmatprep.subr.mxu0 0.0
  %1946 = vmatpush1.msra.mxu0 0.0
  %1947 = vmatprep.subr.mxu0 0.0
  %1948 = vmatpush1.msra.mxu0 0.0
  %1949 = vmatprep.subr.mxu0 0.0
  %1950 = vmatpush1.msra.mxu0 0.0
  %1951 = vmatprep.subr.mxu0 0.0
  %1952 = vmatpush1.msra.mxu0 0.0
  %1953 = vmatprep.subr.mxu0 0.0
  %1954 = vmatpush1.msra.mxu0 0.0
  %1955 = vmatprep.subr.mxu0 0.0
  %1956 = vmatpush1.msra.mxu0 0.0
  %1957 = vmatprep.subr.mxu0 0.0
  %1958 = vmatpush1.msra.mxu0 0.0
  %1959 = vmatprep.subr.mxu0 0.0
  %1960 = vmatpush1.msra.mxu0 0.0
  %1961 = vmatprep.subr.mxu0 0.0
  %1962 = vmatpush1.msra.mxu0 %v1926
  %1963 = vmatprep.subr.mxu0 0.0
  %1964 = vmatpush2.msra.mxu0 0.0
  %1965 = vmatprep.subr.mxu0 0.0
  %1966 = vmatpush2.msra.mxu0 0.0
  %1967 = vmatprep.subr.mxu0 0.0
  %1968 = vmatpush2.msra.mxu0 0.0
  %1969 = vmatprep.subr.mxu0 0.0
  %1970 = vmatpush2.msra.mxu0 0.0
  %1971 = vmatprep.subr.mxu0 0.0
  %1972 = vmatpush2.msra.mxu0 0.0
  %1973 = vmatprep.subr.mxu0 0.0
  %1974 = vmatpush2.msra.mxu0 0.0
  %1975 = vmatprep.subr.mxu0 0.0
  %1976 = vmatpush2.msra.mxu0 0.0
  %1977 = vmatprep.subr.mxu0 0.0
  %1978 = vmatpush2.msra.mxu0 0.0
  %1979 = vmatprep.subr.mxu0 0.0
  %1980 = vmatpush2.msra.mxu0 0.0
  %1981 = vmatprep.subr.mxu0 0.0
  %1982 = vmatpush2.msra.mxu0 0.0
  %1983 = vmatprep.subr.mxu0 0.0
  %1984 = vmatpush2.msra.mxu0 0.0
  %1985 = vmatprep.subr.mxu0 0.0
  %1986 = vmatpush2.msra.mxu0 0.0
  %1987 = vmatprep.subr.mxu0 0.0
  %1988 = vmatpush2.msra.mxu0 0.0
  %1989 = vmatprep.subr.mxu0 0.0
  %1990 = vmatpush2.msra.mxu0 0.0
  %1991 = vmatprep.subr.mxu0 0.0
  %1992 = vmatpush2.msra.mxu0 0.0
  %1993 = vmatprep.subr.mxu0 0.0
  %1994 = vmatpush2.msra.mxu0 0.0
  %1995 = vmatprep.mubr.f32.mxu0 0.0
  %1996 = vmatmul.mubr.f32.gmra.mxu0 %v1929
  %v1997 = vpop.f32.mrf.mxu0
  %v1998 = vadd.f32 0.0, %v1997
  %v1999 = vpop.f32.mrf.mxu0
  %2000 = vdwg.mxu0
  %2001 = vrot.lane.b32.xlu0 %v1300, 64
  %v2002 = vpop.permute.xlu0 %2001
  %v2005 = vsel %vm1317, %v1845, 0
  %2007 = vmatprep.subr.mxu0 0.0
  %2008 = vmatpush1.msra.mxu0 0.0
  %2009 = vmatprep.subr.mxu0 0.0
  %2010 = vmatpush1.msra.mxu0 0.0
  %2011 = vmatprep.subr.mxu0 0.0
  %2012 = vmatpush1.msra.mxu0 0.0
  %2013 = vmatprep.subr.mxu0 0.0
  %2014 = vmatpush1.msra.mxu0 0.0
  %2015 = vmatprep.subr.mxu0 0.0
  %2016 = vmatpush1.msra.mxu0 0.0
  %2017 = vmatprep.subr.mxu0 0.0
  %2018 = vmatpush1.msra.mxu0 0.0
  %2019 = vmatprep.subr.mxu0 0.0
  %2020 = vmatpush1.msra.mxu0 0.0
  %2021 = vmatprep.subr.mxu0 0.0
  %2022 = vmatpush1.msra.mxu0 0.0
  %2023 = vmatprep.subr.mxu0 0.0
  %2024 = vmatpush1.msra.mxu0 0.0
  %2025 = vmatprep.subr.mxu0 0.0
  %2026 = vmatpush1.msra.mxu0 0.0
  %2027 = vmatprep.subr.mxu0 0.0
  %2028 = vmatpush1.msra.mxu0 0.0
  %2029 = vmatprep.subr.mxu0 0.0
  %2030 = vmatpush1.msra.mxu0 0.0
  %2031 = vmatprep.subr.mxu0 0.0
  %2032 = vmatpush1.msra.mxu0 0.0
  %2033 = vmatprep.subr.mxu0 0.0
  %2034 = vmatpush1.msra.mxu0 0.0
  %2035 = vmatprep.subr.mxu0 0.0
  %2036 = vmatpush1.msra.mxu0 0.0
  %2037 = vmatprep.subr.mxu0 0.0
  %2038 = vmatpush1.msra.mxu0 %v2002
  %2039 = vmatprep.subr.mxu0 0.0
  %2040 = vmatpush2.msra.mxu0 0.0
  %2041 = vmatprep.subr.mxu0 0.0
  %2042 = vmatpush2.msra.mxu0 0.0
  %2043 = vmatprep.subr.mxu0 0.0
  %2044 = vmatpush2.msra.mxu0 0.0
  %2045 = vmatprep.subr.mxu0 0.0
  %2046 = vmatpush2.msra.mxu0 0.0
  %2047 = vmatprep.subr.mxu0 0.0
  %2048 = vmatpush2.msra.mxu0 0.0
  %2049 = vmatprep.subr.mxu0 0.0
  %2050 = vmatpush2.msra.mxu0 0.0
  %2051 = vmatprep.subr.mxu0 0.0
  %2052 = vmatpush2.msra.mxu0 0.0
  %2053 = vmatprep.subr.mxu0 0.0
  %2054 = vmatpush2.msra.mxu0 0.0
  %2055 = vmatprep.subr.mxu0 0.0
  %2056 = vmatpush2.msra.mxu0 0.0
  %2057 = vmatprep.subr.mxu0 0.0
  %2058 = vmatpush2.msra.mxu0 0.0
  %2059 = vmatprep.subr.mxu0 0.0
  %2060 = vmatpush2.msra.mxu0 0.0
  %2061 = vmatprep.subr.mxu0 0.0
  %2062 = vmatpush2.msra.mxu0 0.0
  %2063 = vmatprep.subr.mxu0 0.0
  %2064 = vmatpush2.msra.mxu0 0.0
  %2065 = vmatprep.subr.mxu0 0.0
  %2066 = vmatpush2.msra.mxu0 0.0
  %2067 = vmatprep.subr.mxu0 0.0
  %2068 = vmatpush2.msra.mxu0 0.0
  %2069 = vmatprep.subr.mxu0 0.0
  %2070 = vmatpush2.msra.mxu0 0.0
  %2071 = vmatprep.mubr.f32.mxu0 0.0
  %2072 = vmatmul.mubr.f32.gmra.mxu0 %v2005
  %v2073 = vpop.f32.mrf.mxu0
  %v2074 = vadd.f32 0.0, %v2073
  %v2075 = vpop.f32.mrf.mxu0
  %2076 = vdwg.mxu0
  %2077 = vrot.lane.b32.xlu0 %v1303, 64
  %v2078 = vpop.permute.xlu0 %2077
  %v2081 = vsel %vm1317, %v1846, 0
  %2083 = vmatprep.subr.mxu0 0.0
  %2084 = vmatpush1.msra.mxu0 0.0
  %2085 = vmatprep.subr.mxu0 0.0
  %2086 = vmatpush1.msra.mxu0 0.0
  %2087 = vmatprep.subr.mxu0 0.0
  %2088 = vmatpush1.msra.mxu0 0.0
  %2089 = vmatprep.subr.mxu0 0.0
  %2090 = vmatpush1.msra.mxu0 0.0
  %2091 = vmatprep.subr.mxu0 0.0
  %2092 = vmatpush1.msra.mxu0 0.0
  %2093 = vmatprep.subr.mxu0 0.0
  %2094 = vmatpush1.msra.mxu0 0.0
  %2095 = vmatprep.subr.mxu0 0.0
  %2096 = vmatpush1.msra.mxu0 0.0
  %2097 = vmatprep.subr.mxu0 0.0
  %2098 = vmatpush1.msra.mxu0 0.0
  %2099 = vmatprep.subr.mxu0 0.0
  %2100 = vmatpush1.msra.mxu0 0.0
  %2101 = vmatprep.subr.mxu0 0.0
  %2102 = vmatpush1.msra.mxu0 0.0
  %2103 = vmatprep.subr.mxu0 0.0
  %2104 = vmatpush1.msra.mxu0 0.0
  %2105 = vmatprep.subr.mxu0 0.0
  %2106 = vmatpush1.msra.mxu0 0.0
  %2107 = vmatprep.subr.mxu0 0.0
  %2108 = vmatpush1.msra.mxu0 0.0
  %2109 = vmatprep.subr.mxu0 0.0
  %2110 = vmatpush1.msra.mxu0 0.0
  %2111 = vmatprep.subr.mxu0 0.0
  %2112 = vmatpush1.msra.mxu0 0.0
  %2113 = vmatprep.subr.mxu0 0.0
  %2114 = vmatpush1.msra.mxu0 %v2078
  %2115 = vmatprep.subr.mxu0 0.0
  %2116 = vmatpush2.msra.mxu0 0.0
  %2117 = vmatprep.subr.mxu0 0.0
  %2118 = vmatpush2.msra.mxu0 0.0
  %2119 = vmatprep.subr.mxu0 0.0
  %2120 = vmatpush2.msra.mxu0 0.0
  %2121 = vmatprep.subr.mxu0 0.0
  %2122 = vmatpush2.msra.mxu0 0.0
  %2123 = vmatprep.subr.mxu0 0.0
  %2124 = vmatpush2.msra.mxu0 0.0
  %2125 = vmatprep.subr.mxu0 0.0
  %2126 = vmatpush2.msra.mxu0 0.0
  %2127 = vmatprep.subr.mxu0 0.0
  %2128 = vmatpush2.msra.mxu0 0.0
  %2129 = vmatprep.subr.mxu0 0.0
  %2130 = vmatpush2.msra.mxu0 0.0
  %2131 = vmatprep.subr.mxu0 0.0
  %2132 = vmatpush2.msra.mxu0 0.0
  %2133 = vmatprep.subr.mxu0 0.0
  %2134 = vmatpush2.msra.mxu0 0.0
  %2135 = vmatprep.subr.mxu0 0.0
  %2136 = vmatpush2.msra.mxu0 0.0
  %2137 = vmatprep.subr.mxu0 0.0
  %2138 = vmatpush2.msra.mxu0 0.0
  %2139 = vmatprep.subr.mxu0 0.0
  %2140 = vmatpush2.msra.mxu0 0.0
  %2141 = vmatprep.subr.mxu0 0.0
  %2142 = vmatpush2.msra.mxu0 0.0
  %2143 = vmatprep.subr.mxu0 0.0
  %2144 = vmatpush2.msra.mxu0 0.0
  %2145 = vmatprep.subr.mxu0 0.0
  %2146 = vmatpush2.msra.mxu0 0.0
  %2147 = vmatprep.mubr.f32.mxu0 0.0
  %2148 = vmatmul.mubr.f32.gmra.mxu0 %v2081
  %v2149 = vpop.f32.mrf.mxu0
  %v2150 = vadd.f32 0.0, %v2149
  %v2151 = vpop.f32.mrf.mxu0
  %2152 = vdwg.mxu0
  %2153 = vrot.lane.b32.xlu0 %v1308, 64
  %v2154 = vpop.permute.xlu0 %2153
  %v2157 = vsel %vm1317, %v1847, 0
  %2159 = vmatprep.subr.mxu0 0.0
  %2160 = vmatpush1.msra.mxu0 0.0
  %2161 = vmatprep.subr.mxu0 0.0
  %2162 = vmatpush1.msra.mxu0 0.0
  %2163 = vmatprep.subr.mxu0 0.0
  %2164 = vmatpush1.msra.mxu0 0.0
  %2165 = vmatprep.subr.mxu0 0.0
  %2166 = vmatpush1.msra.mxu0 0.0
  %2167 = vmatprep.subr.mxu0 0.0
  %2168 = vmatpush1.msra.mxu0 0.0
  %2169 = vmatprep.subr.mxu0 0.0
  %2170 = vmatpush1.msra.mxu0 0.0
  %2171 = vmatprep.subr.mxu0 0.0
  %2172 = vmatpush1.msra.mxu0 0.0
  %2173 = vmatprep.subr.mxu0 0.0
  %2174 = vmatpush1.msra.mxu0 0.0
  %2175 = vmatprep.subr.mxu0 0.0
  %2176 = vmatpush1.msra.mxu0 0.0
  %2177 = vmatprep.subr.mxu0 0.0
  %2178 = vmatpush1.msra.mxu0 0.0
  %2179 = vmatprep.subr.mxu0 0.0
  %2180 = vmatpush1.msra.mxu0 0.0
  %2181 = vmatprep.subr.mxu0 0.0
  %2182 = vmatpush1.msra.mxu0 0.0
  %2183 = vmatprep.subr.mxu0 0.0
  %2184 = vmatpush1.msra.mxu0 0.0
  %2185 = vmatprep.subr.mxu0 0.0
  %2186 = vmatpush1.msra.mxu0 0.0
  %2187 = vmatprep.subr.mxu0 0.0
  %2188 = vmatpush1.msra.mxu0 0.0
  %2189 = vmatprep.subr.mxu0 0.0
  %2190 = vmatpush1.msra.mxu0 %v2154
  %2191 = vmatprep.subr.mxu0 0.0
  %2192 = vmatpush2.msra.mxu0 0.0
  %2193 = vmatprep.subr.mxu0 0.0
  %2194 = vmatpush2.msra.mxu0 0.0
  %2195 = vmatprep.subr.mxu0 0.0
  %2196 = vmatpush2.msra.mxu0 0.0
  %2197 = vmatprep.subr.mxu0 0.0
  %2198 = vmatpush2.msra.mxu0 0.0
  %2199 = vmatprep.subr.mxu0 0.0
  %2200 = vmatpush2.msra.mxu0 0.0
  %2201 = vmatprep.subr.mxu0 0.0
  %2202 = vmatpush2.msra.mxu0 0.0
  %2203 = vmatprep.subr.mxu0 0.0
  %2204 = vmatpush2.msra.mxu0 0.0
  %2205 = vmatprep.subr.mxu0 0.0
  %2206 = vmatpush2.msra.mxu0 0.0
  %2207 = vmatprep.subr.mxu0 0.0
  %2208 = vmatpush2.msra.mxu0 0.0
  %2209 = vmatprep.subr.mxu0 0.0
  %2210 = vmatpush2.msra.mxu0 0.0
  %2211 = vmatprep.subr.mxu0 0.0
  %2212 = vmatpush2.msra.mxu0 0.0
  %2213 = vmatprep.subr.mxu0 0.0
  %2214 = vmatpush2.msra.mxu0 0.0
  %2215 = vmatprep.subr.mxu0 0.0
  %2216 = vmatpush2.msra.mxu0 0.0
  %2217 = vmatprep.subr.mxu0 0.0
  %2218 = vmatpush2.msra.mxu0 0.0
  %2219 = vmatprep.subr.mxu0 0.0
  %2220 = vmatpush2.msra.mxu0 0.0
  %2221 = vmatprep.subr.mxu0 0.0
  %2222 = vmatpush2.msra.mxu0 0.0
  %2223 = vmatprep.mubr.f32.mxu0 0.0
  %2224 = vmatmul.mubr.f32.gmra.mxu0 %v2157
  %v2225 = vpop.f32.mrf.mxu0
  %v2226 = vadd.f32 0.0, %v2225
  %v2227 = vpop.f32.mrf.mxu0
  %2228 = vdwg.mxu0
  %2229 = vrot.lane.b32.xlu0 %v1311, 64
  %v2230 = vpop.permute.xlu0 %2229
  %v2233 = vsel %vm1317, %v1848, 0
  %2235 = vmatprep.subr.mxu0 0.0
  %2236 = vmatpush1.msra.mxu0 0.0
  %2237 = vmatprep.subr.mxu0 0.0
  %2238 = vmatpush1.msra.mxu0 0.0
  %2239 = vmatprep.subr.mxu0 0.0
  %2240 = vmatpush1.msra.mxu0 0.0
  %2241 = vmatprep.subr.mxu0 0.0
  %2242 = vmatpush1.msra.mxu0 0.0
  %2243 = vmatprep.subr.mxu0 0.0
  %2244 = vmatpush1.msra.mxu0 0.0
  %2245 = vmatprep.subr.mxu0 0.0
  %2246 = vmatpush1.msra.mxu0 0.0
  %2247 = vmatprep.subr.mxu0 0.0
  %2248 = vmatpush1.msra.mxu0 0.0
  %2249 = vmatprep.subr.mxu0 0.0
  %2250 = vmatpush1.msra.mxu0 0.0
  %2251 = vmatprep.subr.mxu0 0.0
  %2252 = vmatpush1.msra.mxu0 0.0
  %2253 = vmatprep.subr.mxu0 0.0
  %2254 = vmatpush1.msra.mxu0 0.0
  %2255 = vmatprep.subr.mxu0 0.0
  %2256 = vmatpush1.msra.mxu0 0.0
  %2257 = vmatprep.subr.mxu0 0.0
  %2258 = vmatpush1.msra.mxu0 0.0
  %2259 = vmatprep.subr.mxu0 0.0
  %2260 = vmatpush1.msra.mxu0 0.0
  %2261 = vmatprep.subr.mxu0 0.0
  %2262 = vmatpush1.msra.mxu0 0.0
  %2263 = vmatprep.subr.mxu0 0.0
  %2264 = vmatpush1.msra.mxu0 0.0
  %2265 = vmatprep.subr.mxu0 0.0
  %2266 = vmatpush1.msra.mxu0 %v2230
  %2267 = vmatprep.subr.mxu0 0.0
  %2268 = vmatpush2.msra.mxu0 0.0
  %2269 = vmatprep.subr.mxu0 0.0
  %2270 = vmatpush2.msra.mxu0 0.0
  %2271 = vmatprep.subr.mxu0 0.0
  %2272 = vmatpush2.msra.mxu0 0.0
  %2273 = vmatprep.subr.mxu0 0.0
  %2274 = vmatpush2.msra.mxu0 0.0
  %2275 = vmatprep.subr.mxu0 0.0
  %2276 = vmatpush2.msra.mxu0 0.0
  %2277 = vmatprep.subr.mxu0 0.0
  %2278 = vmatpush2.msra.mxu0 0.0
  %2279 = vmatprep.subr.mxu0 0.0
  %2280 = vmatpush2.msra.mxu0 0.0
  %2281 = vmatprep.subr.mxu0 0.0
  %2282 = vmatpush2.msra.mxu0 0.0
  %2283 = vmatprep.subr.mxu0 0.0
  %2284 = vmatpush2.msra.mxu0 0.0
  %2285 = vmatprep.subr.mxu0 0.0
  %2286 = vmatpush2.msra.mxu0 0.0
  %2287 = vmatprep.subr.mxu0 0.0
  %2288 = vmatpush2.msra.mxu0 0.0
  %2289 = vmatprep.subr.mxu0 0.0
  %2290 = vmatpush2.msra.mxu0 0.0
  %2291 = vmatprep.subr.mxu0 0.0
  %2292 = vmatpush2.msra.mxu0 0.0
  %2293 = vmatprep.subr.mxu0 0.0
  %2294 = vmatpush2.msra.mxu0 0.0
  %2295 = vmatprep.subr.mxu0 0.0
  %2296 = vmatpush2.msra.mxu0 0.0
  %2297 = vmatprep.subr.mxu0 0.0
  %2298 = vmatpush2.msra.mxu0 0.0
  %2299 = vmatprep.mubr.f32.mxu0 0.0
  %2300 = vmatmul.mubr.f32.gmra.mxu0 %v2233
  %v2301 = vpop.f32.mrf.mxu0
  %v2302 = vadd.f32 0.0, %v2301
  %v2303 = vpop.f32.mrf.mxu0
  %2304 = vdwg.mxu0
  %2305 = vrot.lane.b32.xlu0 %v1292, 120
  %v2306 = vpop.permute.xlu0 %2305
  %2307 = vrot.lane.b32.xlu0 %v1292, 88
  %v2308 = vpop.permute.xlu0 %2307
  %v2309 = vsel %vm1317, %v2306, 0
  %v2311 = vsel %vm1317, %v2308, 0
  %2313 = vmatprep.subr.mxu0 0.0
  %2314 = vmatpush1.xpose.msra.mxu0 0.0
  %2315 = vmatprep.subr.mxu0 0.0
  %2316 = vmatpush1.xpose.msra.mxu0 0.0
  %2317 = vmatprep.subr.mxu0 0.0
  %2318 = vmatpush1.xpose.msra.mxu0 0.0
  %2319 = vmatprep.subr.mxu0 0.0
  %2320 = vmatpush1.xpose.msra.mxu0 0.0
  %2321 = vmatprep.subr.mxu0 0.0
  %2322 = vmatpush1.xpose.msra.mxu0 0.0
  %2323 = vmatprep.subr.mxu0 0.0
  %2324 = vmatpush1.xpose.msra.mxu0 0.0
  %2325 = vmatprep.subr.mxu0 0.0
  %2326 = vmatpush1.xpose.msra.mxu0 0.0
  %2327 = vmatprep.subr.mxu0 0.0
  %2328 = vmatpush1.xpose.msra.mxu0 0.0
  %2329 = vmatprep.subr.mxu0 0.0
  %2330 = vmatpush1.xpose.msra.mxu0 0.0
  %2331 = vmatprep.subr.mxu0 0.0
  %2332 = vmatpush1.xpose.msra.mxu0 0.0
  %2333 = vmatprep.subr.mxu0 0.0
  %2334 = vmatpush1.xpose.msra.mxu0 0.0
  %2335 = vmatprep.subr.mxu0 0.0
  %2336 = vmatpush1.xpose.msra.mxu0 0.0
  %2337 = vmatprep.subr.mxu0 0.0
  %2338 = vmatpush1.xpose.msra.mxu0 0.0
  %2339 = vmatprep.subr.mxu0 0.0
  %2340 = vmatpush1.xpose.msra.mxu0 0.0
  %2341 = vmatprep.subr.mxu0 0.0
  %2342 = vmatpush1.xpose.msra.mxu0 0.0
  %2343 = vmatprep.subr.mxu0 0.0
  %2344 = vmatpush1.xpose.msra.mxu0 %v2311
  %2345 = vmatprep.subr.mxu0 0.0
  %2346 = vmatpush2.xpose.msra.mxu0 0.0
  %2347 = vmatprep.subr.mxu0 0.0
  %2348 = vmatpush2.xpose.msra.mxu0 0.0
  %2349 = vmatprep.subr.mxu0 0.0
  %2350 = vmatpush2.xpose.msra.mxu0 0.0
  %2351 = vmatprep.subr.mxu0 0.0
  %2352 = vmatpush2.xpose.msra.mxu0 0.0
  %2353 = vmatprep.subr.mxu0 0.0
  %2354 = vmatpush2.xpose.msra.mxu0 0.0
  %2355 = vmatprep.subr.mxu0 0.0
  %2356 = vmatpush2.xpose.msra.mxu0 0.0
  %2357 = vmatprep.subr.mxu0 0.0
  %2358 = vmatpush2.xpose.msra.mxu0 0.0
  %2359 = vmatprep.subr.mxu0 0.0
  %2360 = vmatpush2.xpose.msra.mxu0 0.0
  %2361 = vmatprep.subr.mxu0 0.0
  %2362 = vmatpush2.xpose.msra.mxu0 0.0
  %2363 = vmatprep.subr.mxu0 0.0
  %2364 = vmatpush2.xpose.msra.mxu0 0.0
  %2365 = vmatprep.subr.mxu0 0.0
  %2366 = vmatpush2.xpose.msra.mxu0 0.0
  %2367 = vmatprep.subr.mxu0 0.0
  %2368 = vmatpush2.xpose.msra.mxu0 0.0
  %2369 = vmatprep.subr.mxu0 0.0
  %2370 = vmatpush2.xpose.msra.mxu0 0.0
  %2371 = vmatprep.subr.mxu0 0.0
  %2372 = vmatpush2.xpose.msra.mxu0 0.0
  %2373 = vmatprep.subr.mxu0 0.0
  %2374 = vmatpush2.xpose.msra.mxu0 0.0
  %2375 = vmatprep.subr.mxu0 0.0
  %2376 = vmatpush2.xpose.msra.mxu0 0.0
  %2377 = vmatprep.mubr.f32.mxu0 0.0
  %2378 = vmatmul.mubr.f32.gmra.mxu0 %v2309
  %v2379 = vpop.f32.mrf.mxu0
  %v2380 = vadd.f32 0.0, %v2379
  %v2381 = vpop.f32.mrf.mxu0
  %2382 = vdwg.mxu0
  %2383 = vrot.lane.b32.xlu0 %v1295, 120
  %v2384 = vpop.permute.xlu0 %2383
  %2385 = vrot.lane.b32.xlu0 %v1295, 88
  %v2386 = vpop.permute.xlu0 %2385
  %v2387 = vsel %vm1317, %v2384, 0
  %v2389 = vsel %vm1317, %v2386, 0
  %2391 = vmatprep.subr.mxu0 0.0
  %2392 = vmatpush1.xpose.msra.mxu0 0.0
  %2393 = vmatprep.subr.mxu0 0.0
  %2394 = vmatpush1.xpose.msra.mxu0 0.0
  %2395 = vmatprep.subr.mxu0 0.0
  %2396 = vmatpush1.xpose.msra.mxu0 0.0
  %2397 = vmatprep.subr.mxu0 0.0
  %2398 = vmatpush1.xpose.msra.mxu0 0.0
  %2399 = vmatprep.subr.mxu0 0.0
  %2400 = vmatpush1.xpose.msra.mxu0 0.0
  %2401 = vmatprep.subr.mxu0 0.0
  %2402 = vmatpush1.xpose.msra.mxu0 0.0
  %2403 = vmatprep.subr.mxu0 0.0
  %2404 = vmatpush1.xpose.msra.mxu0 0.0
  %2405 = vmatprep.subr.mxu0 0.0
  %2406 = vmatpush1.xpose.msra.mxu0 0.0
  %2407 = vmatprep.subr.mxu0 0.0
  %2408 = vmatpush1.xpose.msra.mxu0 0.0
  %2409 = vmatprep.subr.mxu0 0.0
  %2410 = vmatpush1.xpose.msra.mxu0 0.0
  %2411 = vmatprep.subr.mxu0 0.0
  %2412 = vmatpush1.xpose.msra.mxu0 0.0
  %2413 = vmatprep.subr.mxu0 0.0
  %2414 = vmatpush1.xpose.msra.mxu0 0.0
  %2415 = vmatprep.subr.mxu0 0.0
  %2416 = vmatpush1.xpose.msra.mxu0 0.0
  %2417 = vmatprep.subr.mxu0 0.0
  %2418 = vmatpush1.xpose.msra.mxu0 0.0
  %2419 = vmatprep.subr.mxu0 0.0
  %2420 = vmatpush1.xpose.msra.mxu0 0.0
  %2421 = vmatprep.subr.mxu0 0.0
  %2422 = vmatpush1.xpose.msra.mxu0 %v2389
  %2423 = vmatprep.subr.mxu0 0.0
  %2424 = vmatpush2.xpose.msra.mxu0 0.0
  %2425 = vmatprep.subr.mxu0 0.0
  %2426 = vmatpush2.xpose.msra.mxu0 0.0
  %2427 = vmatprep.subr.mxu0 0.0
  %2428 = vmatpush2.xpose.msra.mxu0 0.0
  %2429 = vmatprep.subr.mxu0 0.0
  %2430 = vmatpush2.xpose.msra.mxu0 0.0
  %2431 = vmatprep.subr.mxu0 0.0
  %2432 = vmatpush2.xpose.msra.mxu0 0.0
  %2433 = vmatprep.subr.mxu0 0.0
  %2434 = vmatpush2.xpose.msra.mxu0 0.0
  %2435 = vmatprep.subr.mxu0 0.0
  %2436 = vmatpush2.xpose.msra.mxu0 0.0
  %2437 = vmatprep.subr.mxu0 0.0
  %2438 = vmatpush2.xpose.msra.mxu0 0.0
  %2439 = vmatprep.subr.mxu0 0.0
  %2440 = vmatpush2.xpose.msra.mxu0 0.0
  %2441 = vmatprep.subr.mxu0 0.0
  %2442 = vmatpush2.xpose.msra.mxu0 0.0
  %2443 = vmatprep.subr.mxu0 0.0
  %2444 = vmatpush2.xpose.msra.mxu0 0.0
  %2445 = vmatprep.subr.mxu0 0.0
  %2446 = vmatpush2.xpose.msra.mxu0 0.0
  %2447 = vmatprep.subr.mxu0 0.0
  %2448 = vmatpush2.xpose.msra.mxu0 0.0
  %2449 = vmatprep.subr.mxu0 0.0
  %2450 = vmatpush2.xpose.msra.mxu0 0.0
  %2451 = vmatprep.subr.mxu0 0.0
  %2452 = vmatpush2.xpose.msra.mxu0 0.0
  %2453 = vmatprep.subr.mxu0 0.0
  %2454 = vmatpush2.xpose.msra.mxu0 0.0
  %2455 = vmatprep.mubr.f32.mxu0 0.0
  %2456 = vmatmul.mubr.f32.gmra.mxu0 %v2387
  %v2457 = vpop.f32.mrf.mxu0
  %v2458 = vadd.f32 0.0, %v2457
  %v2459 = vpop.f32.mrf.mxu0
  %2460 = vdwg.mxu0
  %2461 = vrot.lane.b32.xlu0 %v1300, 120
  %v2462 = vpop.permute.xlu0 %2461
  %2463 = vrot.lane.b32.xlu0 %v1300, 88
  %v2464 = vpop.permute.xlu0 %2463
  %v2465 = vsel %vm1317, %v2462, 0
  %v2467 = vsel %vm1317, %v2464, 0
  %2469 = vmatprep.subr.mxu0 0.0
  %2470 = vmatpush1.xpose.msra.mxu0 0.0
  %2471 = vmatprep.subr.mxu0 0.0
  %2472 = vmatpush1.xpose.msra.mxu0 0.0
  %2473 = vmatprep.subr.mxu0 0.0
  %2474 = vmatpush1.xpose.msra.mxu0 0.0
  %2475 = vmatprep.subr.mxu0 0.0
  %2476 = vmatpush1.xpose.msra.mxu0 0.0
  %2477 = vmatprep.subr.mxu0 0.0
  %2478 = vmatpush1.xpose.msra.mxu0 0.0
  %2479 = vmatprep.subr.mxu0 0.0
  %2480 = vmatpush1.xpose.msra.mxu0 0.0
  %2481 = vmatprep.subr.mxu0 0.0
  %2482 = vmatpush1.xpose.msra.mxu0 0.0
  %2483 = vmatprep.subr.mxu0 0.0
  %2484 = vmatpush1.xpose.msra.mxu0 0.0
  %2485 = vmatprep.subr.mxu0 0.0
  %2486 = vmatpush1.xpose.msra.mxu0 0.0
  %2487 = vmatprep.subr.mxu0 0.0
  %2488 = vmatpush1.xpose.msra.mxu0 0.0
  %2489 = vmatprep.subr.mxu0 0.0
  %2490 = vmatpush1.xpose.msra.mxu0 0.0
  %2491 = vmatprep.subr.mxu0 0.0
  %2492 = vmatpush1.xpose.msra.mxu0 0.0
  %2493 = vmatprep.subr.mxu0 0.0
  %2494 = vmatpush1.xpose.msra.mxu0 0.0
  %2495 = vmatprep.subr.mxu0 0.0
  %2496 = vmatpush1.xpose.msra.mxu0 0.0
  %2497 = vmatprep.subr.mxu0 0.0
  %2498 = vmatpush1.xpose.msra.mxu0 0.0
  %2499 = vmatprep.subr.mxu0 0.0
  %2500 = vmatpush1.xpose.msra.mxu0 %v2467
  %2501 = vmatprep.subr.mxu0 0.0
  %2502 = vmatpush2.xpose.msra.mxu0 0.0
  %2503 = vmatprep.subr.mxu0 0.0
  %2504 = vmatpush2.xpose.msra.mxu0 0.0
  %2505 = vmatprep.subr.mxu0 0.0
  %2506 = vmatpush2.xpose.msra.mxu0 0.0
  %2507 = vmatprep.subr.mxu0 0.0
  %2508 = vmatpush2.xpose.msra.mxu0 0.0
  %2509 = vmatprep.subr.mxu0 0.0
  %2510 = vmatpush2.xpose.msra.mxu0 0.0
  %2511 = vmatprep.subr.mxu0 0.0
  %2512 = vmatpush2.xpose.msra.mxu0 0.0
  %2513 = vmatprep.subr.mxu0 0.0
  %2514 = vmatpush2.xpose.msra.mxu0 0.0
  %2515 = vmatprep.subr.mxu0 0.0
  %2516 = vmatpush2.xpose.msra.mxu0 0.0
  %2517 = vmatprep.subr.mxu0 0.0
  %2518 = vmatpush2.xpose.msra.mxu0 0.0
  %2519 = vmatprep.subr.mxu0 0.0
  %2520 = vmatpush2.xpose.msra.mxu0 0.0
  %2521 = vmatprep.subr.mxu0 0.0
  %2522 = vmatpush2.xpose.msra.mxu0 0.0
  %2523 = vmatprep.subr.mxu0 0.0
  %2524 = vmatpush2.xpose.msra.mxu0 0.0
  %2525 = vmatprep.subr.mxu0 0.0
  %2526 = vmatpush2.xpose.msra.mxu0 0.0
  %2527 = vmatprep.subr.mxu0 0.0
  %2528 = vmatpush2.xpose.msra.mxu0 0.0
  %2529 = vmatprep.subr.mxu0 0.0
  %2530 = vmatpush2.xpose.msra.mxu0 0.0
  %2531 = vmatprep.subr.mxu0 0.0
  %2532 = vmatpush2.xpose.msra.mxu0 0.0
  %2533 = vmatprep.mubr.f32.mxu0 0.0
  %2534 = vmatmul.mubr.f32.gmra.mxu0 %v2465
  %v2535 = vpop.f32.mrf.mxu0
  %v2536 = vadd.f32 0.0, %v2535
  %v2537 = vpop.f32.mrf.mxu0
  %2538 = vdwg.mxu0
  %2539 = vrot.lane.b32.xlu0 %v1303, 120
  %v2540 = vpop.permute.xlu0 %2539
  %2541 = vrot.lane.b32.xlu0 %v1303, 88
  %v2542 = vpop.permute.xlu0 %2541
  %v2543 = vsel %vm1317, %v2540, 0
  %v2545 = vsel %vm1317, %v2542, 0
  %2547 = vmatprep.subr.mxu0 0.0
  %2548 = vmatpush1.xpose.msra.mxu0 0.0
  %2549 = vmatprep.subr.mxu0 0.0
  %2550 = vmatpush1.xpose.msra.mxu0 0.0
  %2551 = vmatprep.subr.mxu0 0.0
  %2552 = vmatpush1.xpose.msra.mxu0 0.0
  %2553 = vmatprep.subr.mxu0 0.0
  %2554 = vmatpush1.xpose.msra.mxu0 0.0
  %2555 = vmatprep.subr.mxu0 0.0
  %2556 = vmatpush1.xpose.msra.mxu0 0.0
  %2557 = vmatprep.subr.mxu0 0.0
  %2558 = vmatpush1.xpose.msra.mxu0 0.0
  %2559 = vmatprep.subr.mxu0 0.0
  %2560 = vmatpush1.xpose.msra.mxu0 0.0
  %2561 = vmatprep.subr.mxu0 0.0
  %2562 = vmatpush1.xpose.msra.mxu0 0.0
  %2563 = vmatprep.subr.mxu0 0.0
  %2564 = vmatpush1.xpose.msra.mxu0 0.0
  %2565 = vmatprep.subr.mxu0 0.0
  %2566 = vmatpush1.xpose.msra.mxu0 0.0
  %2567 = vmatprep.subr.mxu0 0.0
  %2568 = vmatpush1.xpose.msra.mxu0 0.0
  %2569 = vmatprep.subr.mxu0 0.0
  %2570 = vmatpush1.xpose.msra.mxu0 0.0
  %2571 = vmatprep.subr.mxu0 0.0
  %2572 = vmatpush1.xpose.msra.mxu0 0.0
  %2573 = vmatprep.subr.mxu0 0.0
  %2574 = vmatpush1.xpose.msra.mxu0 0.0
  %2575 = vmatprep.subr.mxu0 0.0
  %2576 = vmatpush1.xpose.msra.mxu0 0.0
  %2577 = vmatprep.subr.mxu0 0.0
  %2578 = vmatpush1.xpose.msra.mxu0 %v2545
  %2579 = vmatprep.subr.mxu0 0.0
  %2580 = vmatpush2.xpose.msra.mxu0 0.0
  %2581 = vmatprep.subr.mxu0 0.0
  %2582 = vmatpush2.xpose.msra.mxu0 0.0
  %2583 = vmatprep.subr.mxu0 0.0
  %2584 = vmatpush2.xpose.msra.mxu0 0.0
  %2585 = vmatprep.subr.mxu0 0.0
  %2586 = vmatpush2.xpose.msra.mxu0 0.0
  %2587 = vmatprep.subr.mxu0 0.0
  %2588 = vmatpush2.xpose.msra.mxu0 0.0
  %2589 = vmatprep.subr.mxu0 0.0
  %2590 = vmatpush2.xpose.msra.mxu0 0.0
  %2591 = vmatprep.subr.mxu0 0.0
  %2592 = vmatpush2.xpose.msra.mxu0 0.0
  %2593 = vmatprep.subr.mxu0 0.0
  %2594 = vmatpush2.xpose.msra.mxu0 0.0
  %2595 = vmatprep.subr.mxu0 0.0
  %2596 = vmatpush2.xpose.msra.mxu0 0.0
  %2597 = vmatprep.subr.mxu0 0.0
  %2598 = vmatpush2.xpose.msra.mxu0 0.0
  %2599 = vmatprep.subr.mxu0 0.0
  %2600 = vmatpush2.xpose.msra.mxu0 0.0
  %2601 = vmatprep.subr.mxu0 0.0
  %2602 = vmatpush2.xpose.msra.mxu0 0.0
  %2603 = vmatprep.subr.mxu0 0.0
  %2604 = vmatpush2.xpose.msra.mxu0 0.0
  %2605 = vmatprep.subr.mxu0 0.0
  %2606 = vmatpush2.xpose.msra.mxu0 0.0
  %2607 = vmatprep.subr.mxu0 0.0
  %2608 = vmatpush2.xpose.msra.mxu0 0.0
  %2609 = vmatprep.subr.mxu0 0.0
  %2610 = vmatpush2.xpose.msra.mxu0 0.0
  %2611 = vmatprep.mubr.f32.mxu0 0.0
  %2612 = vmatmul.mubr.f32.gmra.mxu0 %v2543
  %v2613 = vpop.f32.mrf.mxu0
  %v2614 = vadd.f32 0.0, %v2613
  %v2615 = vpop.f32.mrf.mxu0
  %2616 = vdwg.mxu0
  %2617 = vrot.lane.b32.xlu0 %v1308, 120
  %v2618 = vpop.permute.xlu0 %2617
  %2619 = vrot.lane.b32.xlu0 %v1308, 88
  %v2620 = vpop.permute.xlu0 %2619
  %v2621 = vsel %vm1317, %v2618, 0
  %v2623 = vsel %vm1317, %v2620, 0
  %2625 = vmatprep.subr.mxu0 0.0
  %2626 = vmatpush1.xpose.msra.mxu0 0.0
  %2627 = vmatprep.subr.mxu0 0.0
  %2628 = vmatpush1.xpose.msra.mxu0 0.0
  %2629 = vmatprep.subr.mxu0 0.0
  %2630 = vmatpush1.xpose.msra.mxu0 0.0
  %2631 = vmatprep.subr.mxu0 0.0
  %2632 = vmatpush1.xpose.msra.mxu0 0.0
  %2633 = vmatprep.subr.mxu0 0.0
  %2634 = vmatpush1.xpose.msra.mxu0 0.0
  %2635 = vmatprep.subr.mxu0 0.0
  %2636 = vmatpush1.xpose.msra.mxu0 0.0
  %2637 = vmatprep.subr.mxu0 0.0
  %2638 = vmatpush1.xpose.msra.mxu0 0.0
  %2639 = vmatprep.subr.mxu0 0.0
  %2640 = vmatpush1.xpose.msra.mxu0 0.0
  %2641 = vmatprep.subr.mxu0 0.0
  %2642 = vmatpush1.xpose.msra.mxu0 0.0
  %2643 = vmatprep.subr.mxu0 0.0
  %2644 = vmatpush1.xpose.msra.mxu0 0.0
  %2645 = vmatprep.subr.mxu0 0.0
  %2646 = vmatpush1.xpose.msra.mxu0 0.0
  %2647 = vmatprep.subr.mxu0 0.0
  %2648 = vmatpush1.xpose.msra.mxu0 0.0
  %2649 = vmatprep.subr.mxu0 0.0
  %2650 = vmatpush1.xpose.msra.mxu0 0.0
  %2651 = vmatprep.subr.mxu0 0.0
  %2652 = vmatpush1.xpose.msra.mxu0 0.0
  %2653 = vmatprep.subr.mxu0 0.0
  %2654 = vmatpush1.xpose.msra.mxu0 0.0
  %2655 = vmatprep.subr.mxu0 0.0
  %2656 = vmatpush1.xpose.msra.mxu0 %v2623
  %2657 = vmatprep.subr.mxu0 0.0
  %2658 = vmatpush2.xpose.msra.mxu0 0.0
  %2659 = vmatprep.subr.mxu0 0.0
  %2660 = vmatpush2.xpose.msra.mxu0 0.0
  %2661 = vmatprep.subr.mxu0 0.0
  %2662 = vmatpush2.xpose.msra.mxu0 0.0
  %2663 = vmatprep.subr.mxu0 0.0
  %2664 = vmatpush2.xpose.msra.mxu0 0.0
  %2665 = vmatprep.subr.mxu0 0.0
  %2666 = vmatpush2.xpose.msra.mxu0 0.0
  %2667 = vmatprep.subr.mxu0 0.0
  %2668 = vmatpush2.xpose.msra.mxu0 0.0
  %2669 = vmatprep.subr.mxu0 0.0
  %2670 = vmatpush2.xpose.msra.mxu0 0.0
  %2671 = vmatprep.subr.mxu0 0.0
  %2672 = vmatpush2.xpose.msra.mxu0 0.0
  %2673 = vmatprep.subr.mxu0 0.0
  %2674 = vmatpush2.xpose.msra.mxu0 0.0
  %2675 = vmatprep.subr.mxu0 0.0
  %2676 = vmatpush2.xpose.msra.mxu0 0.0
  %2677 = vmatprep.subr.mxu0 0.0
  %2678 = vmatpush2.xpose.msra.mxu0 0.0
  %2679 = vmatprep.subr.mxu0 0.0
  %2680 = vmatpush2.xpose.msra.mxu0 0.0
  %2681 = vmatprep.subr.mxu0 0.0
  %2682 = vmatpush2.xpose.msra.mxu0 0.0
  %2683 = vmatprep.subr.mxu0 0.0
  %2684 = vmatpush2.xpose.msra.mxu0 0.0
  %2685 = vmatprep.subr.mxu0 0.0
  %2686 = vmatpush2.xpose.msra.mxu0 0.0
  %2687 = vmatprep.subr.mxu0 0.0
  %2688 = vmatpush2.xpose.msra.mxu0 0.0
  %2689 = vmatprep.mubr.f32.mxu0 0.0
  %2690 = vmatmul.mubr.f32.gmra.mxu0 %v2621
  %v2691 = vpop.f32.mrf.mxu0
  %v2692 = vadd.f32 0.0, %v2691
  %v2693 = vpop.f32.mrf.mxu0
  %2694 = vdwg.mxu0
  %2695 = vrot.lane.b32.xlu0 %v1311, 120
  %v2696 = vpop.permute.xlu0 %2695
  %2697 = vrot.lane.b32.xlu0 %v1311, 88
  %v2698 = vpop.permute.xlu0 %2697
  %v2699 = vsel %vm1317, %v2696, 0
  %v2701 = vsel %vm1317, %v2698, 0
  %2703 = vmatprep.subr.mxu0 0.0
  %2704 = vmatpush1.xpose.msra.mxu0 0.0
  %2705 = vmatprep.subr.mxu0 0.0
  %2706 = vmatpush1.xpose.msra.mxu0 0.0
  %2707 = vmatprep.subr.mxu0 0.0
  %2708 = vmatpush1.xpose.msra.mxu0 0.0
  %2709 = vmatprep.subr.mxu0 0.0
  %2710 = vmatpush1.xpose.msra.mxu0 0.0
  %2711 = vmatprep.subr.mxu0 0.0
  %2712 = vmatpush1.xpose.msra.mxu0 0.0
  %2713 = vmatprep.subr.mxu0 0.0
  %2714 = vmatpush1.xpose.msra.mxu0 0.0
  %2715 = vmatprep.subr.mxu0 0.0
  %2716 = vmatpush1.xpose.msra.mxu0 0.0
  %2717 = vmatprep.subr.mxu0 0.0
  %2718 = vmatpush1.xpose.msra.mxu0 0.0
  %2719 = vmatprep.subr.mxu0 0.0
  %2720 = vmatpush1.xpose.msra.mxu0 0.0
  %2721 = vmatprep.subr.mxu0 0.0
  %2722 = vmatpush1.xpose.msra.mxu0 0.0
  %2723 = vmatprep.subr.mxu0 0.0
  %2724 = vmatpush1.xpose.msra.mxu0 0.0
  %2725 = vmatprep.subr.mxu0 0.0
  %2726 = vmatpush1.xpose.msra.mxu0 0.0
  %2727 = vmatprep.subr.mxu0 0.0
  %2728 = vmatpush1.xpose.msra.mxu0 0.0
  %2729 = vmatprep.subr.mxu0 0.0
  %2730 = vmatpush1.xpose.msra.mxu0 0.0
  %2731 = vmatprep.subr.mxu0 0.0
  %2732 = vmatpush1.xpose.msra.mxu0 0.0
  %2733 = vmatprep.subr.mxu0 0.0
  %2734 = vmatpush1.xpose.msra.mxu0 %v2701
  %2735 = vmatprep.subr.mxu0 0.0
  %2736 = vmatpush2.xpose.msra.mxu0 0.0
  %2737 = vmatprep.subr.mxu0 0.0
  %2738 = vmatpush2.xpose.msra.mxu0 0.0
  %2739 = vmatprep.subr.mxu0 0.0
  %2740 = vmatpush2.xpose.msra.mxu0 0.0
  %2741 = vmatprep.subr.mxu0 0.0
  %2742 = vmatpush2.xpose.msra.mxu0 0.0
  %2743 = vmatprep.subr.mxu0 0.0
  %2744 = vmatpush2.xpose.msra.mxu0 0.0
  %2745 = vmatprep.subr.mxu0 0.0
  %2746 = vmatpush2.xpose.msra.mxu0 0.0
  %2747 = vmatprep.subr.mxu0 0.0
  %2748 = vmatpush2.xpose.msra.mxu0 0.0
  %2749 = vmatprep.subr.mxu0 0.0
  %2750 = vmatpush2.xpose.msra.mxu0 0.0
  %2751 = vmatprep.subr.mxu0 0.0
  %2752 = vmatpush2.xpose.msra.mxu0 0.0
  %2753 = vmatprep.subr.mxu0 0.0
  %2754 = vmatpush2.xpose.msra.mxu0 0.0
  %2755 = vmatprep.subr.mxu0 0.0
  %2756 = vmatpush2.xpose.msra.mxu0 0.0
  %2757 = vmatprep.subr.mxu0 0.0
  %2758 = vmatpush2.xpose.msra.mxu0 0.0
  %2759 = vmatprep.subr.mxu0 0.0
  %2760 = vmatpush2.xpose.msra.mxu0 0.0
  %2761 = vmatprep.subr.mxu0 0.0
  %2762 = vmatpush2.xpose.msra.mxu0 0.0
  %2763 = vmatprep.subr.mxu0 0.0
  %2764 = vmatpush2.xpose.msra.mxu0 0.0
  %2765 = vmatprep.subr.mxu0 0.0
  %2766 = vmatpush2.xpose.msra.mxu0 0.0
  %2767 = vmatprep.mubr.f32.mxu0 0.0
  %2768 = vmatmul.mubr.f32.gmra.mxu0 %v2699
  %v2769 = vpop.f32.mrf.mxu0
  %v2770 = vadd.f32 0.0, %v2769
  %v2771 = vpop.f32.mrf.mxu0
  %2772 = vdwg.mxu0
  %v2773 = vmul.f32 %v2380, 0.35355338
  %v2774 = vmul.f32 %v2458, 0.35355338
  %v2775 = vmul.f32 %v2536, 0.35355338
  %v2776 = vmul.f32 %v2614, 0.35355338
  %v2777 = vmul.f32 %v2692, 0.35355338
  %v2778 = vmul.f32 %v2770, 0.35355338
  %v2779 = vsel %vm1317, %v2773, -inf
  %2780 = vmax.xlane.f32.xlu0 %v2779
  %v2781 = vpop.xlane.xlu0 %2780
  %v2782 = vsel %vm1317, %v2774, -inf
  %2783 = vmax.xlane.f32.xlu0 %v2782
  %v2784 = vpop.xlane.xlu0 %2783
  %v2785 = vsel %vm1317, %v2775, -inf
  %2786 = vmax.xlane.f32.xlu0 %v2785
  %v2787 = vpop.xlane.xlu0 %2786
  %v2788 = vsel %vm1317, %v2776, -inf
  %2789 = vmax.xlane.f32.xlu0 %v2788
  %v2790 = vpop.xlane.xlu0 %2789
  %v2791 = vsel %vm1317, %v2777, -inf
  %2792 = vmax.xlane.f32.xlu0 %v2791
  %v2793 = vpop.xlane.xlu0 %2792
  %v2794 = vsel %vm1317, %v2778, -inf
  %2795 = vmax.xlane.f32.xlu0 %v2794
  %v2796 = vpop.xlane.xlu0 %2795
  %v2797 = vsub.f32 %v2773, %v2781
  %v2798 = vsub.f32 %v2774, %v2784
  %v2799 = vsub.f32 %v2775, %v2787
  %v2800 = vsub.f32 %v2776, %v2790
  %v2801 = vsub.f32 %v2777, %v2793
  %v2802 = vsub.f32 %v2778, %v2796
  %v2803 = vmul.f32 %v2797, 1.442695
  %v2804 = vpow.pop %v2803
  %v2805 = vmul.f32 %v2798, 1.442695
  %v2806 = vpow.pop %v2805
  %v2807 = vmul.f32 %v2799, 1.442695
  %v2808 = vpow.pop %v2807
  %v2809 = vmul.f32 %v2800, 1.442695
  %v2810 = vpow.pop %v2809
  %v2811 = vmul.f32 %v2801, 1.442695
  %v2812 = vpow.pop %v2811
  %v2813 = vmul.f32 %v2802, 1.442695
  %v2814 = vpow.pop %v2813
  %v2815 = vsel %vm1317, %v2804, 0.0
  %2816 = vadd.xlane.f32.xlu0 %v2815
  %v2817 = vpop.xlane.xlu0 %2816
  %v2818 = vsel %vm1317, %v2806, 0.0
  %2819 = vadd.xlane.f32.xlu0 %v2818
  %v2820 = vpop.xlane.xlu0 %2819
  %v2821 = vsel %vm1317, %v2808, 0.0
  %2822 = vadd.xlane.f32.xlu0 %v2821
  %v2823 = vpop.xlane.xlu0 %2822
  %v2824 = vsel %vm1317, %v2810, 0.0
  %2825 = vadd.xlane.f32.xlu0 %v2824
  %v2826 = vpop.xlane.xlu0 %2825
  %v2827 = vsel %vm1317, %v2812, 0.0
  %2828 = vadd.xlane.f32.xlu0 %v2827
  %v2829 = vpop.xlane.xlu0 %2828
  %v2830 = vsel %vm1317, %v2814, 0.0
  %2831 = vadd.xlane.f32.xlu0 %v2830
  %v2832 = vpop.xlane.xlu0 %2831
  %v2833 = vrcp.pop %v2817
  %v2834 = vrcp.pop %v2820
  %v2835 = vrcp.pop %v2823
  %v2836 = vrcp.pop %v2826
  %v2837 = vrcp.pop %v2829
  %v2838 = vrcp.pop %v2832
  %v2839 = vmul.f32 %v2804, %v2833
  %v2840 = vmul.f32 %v2806, %v2834
  %v2841 = vmul.f32 %v2808, %v2835
  %v2842 = vmul.f32 %v2810, %v2836
  %v2843 = vmul.f32 %v2812, %v2837
  %v2844 = vmul.f32 %v2814, %v2838
  %2845 = vrot.lane.b32.xlu0 %v1292, 56
  %v2846 = vpop.permute.xlu0 %2845
  %v2849 = vsel %vm1317, %v2839, 0
  %2851 = vmatprep.subr.mxu0 0.0
  %2852 = vmatpush1.msra.mxu0 0.0
  %2853 = vmatprep.subr.mxu0 0.0
  %2854 = vmatpush1.msra.mxu0 0.0
  %2855 = vmatprep.subr.mxu0 0.0
  %2856 = vmatpush1.msra.mxu0 0.0
  %2857 = vmatprep.subr.mxu0 0.0
  %2858 = vmatpush1.msra.mxu0 0.0
  %2859 = vmatprep.subr.mxu0 0.0
  %2860 = vmatpush1.msra.mxu0 0.0
  %2861 = vmatprep.subr.mxu0 0.0
  %2862 = vmatpush1.msra.mxu0 0.0
  %2863 = vmatprep.subr.mxu0 0.0
  %2864 = vmatpush1.msra.mxu0 0.0
  %2865 = vmatprep.subr.mxu0 0.0
  %2866 = vmatpush1.msra.mxu0 0.0
  %2867 = vmatprep.subr.mxu0 0.0
  %2868 = vmatpush1.msra.mxu0 0.0
  %2869 = vmatprep.subr.mxu0 0.0
  %2870 = vmatpush1.msra.mxu0 0.0
  %2871 = vmatprep.subr.mxu0 0.0
  %2872 = vmatpush1.msra.mxu0 0.0
  %2873 = vmatprep.subr.mxu0 0.0
  %2874 = vmatpush1.msra.mxu0 0.0
  %2875 = vmatprep.subr.mxu0 0.0
  %2876 = vmatpush1.msra.mxu0 0.0
  %2877 = vmatprep.subr.mxu0 0.0
  %2878 = vmatpush1.msra.mxu0 0.0
  %2879 = vmatprep.subr.mxu0 0.0
  %2880 = vmatpush1.msra.mxu0 0.0
  %2881 = vmatprep.subr.mxu0 0.0
  %2882 = vmatpush1.msra.mxu0 %v2846
  %2883 = vmatprep.subr.mxu0 0.0
  %2884 = vmatpush2.msra.mxu0 0.0
  %2885 = vmatprep.subr.mxu0 0.0
  %2886 = vmatpush2.msra.mxu0 0.0
  %2887 = vmatprep.subr.mxu0 0.0
  %2888 = vmatpush2.msra.mxu0 0.0
  %2889 = vmatprep.subr.mxu0 0.0
  %2890 = vmatpush2.msra.mxu0 0.0
  %2891 = vmatprep.subr.mxu0 0.0
  %2892 = vmatpush2.msra.mxu0 0.0
  %2893 = vmatprep.subr.mxu0 0.0
  %2894 = vmatpush2.msra.mxu0 0.0
  %2895 = vmatprep.subr.mxu0 0.0
  %2896 = vmatpush2.msra.mxu0 0.0
  %2897 = vmatprep.subr.mxu0 0.0
  %2898 = vmatpush2.msra.mxu0 0.0
  %2899 = vmatprep.subr.mxu0 0.0
  %2900 = vmatpush2.msra.mxu0 0.0
  %2901 = vmatprep.subr.mxu0 0.0
  %2902 = vmatpush2.msra.mxu0 0.0
  %2903 = vmatprep.subr.mxu0 0.0
  %2904 = vmatpush2.msra.mxu0 0.0
  %2905 = vmatprep.subr.mxu0 0.0
  %2906 = vmatpush2.msra.mxu0 0.0
  %2907 = vmatprep.subr.mxu0 0.0
  %2908 = vmatpush2.msra.mxu0 0.0
  %2909 = vmatprep.subr.mxu0 0.0
  %2910 = vmatpush2.msra.mxu0 0.0
  %2911 = vmatprep.subr.mxu0 0.0
  %2912 = vmatpush2.msra.mxu0 0.0
  %2913 = vmatprep.subr.mxu0 0.0
  %2914 = vmatpush2.msra.mxu0 0.0
  %2915 = vmatprep.mubr.f32.mxu0 0.0
  %2916 = vmatmul.mubr.f32.gmra.mxu0 %v2849
  %v2917 = vpop.f32.mrf.mxu0
  %v2918 = vadd.f32 0.0, %v2917
  %v2919 = vpop.f32.mrf.mxu0
  %2920 = vdwg.mxu0
  %2921 = vrot.lane.b32.xlu0 %v1295, 56
  %v2922 = vpop.permute.xlu0 %2921
  %v2925 = vsel %vm1317, %v2840, 0
  %2927 = vmatprep.subr.mxu0 0.0
  %2928 = vmatpush1.msra.mxu0 0.0
  %2929 = vmatprep.subr.mxu0 0.0
  %2930 = vmatpush1.msra.mxu0 0.0
  %2931 = vmatprep.subr.mxu0 0.0
  %2932 = vmatpush1.msra.mxu0 0.0
  %2933 = vmatprep.subr.mxu0 0.0
  %2934 = vmatpush1.msra.mxu0 0.0
  %2935 = vmatprep.subr.mxu0 0.0
  %2936 = vmatpush1.msra.mxu0 0.0
  %2937 = vmatprep.subr.mxu0 0.0
  %2938 = vmatpush1.msra.mxu0 0.0
  %2939 = vmatprep.subr.mxu0 0.0
  %2940 = vmatpush1.msra.mxu0 0.0
  %2941 = vmatprep.subr.mxu0 0.0
  %2942 = vmatpush1.msra.mxu0 0.0
  %2943 = vmatprep.subr.mxu0 0.0
  %2944 = vmatpush1.msra.mxu0 0.0
  %2945 = vmatprep.subr.mxu0 0.0
  %2946 = vmatpush1.msra.mxu0 0.0
  %2947 = vmatprep.subr.mxu0 0.0
  %2948 = vmatpush1.msra.mxu0 0.0
  %2949 = vmatprep.subr.mxu0 0.0
  %2950 = vmatpush1.msra.mxu0 0.0
  %2951 = vmatprep.subr.mxu0 0.0
  %2952 = vmatpush1.msra.mxu0 0.0
  %2953 = vmatprep.subr.mxu0 0.0
  %2954 = vmatpush1.msra.mxu0 0.0
  %2955 = vmatprep.subr.mxu0 0.0
  %2956 = vmatpush1.msra.mxu0 0.0
  %2957 = vmatprep.subr.mxu0 0.0
  %2958 = vmatpush1.msra.mxu0 %v2922
  %2959 = vmatprep.subr.mxu0 0.0
  %2960 = vmatpush2.msra.mxu0 0.0
  %2961 = vmatprep.subr.mxu0 0.0
  %2962 = vmatpush2.msra.mxu0 0.0
  %2963 = vmatprep.subr.mxu0 0.0
  %2964 = vmatpush2.msra.mxu0 0.0
  %2965 = vmatprep.subr.mxu0 0.0
  %2966 = vmatpush2.msra.mxu0 0.0
  %2967 = vmatprep.subr.mxu0 0.0
  %2968 = vmatpush2.msra.mxu0 0.0
  %2969 = vmatprep.subr.mxu0 0.0
  %2970 = vmatpush2.msra.mxu0 0.0
  %2971 = vmatprep.subr.mxu0 0.0
  %2972 = vmatpush2.msra.mxu0 0.0
  %2973 = vmatprep.subr.mxu0 0.0
  %2974 = vmatpush2.msra.mxu0 0.0
  %2975 = vmatprep.subr.mxu0 0.0
  %2976 = vmatpush2.msra.mxu0 0.0
  %2977 = vmatprep.subr.mxu0 0.0
  %2978 = vmatpush2.msra.mxu0 0.0
  %2979 = vmatprep.subr.mxu0 0.0
  %2980 = vmatpush2.msra.mxu0 0.0
  %2981 = vmatprep.subr.mxu0 0.0
  %2982 = vmatpush2.msra.mxu0 0.0
  %2983 = vmatprep.subr.mxu0 0.0
  %2984 = vmatpush2.msra.mxu0 0.0
  %2985 = vmatprep.subr.mxu0 0.0
  %2986 = vmatpush2.msra.mxu0 0.0
  %2987 = vmatprep.subr.mxu0 0.0
  %2988 = vmatpush2.msra.mxu0 0.0
  %2989 = vmatprep.subr.mxu0 0.0
  %2990 = vmatpush2.msra.mxu0 0.0
  %2991 = vmatprep.mubr.f32.mxu0 0.0
  %2992 = vmatmul.mubr.f32.gmra.mxu0 %v2925
  %v2993 = vpop.f32.mrf.mxu0
  %v2994 = vadd.f32 0.0, %v2993
  %v2995 = vpop.f32.mrf.mxu0
  %2996 = vdwg.mxu0
  %2997 = vrot.lane.b32.xlu0 %v1300, 56
  %v2998 = vpop.permute.xlu0 %2997
  %v3001 = vsel %vm1317, %v2841, 0
  %3003 = vmatprep.subr.mxu0 0.0
  %3004 = vmatpush1.msra.mxu0 0.0
  %3005 = vmatprep.subr.mxu0 0.0
  %3006 = vmatpush1.msra.mxu0 0.0
  %3007 = vmatprep.subr.mxu0 0.0
  %3008 = vmatpush1.msra.mxu0 0.0
  %3009 = vmatprep.subr.mxu0 0.0
  %3010 = vmatpush1.msra.mxu0 0.0
  %3011 = vmatprep.subr.mxu0 0.0
  %3012 = vmatpush1.msra.mxu0 0.0
  %3013 = vmatprep.subr.mxu0 0.0
  %3014 = vmatpush1.msra.mxu0 0.0
  %3015 = vmatprep.subr.mxu0 0.0
  %3016 = vmatpush1.msra.mxu0 0.0
  %3017 = vmatprep.subr.mxu0 0.0
  %3018 = vmatpush1.msra.mxu0 0.0
  %3019 = vmatprep.subr.mxu0 0.0
  %3020 = vmatpush1.msra.mxu0 0.0
  %3021 = vmatprep.subr.mxu0 0.0
  %3022 = vmatpush1.msra.mxu0 0.0
  %3023 = vmatprep.subr.mxu0 0.0
  %3024 = vmatpush1.msra.mxu0 0.0
  %3025 = vmatprep.subr.mxu0 0.0
  %3026 = vmatpush1.msra.mxu0 0.0
  %3027 = vmatprep.subr.mxu0 0.0
  %3028 = vmatpush1.msra.mxu0 0.0
  %3029 = vmatprep.subr.mxu0 0.0
  %3030 = vmatpush1.msra.mxu0 0.0
  %3031 = vmatprep.subr.mxu0 0.0
  %3032 = vmatpush1.msra.mxu0 0.0
  %3033 = vmatprep.subr.mxu0 0.0
  %3034 = vmatpush1.msra.mxu0 %v2998
  %3035 = vmatprep.subr.mxu0 0.0
  %3036 = vmatpush2.msra.mxu0 0.0
  %3037 = vmatprep.subr.mxu0 0.0
  %3038 = vmatpush2.msra.mxu0 0.0
  %3039 = vmatprep.subr.mxu0 0.0
  %3040 = vmatpush2.msra.mxu0 0.0
  %3041 = vmatprep.subr.mxu0 0.0
  %3042 = vmatpush2.msra.mxu0 0.0
  %3043 = vmatprep.subr.mxu0 0.0
  %3044 = vmatpush2.msra.mxu0 0.0
  %3045 = vmatprep.subr.mxu0 0.0
  %3046 = vmatpush2.msra.mxu0 0.0
  %3047 = vmatprep.subr.mxu0 0.0
  %3048 = vmatpush2.msra.mxu0 0.0
  %3049 = vmatprep.subr.mxu0 0.0
  %3050 = vmatpush2.msra.mxu0 0.0
  %3051 = vmatprep.subr.mxu0 0.0
  %3052 = vmatpush2.msra.mxu0 0.0
  %3053 = vmatprep.subr.mxu0 0.0
  %3054 = vmatpush2.msra.mxu0 0.0
  %3055 = vmatprep.subr.mxu0 0.0
  %3056 = vmatpush2.msra.mxu0 0.0
  %3057 = vmatprep.subr.mxu0 0.0
  %3058 = vmatpush2.msra.mxu0 0.0
  %3059 = vmatprep.subr.mxu0 0.0
  %3060 = vmatpush2.msra.mxu0 0.0
  %3061 = vmatprep.subr.mxu0 0.0
  %3062 = vmatpush2.msra.mxu0 0.0
  %3063 = vmatprep.subr.mxu0 0.0
  %3064 = vmatpush2.msra.mxu0 0.0
  %3065 = vmatprep.subr.mxu0 0.0
  %3066 = vmatpush2.msra.mxu0 0.0
  %3067 = vmatprep.mubr.f32.mxu0 0.0
  %3068 = vmatmul.mubr.f32.gmra.mxu0 %v3001
  %v3069 = vpop.f32.mrf.mxu0
  %v3070 = vadd.f32 0.0, %v3069
  %v3071 = vpop.f32.mrf.mxu0
  %3072 = vdwg.mxu0
  %3073 = vrot.lane.b32.xlu0 %v1303, 56
  %v3074 = vpop.permute.xlu0 %3073
  %v3077 = vsel %vm1317, %v2842, 0
  %3079 = vmatprep.subr.mxu0 0.0
  %3080 = vmatpush1.msra.mxu0 0.0
  %3081 = vmatprep.subr.mxu0 0.0
  %3082 = vmatpush1.msra.mxu0 0.0
  %3083 = vmatprep.subr.mxu0 0.0
  %3084 = vmatpush1.msra.mxu0 0.0
  %3085 = vmatprep.subr.mxu0 0.0
  %3086 = vmatpush1.msra.mxu0 0.0
  %3087 = vmatprep.subr.mxu0 0.0
  %3088 = vmatpush1.msra.mxu0 0.0
  %3089 = vmatprep.subr.mxu0 0.0
  %3090 = vmatpush1.msra.mxu0 0.0
  %3091 = vmatprep.subr.mxu0 0.0
  %3092 = vmatpush1.msra.mxu0 0.0
  %3093 = vmatprep.subr.mxu0 0.0
  %3094 = vmatpush1.msra.mxu0 0.0
  %3095 = vmatprep.subr.mxu0 0.0
  %3096 = vmatpush1.msra.mxu0 0.0
  %3097 = vmatprep.subr.mxu0 0.0
  %3098 = vmatpush1.msra.mxu0 0.0
  %3099 = vmatprep.subr.mxu0 0.0
  %3100 = vmatpush1.msra.mxu0 0.0
  %3101 = vmatprep.subr.mxu0 0.0
  %3102 = vmatpush1.msra.mxu0 0.0
  %3103 = vmatprep.subr.mxu0 0.0
  %3104 = vmatpush1.msra.mxu0 0.0
  %3105 = vmatprep.subr.mxu0 0.0
  %3106 = vmatpush1.msra.mxu0 0.0
  %3107 = vmatprep.subr.mxu0 0.0
  %3108 = vmatpush1.msra.mxu0 0.0
  %3109 = vmatprep.subr.mxu0 0.0
  %3110 = vmatpush1.msra.mxu0 %v3074
  %3111 = vmatprep.subr.mxu0 0.0
  %3112 = vmatpush2.msra.mxu0 0.0
  %3113 = vmatprep.subr.mxu0 0.0
  %3114 = vmatpush2.msra.mxu0 0.0
  %3115 = vmatprep.subr.mxu0 0.0
  %3116 = vmatpush2.msra.mxu0 0.0
  %3117 = vmatprep.subr.mxu0 0.0
  %3118 = vmatpush2.msra.mxu0 0.0
  %3119 = vmatprep.subr.mxu0 0.0
  %3120 = vmatpush2.msra.mxu0 0.0
  %3121 = vmatprep.subr.mxu0 0.0
  %3122 = vmatpush2.msra.mxu0 0.0
  %3123 = vmatprep.subr.mxu0 0.0
  %3124 = vmatpush2.msra.mxu0 0.0
  %3125 = vmatprep.subr.mxu0 0.0
  %3126 = vmatpush2.msra.mxu0 0.0
  %3127 = vmatprep.subr.mxu0 0.0
  %3128 = vmatpush2.msra.mxu0 0.0
  %3129 = vmatprep.subr.mxu0 0.0
  %3130 = vmatpush2.msra.mxu0 0.0
  %3131 = vmatprep.subr.mxu0 0.0
  %3132 = vmatpush2.msra.mxu0 0.0
  %3133 = vmatprep.subr.mxu0 0.0
  %3134 = vmatpush2.msra.mxu0 0.0
  %3135 = vmatprep.subr.mxu0 0.0
  %3136 = vmatpush2.msra.mxu0 0.0
  %3137 = vmatprep.subr.mxu0 0.0
  %3138 = vmatpush2.msra.mxu0 0.0
  %3139 = vmatprep.subr.mxu0 0.0
  %3140 = vmatpush2.msra.mxu0 0.0
  %3141 = vmatprep.subr.mxu0 0.0
  %3142 = vmatpush2.msra.mxu0 0.0
  %3143 = vmatprep.mubr.f32.mxu0 0.0
  %3144 = vmatmul.mubr.f32.gmra.mxu0 %v3077
  %v3145 = vpop.f32.mrf.mxu0
  %v3146 = vadd.f32 0.0, %v3145
  %v3147 = vpop.f32.mrf.mxu0
  %3148 = vdwg.mxu0
  %3149 = vrot.lane.b32.xlu0 %v1308, 56
  %v3150 = vpop.permute.xlu0 %3149
  %v3153 = vsel %vm1317, %v2843, 0
  %3155 = vmatprep.subr.mxu0 0.0
  %3156 = vmatpush1.msra.mxu0 0.0
  %3157 = vmatprep.subr.mxu0 0.0
  %3158 = vmatpush1.msra.mxu0 0.0
  %3159 = vmatprep.subr.mxu0 0.0
  %3160 = vmatpush1.msra.mxu0 0.0
  %3161 = vmatprep.subr.mxu0 0.0
  %3162 = vmatpush1.msra.mxu0 0.0
  %3163 = vmatprep.subr.mxu0 0.0
  %3164 = vmatpush1.msra.mxu0 0.0
  %3165 = vmatprep.subr.mxu0 0.0
  %3166 = vmatpush1.msra.mxu0 0.0
  %3167 = vmatprep.subr.mxu0 0.0
  %3168 = vmatpush1.msra.mxu0 0.0
  %3169 = vmatprep.subr.mxu0 0.0
  %3170 = vmatpush1.msra.mxu0 0.0
  %3171 = vmatprep.subr.mxu0 0.0
  %3172 = vmatpush1.msra.mxu0 0.0
  %3173 = vmatprep.subr.mxu0 0.0
  %3174 = vmatpush1.msra.mxu0 0.0
  %3175 = vmatprep.subr.mxu0 0.0
  %3176 = vmatpush1.msra.mxu0 0.0
  %3177 = vmatprep.subr.mxu0 0.0
  %3178 = vmatpush1.msra.mxu0 0.0
  %3179 = vmatprep.subr.mxu0 0.0
  %3180 = vmatpush1.msra.mxu0 0.0
  %3181 = vmatprep.subr.mxu0 0.0
  %3182 = vmatpush1.msra.mxu0 0.0
  %3183 = vmatprep.subr.mxu0 0.0
  %3184 = vmatpush1.msra.mxu0 0.0
  %3185 = vmatprep.subr.mxu0 0.0
  %3186 = vmatpush1.msra.mxu0 %v3150
  %3187 = vmatprep.subr.mxu0 0.0
  %3188 = vmatpush2.msra.mxu0 0.0
  %3189 = vmatprep.subr.mxu0 0.0
  %3190 = vmatpush2.msra.mxu0 0.0
  %3191 = vmatprep.subr.mxu0 0.0
  %3192 = vmatpush2.msra.mxu0 0.0
  %3193 = vmatprep.subr.mxu0 0.0
  %3194 = vmatpush2.msra.mxu0 0.0
  %3195 = vmatprep.subr.mxu0 0.0
  %3196 = vmatpush2.msra.mxu0 0.0
  %3197 = vmatprep.subr.mxu0 0.0
  %3198 = vmatpush2.msra.mxu0 0.0
  %3199 = vmatprep.subr.mxu0 0.0
  %3200 = vmatpush2.msra.mxu0 0.0
  %3201 = vmatprep.subr.mxu0 0.0
  %3202 = vmatpush2.msra.mxu0 0.0
  %3203 = vmatprep.subr.mxu0 0.0
  %3204 = vmatpush2.msra.mxu0 0.0
  %3205 = vmatprep.subr.mxu0 0.0
  %3206 = vmatpush2.msra.mxu0 0.0
  %3207 = vmatprep.subr.mxu0 0.0
  %3208 = vmatpush2.msra.mxu0 0.0
  %3209 = vmatprep.subr.mxu0 0.0
  %3210 = vmatpush2.msra.mxu0 0.0
  %3211 = vmatprep.subr.mxu0 0.0
  %3212 = vmatpush2.msra.mxu0 0.0
  %3213 = vmatprep.subr.mxu0 0.0
  %3214 = vmatpush2.msra.mxu0 0.0
  %3215 = vmatprep.subr.mxu0 0.0
  %3216 = vmatpush2.msra.mxu0 0.0
  %3217 = vmatprep.subr.mxu0 0.0
  %3218 = vmatpush2.msra.mxu0 0.0
  %3219 = vmatprep.mubr.f32.mxu0 0.0
  %3220 = vmatmul.mubr.f32.gmra.mxu0 %v3153
  %v3221 = vpop.f32.mrf.mxu0
  %v3222 = vadd.f32 0.0, %v3221
  %v3223 = vpop.f32.mrf.mxu0
  %3224 = vdwg.mxu0
  %3225 = vrot.lane.b32.xlu0 %v1311, 56
  %v3226 = vpop.permute.xlu0 %3225
  %v3229 = vsel %vm1317, %v2844, 0
  %3231 = vmatprep.subr.mxu0 0.0
  %3232 = vmatpush1.msra.mxu0 0.0
  %3233 = vmatprep.subr.mxu0 0.0
  %3234 = vmatpush1.msra.mxu0 0.0
  %3235 = vmatprep.subr.mxu0 0.0
  %3236 = vmatpush1.msra.mxu0 0.0
  %3237 = vmatprep.subr.mxu0 0.0
  %3238 = vmatpush1.msra.mxu0 0.0
  %3239 = vmatprep.subr.mxu0 0.0
  %3240 = vmatpush1.msra.mxu0 0.0
  %3241 = vmatprep.subr.mxu0 0.0
  %3242 = vmatpush1.msra.mxu0 0.0
  %3243 = vmatprep.subr.mxu0 0.0
  %3244 = vmatpush1.msra.mxu0 0.0
  %3245 = vmatprep.subr.mxu0 0.0
  %3246 = vmatpush1.msra.mxu0 0.0
  %3247 = vmatprep.subr.mxu0 0.0
  %3248 = vmatpush1.msra.mxu0 0.0
  %3249 = vmatprep.subr.mxu0 0.0
  %3250 = vmatpush1.msra.mxu0 0.0
  %3251 = vmatprep.subr.mxu0 0.0
  %3252 = vmatpush1.msra.mxu0 0.0
  %3253 = vmatprep.subr.mxu0 0.0
  %3254 = vmatpush1.msra.mxu0 0.0
  %3255 = vmatprep.subr.mxu0 0.0
  %3256 = vmatpush1.msra.mxu0 0.0
  %3257 = vmatprep.subr.mxu0 0.0
  %3258 = vmatpush1.msra.mxu0 0.0
  %3259 = vmatprep.subr.mxu0 0.0
  %3260 = vmatpush1.msra.mxu0 0.0
  %3261 = vmatprep.subr.mxu0 0.0
  %3262 = vmatpush1.msra.mxu0 %v3226
  %3263 = vmatprep.subr.mxu0 0.0
  %3264 = vmatpush2.msra.mxu0 0.0
  %3265 = vmatprep.subr.mxu0 0.0
  %3266 = vmatpush2.msra.mxu0 0.0
  %3267 = vmatprep.subr.mxu0 0.0
  %3268 = vmatpush2.msra.mxu0 0.0
  %3269 = vmatprep.subr.mxu0 0.0
  %3270 = vmatpush2.msra.mxu0 0.0
  %3271 = vmatprep.subr.mxu0 0.0
  %3272 = vmatpush2.msra.mxu0 0.0
  %3273 = vmatprep.subr.mxu0 0.0
  %3274 = vmatpush2.msra.mxu0 0.0
  %3275 = vmatprep.subr.mxu0 0.0
  %3276 = vmatpush2.msra.mxu0 0.0
  %3277 = vmatprep.subr.mxu0 0.0
  %3278 = vmatpush2.msra.mxu0 0.0
  %3279 = vmatprep.subr.mxu0 0.0
  %3280 = vmatpush2.msra.mxu0 0.0
  %3281 = vmatprep.subr.mxu0 0.0
  %3282 = vmatpush2.msra.mxu0 0.0
  %3283 = vmatprep.subr.mxu0 0.0
  %3284 = vmatpush2.msra.mxu0 0.0
  %3285 = vmatprep.subr.mxu0 0.0
  %3286 = vmatpush2.msra.mxu0 0.0
  %3287 = vmatprep.subr.mxu0 0.0
  %3288 = vmatpush2.msra.mxu0 0.0
  %3289 = vmatprep.subr.mxu0 0.0
  %3290 = vmatpush2.msra.mxu0 0.0
  %3291 = vmatprep.subr.mxu0 0.0
  %3292 = vmatpush2.msra.mxu0 0.0
  %3293 = vmatprep.subr.mxu0 0.0
  %3294 = vmatpush2.msra.mxu0 0.0
  %3295 = vmatprep.mubr.f32.mxu0 0.0
  %3296 = vmatmul.mubr.f32.gmra.mxu0 %v3229
  %v3297 = vpop.f32.mrf.mxu0
  %v3298 = vadd.f32 0.0, %v3297
  %v3299 = vpop.f32.mrf.mxu0
  %3300 = vdwg.mxu0
  %3301 = vrot.lane.b32.xlu0 %v1292, 112
  %v3302 = vpop.permute.xlu0 %3301
  %3303 = vrot.lane.b32.xlu0 %v1292, 80
  %v3304 = vpop.permute.xlu0 %3303
  %v3305 = vsel %vm1317, %v3302, 0
  %v3307 = vsel %vm1317, %v3304, 0
  %3309 = vmatprep.subr.mxu0 0.0
  %3310 = vmatpush1.xpose.msra.mxu0 0.0
  %3311 = vmatprep.subr.mxu0 0.0
  %3312 = vmatpush1.xpose.msra.mxu0 0.0
  %3313 = vmatprep.subr.mxu0 0.0
  %3314 = vmatpush1.xpose.msra.mxu0 0.0
  %3315 = vmatprep.subr.mxu0 0.0
  %3316 = vmatpush1.xpose.msra.mxu0 0.0
  %3317 = vmatprep.subr.mxu0 0.0
  %3318 = vmatpush1.xpose.msra.mxu0 0.0
  %3319 = vmatprep.subr.mxu0 0.0
  %3320 = vmatpush1.xpose.msra.mxu0 0.0
  %3321 = vmatprep.subr.mxu0 0.0
  %3322 = vmatpush1.xpose.msra.mxu0 0.0
  %3323 = vmatprep.subr.mxu0 0.0
  %3324 = vmatpush1.xpose.msra.mxu0 0.0
  %3325 = vmatprep.subr.mxu0 0.0
  %3326 = vmatpush1.xpose.msra.mxu0 0.0
  %3327 = vmatprep.subr.mxu0 0.0
  %3328 = vmatpush1.xpose.msra.mxu0 0.0
  %3329 = vmatprep.subr.mxu0 0.0
  %3330 = vmatpush1.xpose.msra.mxu0 0.0
  %3331 = vmatprep.subr.mxu0 0.0
  %3332 = vmatpush1.xpose.msra.mxu0 0.0
  %3333 = vmatprep.subr.mxu0 0.0
  %3334 = vmatpush1.xpose.msra.mxu0 0.0
  %3335 = vmatprep.subr.mxu0 0.0
  %3336 = vmatpush1.xpose.msra.mxu0 0.0
  %3337 = vmatprep.subr.mxu0 0.0
  %3338 = vmatpush1.xpose.msra.mxu0 0.0
  %3339 = vmatprep.subr.mxu0 0.0
  %3340 = vmatpush1.xpose.msra.mxu0 %v3307
  %3341 = vmatprep.subr.mxu0 0.0
  %3342 = vmatpush2.xpose.msra.mxu0 0.0
  %3343 = vmatprep.subr.mxu0 0.0
  %3344 = vmatpush2.xpose.msra.mxu0 0.0
  %3345 = vmatprep.subr.mxu0 0.0
  %3346 = vmatpush2.xpose.msra.mxu0 0.0
  %3347 = vmatprep.subr.mxu0 0.0
  %3348 = vmatpush2.xpose.msra.mxu0 0.0
  %3349 = vmatprep.subr.mxu0 0.0
  %3350 = vmatpush2.xpose.msra.mxu0 0.0
  %3351 = vmatprep.subr.mxu0 0.0
  %3352 = vmatpush2.xpose.msra.mxu0 0.0
  %3353 = vmatprep.subr.mxu0 0.0
  %3354 = vmatpush2.xpose.msra.mxu0 0.0
  %3355 = vmatprep.subr.mxu0 0.0
  %3356 = vmatpush2.xpose.msra.mxu0 0.0
  %3357 = vmatprep.subr.mxu0 0.0
  %3358 = vmatpush2.xpose.msra.mxu0 0.0
  %3359 = vmatprep.subr.mxu0 0.0
  %3360 = vmatpush2.xpose.msra.mxu0 0.0
  %3361 = vmatprep.subr.mxu0 0.0
  %3362 = vmatpush2.xpose.msra.mxu0 0.0
  %3363 = vmatprep.subr.mxu0 0.0
  %3364 = vmatpush2.xpose.msra.mxu0 0.0
  %3365 = vmatprep.subr.mxu0 0.0
  %3366 = vmatpush2.xpose.msra.mxu0 0.0
  %3367 = vmatprep.subr.mxu0 0.0
  %3368 = vmatpush2.xpose.msra.mxu0 0.0
  %3369 = vmatprep.subr.mxu0 0.0
  %3370 = vmatpush2.xpose.msra.mxu0 0.0
  %3371 = vmatprep.subr.mxu0 0.0
  %3372 = vmatpush2.xpose.msra.mxu0 0.0
  %3373 = vmatprep.mubr.f32.mxu0 0.0
  %3374 = vmatmul.mubr.f32.gmra.mxu0 %v3305
  %v3375 = vpop.f32.mrf.mxu0
  %v3376 = vadd.f32 0.0, %v3375
  %v3377 = vpop.f32.mrf.mxu0
  %3378 = vdwg.mxu0
  %3379 = vrot.lane.b32.xlu0 %v1295, 112
  %v3380 = vpop.permute.xlu0 %3379
  %3381 = vrot.lane.b32.xlu0 %v1295, 80
  %v3382 = vpop.permute.xlu0 %3381
  %v3383 = vsel %vm1317, %v3380, 0
  %v3385 = vsel %vm1317, %v3382, 0
  %3387 = vmatprep.subr.mxu0 0.0
  %3388 = vmatpush1.xpose.msra.mxu0 0.0
  %3389 = vmatprep.subr.mxu0 0.0
  %3390 = vmatpush1.xpose.msra.mxu0 0.0
  %3391 = vmatprep.subr.mxu0 0.0
  %3392 = vmatpush1.xpose.msra.mxu0 0.0
  %3393 = vmatprep.subr.mxu0 0.0
  %3394 = vmatpush1.xpose.msra.mxu0 0.0
  %3395 = vmatprep.subr.mxu0 0.0
  %3396 = vmatpush1.xpose.msra.mxu0 0.0
  %3397 = vmatprep.subr.mxu0 0.0
  %3398 = vmatpush1.xpose.msra.mxu0 0.0
  %3399 = vmatprep.subr.mxu0 0.0
  %3400 = vmatpush1.xpose.msra.mxu0 0.0
  %3401 = vmatprep.subr.mxu0 0.0
  %3402 = vmatpush1.xpose.msra.mxu0 0.0
  %3403 = vmatprep.subr.mxu0 0.0
  %3404 = vmatpush1.xpose.msra.mxu0 0.0
  %3405 = vmatprep.subr.mxu0 0.0
  %3406 = vmatpush1.xpose.msra.mxu0 0.0
  %3407 = vmatprep.subr.mxu0 0.0
  %3408 = vmatpush1.xpose.msra.mxu0 0.0
  %3409 = vmatprep.subr.mxu0 0.0
  %3410 = vmatpush1.xpose.msra.mxu0 0.0
  %3411 = vmatprep.subr.mxu0 0.0
  %3412 = vmatpush1.xpose.msra.mxu0 0.0
  %3413 = vmatprep.subr.mxu0 0.0
  %3414 = vmatpush1.xpose.msra.mxu0 0.0
  %3415 = vmatprep.subr.mxu0 0.0
  %3416 = vmatpush1.xpose.msra.mxu0 0.0
  %3417 = vmatprep.subr.mxu0 0.0
  %3418 = vmatpush1.xpose.msra.mxu0 %v3385
  %3419 = vmatprep.subr.mxu0 0.0
  %3420 = vmatpush2.xpose.msra.mxu0 0.0
  %3421 = vmatprep.subr.mxu0 0.0
  %3422 = vmatpush2.xpose.msra.mxu0 0.0
  %3423 = vmatprep.subr.mxu0 0.0
  %3424 = vmatpush2.xpose.msra.mxu0 0.0
  %3425 = vmatprep.subr.mxu0 0.0
  %3426 = vmatpush2.xpose.msra.mxu0 0.0
  %3427 = vmatprep.subr.mxu0 0.0
  %3428 = vmatpush2.xpose.msra.mxu0 0.0
  %3429 = vmatprep.subr.mxu0 0.0
  %3430 = vmatpush2.xpose.msra.mxu0 0.0
  %3431 = vmatprep.subr.mxu0 0.0
  %3432 = vmatpush2.xpose.msra.mxu0 0.0
  %3433 = vmatprep.subr.mxu0 0.0
  %3434 = vmatpush2.xpose.msra.mxu0 0.0
  %3435 = vmatprep.subr.mxu0 0.0
  %3436 = vmatpush2.xpose.msra.mxu0 0.0
  %3437 = vmatprep.subr.mxu0 0.0
  %3438 = vmatpush2.xpose.msra.mxu0 0.0
  %3439 = vmatprep.subr.mxu0 0.0
  %3440 = vmatpush2.xpose.msra.mxu0 0.0
  %3441 = vmatprep.subr.mxu0 0.0
  %3442 = vmatpush2.xpose.msra.mxu0 0.0
  %3443 = vmatprep.subr.mxu0 0.0
  %3444 = vmatpush2.xpose.msra.mxu0 0.0
  %3445 = vmatprep.subr.mxu0 0.0
  %3446 = vmatpush2.xpose.msra.mxu0 0.0
  %3447 = vmatprep.subr.mxu0 0.0
  %3448 = vmatpush2.xpose.msra.mxu0 0.0
  %3449 = vmatprep.subr.mxu0 0.0
  %3450 = vmatpush2.xpose.msra.mxu0 0.0
  %3451 = vmatprep.mubr.f32.mxu0 0.0
  %3452 = vmatmul.mubr.f32.gmra.mxu0 %v3383
  %v3453 = vpop.f32.mrf.mxu0
  %v3454 = vadd.f32 0.0, %v3453
  %v3455 = vpop.f32.mrf.mxu0
  %3456 = vdwg.mxu0
  %3457 = vrot.lane.b32.xlu0 %v1300, 112
  %v3458 = vpop.permute.xlu0 %3457
  %3459 = vrot.lane.b32.xlu0 %v1300, 80
  %v3460 = vpop.permute.xlu0 %3459
  %v3461 = vsel %vm1317, %v3458, 0
  %v3463 = vsel %vm1317, %v3460, 0
  %3465 = vmatprep.subr.mxu0 0.0
  %3466 = vmatpush1.xpose.msra.mxu0 0.0
  %3467 = vmatprep.subr.mxu0 0.0
  %3468 = vmatpush1.xpose.msra.mxu0 0.0
  %3469 = vmatprep.subr.mxu0 0.0
  %3470 = vmatpush1.xpose.msra.mxu0 0.0
  %3471 = vmatprep.subr.mxu0 0.0
  %3472 = vmatpush1.xpose.msra.mxu0 0.0
  %3473 = vmatprep.subr.mxu0 0.0
  %3474 = vmatpush1.xpose.msra.mxu0 0.0
  %3475 = vmatprep.subr.mxu0 0.0
  %3476 = vmatpush1.xpose.msra.mxu0 0.0
  %3477 = vmatprep.subr.mxu0 0.0
  %3478 = vmatpush1.xpose.msra.mxu0 0.0
  %3479 = vmatprep.subr.mxu0 0.0
  %3480 = vmatpush1.xpose.msra.mxu0 0.0
  %3481 = vmatprep.subr.mxu0 0.0
  %3482 = vmatpush1.xpose.msra.mxu0 0.0
  %3483 = vmatprep.subr.mxu0 0.0
  %3484 = vmatpush1.xpose.msra.mxu0 0.0
  %3485 = vmatprep.subr.mxu0 0.0
  %3486 = vmatpush1.xpose.msra.mxu0 0.0
  %3487 = vmatprep.subr.mxu0 0.0
  %3488 = vmatpush1.xpose.msra.mxu0 0.0
  %3489 = vmatprep.subr.mxu0 0.0
  %3490 = vmatpush1.xpose.msra.mxu0 0.0
  %3491 = vmatprep.subr.mxu0 0.0
  %3492 = vmatpush1.xpose.msra.mxu0 0.0
  %3493 = vmatprep.subr.mxu0 0.0
  %3494 = vmatpush1.xpose.msra.mxu0 0.0
  %3495 = vmatprep.subr.mxu0 0.0
  %3496 = vmatpush1.xpose.msra.mxu0 %v3463
  %3497 = vmatprep.subr.mxu0 0.0
  %3498 = vmatpush2.xpose.msra.mxu0 0.0
  %3499 = vmatprep.subr.mxu0 0.0
  %3500 = vmatpush2.xpose.msra.mxu0 0.0
  %3501 = vmatprep.subr.mxu0 0.0
  %3502 = vmatpush2.xpose.msra.mxu0 0.0
  %3503 = vmatprep.subr.mxu0 0.0
  %3504 = vmatpush2.xpose.msra.mxu0 0.0
  %3505 = vmatprep.subr.mxu0 0.0
  %3506 = vmatpush2.xpose.msra.mxu0 0.0
  %3507 = vmatprep.subr.mxu0 0.0
  %3508 = vmatpush2.xpose.msra.mxu0 0.0
  %3509 = vmatprep.subr.mxu0 0.0
  %3510 = vmatpush2.xpose.msra.mxu0 0.0
  %3511 = vmatprep.subr.mxu0 0.0
  %3512 = vmatpush2.xpose.msra.mxu0 0.0
  %3513 = vmatprep.subr.mxu0 0.0
  %3514 = vmatpush2.xpose.msra.mxu0 0.0
  %3515 = vmatprep.subr.mxu0 0.0
  %3516 = vmatpush2.xpose.msra.mxu0 0.0
  %3517 = vmatprep.subr.mxu0 0.0
  %3518 = vmatpush2.xpose.msra.mxu0 0.0
  %3519 = vmatprep.subr.mxu0 0.0
  %3520 = vmatpush2.xpose.msra.mxu0 0.0
  %3521 = vmatprep.subr.mxu0 0.0
  %3522 = vmatpush2.xpose.msra.mxu0 0.0
  %3523 = vmatprep.subr.mxu0 0.0
  %3524 = vmatpush2.xpose.msra.mxu0 0.0
  %3525 = vmatprep.subr.mxu0 0.0
  %3526 = vmatpush2.xpose.msra.mxu0 0.0
  %3527 = vmatprep.subr.mxu0 0.0
  %3528 = vmatpush2.xpose.msra.mxu0 0.0
  %3529 = vmatprep.mubr.f32.mxu0 0.0
  %3530 = vmatmul.mubr.f32.gmra.mxu0 %v3461
  %v3531 = vpop.f32.mrf.mxu0
  %v3532 = vadd.f32 0.0, %v3531
  %v3533 = vpop.f32.mrf.mxu0
  %3534 = vdwg.mxu0
  %3535 = vrot.lane.b32.xlu0 %v1303, 112
  %v3536 = vpop.permute.xlu0 %3535
  %3537 = vrot.lane.b32.xlu0 %v1303, 80
  %v3538 = vpop.permute.xlu0 %3537
  %v3539 = vsel %vm1317, %v3536, 0
  %v3541 = vsel %vm1317, %v3538, 0
  %3543 = vmatprep.subr.mxu0 0.0
  %3544 = vmatpush1.xpose.msra.mxu0 0.0
  %3545 = vmatprep.subr.mxu0 0.0
  %3546 = vmatpush1.xpose.msra.mxu0 0.0
  %3547 = vmatprep.subr.mxu0 0.0
  %3548 = vmatpush1.xpose.msra.mxu0 0.0
  %3549 = vmatprep.subr.mxu0 0.0
  %3550 = vmatpush1.xpose.msra.mxu0 0.0
  %3551 = vmatprep.subr.mxu0 0.0
  %3552 = vmatpush1.xpose.msra.mxu0 0.0
  %3553 = vmatprep.subr.mxu0 0.0
  %3554 = vmatpush1.xpose.msra.mxu0 0.0
  %3555 = vmatprep.subr.mxu0 0.0
  %3556 = vmatpush1.xpose.msra.mxu0 0.0
  %3557 = vmatprep.subr.mxu0 0.0
  %3558 = vmatpush1.xpose.msra.mxu0 0.0
  %3559 = vmatprep.subr.mxu0 0.0
  %3560 = vmatpush1.xpose.msra.mxu0 0.0
  %3561 = vmatprep.subr.mxu0 0.0
  %3562 = vmatpush1.xpose.msra.mxu0 0.0
  %3563 = vmatprep.subr.mxu0 0.0
  %3564 = vmatpush1.xpose.msra.mxu0 0.0
  %3565 = vmatprep.subr.mxu0 0.0
  %3566 = vmatpush1.xpose.msra.mxu0 0.0
  %3567 = vmatprep.subr.mxu0 0.0
  %3568 = vmatpush1.xpose.msra.mxu0 0.0
  %3569 = vmatprep.subr.mxu0 0.0
  %3570 = vmatpush1.xpose.msra.mxu0 0.0
  %3571 = vmatprep.subr.mxu0 0.0
  %3572 = vmatpush1.xpose.msra.mxu0 0.0
  %3573 = vmatprep.subr.mxu0 0.0
  %3574 = vmatpush1.xpose.msra.mxu0 %v3541
  %3575 = vmatprep.subr.mxu0 0.0
  %3576 = vmatpush2.xpose.msra.mxu0 0.0
  %3577 = vmatprep.subr.mxu0 0.0
  %3578 = vmatpush2.xpose.msra.mxu0 0.0
  %3579 = vmatprep.subr.mxu0 0.0
  %3580 = vmatpush2.xpose.msra.mxu0 0.0
  %3581 = vmatprep.subr.mxu0 0.0
  %3582 = vmatpush2.xpose.msra.mxu0 0.0
  %3583 = vmatprep.subr.mxu0 0.0
  %3584 = vmatpush2.xpose.msra.mxu0 0.0
  %3585 = vmatprep.subr.mxu0 0.0
  %3586 = vmatpush2.xpose.msra.mxu0 0.0
  %3587 = vmatprep.subr.mxu0 0.0
  %3588 = vmatpush2.xpose.msra.mxu0 0.0
  %3589 = vmatprep.subr.mxu0 0.0
  %3590 = vmatpush2.xpose.msra.mxu0 0.0
  %3591 = vmatprep.subr.mxu0 0.0
  %3592 = vmatpush2.xpose.msra.mxu0 0.0
  %3593 = vmatprep.subr.mxu0 0.0
  %3594 = vmatpush2.xpose.msra.mxu0 0.0
  %3595 = vmatprep.subr.mxu0 0.0
  %3596 = vmatpush2.xpose.msra.mxu0 0.0
  %3597 = vmatprep.subr.mxu0 0.0
  %3598 = vmatpush2.xpose.msra.mxu0 0.0
  %3599 = vmatprep.subr.mxu0 0.0
  %3600 = vmatpush2.xpose.msra.mxu0 0.0
  %3601 = vmatprep.subr.mxu0 0.0
  %3602 = vmatpush2.xpose.msra.mxu0 0.0
  %3603 = vmatprep.subr.mxu0 0.0
  %3604 = vmatpush2.xpose.msra.mxu0 0.0
  %3605 = vmatprep.subr.mxu0 0.0
  %3606 = vmatpush2.xpose.msra.mxu0 0.0
  %3607 = vmatprep.mubr.f32.mxu0 0.0
  %3608 = vmatmul.mubr.f32.gmra.mxu0 %v3539
  %v3609 = vpop.f32.mrf.mxu0
  %v3610 = vadd.f32 0.0, %v3609
  %v3611 = vpop.f32.mrf.mxu0
  %3612 = vdwg.mxu0
  %3613 = vrot.lane.b32.xlu0 %v1308, 112
  %v3614 = vpop.permute.xlu0 %3613
  %3615 = vrot.lane.b32.xlu0 %v1308, 80
  %v3616 = vpop.permute.xlu0 %3615
  %v3617 = vsel %vm1317, %v3614, 0
  %v3619 = vsel %vm1317, %v3616, 0
  %3621 = vmatprep.subr.mxu0 0.0
  %3622 = vmatpush1.xpose.msra.mxu0 0.0
  %3623 = vmatprep.subr.mxu0 0.0
  %3624 = vmatpush1.xpose.msra.mxu0 0.0
  %3625 = vmatprep.subr.mxu0 0.0
  %3626 = vmatpush1.xpose.msra.mxu0 0.0
  %3627 = vmatprep.subr.mxu0 0.0
  %3628 = vmatpush1.xpose.msra.mxu0 0.0
  %3629 = vmatprep.subr.mxu0 0.0
  %3630 = vmatpush1.xpose.msra.mxu0 0.0
  %3631 = vmatprep.subr.mxu0 0.0
  %3632 = vmatpush1.xpose.msra.mxu0 0.0
  %3633 = vmatprep.subr.mxu0 0.0
  %3634 = vmatpush1.xpose.msra.mxu0 0.0
  %3635 = vmatprep.subr.mxu0 0.0
  %3636 = vmatpush1.xpose.msra.mxu0 0.0
  %3637 = vmatprep.subr.mxu0 0.0
  %3638 = vmatpush1.xpose.msra.mxu0 0.0
  %3639 = vmatprep.subr.mxu0 0.0
  %3640 = vmatpush1.xpose.msra.mxu0 0.0
  %3641 = vmatprep.subr.mxu0 0.0
  %3642 = vmatpush1.xpose.msra.mxu0 0.0
  %3643 = vmatprep.subr.mxu0 0.0
  %3644 = vmatpush1.xpose.msra.mxu0 0.0
  %3645 = vmatprep.subr.mxu0 0.0
  %3646 = vmatpush1.xpose.msra.mxu0 0.0
  %3647 = vmatprep.subr.mxu0 0.0
  %3648 = vmatpush1.xpose.msra.mxu0 0.0
  %3649 = vmatprep.subr.mxu0 0.0
  %3650 = vmatpush1.xpose.msra.mxu0 0.0
  %3651 = vmatprep.subr.mxu0 0.0
  %3652 = vmatpush1.xpose.msra.mxu0 %v3619
  %3653 = vmatprep.subr.mxu0 0.0
  %3654 = vmatpush2.xpose.msra.mxu0 0.0
  %3655 = vmatprep.subr.mxu0 0.0
  %3656 = vmatpush2.xpose.msra.mxu0 0.0
  %3657 = vmatprep.subr.mxu0 0.0
  %3658 = vmatpush2.xpose.msra.mxu0 0.0
  %3659 = vmatprep.subr.mxu0 0.0
  %3660 = vmatpush2.xpose.msra.mxu0 0.0
  %3661 = vmatprep.subr.mxu0 0.0
  %3662 = vmatpush2.xpose.msra.mxu0 0.0
  %3663 = vmatprep.subr.mxu0 0.0
  %3664 = vmatpush2.xpose.msra.mxu0 0.0
  %3665 = vmatprep.subr.mxu0 0.0
  %3666 = vmatpush2.xpose.msra.mxu0 0.0
  %3667 = vmatprep.subr.mxu0 0.0
  %3668 = vmatpush2.xpose.msra.mxu0 0.0
  %3669 = vmatprep.subr.mxu0 0.0
  %3670 = vmatpush2.xpose.msra.mxu0 0.0
  %3671 = vmatprep.subr.mxu0 0.0
  %3672 = vmatpush2.xpose.msra.mxu0 0.0
  %3673 = vmatprep.subr.mxu0 0.0
  %3674 = vmatpush2.xpose.msra.mxu0 0.0
  %3675 = vmatprep.subr.mxu0 0.0
  %3676 = vmatpush2.xpose.msra.mxu0 0.0
  %3677 = vmatprep.subr.mxu0 0.0
  %3678 = vmatpush2.xpose.msra.mxu0 0.0
  %3679 = vmatprep.subr.mxu0 0.0
  %3680 = vmatpush2.xpose.msra.mxu0 0.0
  %3681 = vmatprep.subr.mxu0 0.0
  %3682 = vmatpush2.xpose.msra.mxu0 0.0
  %3683 = vmatprep.subr.mxu0 0.0
  %3684 = vmatpush2.xpose.msra.mxu0 0.0
  %3685 = vmatprep.mubr.f32.mxu0 0.0
  %3686 = vmatmul.mubr.f32.gmra.mxu0 %v3617
  %v3687 = vpop.f32.mrf.mxu0
  %v3688 = vadd.f32 0.0, %v3687
  %v3689 = vpop.f32.mrf.mxu0
  %3690 = vdwg.mxu0
  %3691 = vrot.lane.b32.xlu0 %v1311, 112
  %v3692 = vpop.permute.xlu0 %3691
  %3693 = vrot.lane.b32.xlu0 %v1311, 80
  %v3694 = vpop.permute.xlu0 %3693
  %v3695 = vsel %vm1317, %v3692, 0
  %v3697 = vsel %vm1317, %v3694, 0
  %3699 = vmatprep.subr.mxu0 0.0
  %3700 = vmatpush1.xpose.msra.mxu0 0.0
  %3701 = vmatprep.subr.mxu0 0.0
  %3702 = vmatpush1.xpose.msra.mxu0 0.0
  %3703 = vmatprep.subr.mxu0 0.0
  %3704 = vmatpush1.xpose.msra.mxu0 0.0
  %3705 = vmatprep.subr.mxu0 0.0
  %3706 = vmatpush1.xpose.msra.mxu0 0.0
  %3707 = vmatprep.subr.mxu0 0.0
  %3708 = vmatpush1.xpose.msra.mxu0 0.0
  %3709 = vmatprep.subr.mxu0 0.0
  %3710 = vmatpush1.xpose.msra.mxu0 0.0
  %3711 = vmatprep.subr.mxu0 0.0
  %3712 = vmatpush1.xpose.msra.mxu0 0.0
  %3713 = vmatprep.subr.mxu0 0.0
  %3714 = vmatpush1.xpose.msra.mxu0 0.0
  %3715 = vmatprep.subr.mxu0 0.0
  %3716 = vmatpush1.xpose.msra.mxu0 0.0
  %3717 = vmatprep.subr.mxu0 0.0
  %3718 = vmatpush1.xpose.msra.mxu0 0.0
  %3719 = vmatprep.subr.mxu0 0.0
  %3720 = vmatpush1.xpose.msra.mxu0 0.0
  %3721 = vmatprep.subr.mxu0 0.0
  %3722 = vmatpush1.xpose.msra.mxu0 0.0
  %3723 = vmatprep.subr.mxu0 0.0
  %3724 = vmatpush1.xpose.msra.mxu0 0.0
  %3725 = vmatprep.subr.mxu0 0.0
  %3726 = vmatpush1.xpose.msra.mxu0 0.0
  %3727 = vmatprep.subr.mxu0 0.0
  %3728 = vmatpush1.xpose.msra.mxu0 0.0
  %3729 = vmatprep.subr.mxu0 0.0
  %3730 = vmatpush1.xpose.msra.mxu0 %v3697
  %3731 = vmatprep.subr.mxu0 0.0
  %3732 = vmatpush2.xpose.msra.mxu0 0.0
  %3733 = vmatprep.subr.mxu0 0.0
  %3734 = vmatpush2.xpose.msra.mxu0 0.0
  %3735 = vmatprep.subr.mxu0 0.0
  %3736 = vmatpush2.xpose.msra.mxu0 0.0
  %3737 = vmatprep.subr.mxu0 0.0
  %3738 = vmatpush2.xpose.msra.mxu0 0.0
  %3739 = vmatprep.subr.mxu0 0.0
  %3740 = vmatpush2.xpose.msra.mxu0 0.0
  %3741 = vmatprep.subr.mxu0 0.0
  %3742 = vmatpush2.xpose.msra.mxu0 0.0
  %3743 = vmatprep.subr.mxu0 0.0
  %3744 = vmatpush2.xpose.msra.mxu0 0.0
  %3745 = vmatprep.subr.mxu0 0.0
  %3746 = vmatpush2.xpose.msra.mxu0 0.0
  %3747 = vmatprep.subr.mxu0 0.0
  %3748 = vmatpush2.xpose.msra.mxu0 0.0
  %3749 = vmatprep.subr.mxu0 0.0
  %3750 = vmatpush2.xpose.msra.mxu0 0.0
  %3751 = vmatprep.subr.mxu0 0.0
  %3752 = vmatpush2.xpose.msra.mxu0 0.0
  %3753 = vmatprep.subr.mxu0 0.0
  %3754 = vmatpush2.xpose.msra.mxu0 0.0
  %3755 = vmatprep.subr.mxu0 0.0
  %3756 = vmatpush2.xpose.msra.mxu0 0.0
  %3757 = vmatprep.subr.mxu0 0.0
  %3758 = vmatpush2.xpose.msra.mxu0 0.0
  %3759 = vmatprep.subr.mxu0 0.0
  %3760 = vmatpush2.xpose.msra.mxu0 0.0
  %3761 = vmatprep.subr.mxu0 0.0
  %3762 = vmatpush2.xpose.msra.mxu0 0.0
  %3763 = vmatprep.mubr.f32.mxu0 0.0
  %3764 = vmatmul.mubr.f32.gmra.mxu0 %v3695
  %v3765 = vpop.f32.mrf.mxu0
  %v3766 = vadd.f32 0.0, %v3765
  %v3767 = vpop.f32.mrf.mxu0
  %3768 = vdwg.mxu0
  %v3769 = vmul.f32 %v3376, 0.35355338
  %v3770 = vmul.f32 %v3454, 0.35355338
  %v3771 = vmul.f32 %v3532, 0.35355338
  %v3772 = vmul.f32 %v3610, 0.35355338
  %v3773 = vmul.f32 %v3688, 0.35355338
  %v3774 = vmul.f32 %v3766, 0.35355338
  %v3775 = vsel %vm1317, %v3769, -inf
  %3776 = vmax.xlane.f32.xlu0 %v3775
  %v3777 = vpop.xlane.xlu0 %3776
  %v3778 = vsel %vm1317, %v3770, -inf
  %3779 = vmax.xlane.f32.xlu0 %v3778
  %v3780 = vpop.xlane.xlu0 %3779
  %v3781 = vsel %vm1317, %v3771, -inf
  %3782 = vmax.xlane.f32.xlu0 %v3781
  %v3783 = vpop.xlane.xlu0 %3782
  %v3784 = vsel %vm1317, %v3772, -inf
  %3785 = vmax.xlane.f32.xlu0 %v3784
  %v3786 = vpop.xlane.xlu0 %3785
  %v3787 = vsel %vm1317, %v3773, -inf
  %3788 = vmax.xlane.f32.xlu0 %v3787
  %v3789 = vpop.xlane.xlu0 %3788
  %v3790 = vsel %vm1317, %v3774, -inf
  %3791 = vmax.xlane.f32.xlu0 %v3790
  %v3792 = vpop.xlane.xlu0 %3791
  %v3793 = vsub.f32 %v3769, %v3777
  %v3794 = vsub.f32 %v3770, %v3780
  %v3795 = vsub.f32 %v3771, %v3783
  %v3796 = vsub.f32 %v3772, %v3786
  %v3797 = vsub.f32 %v3773, %v3789
  %v3798 = vsub.f32 %v3774, %v3792
  %v3799 = vmul.f32 %v3793, 1.442695
  %v3800 = vpow.pop %v3799
  %v3801 = vmul.f32 %v3794, 1.442695
  %v3802 = vpow.pop %v3801
  %v3803 = vmul.f32 %v3795, 1.442695
  %v3804 = vpow.pop %v3803
  %v3805 = vmul.f32 %v3796, 1.442695
  %v3806 = vpow.pop %v3805
  %v3807 = vmul.f32 %v3797, 1.442695
  %v3808 = vpow.pop %v3807
  %v3809 = vmul.f32 %v3798, 1.442695
  %v3810 = vpow.pop %v3809
  %v3811 = vsel %vm1317, %v3800, 0.0
  %3812 = vadd.xlane.f32.xlu0 %v3811
  %v3813 = vpop.xlane.xlu0 %3812
  %v3814 = vsel %vm1317, %v3802, 0.0
  %3815 = vadd.xlane.f32.xlu0 %v3814
  %v3816 = vpop.xlane.xlu0 %3815
  %v3817 = vsel %vm1317, %v3804, 0.0
  %3818 = vadd.xlane.f32.xlu0 %v3817
  %v3819 = vpop.xlane.xlu0 %3818
  %v3820 = vsel %vm1317, %v3806, 0.0
  %3821 = vadd.xlane.f32.xlu0 %v3820
  %v3822 = vpop.xlane.xlu0 %3821
  %v3823 = vsel %vm1317, %v3808, 0.0
  %3824 = vadd.xlane.f32.xlu0 %v3823
  %v3825 = vpop.xlane.xlu0 %3824
  %v3826 = vsel %vm1317, %v3810, 0.0
  %3827 = vadd.xlane.f32.xlu0 %v3826
  %v3828 = vpop.xlane.xlu0 %3827
  %v3829 = vrcp.pop %v3813
  %v3830 = vrcp.pop %v3816
  %v3831 = vrcp.pop %v3819
  %v3832 = vrcp.pop %v3822
  %v3833 = vrcp.pop %v3825
  %v3834 = vrcp.pop %v3828
  %v3835 = vmul.f32 %v3800, %v3829
  %v3836 = vmul.f32 %v3802, %v3830
  %v3837 = vmul.f32 %v3804, %v3831
  %v3838 = vmul.f32 %v3806, %v3832
  %v3839 = vmul.f32 %v3808, %v3833
  %v3840 = vmul.f32 %v3810, %v3834
  %3841 = vrot.lane.b32.xlu0 %v1292, 48
  %v3842 = vpop.permute.xlu0 %3841
  %v3845 = vsel %vm1317, %v3835, 0
  %3847 = vmatprep.subr.mxu0 0.0
  %3848 = vmatpush1.msra.mxu0 0.0
  %3849 = vmatprep.subr.mxu0 0.0
  %3850 = vmatpush1.msra.mxu0 0.0
  %3851 = vmatprep.subr.mxu0 0.0
  %3852 = vmatpush1.msra.mxu0 0.0
  %3853 = vmatprep.subr.mxu0 0.0
  %3854 = vmatpush1.msra.mxu0 0.0
  %3855 = vmatprep.subr.mxu0 0.0
  %3856 = vmatpush1.msra.mxu0 0.0
  %3857 = vmatprep.subr.mxu0 0.0
  %3858 = vmatpush1.msra.mxu0 0.0
  %3859 = vmatprep.subr.mxu0 0.0
  %3860 = vmatpush1.msra.mxu0 0.0
  %3861 = vmatprep.subr.mxu0 0.0
  %3862 = vmatpush1.msra.mxu0 0.0
  %3863 = vmatprep.subr.mxu0 0.0
  %3864 = vmatpush1.msra.mxu0 0.0
  %3865 = vmatprep.subr.mxu0 0.0
  %3866 = vmatpush1.msra.mxu0 0.0
  %3867 = vmatprep.subr.mxu0 0.0
  %3868 = vmatpush1.msra.mxu0 0.0
  %3869 = vmatprep.subr.mxu0 0.0
  %3870 = vmatpush1.msra.mxu0 0.0
  %3871 = vmatprep.subr.mxu0 0.0
  %3872 = vmatpush1.msra.mxu0 0.0
  %3873 = vmatprep.subr.mxu0 0.0
  %3874 = vmatpush1.msra.mxu0 0.0
  %3875 = vmatprep.subr.mxu0 0.0
  %3876 = vmatpush1.msra.mxu0 0.0
  %3877 = vmatprep.subr.mxu0 0.0
  %3878 = vmatpush1.msra.mxu0 %v3842
  %3879 = vmatprep.subr.mxu0 0.0
  %3880 = vmatpush2.msra.mxu0 0.0
  %3881 = vmatprep.subr.mxu0 0.0
  %3882 = vmatpush2.msra.mxu0 0.0
  %3883 = vmatprep.subr.mxu0 0.0
  %3884 = vmatpush2.msra.mxu0 0.0
  %3885 = vmatprep.subr.mxu0 0.0
  %3886 = vmatpush2.msra.mxu0 0.0
  %3887 = vmatprep.subr.mxu0 0.0
  %3888 = vmatpush2.msra.mxu0 0.0
  %3889 = vmatprep.subr.mxu0 0.0
  %3890 = vmatpush2.msra.mxu0 0.0
  %3891 = vmatprep.subr.mxu0 0.0
  %3892 = vmatpush2.msra.mxu0 0.0
  %3893 = vmatprep.subr.mxu0 0.0
  %3894 = vmatpush2.msra.mxu0 0.0
  %3895 = vmatprep.subr.mxu0 0.0
  %3896 = vmatpush2.msra.mxu0 0.0
  %3897 = vmatprep.subr.mxu0 0.0
  %3898 = vmatpush2.msra.mxu0 0.0
  %3899 = vmatprep.subr.mxu0 0.0
  %3900 = vmatpush2.msra.mxu0 0.0
  %3901 = vmatprep.subr.mxu0 0.0
  %3902 = vmatpush2.msra.mxu0 0.0
  %3903 = vmatprep.subr.mxu0 0.0
  %3904 = vmatpush2.msra.mxu0 0.0
  %3905 = vmatprep.subr.mxu0 0.0
  %3906 = vmatpush2.msra.mxu0 0.0
  %3907 = vmatprep.subr.mxu0 0.0
  %3908 = vmatpush2.msra.mxu0 0.0
  %3909 = vmatprep.subr.mxu0 0.0
  %3910 = vmatpush2.msra.mxu0 0.0
  %3911 = vmatprep.mubr.f32.mxu0 0.0
  %3912 = vmatmul.mubr.f32.gmra.mxu0 %v3845
  %v3913 = vpop.f32.mrf.mxu0
  %v3914 = vadd.f32 0.0, %v3913
  %v3915 = vpop.f32.mrf.mxu0
  %3916 = vdwg.mxu0
  %3917 = vrot.lane.b32.xlu0 %v1295, 48
  %v3918 = vpop.permute.xlu0 %3917
  %v3921 = vsel %vm1317, %v3836, 0
  %3923 = vmatprep.subr.mxu0 0.0
  %3924 = vmatpush1.msra.mxu0 0.0
  %3925 = vmatprep.subr.mxu0 0.0
  %3926 = vmatpush1.msra.mxu0 0.0
  %3927 = vmatprep.subr.mxu0 0.0
  %3928 = vmatpush1.msra.mxu0 0.0
  %3929 = vmatprep.subr.mxu0 0.0
  %3930 = vmatpush1.msra.mxu0 0.0
  %3931 = vmatprep.subr.mxu0 0.0
  %3932 = vmatpush1.msra.mxu0 0.0
  %3933 = vmatprep.subr.mxu0 0.0
  %3934 = vmatpush1.msra.mxu0 0.0
  %3935 = vmatprep.subr.mxu0 0.0
  %3936 = vmatpush1.msra.mxu0 0.0
  %3937 = vmatprep.subr.mxu0 0.0
  %3938 = vmatpush1.msra.mxu0 0.0
  %3939 = vmatprep.subr.mxu0 0.0
  %3940 = vmatpush1.msra.mxu0 0.0
  %3941 = vmatprep.subr.mxu0 0.0
  %3942 = vmatpush1.msra.mxu0 0.0
  %3943 = vmatprep.subr.mxu0 0.0
  %3944 = vmatpush1.msra.mxu0 0.0
  %3945 = vmatprep.subr.mxu0 0.0
  %3946 = vmatpush1.msra.mxu0 0.0
  %3947 = vmatprep.subr.mxu0 0.0
  %3948 = vmatpush1.msra.mxu0 0.0
  %3949 = vmatprep.subr.mxu0 0.0
  %3950 = vmatpush1.msra.mxu0 0.0
  %3951 = vmatprep.subr.mxu0 0.0
  %3952 = vmatpush1.msra.mxu0 0.0
  %3953 = vmatprep.subr.mxu0 0.0
  %3954 = vmatpush1.msra.mxu0 %v3918
  %3955 = vmatprep.subr.mxu0 0.0
  %3956 = vmatpush2.msra.mxu0 0.0
  %3957 = vmatprep.subr.mxu0 0.0
  %3958 = vmatpush2.msra.mxu0 0.0
  %3959 = vmatprep.subr.mxu0 0.0
  %3960 = vmatpush2.msra.mxu0 0.0
  %3961 = vmatprep.subr.mxu0 0.0
  %3962 = vmatpush2.msra.mxu0 0.0
  %3963 = vmatprep.subr.mxu0 0.0
  %3964 = vmatpush2.msra.mxu0 0.0
  %3965 = vmatprep.subr.mxu0 0.0
  %3966 = vmatpush2.msra.mxu0 0.0
  %3967 = vmatprep.subr.mxu0 0.0
  %3968 = vmatpush2.msra.mxu0 0.0
  %3969 = vmatprep.subr.mxu0 0.0
  %3970 = vmatpush2.msra.mxu0 0.0
  %3971 = vmatprep.subr.mxu0 0.0
  %3972 = vmatpush2.msra.mxu0 0.0
  %3973 = vmatprep.subr.mxu0 0.0
  %3974 = vmatpush2.msra.mxu0 0.0
  %3975 = vmatprep.subr.mxu0 0.0
  %3976 = vmatpush2.msra.mxu0 0.0
  %3977 = vmatprep.subr.mxu0 0.0
  %3978 = vmatpush2.msra.mxu0 0.0
  %3979 = vmatprep.subr.mxu0 0.0
  %3980 = vmatpush2.msra.mxu0 0.0
  %3981 = vmatprep.subr.mxu0 0.0
  %3982 = vmatpush2.msra.mxu0 0.0
  %3983 = vmatprep.subr.mxu0 0.0
  %3984 = vmatpush2.msra.mxu0 0.0
  %3985 = vmatprep.subr.mxu0 0.0
  %3986 = vmatpush2.msra.mxu0 0.0
  %3987 = vmatprep.mubr.f32.mxu0 0.0
  %3988 = vmatmul.mubr.f32.gmra.mxu0 %v3921
  %v3989 = vpop.f32.mrf.mxu0
  %v3990 = vadd.f32 0.0, %v3989
  %v3991 = vpop.f32.mrf.mxu0
  %3992 = vdwg.mxu0
  %3993 = vrot.lane.b32.xlu0 %v1300, 48
  %v3994 = vpop.permute.xlu0 %3993
  %v3997 = vsel %vm1317, %v3837, 0
  %3999 = vmatprep.subr.mxu0 0.0
  %4000 = vmatpush1.msra.mxu0 0.0
  %4001 = vmatprep.subr.mxu0 0.0
  %4002 = vmatpush1.msra.mxu0 0.0
  %4003 = vmatprep.subr.mxu0 0.0
  %4004 = vmatpush1.msra.mxu0 0.0
  %4005 = vmatprep.subr.mxu0 0.0
  %4006 = vmatpush1.msra.mxu0 0.0
  %4007 = vmatprep.subr.mxu0 0.0
  %4008 = vmatpush1.msra.mxu0 0.0
  %4009 = vmatprep.subr.mxu0 0.0
  %4010 = vmatpush1.msra.mxu0 0.0
  %4011 = vmatprep.subr.mxu0 0.0
  %4012 = vmatpush1.msra.mxu0 0.0
  %4013 = vmatprep.subr.mxu0 0.0
  %4014 = vmatpush1.msra.mxu0 0.0
  %4015 = vmatprep.subr.mxu0 0.0
  %4016 = vmatpush1.msra.mxu0 0.0
  %4017 = vmatprep.subr.mxu0 0.0
  %4018 = vmatpush1.msra.mxu0 0.0
  %4019 = vmatprep.subr.mxu0 0.0
  %4020 = vmatpush1.msra.mxu0 0.0
  %4021 = vmatprep.subr.mxu0 0.0
  %4022 = vmatpush1.msra.mxu0 0.0
  %4023 = vmatprep.subr.mxu0 0.0
  %4024 = vmatpush1.msra.mxu0 0.0
  %4025 = vmatprep.subr.mxu0 0.0
  %4026 = vmatpush1.msra.mxu0 0.0
  %4027 = vmatprep.subr.mxu0 0.0
  %4028 = vmatpush1.msra.mxu0 0.0
  %4029 = vmatprep.subr.mxu0 0.0
  %4030 = vmatpush1.msra.mxu0 %v3994
  %4031 = vmatprep.subr.mxu0 0.0
  %4032 = vmatpush2.msra.mxu0 0.0
  %4033 = vmatprep.subr.mxu0 0.0
  %4034 = vmatpush2.msra.mxu0 0.0
  %4035 = vmatprep.subr.mxu0 0.0
  %4036 = vmatpush2.msra.mxu0 0.0
  %4037 = vmatprep.subr.mxu0 0.0
  %4038 = vmatpush2.msra.mxu0 0.0
  %4039 = vmatprep.subr.mxu0 0.0
  %4040 = vmatpush2.msra.mxu0 0.0
  %4041 = vmatprep.subr.mxu0 0.0
  %4042 = vmatpush2.msra.mxu0 0.0
  %4043 = vmatprep.subr.mxu0 0.0
  %4044 = vmatpush2.msra.mxu0 0.0
  %4045 = vmatprep.subr.mxu0 0.0
  %4046 = vmatpush2.msra.mxu0 0.0
  %4047 = vmatprep.subr.mxu0 0.0
  %4048 = vmatpush2.msra.mxu0 0.0
  %4049 = vmatprep.subr.mxu0 0.0
  %4050 = vmatpush2.msra.mxu0 0.0
  %4051 = vmatprep.subr.mxu0 0.0
  %4052 = vmatpush2.msra.mxu0 0.0
  %4053 = vmatprep.subr.mxu0 0.0
  %4054 = vmatpush2.msra.mxu0 0.0
  %4055 = vmatprep.subr.mxu0 0.0
  %4056 = vmatpush2.msra.mxu0 0.0
  %4057 = vmatprep.subr.mxu0 0.0
  %4058 = vmatpush2.msra.mxu0 0.0
  %4059 = vmatprep.subr.mxu0 0.0
  %4060 = vmatpush2.msra.mxu0 0.0
  %4061 = vmatprep.subr.mxu0 0.0
  %4062 = vmatpush2.msra.mxu0 0.0
  %4063 = vmatprep.mubr.f32.mxu0 0.0
  %4064 = vmatmul.mubr.f32.gmra.mxu0 %v3997
  %v4065 = vpop.f32.mrf.mxu0
  %v4066 = vadd.f32 0.0, %v4065
  %v4067 = vpop.f32.mrf.mxu0
  %4068 = vdwg.mxu0
  %4069 = vrot.lane.b32.xlu0 %v1303, 48
  %v4070 = vpop.permute.xlu0 %4069
  %v4073 = vsel %vm1317, %v3838, 0
  %4075 = vmatprep.subr.mxu0 0.0
  %4076 = vmatpush1.msra.mxu0 0.0
  %4077 = vmatprep.subr.mxu0 0.0
  %4078 = vmatpush1.msra.mxu0 0.0
  %4079 = vmatprep.subr.mxu0 0.0
  %4080 = vmatpush1.msra.mxu0 0.0
  %4081 = vmatprep.subr.mxu0 0.0
  %4082 = vmatpush1.msra.mxu0 0.0
  %4083 = vmatprep.subr.mxu0 0.0
  %4084 = vmatpush1.msra.mxu0 0.0
  %4085 = vmatprep.subr.mxu0 0.0
  %4086 = vmatpush1.msra.mxu0 0.0
  %4087 = vmatprep.subr.mxu0 0.0
  %4088 = vmatpush1.msra.mxu0 0.0
  %4089 = vmatprep.subr.mxu0 0.0
  %4090 = vmatpush1.msra.mxu0 0.0
  %4091 = vmatprep.subr.mxu0 0.0
  %4092 = vmatpush1.msra.mxu0 0.0
  %4093 = vmatprep.subr.mxu0 0.0
  %4094 = vmatpush1.msra.mxu0 0.0
  %4095 = vmatprep.subr.mxu0 0.0
  %4096 = vmatpush1.msra.mxu0 0.0
  %4097 = vmatprep.subr.mxu0 0.0
  %4098 = vmatpush1.msra.mxu0 0.0
  %4099 = vmatprep.subr.mxu0 0.0
  %4100 = vmatpush1.msra.mxu0 0.0
  %4101 = vmatprep.subr.mxu0 0.0
  %4102 = vmatpush1.msra.mxu0 0.0
  %4103 = vmatprep.subr.mxu0 0.0
  %4104 = vmatpush1.msra.mxu0 0.0
  %4105 = vmatprep.subr.mxu0 0.0
  %4106 = vmatpush1.msra.mxu0 %v4070
  %4107 = vmatprep.subr.mxu0 0.0
  %4108 = vmatpush2.msra.mxu0 0.0
  %4109 = vmatprep.subr.mxu0 0.0
  %4110 = vmatpush2.msra.mxu0 0.0
  %4111 = vmatprep.subr.mxu0 0.0
  %4112 = vmatpush2.msra.mxu0 0.0
  %4113 = vmatprep.subr.mxu0 0.0
  %4114 = vmatpush2.msra.mxu0 0.0
  %4115 = vmatprep.subr.mxu0 0.0
  %4116 = vmatpush2.msra.mxu0 0.0
  %4117 = vmatprep.subr.mxu0 0.0
  %4118 = vmatpush2.msra.mxu0 0.0
  %4119 = vmatprep.subr.mxu0 0.0
  %4120 = vmatpush2.msra.mxu0 0.0
  %4121 = vmatprep.subr.mxu0 0.0
  %4122 = vmatpush2.msra.mxu0 0.0
  %4123 = vmatprep.subr.mxu0 0.0
  %4124 = vmatpush2.msra.mxu0 0.0
  %4125 = vmatprep.subr.mxu0 0.0
  %4126 = vmatpush2.msra.mxu0 0.0
  %4127 = vmatprep.subr.mxu0 0.0
  %4128 = vmatpush2.msra.mxu0 0.0
  %4129 = vmatprep.subr.mxu0 0.0
  %4130 = vmatpush2.msra.mxu0 0.0
  %4131 = vmatprep.subr.mxu0 0.0
  %4132 = vmatpush2.msra.mxu0 0.0
  %4133 = vmatprep.subr.mxu0 0.0
  %4134 = vmatpush2.msra.mxu0 0.0
  %4135 = vmatprep.subr.mxu0 0.0
  %4136 = vmatpush2.msra.mxu0 0.0
  %4137 = vmatprep.subr.mxu0 0.0
  %4138 = vmatpush2.msra.mxu0 0.0
  %4139 = vmatprep.mubr.f32.mxu0 0.0
  %4140 = vmatmul.mubr.f32.gmra.mxu0 %v4073
  %v4141 = vpop.f32.mrf.mxu0
  %v4142 = vadd.f32 0.0, %v4141
  %v4143 = vpop.f32.mrf.mxu0
  %4144 = vdwg.mxu0
  %4145 = vrot.lane.b32.xlu0 %v1308, 48
  %v4146 = vpop.permute.xlu0 %4145
  %v4149 = vsel %vm1317, %v3839, 0
  %4151 = vmatprep.subr.mxu0 0.0
  %4152 = vmatpush1.msra.mxu0 0.0
  %4153 = vmatprep.subr.mxu0 0.0
  %4154 = vmatpush1.msra.mxu0 0.0
  %4155 = vmatprep.subr.mxu0 0.0
  %4156 = vmatpush1.msra.mxu0 0.0
  %4157 = vmatprep.subr.mxu0 0.0
  %4158 = vmatpush1.msra.mxu0 0.0
  %4159 = vmatprep.subr.mxu0 0.0
  %4160 = vmatpush1.msra.mxu0 0.0
  %4161 = vmatprep.subr.mxu0 0.0
  %4162 = vmatpush1.msra.mxu0 0.0
  %4163 = vmatprep.subr.mxu0 0.0
  %4164 = vmatpush1.msra.mxu0 0.0
  %4165 = vmatprep.subr.mxu0 0.0
  %4166 = vmatpush1.msra.mxu0 0.0
  %4167 = vmatprep.subr.mxu0 0.0
  %4168 = vmatpush1.msra.mxu0 0.0
  %4169 = vmatprep.subr.mxu0 0.0
  %4170 = vmatpush1.msra.mxu0 0.0
  %4171 = vmatprep.subr.mxu0 0.0
  %4172 = vmatpush1.msra.mxu0 0.0
  %4173 = vmatprep.subr.mxu0 0.0
  %4174 = vmatpush1.msra.mxu0 0.0
  %4175 = vmatprep.subr.mxu0 0.0
  %4176 = vmatpush1.msra.mxu0 0.0
  %4177 = vmatprep.subr.mxu0 0.0
  %4178 = vmatpush1.msra.mxu0 0.0
  %4179 = vmatprep.subr.mxu0 0.0
  %4180 = vmatpush1.msra.mxu0 0.0
  %4181 = vmatprep.subr.mxu0 0.0
  %4182 = vmatpush1.msra.mxu0 %v4146
  %4183 = vmatprep.subr.mxu0 0.0
  %4184 = vmatpush2.msra.mxu0 0.0
  %4185 = vmatprep.subr.mxu0 0.0
  %4186 = vmatpush2.msra.mxu0 0.0
  %4187 = vmatprep.subr.mxu0 0.0
  %4188 = vmatpush2.msra.mxu0 0.0
  %4189 = vmatprep.subr.mxu0 0.0
  %4190 = vmatpush2.msra.mxu0 0.0
  %4191 = vmatprep.subr.mxu0 0.0
  %4192 = vmatpush2.msra.mxu0 0.0
  %4193 = vmatprep.subr.mxu0 0.0
  %4194 = vmatpush2.msra.mxu0 0.0
  %4195 = vmatprep.subr.mxu0 0.0
  %4196 = vmatpush2.msra.mxu0 0.0
  %4197 = vmatprep.subr.mxu0 0.0
  %4198 = vmatpush2.msra.mxu0 0.0
  %4199 = vmatprep.subr.mxu0 0.0
  %4200 = vmatpush2.msra.mxu0 0.0
  %4201 = vmatprep.subr.mxu0 0.0
  %4202 = vmatpush2.msra.mxu0 0.0
  %4203 = vmatprep.subr.mxu0 0.0
  %4204 = vmatpush2.msra.mxu0 0.0
  %4205 = vmatprep.subr.mxu0 0.0
  %4206 = vmatpush2.msra.mxu0 0.0
  %4207 = vmatprep.subr.mxu0 0.0
  %4208 = vmatpush2.msra.mxu0 0.0
  %4209 = vmatprep.subr.mxu0 0.0
  %4210 = vmatpush2.msra.mxu0 0.0
  %4211 = vmatprep.subr.mxu0 0.0
  %4212 = vmatpush2.msra.mxu0 0.0
  %4213 = vmatprep.subr.mxu0 0.0
  %4214 = vmatpush2.msra.mxu0 0.0
  %4215 = vmatprep.mubr.f32.mxu0 0.0
  %4216 = vmatmul.mubr.f32.gmra.mxu0 %v4149
  %v4217 = vpop.f32.mrf.mxu0
  %v4218 = vadd.f32 0.0, %v4217
  %v4219 = vpop.f32.mrf.mxu0
  %4220 = vdwg.mxu0
  %4221 = vrot.lane.b32.xlu0 %v1311, 48
  %v4222 = vpop.permute.xlu0 %4221
  %v4225 = vsel %vm1317, %v3840, 0
  %4227 = vmatprep.subr.mxu0 0.0
  %4228 = vmatpush1.msra.mxu0 0.0
  %4229 = vmatprep.subr.mxu0 0.0
  %4230 = vmatpush1.msra.mxu0 0.0
  %4231 = vmatprep.subr.mxu0 0.0
  %4232 = vmatpush1.msra.mxu0 0.0
  %4233 = vmatprep.subr.mxu0 0.0
  %4234 = vmatpush1.msra.mxu0 0.0
  %4235 = vmatprep.subr.mxu0 0.0
  %4236 = vmatpush1.msra.mxu0 0.0
  %4237 = vmatprep.subr.mxu0 0.0
  %4238 = vmatpush1.msra.mxu0 0.0
  %4239 = vmatprep.subr.mxu0 0.0
  %4240 = vmatpush1.msra.mxu0 0.0
  %4241 = vmatprep.subr.mxu0 0.0
  %4242 = vmatpush1.msra.mxu0 0.0
  %4243 = vmatprep.subr.mxu0 0.0
  %4244 = vmatpush1.msra.mxu0 0.0
  %4245 = vmatprep.subr.mxu0 0.0
  %4246 = vmatpush1.msra.mxu0 0.0
  %4247 = vmatprep.subr.mxu0 0.0
  %4248 = vmatpush1.msra.mxu0 0.0
  %4249 = vmatprep.subr.mxu0 0.0
  %4250 = vmatpush1.msra.mxu0 0.0
  %4251 = vmatprep.subr.mxu0 0.0
  %4252 = vmatpush1.msra.mxu0 0.0
  %4253 = vmatprep.subr.mxu0 0.0
  %4254 = vmatpush1.msra.mxu0 0.0
  %4255 = vmatprep.subr.mxu0 0.0
  %4256 = vmatpush1.msra.mxu0 0.0
  %4257 = vmatprep.subr.mxu0 0.0
  %4258 = vmatpush1.msra.mxu0 %v4222
  %4259 = vmatprep.subr.mxu0 0.0
  %4260 = vmatpush2.msra.mxu0 0.0
  %4261 = vmatprep.subr.mxu0 0.0
  %4262 = vmatpush2.msra.mxu0 0.0
  %4263 = vmatprep.subr.mxu0 0.0
  %4264 = vmatpush2.msra.mxu0 0.0
  %4265 = vmatprep.subr.mxu0 0.0
  %4266 = vmatpush2.msra.mxu0 0.0
  %4267 = vmatprep.subr.mxu0 0.0
  %4268 = vmatpush2.msra.mxu0 0.0
  %4269 = vmatprep.subr.mxu0 0.0
  %4270 = vmatpush2.msra.mxu0 0.0
  %4271 = vmatprep.subr.mxu0 0.0
  %4272 = vmatpush2.msra.mxu0 0.0
  %4273 = vmatprep.subr.mxu0 0.0
  %4274 = vmatpush2.msra.mxu0 0.0
  %4275 = vmatprep.subr.mxu0 0.0
  %4276 = vmatpush2.msra.mxu0 0.0
  %4277 = vmatprep.subr.mxu0 0.0
  %4278 = vmatpush2.msra.mxu0 0.0
  %4279 = vmatprep.subr.mxu0 0.0
  %4280 = vmatpush2.msra.mxu0 0.0
  %4281 = vmatprep.subr.mxu0 0.0
  %4282 = vmatpush2.msra.mxu0 0.0
  %4283 = vmatprep.subr.mxu0 0.0
  %4284 = vmatpush2.msra.mxu0 0.0
  %4285 = vmatprep.subr.mxu0 0.0
  %4286 = vmatpush2.msra.mxu0 0.0
  %4287 = vmatprep.subr.mxu0 0.0
  %4288 = vmatpush2.msra.mxu0 0.0
  %4289 = vmatprep.subr.mxu0 0.0
  %4290 = vmatpush2.msra.mxu0 0.0
  %4291 = vmatprep.mubr.f32.mxu0 0.0
  %4292 = vmatmul.mubr.f32.gmra.mxu0 %v4225
  %v4293 = vpop.f32.mrf.mxu0
  %v4294 = vadd.f32 0.0, %v4293
  %v4295 = vpop.f32.mrf.mxu0
  %4296 = vdwg.mxu0
  %4297 = vrot.lane.b32.xlu0 %v1292, 104
  %v4298 = vpop.permute.xlu0 %4297
  %4299 = vrot.lane.b32.xlu0 %v1292, 72
  %v4300 = vpop.permute.xlu0 %4299
  %v4301 = vsel %vm1317, %v4298, 0
  %v4303 = vsel %vm1317, %v4300, 0
  %4305 = vmatprep.subr.mxu0 0.0
  %4306 = vmatpush1.xpose.msra.mxu0 0.0
  %4307 = vmatprep.subr.mxu0 0.0
  %4308 = vmatpush1.xpose.msra.mxu0 0.0
  %4309 = vmatprep.subr.mxu0 0.0
  %4310 = vmatpush1.xpose.msra.mxu0 0.0
  %4311 = vmatprep.subr.mxu0 0.0
  %4312 = vmatpush1.xpose.msra.mxu0 0.0
  %4313 = vmatprep.subr.mxu0 0.0
  %4314 = vmatpush1.xpose.msra.mxu0 0.0
  %4315 = vmatprep.subr.mxu0 0.0
  %4316 = vmatpush1.xpose.msra.mxu0 0.0
  %4317 = vmatprep.subr.mxu0 0.0
  %4318 = vmatpush1.xpose.msra.mxu0 0.0
  %4319 = vmatprep.subr.mxu0 0.0
  %4320 = vmatpush1.xpose.msra.mxu0 0.0
  %4321 = vmatprep.subr.mxu0 0.0
  %4322 = vmatpush1.xpose.msra.mxu0 0.0
  %4323 = vmatprep.subr.mxu0 0.0
  %4324 = vmatpush1.xpose.msra.mxu0 0.0
  %4325 = vmatprep.subr.mxu0 0.0
  %4326 = vmatpush1.xpose.msra.mxu0 0.0
  %4327 = vmatprep.subr.mxu0 0.0
  %4328 = vmatpush1.xpose.msra.mxu0 0.0
  %4329 = vmatprep.subr.mxu0 0.0
  %4330 = vmatpush1.xpose.msra.mxu0 0.0
  %4331 = vmatprep.subr.mxu0 0.0
  %4332 = vmatpush1.xpose.msra.mxu0 0.0
  %4333 = vmatprep.subr.mxu0 0.0
  %4334 = vmatpush1.xpose.msra.mxu0 0.0
  %4335 = vmatprep.subr.mxu0 0.0
  %4336 = vmatpush1.xpose.msra.mxu0 %v4303
  %4337 = vmatprep.subr.mxu0 0.0
  %4338 = vmatpush2.xpose.msra.mxu0 0.0
  %4339 = vmatprep.subr.mxu0 0.0
  %4340 = vmatpush2.xpose.msra.mxu0 0.0
  %4341 = vmatprep.subr.mxu0 0.0
  %4342 = vmatpush2.xpose.msra.mxu0 0.0
  %4343 = vmatprep.subr.mxu0 0.0
  %4344 = vmatpush2.xpose.msra.mxu0 0.0
  %4345 = vmatprep.subr.mxu0 0.0
  %4346 = vmatpush2.xpose.msra.mxu0 0.0
  %4347 = vmatprep.subr.mxu0 0.0
  %4348 = vmatpush2.xpose.msra.mxu0 0.0
  %4349 = vmatprep.subr.mxu0 0.0
  %4350 = vmatpush2.xpose.msra.mxu0 0.0
  %4351 = vmatprep.subr.mxu0 0.0
  %4352 = vmatpush2.xpose.msra.mxu0 0.0
  %4353 = vmatprep.subr.mxu0 0.0
  %4354 = vmatpush2.xpose.msra.mxu0 0.0
  %4355 = vmatprep.subr.mxu0 0.0
  %4356 = vmatpush2.xpose.msra.mxu0 0.0
  %4357 = vmatprep.subr.mxu0 0.0
  %4358 = vmatpush2.xpose.msra.mxu0 0.0
  %4359 = vmatprep.subr.mxu0 0.0
  %4360 = vmatpush2.xpose.msra.mxu0 0.0
  %4361 = vmatprep.subr.mxu0 0.0
  %4362 = vmatpush2.xpose.msra.mxu0 0.0
  %4363 = vmatprep.subr.mxu0 0.0
  %4364 = vmatpush2.xpose.msra.mxu0 0.0
  %4365 = vmatprep.subr.mxu0 0.0
  %4366 = vmatpush2.xpose.msra.mxu0 0.0
  %4367 = vmatprep.subr.mxu0 0.0
  %4368 = vmatpush2.xpose.msra.mxu0 0.0
  %4369 = vmatprep.mubr.f32.mxu0 0.0
  %4370 = vmatmul.mubr.f32.gmra.mxu0 %v4301
  %v4371 = vpop.f32.mrf.mxu0
  %v4372 = vadd.f32 0.0, %v4371
  %v4373 = vpop.f32.mrf.mxu0
  %4374 = vdwg.mxu0
  %4375 = vrot.lane.b32.xlu0 %v1295, 104
  %v4376 = vpop.permute.xlu0 %4375
  %4377 = vrot.lane.b32.xlu0 %v1295, 72
  %v4378 = vpop.permute.xlu0 %4377
  %v4379 = vsel %vm1317, %v4376, 0
  %v4381 = vsel %vm1317, %v4378, 0
  %4383 = vmatprep.subr.mxu0 0.0
  %4384 = vmatpush1.xpose.msra.mxu0 0.0
  %4385 = vmatprep.subr.mxu0 0.0
  %4386 = vmatpush1.xpose.msra.mxu0 0.0
  %4387 = vmatprep.subr.mxu0 0.0
  %4388 = vmatpush1.xpose.msra.mxu0 0.0
  %4389 = vmatprep.subr.mxu0 0.0
  %4390 = vmatpush1.xpose.msra.mxu0 0.0
  %4391 = vmatprep.subr.mxu0 0.0
  %4392 = vmatpush1.xpose.msra.mxu0 0.0
  %4393 = vmatprep.subr.mxu0 0.0
  %4394 = vmatpush1.xpose.msra.mxu0 0.0
  %4395 = vmatprep.subr.mxu0 0.0
  %4396 = vmatpush1.xpose.msra.mxu0 0.0
  %4397 = vmatprep.subr.mxu0 0.0
  %4398 = vmatpush1.xpose.msra.mxu0 0.0
  %4399 = vmatprep.subr.mxu0 0.0
  %4400 = vmatpush1.xpose.msra.mxu0 0.0
  %4401 = vmatprep.subr.mxu0 0.0
  %4402 = vmatpush1.xpose.msra.mxu0 0.0
  %4403 = vmatprep.subr.mxu0 0.0
  %4404 = vmatpush1.xpose.msra.mxu0 0.0
  %4405 = vmatprep.subr.mxu0 0.0
  %4406 = vmatpush1.xpose.msra.mxu0 0.0
  %4407 = vmatprep.subr.mxu0 0.0
  %4408 = vmatpush1.xpose.msra.mxu0 0.0
  %4409 = vmatprep.subr.mxu0 0.0
  %4410 = vmatpush1.xpose.msra.mxu0 0.0
  %4411 = vmatprep.subr.mxu0 0.0
  %4412 = vmatpush1.xpose.msra.mxu0 0.0
  %4413 = vmatprep.subr.mxu0 0.0
  %4414 = vmatpush1.xpose.msra.mxu0 %v4381
  %4415 = vmatprep.subr.mxu0 0.0
  %4416 = vmatpush2.xpose.msra.mxu0 0.0
  %4417 = vmatprep.subr.mxu0 0.0
  %4418 = vmatpush2.xpose.msra.mxu0 0.0
  %4419 = vmatprep.subr.mxu0 0.0
  %4420 = vmatpush2.xpose.msra.mxu0 0.0
  %4421 = vmatprep.subr.mxu0 0.0
  %4422 = vmatpush2.xpose.msra.mxu0 0.0
  %4423 = vmatprep.subr.mxu0 0.0
  %4424 = vmatpush2.xpose.msra.mxu0 0.0
  %4425 = vmatprep.subr.mxu0 0.0
  %4426 = vmatpush2.xpose.msra.mxu0 0.0
  %4427 = vmatprep.subr.mxu0 0.0
  %4428 = vmatpush2.xpose.msra.mxu0 0.0
  %4429 = vmatprep.subr.mxu0 0.0
  %4430 = vmatpush2.xpose.msra.mxu0 0.0
  %4431 = vmatprep.subr.mxu0 0.0
  %4432 = vmatpush2.xpose.msra.mxu0 0.0
  %4433 = vmatprep.subr.mxu0 0.0
  %4434 = vmatpush2.xpose.msra.mxu0 0.0
  %4435 = vmatprep.subr.mxu0 0.0
  %4436 = vmatpush2.xpose.msra.mxu0 0.0
  %4437 = vmatprep.subr.mxu0 0.0
  %4438 = vmatpush2.xpose.msra.mxu0 0.0
  %4439 = vmatprep.subr.mxu0 0.0
  %4440 = vmatpush2.xpose.msra.mxu0 0.0
  %4441 = vmatprep.subr.mxu0 0.0
  %4442 = vmatpush2.xpose.msra.mxu0 0.0
  %4443 = vmatprep.subr.mxu0 0.0
  %4444 = vmatpush2.xpose.msra.mxu0 0.0
  %4445 = vmatprep.subr.mxu0 0.0
  %4446 = vmatpush2.xpose.msra.mxu0 0.0
  %4447 = vmatprep.mubr.f32.mxu0 0.0
  %4448 = vmatmul.mubr.f32.gmra.mxu0 %v4379
  %v4449 = vpop.f32.mrf.mxu0
  %v4450 = vadd.f32 0.0, %v4449
  %v4451 = vpop.f32.mrf.mxu0
  %4452 = vdwg.mxu0
  %4453 = vrot.lane.b32.xlu0 %v1300, 104
  %v4454 = vpop.permute.xlu0 %4453
  %4455 = vrot.lane.b32.xlu0 %v1300, 72
  %v4456 = vpop.permute.xlu0 %4455
  %v4457 = vsel %vm1317, %v4454, 0
  %v4459 = vsel %vm1317, %v4456, 0
  %4461 = vmatprep.subr.mxu0 0.0
  %4462 = vmatpush1.xpose.msra.mxu0 0.0
  %4463 = vmatprep.subr.mxu0 0.0
  %4464 = vmatpush1.xpose.msra.mxu0 0.0
  %4465 = vmatprep.subr.mxu0 0.0
  %4466 = vmatpush1.xpose.msra.mxu0 0.0
  %4467 = vmatprep.subr.mxu0 0.0
  %4468 = vmatpush1.xpose.msra.mxu0 0.0
  %4469 = vmatprep.subr.mxu0 0.0
  %4470 = vmatpush1.xpose.msra.mxu0 0.0
  %4471 = vmatprep.subr.mxu0 0.0
  %4472 = vmatpush1.xpose.msra.mxu0 0.0
  %4473 = vmatprep.subr.mxu0 0.0
  %4474 = vmatpush1.xpose.msra.mxu0 0.0
  %4475 = vmatprep.subr.mxu0 0.0
  %4476 = vmatpush1.xpose.msra.mxu0 0.0
  %4477 = vmatprep.subr.mxu0 0.0
  %4478 = vmatpush1.xpose.msra.mxu0 0.0
  %4479 = vmatprep.subr.mxu0 0.0
  %4480 = vmatpush1.xpose.msra.mxu0 0.0
  %4481 = vmatprep.subr.mxu0 0.0
  %4482 = vmatpush1.xpose.msra.mxu0 0.0
  %4483 = vmatprep.subr.mxu0 0.0
  %4484 = vmatpush1.xpose.msra.mxu0 0.0
  %4485 = vmatprep.subr.mxu0 0.0
  %4486 = vmatpush1.xpose.msra.mxu0 0.0
  %4487 = vmatprep.subr.mxu0 0.0
  %4488 = vmatpush1.xpose.msra.mxu0 0.0
  %4489 = vmatprep.subr.mxu0 0.0
  %4490 = vmatpush1.xpose.msra.mxu0 0.0
  %4491 = vmatprep.subr.mxu0 0.0
  %4492 = vmatpush1.xpose.msra.mxu0 %v4459
  %4493 = vmatprep.subr.mxu0 0.0
  %4494 = vmatpush2.xpose.msra.mxu0 0.0
  %4495 = vmatprep.subr.mxu0 0.0
  %4496 = vmatpush2.xpose.msra.mxu0 0.0
  %4497 = vmatprep.subr.mxu0 0.0
  %4498 = vmatpush2.xpose.msra.mxu0 0.0
  %4499 = vmatprep.subr.mxu0 0.0
  %4500 = vmatpush2.xpose.msra.mxu0 0.0
  %4501 = vmatprep.subr.mxu0 0.0
  %4502 = vmatpush2.xpose.msra.mxu0 0.0
  %4503 = vmatprep.subr.mxu0 0.0
  %4504 = vmatpush2.xpose.msra.mxu0 0.0
  %4505 = vmatprep.subr.mxu0 0.0
  %4506 = vmatpush2.xpose.msra.mxu0 0.0
  %4507 = vmatprep.subr.mxu0 0.0
  %4508 = vmatpush2.xpose.msra.mxu0 0.0
  %4509 = vmatprep.subr.mxu0 0.0
  %4510 = vmatpush2.xpose.msra.mxu0 0.0
  %4511 = vmatprep.subr.mxu0 0.0
  %4512 = vmatpush2.xpose.msra.mxu0 0.0
  %4513 = vmatprep.subr.mxu0 0.0
  %4514 = vmatpush2.xpose.msra.mxu0 0.0
  %4515 = vmatprep.subr.mxu0 0.0
  %4516 = vmatpush2.xpose.msra.mxu0 0.0
  %4517 = vmatprep.subr.mxu0 0.0
  %4518 = vmatpush2.xpose.msra.mxu0 0.0
  %4519 = vmatprep.subr.mxu0 0.0
  %4520 = vmatpush2.xpose.msra.mxu0 0.0
  %4521 = vmatprep.subr.mxu0 0.0
  %4522 = vmatpush2.xpose.msra.mxu0 0.0
  %4523 = vmatprep.subr.mxu0 0.0
  %4524 = vmatpush2.xpose.msra.mxu0 0.0
  %4525 = vmatprep.mubr.f32.mxu0 0.0
  %4526 = vmatmul.mubr.f32.gmra.mxu0 %v4457
  %v4527 = vpop.f32.mrf.mxu0
  %v4528 = vadd.f32 0.0, %v4527
  %v4529 = vpop.f32.mrf.mxu0
  %4530 = vdwg.mxu0
  %4531 = vrot.lane.b32.xlu0 %v1303, 104
  %v4532 = vpop.permute.xlu0 %4531
  %4533 = vrot.lane.b32.xlu0 %v1303, 72
  %v4534 = vpop.permute.xlu0 %4533
  %v4535 = vsel %vm1317, %v4532, 0
  %v4537 = vsel %vm1317, %v4534, 0
  %4539 = vmatprep.subr.mxu0 0.0
  %4540 = vmatpush1.xpose.msra.mxu0 0.0
  %4541 = vmatprep.subr.mxu0 0.0
  %4542 = vmatpush1.xpose.msra.mxu0 0.0
  %4543 = vmatprep.subr.mxu0 0.0
  %4544 = vmatpush1.xpose.msra.mxu0 0.0
  %4545 = vmatprep.subr.mxu0 0.0
  %4546 = vmatpush1.xpose.msra.mxu0 0.0
  %4547 = vmatprep.subr.mxu0 0.0
  %4548 = vmatpush1.xpose.msra.mxu0 0.0
  %4549 = vmatprep.subr.mxu0 0.0
  %4550 = vmatpush1.xpose.msra.mxu0 0.0
  %4551 = vmatprep.subr.mxu0 0.0
  %4552 = vmatpush1.xpose.msra.mxu0 0.0
  %4553 = vmatprep.subr.mxu0 0.0
  %4554 = vmatpush1.xpose.msra.mxu0 0.0
  %4555 = vmatprep.subr.mxu0 0.0
  %4556 = vmatpush1.xpose.msra.mxu0 0.0
  %4557 = vmatprep.subr.mxu0 0.0
  %4558 = vmatpush1.xpose.msra.mxu0 0.0
  %4559 = vmatprep.subr.mxu0 0.0
  %4560 = vmatpush1.xpose.msra.mxu0 0.0
  %4561 = vmatprep.subr.mxu0 0.0
  %4562 = vmatpush1.xpose.msra.mxu0 0.0
  %4563 = vmatprep.subr.mxu0 0.0
  %4564 = vmatpush1.xpose.msra.mxu0 0.0
  %4565 = vmatprep.subr.mxu0 0.0
  %4566 = vmatpush1.xpose.msra.mxu0 0.0
  %4567 = vmatprep.subr.mxu0 0.0
  %4568 = vmatpush1.xpose.msra.mxu0 0.0
  %4569 = vmatprep.subr.mxu0 0.0
  %4570 = vmatpush1.xpose.msra.mxu0 %v4537
  %4571 = vmatprep.subr.mxu0 0.0
  %4572 = vmatpush2.xpose.msra.mxu0 0.0
  %4573 = vmatprep.subr.mxu0 0.0
  %4574 = vmatpush2.xpose.msra.mxu0 0.0
  %4575 = vmatprep.subr.mxu0 0.0
  %4576 = vmatpush2.xpose.msra.mxu0 0.0
  %4577 = vmatprep.subr.mxu0 0.0
  %4578 = vmatpush2.xpose.msra.mxu0 0.0
  %4579 = vmatprep.subr.mxu0 0.0
  %4580 = vmatpush2.xpose.msra.mxu0 0.0
  %4581 = vmatprep.subr.mxu0 0.0
  %4582 = vmatpush2.xpose.msra.mxu0 0.0
  %4583 = vmatprep.subr.mxu0 0.0
  %4584 = vmatpush2.xpose.msra.mxu0 0.0
  %4585 = vmatprep.subr.mxu0 0.0
  %4586 = vmatpush2.xpose.msra.mxu0 0.0
  %4587 = vmatprep.subr.mxu0 0.0
  %4588 = vmatpush2.xpose.msra.mxu0 0.0
  %4589 = vmatprep.subr.mxu0 0.0
  %4590 = vmatpush2.xpose.msra.mxu0 0.0
  %4591 = vmatprep.subr.mxu0 0.0
  %4592 = vmatpush2.xpose.msra.mxu0 0.0
  %4593 = vmatprep.subr.mxu0 0.0
  %4594 = vmatpush2.xpose.msra.mxu0 0.0
  %4595 = vmatprep.subr.mxu0 0.0
  %4596 = vmatpush2.xpose.msra.mxu0 0.0
  %4597 = vmatprep.subr.mxu0 0.0
  %4598 = vmatpush2.xpose.msra.mxu0 0.0
  %4599 = vmatprep.subr.mxu0 0.0
  %4600 = vmatpush2.xpose.msra.mxu0 0.0
  %4601 = vmatprep.subr.mxu0 0.0
  %4602 = vmatpush2.xpose.msra.mxu0 0.0
  %4603 = vmatprep.mubr.f32.mxu0 0.0
  %4604 = vmatmul.mubr.f32.gmra.mxu0 %v4535
  %v4605 = vpop.f32.mrf.mxu0
  %v4606 = vadd.f32 0.0, %v4605
  %v4607 = vpop.f32.mrf.mxu0
  %4608 = vdwg.mxu0
  %4609 = vrot.lane.b32.xlu0 %v1308, 104
  %v4610 = vpop.permute.xlu0 %4609
  %4611 = vrot.lane.b32.xlu0 %v1308, 72
  %v4612 = vpop.permute.xlu0 %4611
  %v4613 = vsel %vm1317, %v4610, 0
  %v4615 = vsel %vm1317, %v4612, 0
  %4617 = vmatprep.subr.mxu0 0.0
  %4618 = vmatpush1.xpose.msra.mxu0 0.0
  %4619 = vmatprep.subr.mxu0 0.0
  %4620 = vmatpush1.xpose.msra.mxu0 0.0
  %4621 = vmatprep.subr.mxu0 0.0
  %4622 = vmatpush1.xpose.msra.mxu0 0.0
  %4623 = vmatprep.subr.mxu0 0.0
  %4624 = vmatpush1.xpose.msra.mxu0 0.0
  %4625 = vmatprep.subr.mxu0 0.0
  %4626 = vmatpush1.xpose.msra.mxu0 0.0
  %4627 = vmatprep.subr.mxu0 0.0
  %4628 = vmatpush1.xpose.msra.mxu0 0.0
  %4629 = vmatprep.subr.mxu0 0.0
  %4630 = vmatpush1.xpose.msra.mxu0 0.0
  %4631 = vmatprep.subr.mxu0 0.0
  %4632 = vmatpush1.xpose.msra.mxu0 0.0
  %4633 = vmatprep.subr.mxu0 0.0
  %4634 = vmatpush1.xpose.msra.mxu0 0.0
  %4635 = vmatprep.subr.mxu0 0.0
  %4636 = vmatpush1.xpose.msra.mxu0 0.0
  %4637 = vmatprep.subr.mxu0 0.0
  %4638 = vmatpush1.xpose.msra.mxu0 0.0
  %4639 = vmatprep.subr.mxu0 0.0
  %4640 = vmatpush1.xpose.msra.mxu0 0.0
  %4641 = vmatprep.subr.mxu0 0.0
  %4642 = vmatpush1.xpose.msra.mxu0 0.0
  %4643 = vmatprep.subr.mxu0 0.0
  %4644 = vmatpush1.xpose.msra.mxu0 0.0
  %4645 = vmatprep.subr.mxu0 0.0
  %4646 = vmatpush1.xpose.msra.mxu0 0.0
  %4647 = vmatprep.subr.mxu0 0.0
  %4648 = vmatpush1.xpose.msra.mxu0 %v4615
  %4649 = vmatprep.subr.mxu0 0.0
  %4650 = vmatpush2.xpose.msra.mxu0 0.0
  %4651 = vmatprep.subr.mxu0 0.0
  %4652 = vmatpush2.xpose.msra.mxu0 0.0
  %4653 = vmatprep.subr.mxu0 0.0
  %4654 = vmatpush2.xpose.msra.mxu0 0.0
  %4655 = vmatprep.subr.mxu0 0.0
  %4656 = vmatpush2.xpose.msra.mxu0 0.0
  %4657 = vmatprep.subr.mxu0 0.0
  %4658 = vmatpush2.xpose.msra.mxu0 0.0
  %4659 = vmatprep.subr.mxu0 0.0
  %4660 = vmatpush2.xpose.msra.mxu0 0.0
  %4661 = vmatprep.subr.mxu0 0.0
  %4662 = vmatpush2.xpose.msra.mxu0 0.0
  %4663 = vmatprep.subr.mxu0 0.0
  %4664 = vmatpush2.xpose.msra.mxu0 0.0
  %4665 = vmatprep.subr.mxu0 0.0
  %4666 = vmatpush2.xpose.msra.mxu0 0.0
  %4667 = vmatprep.subr.mxu0 0.0
  %4668 = vmatpush2.xpose.msra.mxu0 0.0
  %4669 = vmatprep.subr.mxu0 0.0
  %4670 = vmatpush2.xpose.msra.mxu0 0.0
  %4671 = vmatprep.subr.mxu0 0.0
  %4672 = vmatpush2.xpose.msra.mxu0 0.0
  %4673 = vmatprep.subr.mxu0 0.0
  %4674 = vmatpush2.xpose.msra.mxu0 0.0
  %4675 = vmatprep.subr.mxu0 0.0
  %4676 = vmatpush2.xpose.msra.mxu0 0.0
  %4677 = vmatprep.subr.mxu0 0.0
  %4678 = vmatpush2.xpose.msra.mxu0 0.0
  %4679 = vmatprep.subr.mxu0 0.0
  %4680 = vmatpush2.xpose.msra.mxu0 0.0
  %4681 = vmatprep.mubr.f32.mxu0 0.0
  %4682 = vmatmul.mubr.f32.gmra.mxu0 %v4613
  %v4683 = vpop.f32.mrf.mxu0
  %v4684 = vadd.f32 0.0, %v4683
  %v4685 = vpop.f32.mrf.mxu0
  %4686 = vdwg.mxu0
  %4687 = vrot.lane.b32.xlu0 %v1311, 104
  %v4688 = vpop.permute.xlu0 %4687
  %4689 = vrot.lane.b32.xlu0 %v1311, 72
  %v4690 = vpop.permute.xlu0 %4689
  %v4691 = vsel %vm1317, %v4688, 0
  %v4693 = vsel %vm1317, %v4690, 0
  %4695 = vmatprep.subr.mxu0 0.0
  %4696 = vmatpush1.xpose.msra.mxu0 0.0
  %4697 = vmatprep.subr.mxu0 0.0
  %4698 = vmatpush1.xpose.msra.mxu0 0.0
  %4699 = vmatprep.subr.mxu0 0.0
  %4700 = vmatpush1.xpose.msra.mxu0 0.0
  %4701 = vmatprep.subr.mxu0 0.0
  %4702 = vmatpush1.xpose.msra.mxu0 0.0
  %4703 = vmatprep.subr.mxu0 0.0
  %4704 = vmatpush1.xpose.msra.mxu0 0.0
  %4705 = vmatprep.subr.mxu0 0.0
  %4706 = vmatpush1.xpose.msra.mxu0 0.0
  %4707 = vmatprep.subr.mxu0 0.0
  %4708 = vmatpush1.xpose.msra.mxu0 0.0
  %4709 = vmatprep.subr.mxu0 0.0
  %4710 = vmatpush1.xpose.msra.mxu0 0.0
  %4711 = vmatprep.subr.mxu0 0.0
  %4712 = vmatpush1.xpose.msra.mxu0 0.0
  %4713 = vmatprep.subr.mxu0 0.0
  %4714 = vmatpush1.xpose.msra.mxu0 0.0
  %4715 = vmatprep.subr.mxu0 0.0
  %4716 = vmatpush1.xpose.msra.mxu0 0.0
  %4717 = vmatprep.subr.mxu0 0.0
  %4718 = vmatpush1.xpose.msra.mxu0 0.0
  %4719 = vmatprep.subr.mxu0 0.0
  %4720 = vmatpush1.xpose.msra.mxu0 0.0
  %4721 = vmatprep.subr.mxu0 0.0
  %4722 = vmatpush1.xpose.msra.mxu0 0.0
  %4723 = vmatprep.subr.mxu0 0.0
  %4724 = vmatpush1.xpose.msra.mxu0 0.0
  %4725 = vmatprep.subr.mxu0 0.0
  %4726 = vmatpush1.xpose.msra.mxu0 %v4693
  %4727 = vmatprep.subr.mxu0 0.0
  %4728 = vmatpush2.xpose.msra.mxu0 0.0
  %4729 = vmatprep.subr.mxu0 0.0
  %4730 = vmatpush2.xpose.msra.mxu0 0.0
  %4731 = vmatprep.subr.mxu0 0.0
  %4732 = vmatpush2.xpose.msra.mxu0 0.0
  %4733 = vmatprep.subr.mxu0 0.0
  %4734 = vmatpush2.xpose.msra.mxu0 0.0
  %4735 = vmatprep.subr.mxu0 0.0
  %4736 = vmatpush2.xpose.msra.mxu0 0.0
  %4737 = vmatprep.subr.mxu0 0.0
  %4738 = vmatpush2.xpose.msra.mxu0 0.0
  %4739 = vmatprep.subr.mxu0 0.0
  %4740 = vmatpush2.xpose.msra.mxu0 0.0
  %4741 = vmatprep.subr.mxu0 0.0
  %4742 = vmatpush2.xpose.msra.mxu0 0.0
  %4743 = vmatprep.subr.mxu0 0.0
  %4744 = vmatpush2.xpose.msra.mxu0 0.0
  %4745 = vmatprep.subr.mxu0 0.0
  %4746 = vmatpush2.xpose.msra.mxu0 0.0
  %4747 = vmatprep.subr.mxu0 0.0
  %4748 = vmatpush2.xpose.msra.mxu0 0.0
  %4749 = vmatprep.subr.mxu0 0.0
  %4750 = vmatpush2.xpose.msra.mxu0 0.0
  %4751 = vmatprep.subr.mxu0 0.0
  %4752 = vmatpush2.xpose.msra.mxu0 0.0
  %4753 = vmatprep.subr.mxu0 0.0
  %4754 = vmatpush2.xpose.msra.mxu0 0.0
  %4755 = vmatprep.subr.mxu0 0.0
  %4756 = vmatpush2.xpose.msra.mxu0 0.0
  %4757 = vmatprep.subr.mxu0 0.0
  %4758 = vmatpush2.xpose.msra.mxu0 0.0
  %4759 = vmatprep.mubr.f32.mxu0 0.0
  %4760 = vmatmul.mubr.f32.gmra.mxu0 %v4691
  %v4761 = vpop.f32.mrf.mxu0
  %v4762 = vadd.f32 0.0, %v4761
  %v4763 = vpop.f32.mrf.mxu0
  %4764 = vdwg.mxu0
  %v4765 = vmul.f32 %v4372, 0.35355338
  %v4766 = vmul.f32 %v4450, 0.35355338
  %v4767 = vmul.f32 %v4528, 0.35355338
  %v4768 = vmul.f32 %v4606, 0.35355338
  %v4769 = vmul.f32 %v4684, 0.35355338
  %v4770 = vmul.f32 %v4762, 0.35355338
  %v4771 = vsel %vm1317, %v4765, -inf
  %4772 = vmax.xlane.f32.xlu0 %v4771
  %v4773 = vpop.xlane.xlu0 %4772
  %v4774 = vsel %vm1317, %v4766, -inf
  %4775 = vmax.xlane.f32.xlu0 %v4774
  %v4776 = vpop.xlane.xlu0 %4775
  %v4777 = vsel %vm1317, %v4767, -inf
  %4778 = vmax.xlane.f32.xlu0 %v4777
  %v4779 = vpop.xlane.xlu0 %4778
  %v4780 = vsel %vm1317, %v4768, -inf
  %4781 = vmax.xlane.f32.xlu0 %v4780
  %v4782 = vpop.xlane.xlu0 %4781
  %v4783 = vsel %vm1317, %v4769, -inf
  %4784 = vmax.xlane.f32.xlu0 %v4783
  %v4785 = vpop.xlane.xlu0 %4784
  %v4786 = vsel %vm1317, %v4770, -inf
  %4787 = vmax.xlane.f32.xlu0 %v4786
  %v4788 = vpop.xlane.xlu0 %4787
  %v4789 = vsub.f32 %v4765, %v4773
  %v4790 = vsub.f32 %v4766, %v4776
  %v4791 = vsub.f32 %v4767, %v4779
  %v4792 = vsub.f32 %v4768, %v4782
  %v4793 = vsub.f32 %v4769, %v4785
  %v4794 = vsub.f32 %v4770, %v4788
  %v4795 = vmul.f32 %v4789, 1.442695
  %v4796 = vpow.pop %v4795
  %v4797 = vmul.f32 %v4790, 1.442695
  %v4798 = vpow.pop %v4797
  %v4799 = vmul.f32 %v4791, 1.442695
  %v4800 = vpow.pop %v4799
  %v4801 = vmul.f32 %v4792, 1.442695
  %v4802 = vpow.pop %v4801
  %v4803 = vmul.f32 %v4793, 1.442695
  %v4804 = vpow.pop %v4803
  %v4805 = vmul.f32 %v4794, 1.442695
  %v4806 = vpow.pop %v4805
  %v4807 = vsel %vm1317, %v4796, 0.0
  %4808 = vadd.xlane.f32.xlu0 %v4807
  %v4809 = vpop.xlane.xlu0 %4808
  %v4810 = vsel %vm1317, %v4798, 0.0
  %4811 = vadd.xlane.f32.xlu0 %v4810
  %v4812 = vpop.xlane.xlu0 %4811
  %v4813 = vsel %vm1317, %v4800, 0.0
  %4814 = vadd.xlane.f32.xlu0 %v4813
  %v4815 = vpop.xlane.xlu0 %4814
  %v4816 = vsel %vm1317, %v4802, 0.0
  %4817 = vadd.xlane.f32.xlu0 %v4816
  %v4818 = vpop.xlane.xlu0 %4817
  %v4819 = vsel %vm1317, %v4804, 0.0
  %4820 = vadd.xlane.f32.xlu0 %v4819
  %v4821 = vpop.xlane.xlu0 %4820
  %v4822 = vsel %vm1317, %v4806, 0.0
  %4823 = vadd.xlane.f32.xlu0 %v4822
  %v4824 = vpop.xlane.xlu0 %4823
  %v4825 = vrcp.pop %v4809
  %v4826 = vrcp.pop %v4812
  %v4827 = vrcp.pop %v4815
  %v4828 = vrcp.pop %v4818
  %v4829 = vrcp.pop %v4821
  %v4830 = vrcp.pop %v4824
  %v4831 = vmul.f32 %v4796, %v4825
  %v4832 = vmul.f32 %v4798, %v4826
  %v4833 = vmul.f32 %v4800, %v4827
  %v4834 = vmul.f32 %v4802, %v4828
  %v4835 = vmul.f32 %v4804, %v4829
  %v4836 = vmul.f32 %v4806, %v4830
  %4837 = vrot.lane.b32.xlu0 %v1292, 40
  %v4838 = vpop.permute.xlu0 %4837
  %v4841 = vsel %vm1317, %v4831, 0
  %4843 = vmatprep.subr.mxu0 0.0
  %4844 = vmatpush1.msra.mxu0 0.0
  %4845 = vmatprep.subr.mxu0 0.0
  %4846 = vmatpush1.msra.mxu0 0.0
  %4847 = vmatprep.subr.mxu0 0.0
  %4848 = vmatpush1.msra.mxu0 0.0
  %4849 = vmatprep.subr.mxu0 0.0
  %4850 = vmatpush1.msra.mxu0 0.0
  %4851 = vmatprep.subr.mxu0 0.0
  %4852 = vmatpush1.msra.mxu0 0.0
  %4853 = vmatprep.subr.mxu0 0.0
  %4854 = vmatpush1.msra.mxu0 0.0
  %4855 = vmatprep.subr.mxu0 0.0
  %4856 = vmatpush1.msra.mxu0 0.0
  %4857 = vmatprep.subr.mxu0 0.0
  %4858 = vmatpush1.msra.mxu0 0.0
  %4859 = vmatprep.subr.mxu0 0.0
  %4860 = vmatpush1.msra.mxu0 0.0
  %4861 = vmatprep.subr.mxu0 0.0
  %4862 = vmatpush1.msra.mxu0 0.0
  %4863 = vmatprep.subr.mxu0 0.0
  %4864 = vmatpush1.msra.mxu0 0.0
  %4865 = vmatprep.subr.mxu0 0.0
  %4866 = vmatpush1.msra.mxu0 0.0
  %4867 = vmatprep.subr.mxu0 0.0
  %4868 = vmatpush1.msra.mxu0 0.0
  %4869 = vmatprep.subr.mxu0 0.0
  %4870 = vmatpush1.msra.mxu0 0.0
  %4871 = vmatprep.subr.mxu0 0.0
  %4872 = vmatpush1.msra.mxu0 0.0
  %4873 = vmatprep.subr.mxu0 0.0
  %4874 = vmatpush1.msra.mxu0 %v4838
  %4875 = vmatprep.subr.mxu0 0.0
  %4876 = vmatpush2.msra.mxu0 0.0
  %4877 = vmatprep.subr.mxu0 0.0
  %4878 = vmatpush2.msra.mxu0 0.0
  %4879 = vmatprep.subr.mxu0 0.0
  %4880 = vmatpush2.msra.mxu0 0.0
  %4881 = vmatprep.subr.mxu0 0.0
  %4882 = vmatpush2.msra.mxu0 0.0
  %4883 = vmatprep.subr.mxu0 0.0
  %4884 = vmatpush2.msra.mxu0 0.0
  %4885 = vmatprep.subr.mxu0 0.0
  %4886 = vmatpush2.msra.mxu0 0.0
  %4887 = vmatprep.subr.mxu0 0.0
  %4888 = vmatpush2.msra.mxu0 0.0
  %4889 = vmatprep.subr.mxu0 0.0
  %4890 = vmatpush2.msra.mxu0 0.0
  %4891 = vmatprep.subr.mxu0 0.0
  %4892 = vmatpush2.msra.mxu0 0.0
  %4893 = vmatprep.subr.mxu0 0.0
  %4894 = vmatpush2.msra.mxu0 0.0
  %4895 = vmatprep.subr.mxu0 0.0
  %4896 = vmatpush2.msra.mxu0 0.0
  %4897 = vmatprep.subr.mxu0 0.0
  %4898 = vmatpush2.msra.mxu0 0.0
  %4899 = vmatprep.subr.mxu0 0.0
  %4900 = vmatpush2.msra.mxu0 0.0
  %4901 = vmatprep.subr.mxu0 0.0
  %4902 = vmatpush2.msra.mxu0 0.0
  %4903 = vmatprep.subr.mxu0 0.0
  %4904 = vmatpush2.msra.mxu0 0.0
  %4905 = vmatprep.subr.mxu0 0.0
  %4906 = vmatpush2.msra.mxu0 0.0
  %4907 = vmatprep.mubr.f32.mxu0 0.0
  %4908 = vmatmul.mubr.f32.gmra.mxu0 %v4841
  %v4909 = vpop.f32.mrf.mxu0
  %v4910 = vadd.f32 0.0, %v4909
  %v4911 = vpop.f32.mrf.mxu0
  %4912 = vdwg.mxu0
  %4913 = vrot.lane.b32.xlu0 %v1295, 40
  %v4914 = vpop.permute.xlu0 %4913
  %v4917 = vsel %vm1317, %v4832, 0
  %4919 = vmatprep.subr.mxu0 0.0
  %4920 = vmatpush1.msra.mxu0 0.0
  %4921 = vmatprep.subr.mxu0 0.0
  %4922 = vmatpush1.msra.mxu0 0.0
  %4923 = vmatprep.subr.mxu0 0.0
  %4924 = vmatpush1.msra.mxu0 0.0
  %4925 = vmatprep.subr.mxu0 0.0
  %4926 = vmatpush1.msra.mxu0 0.0
  %4927 = vmatprep.subr.mxu0 0.0
  %4928 = vmatpush1.msra.mxu0 0.0
  %4929 = vmatprep.subr.mxu0 0.0
  %4930 = vmatpush1.msra.mxu0 0.0
  %4931 = vmatprep.subr.mxu0 0.0
  %4932 = vmatpush1.msra.mxu0 0.0
  %4933 = vmatprep.subr.mxu0 0.0
  %4934 = vmatpush1.msra.mxu0 0.0
  %4935 = vmatprep.subr.mxu0 0.0
  %4936 = vmatpush1.msra.mxu0 0.0
  %4937 = vmatprep.subr.mxu0 0.0
  %4938 = vmatpush1.msra.mxu0 0.0
  %4939 = vmatprep.subr.mxu0 0.0
  %4940 = vmatpush1.msra.mxu0 0.0
  %4941 = vmatprep.subr.mxu0 0.0
  %4942 = vmatpush1.msra.mxu0 0.0
  %4943 = vmatprep.subr.mxu0 0.0
  %4944 = vmatpush1.msra.mxu0 0.0
  %4945 = vmatprep.subr.mxu0 0.0
  %4946 = vmatpush1.msra.mxu0 0.0
  %4947 = vmatprep.subr.mxu0 0.0
  %4948 = vmatpush1.msra.mxu0 0.0
  %4949 = vmatprep.subr.mxu0 0.0
  %4950 = vmatpush1.msra.mxu0 %v4914
  %4951 = vmatprep.subr.mxu0 0.0
  %4952 = vmatpush2.msra.mxu0 0.0
  %4953 = vmatprep.subr.mxu0 0.0
  %4954 = vmatpush2.msra.mxu0 0.0
  %4955 = vmatprep.subr.mxu0 0.0
  %4956 = vmatpush2.msra.mxu0 0.0
  %4957 = vmatprep.subr.mxu0 0.0
  %4958 = vmatpush2.msra.mxu0 0.0
  %4959 = vmatprep.subr.mxu0 0.0
  %4960 = vmatpush2.msra.mxu0 0.0
  %4961 = vmatprep.subr.mxu0 0.0
  %4962 = vmatpush2.msra.mxu0 0.0
  %4963 = vmatprep.subr.mxu0 0.0
  %4964 = vmatpush2.msra.mxu0 0.0
  %4965 = vmatprep.subr.mxu0 0.0
  %4966 = vmatpush2.msra.mxu0 0.0
  %4967 = vmatprep.subr.mxu0 0.0
  %4968 = vmatpush2.msra.mxu0 0.0
  %4969 = vmatprep.subr.mxu0 0.0
  %4970 = vmatpush2.msra.mxu0 0.0
  %4971 = vmatprep.subr.mxu0 0.0
  %4972 = vmatpush2.msra.mxu0 0.0
  %4973 = vmatprep.subr.mxu0 0.0
  %4974 = vmatpush2.msra.mxu0 0.0
  %4975 = vmatprep.subr.mxu0 0.0
  %4976 = vmatpush2.msra.mxu0 0.0
  %4977 = vmatprep.subr.mxu0 0.0
  %4978 = vmatpush2.msra.mxu0 0.0
  %4979 = vmatprep.subr.mxu0 0.0
  %4980 = vmatpush2.msra.mxu0 0.0
  %4981 = vmatprep.subr.mxu0 0.0
  %4982 = vmatpush2.msra.mxu0 0.0
  %4983 = vmatprep.mubr.f32.mxu0 0.0
  %4984 = vmatmul.mubr.f32.gmra.mxu0 %v4917
  %v4985 = vpop.f32.mrf.mxu0
  %v4986 = vadd.f32 0.0, %v4985
  %v4987 = vpop.f32.mrf.mxu0
  %4988 = vdwg.mxu0
  %4989 = vrot.lane.b32.xlu0 %v1300, 40
  %v4990 = vpop.permute.xlu0 %4989
  %v4993 = vsel %vm1317, %v4833, 0
  %4995 = vmatprep.subr.mxu0 0.0
  %4996 = vmatpush1.msra.mxu0 0.0
  %4997 = vmatprep.subr.mxu0 0.0
  %4998 = vmatpush1.msra.mxu0 0.0
  %4999 = vmatprep.subr.mxu0 0.0
  %5000 = vmatpush1.msra.mxu0 0.0
  %5001 = vmatprep.subr.mxu0 0.0
  %5002 = vmatpush1.msra.mxu0 0.0
  %5003 = vmatprep.subr.mxu0 0.0
  %5004 = vmatpush1.msra.mxu0 0.0
  %5005 = vmatprep.subr.mxu0 0.0
  %5006 = vmatpush1.msra.mxu0 0.0
  %5007 = vmatprep.subr.mxu0 0.0
  %5008 = vmatpush1.msra.mxu0 0.0
  %5009 = vmatprep.subr.mxu0 0.0
  %5010 = vmatpush1.msra.mxu0 0.0
  %5011 = vmatprep.subr.mxu0 0.0
  %5012 = vmatpush1.msra.mxu0 0.0
  %5013 = vmatprep.subr.mxu0 0.0
  %5014 = vmatpush1.msra.mxu0 0.0
  %5015 = vmatprep.subr.mxu0 0.0
  %5016 = vmatpush1.msra.mxu0 0.0
  %5017 = vmatprep.subr.mxu0 0.0
  %5018 = vmatpush1.msra.mxu0 0.0
  %5019 = vmatprep.subr.mxu0 0.0
  %5020 = vmatpush1.msra.mxu0 0.0
  %5021 = vmatprep.subr.mxu0 0.0
  %5022 = vmatpush1.msra.mxu0 0.0
  %5023 = vmatprep.subr.mxu0 0.0
  %5024 = vmatpush1.msra.mxu0 0.0
  %5025 = vmatprep.subr.mxu0 0.0
  %5026 = vmatpush1.msra.mxu0 %v4990
  %5027 = vmatprep.subr.mxu0 0.0
  %5028 = vmatpush2.msra.mxu0 0.0
  %5029 = vmatprep.subr.mxu0 0.0
  %5030 = vmatpush2.msra.mxu0 0.0
  %5031 = vmatprep.subr.mxu0 0.0
  %5032 = vmatpush2.msra.mxu0 0.0
  %5033 = vmatprep.subr.mxu0 0.0
  %5034 = vmatpush2.msra.mxu0 0.0
  %5035 = vmatprep.subr.mxu0 0.0
  %5036 = vmatpush2.msra.mxu0 0.0
  %5037 = vmatprep.subr.mxu0 0.0
  %5038 = vmatpush2.msra.mxu0 0.0
  %5039 = vmatprep.subr.mxu0 0.0
  %5040 = vmatpush2.msra.mxu0 0.0
  %5041 = vmatprep.subr.mxu0 0.0
  %5042 = vmatpush2.msra.mxu0 0.0
  %5043 = vmatprep.subr.mxu0 0.0
  %5044 = vmatpush2.msra.mxu0 0.0
  %5045 = vmatprep.subr.mxu0 0.0
  %5046 = vmatpush2.msra.mxu0 0.0
  %5047 = vmatprep.subr.mxu0 0.0
  %5048 = vmatpush2.msra.mxu0 0.0
  %5049 = vmatprep.subr.mxu0 0.0
  %5050 = vmatpush2.msra.mxu0 0.0
  %5051 = vmatprep.subr.mxu0 0.0
  %5052 = vmatpush2.msra.mxu0 0.0
  %5053 = vmatprep.subr.mxu0 0.0
  %5054 = vmatpush2.msra.mxu0 0.0
  %5055 = vmatprep.subr.mxu0 0.0
  %5056 = vmatpush2.msra.mxu0 0.0
  %5057 = vmatprep.subr.mxu0 0.0
  %5058 = vmatpush2.msra.mxu0 0.0
  %5059 = vmatprep.mubr.f32.mxu0 0.0
  %5060 = vmatmul.mubr.f32.gmra.mxu0 %v4993
  %v5061 = vpop.f32.mrf.mxu0
  %v5062 = vadd.f32 0.0, %v5061
  %v5063 = vpop.f32.mrf.mxu0
  %5064 = vdwg.mxu0
  %5065 = vrot.lane.b32.xlu0 %v1303, 40
  %v5066 = vpop.permute.xlu0 %5065
  %v5069 = vsel %vm1317, %v4834, 0
  %5071 = vmatprep.subr.mxu0 0.0
  %5072 = vmatpush1.msra.mxu0 0.0
  %5073 = vmatprep.subr.mxu0 0.0
  %5074 = vmatpush1.msra.mxu0 0.0
  %5075 = vmatprep.subr.mxu0 0.0
  %5076 = vmatpush1.msra.mxu0 0.0
  %5077 = vmatprep.subr.mxu0 0.0
  %5078 = vmatpush1.msra.mxu0 0.0
  %5079 = vmatprep.subr.mxu0 0.0
  %5080 = vmatpush1.msra.mxu0 0.0
  %5081 = vmatprep.subr.mxu0 0.0
  %5082 = vmatpush1.msra.mxu0 0.0
  %5083 = vmatprep.subr.mxu0 0.0
  %5084 = vmatpush1.msra.mxu0 0.0
  %5085 = vmatprep.subr.mxu0 0.0
  %5086 = vmatpush1.msra.mxu0 0.0
  %5087 = vmatprep.subr.mxu0 0.0
  %5088 = vmatpush1.msra.mxu0 0.0
  %5089 = vmatprep.subr.mxu0 0.0
  %5090 = vmatpush1.msra.mxu0 0.0
  %5091 = vmatprep.subr.mxu0 0.0
  %5092 = vmatpush1.msra.mxu0 0.0
  %5093 = vmatprep.subr.mxu0 0.0
  %5094 = vmatpush1.msra.mxu0 0.0
  %5095 = vmatprep.subr.mxu0 0.0
  %5096 = vmatpush1.msra.mxu0 0.0
  %5097 = vmatprep.subr.mxu0 0.0
  %5098 = vmatpush1.msra.mxu0 0.0
  %5099 = vmatprep.subr.mxu0 0.0
  %5100 = vmatpush1.msra.mxu0 0.0
  %5101 = vmatprep.subr.mxu0 0.0
  %5102 = vmatpush1.msra.mxu0 %v5066
  %5103 = vmatprep.subr.mxu0 0.0
  %5104 = vmatpush2.msra.mxu0 0.0
  %5105 = vmatprep.subr.mxu0 0.0
  %5106 = vmatpush2.msra.mxu0 0.0
  %5107 = vmatprep.subr.mxu0 0.0
  %5108 = vmatpush2.msra.mxu0 0.0
  %5109 = vmatprep.subr.mxu0 0.0
  %5110 = vmatpush2.msra.mxu0 0.0
  %5111 = vmatprep.subr.mxu0 0.0
  %5112 = vmatpush2.msra.mxu0 0.0
  %5113 = vmatprep.subr.mxu0 0.0
  %5114 = vmatpush2.msra.mxu0 0.0
  %5115 = vmatprep.subr.mxu0 0.0
  %5116 = vmatpush2.msra.mxu0 0.0
  %5117 = vmatprep.subr.mxu0 0.0
  %5118 = vmatpush2.msra.mxu0 0.0
  %5119 = vmatprep.subr.mxu0 0.0
  %5120 = vmatpush2.msra.mxu0 0.0
  %5121 = vmatprep.subr.mxu0 0.0
  %5122 = vmatpush2.msra.mxu0 0.0
  %5123 = vmatprep.subr.mxu0 0.0
  %5124 = vmatpush2.msra.mxu0 0.0
  %5125 = vmatprep.subr.mxu0 0.0
  %5126 = vmatpush2.msra.mxu0 0.0
  %5127 = vmatprep.subr.mxu0 0.0
  %5128 = vmatpush2.msra.mxu0 0.0
  %5129 = vmatprep.subr.mxu0 0.0
  %5130 = vmatpush2.msra.mxu0 0.0
  %5131 = vmatprep.subr.mxu0 0.0
  %5132 = vmatpush2.msra.mxu0 0.0
  %5133 = vmatprep.subr.mxu0 0.0
  %5134 = vmatpush2.msra.mxu0 0.0
  %5135 = vmatprep.mubr.f32.mxu0 0.0
  %5136 = vmatmul.mubr.f32.gmra.mxu0 %v5069
  %v5137 = vpop.f32.mrf.mxu0
  %v5138 = vadd.f32 0.0, %v5137
  %v5139 = vpop.f32.mrf.mxu0
  %5140 = vdwg.mxu0
  %5141 = vrot.lane.b32.xlu0 %v1308, 40
  %v5142 = vpop.permute.xlu0 %5141
  %v5145 = vsel %vm1317, %v4835, 0
  %5147 = vmatprep.subr.mxu0 0.0
  %5148 = vmatpush1.msra.mxu0 0.0
  %5149 = vmatprep.subr.mxu0 0.0
  %5150 = vmatpush1.msra.mxu0 0.0
  %5151 = vmatprep.subr.mxu0 0.0
  %5152 = vmatpush1.msra.mxu0 0.0
  %5153 = vmatprep.subr.mxu0 0.0
  %5154 = vmatpush1.msra.mxu0 0.0
  %5155 = vmatprep.subr.mxu0 0.0
  %5156 = vmatpush1.msra.mxu0 0.0
  %5157 = vmatprep.subr.mxu0 0.0
  %5158 = vmatpush1.msra.mxu0 0.0
  %5159 = vmatprep.subr.mxu0 0.0
  %5160 = vmatpush1.msra.mxu0 0.0
  %5161 = vmatprep.subr.mxu0 0.0
  %5162 = vmatpush1.msra.mxu0 0.0
  %5163 = vmatprep.subr.mxu0 0.0
  %5164 = vmatpush1.msra.mxu0 0.0
  %5165 = vmatprep.subr.mxu0 0.0
  %5166 = vmatpush1.msra.mxu0 0.0
  %5167 = vmatprep.subr.mxu0 0.0
  %5168 = vmatpush1.msra.mxu0 0.0
  %5169 = vmatprep.subr.mxu0 0.0
  %5170 = vmatpush1.msra.mxu0 0.0
  %5171 = vmatprep.subr.mxu0 0.0
  %5172 = vmatpush1.msra.mxu0 0.0
  %5173 = vmatprep.subr.mxu0 0.0
  %5174 = vmatpush1.msra.mxu0 0.0
  %5175 = vmatprep.subr.mxu0 0.0
  %5176 = vmatpush1.msra.mxu0 0.0
  %5177 = vmatprep.subr.mxu0 0.0
  %5178 = vmatpush1.msra.mxu0 %v5142
  %5179 = vmatprep.subr.mxu0 0.0
  %5180 = vmatpush2.msra.mxu0 0.0
  %5181 = vmatprep.subr.mxu0 0.0
  %5182 = vmatpush2.msra.mxu0 0.0
  %5183 = vmatprep.subr.mxu0 0.0
  %5184 = vmatpush2.msra.mxu0 0.0
  %5185 = vmatprep.subr.mxu0 0.0
  %5186 = vmatpush2.msra.mxu0 0.0
  %5187 = vmatprep.subr.mxu0 0.0
  %5188 = vmatpush2.msra.mxu0 0.0
  %5189 = vmatprep.subr.mxu0 0.0
  %5190 = vmatpush2.msra.mxu0 0.0
  %5191 = vmatprep.subr.mxu0 0.0
  %5192 = vmatpush2.msra.mxu0 0.0
  %5193 = vmatprep.subr.mxu0 0.0
  %5194 = vmatpush2.msra.mxu0 0.0
  %5195 = vmatprep.subr.mxu0 0.0
  %5196 = vmatpush2.msra.mxu0 0.0
  %5197 = vmatprep.subr.mxu0 0.0
  %5198 = vmatpush2.msra.mxu0 0.0
  %5199 = vmatprep.subr.mxu0 0.0
  %5200 = vmatpush2.msra.mxu0 0.0
  %5201 = vmatprep.subr.mxu0 0.0
  %5202 = vmatpush2.msra.mxu0 0.0
  %5203 = vmatprep.subr.mxu0 0.0
  %5204 = vmatpush2.msra.mxu0 0.0
  %5205 = vmatprep.subr.mxu0 0.0
  %5206 = vmatpush2.msra.mxu0 0.0
  %5207 = vmatprep.subr.mxu0 0.0
  %5208 = vmatpush2.msra.mxu0 0.0
  %5209 = vmatprep.subr.mxu0 0.0
  %5210 = vmatpush2.msra.mxu0 0.0
  %5211 = vmatprep.mubr.f32.mxu0 0.0
  %5212 = vmatmul.mubr.f32.gmra.mxu0 %v5145
  %v5213 = vpop.f32.mrf.mxu0
  %v5214 = vadd.f32 0.0, %v5213
  %v5215 = vpop.f32.mrf.mxu0
  %5216 = vdwg.mxu0
  %5217 = vrot.lane.b32.xlu0 %v1311, 40
  %v5218 = vpop.permute.xlu0 %5217
  %v5221 = vsel %vm1317, %v4836, 0
  %5223 = vmatprep.subr.mxu0 0.0
  %5224 = vmatpush1.msra.mxu0 0.0
  %5225 = vmatprep.subr.mxu0 0.0
  %5226 = vmatpush1.msra.mxu0 0.0
  %5227 = vmatprep.subr.mxu0 0.0
  %5228 = vmatpush1.msra.mxu0 0.0
  %5229 = vmatprep.subr.mxu0 0.0
  %5230 = vmatpush1.msra.mxu0 0.0
  %5231 = vmatprep.subr.mxu0 0.0
  %5232 = vmatpush1.msra.mxu0 0.0
  %5233 = vmatprep.subr.mxu0 0.0
  %5234 = vmatpush1.msra.mxu0 0.0
  %5235 = vmatprep.subr.mxu0 0.0
  %5236 = vmatpush1.msra.mxu0 0.0
  %5237 = vmatprep.subr.mxu0 0.0
  %5238 = vmatpush1.msra.mxu0 0.0
  %5239 = vmatprep.subr.mxu0 0.0
  %5240 = vmatpush1.msra.mxu0 0.0
  %5241 = vmatprep.subr.mxu0 0.0
  %5242 = vmatpush1.msra.mxu0 0.0
  %5243 = vmatprep.subr.mxu0 0.0
  %5244 = vmatpush1.msra.mxu0 0.0
  %5245 = vmatprep.subr.mxu0 0.0
  %5246 = vmatpush1.msra.mxu0 0.0
  %5247 = vmatprep.subr.mxu0 0.0
  %5248 = vmatpush1.msra.mxu0 0.0
  %5249 = vmatprep.subr.mxu0 0.0
  %5250 = vmatpush1.msra.mxu0 0.0
  %5251 = vmatprep.subr.mxu0 0.0
  %5252 = vmatpush1.msra.mxu0 0.0
  %5253 = vmatprep.subr.mxu0 0.0
  %5254 = vmatpush1.msra.mxu0 %v5218
  %5255 = vmatprep.subr.mxu0 0.0
  %5256 = vmatpush2.msra.mxu0 0.0
  %5257 = vmatprep.subr.mxu0 0.0
  %5258 = vmatpush2.msra.mxu0 0.0
  %5259 = vmatprep.subr.mxu0 0.0
  %5260 = vmatpush2.msra.mxu0 0.0
  %5261 = vmatprep.subr.mxu0 0.0
  %5262 = vmatpush2.msra.mxu0 0.0
  %5263 = vmatprep.subr.mxu0 0.0
  %5264 = vmatpush2.msra.mxu0 0.0
  %5265 = vmatprep.subr.mxu0 0.0
  %5266 = vmatpush2.msra.mxu0 0.0
  %5267 = vmatprep.subr.mxu0 0.0
  %5268 = vmatpush2.msra.mxu0 0.0
  %5269 = vmatprep.subr.mxu0 0.0
  %5270 = vmatpush2.msra.mxu0 0.0
  %5271 = vmatprep.subr.mxu0 0.0
  %5272 = vmatpush2.msra.mxu0 0.0
  %5273 = vmatprep.subr.mxu0 0.0
  %5274 = vmatpush2.msra.mxu0 0.0
  %5275 = vmatprep.subr.mxu0 0.0
  %5276 = vmatpush2.msra.mxu0 0.0
  %5277 = vmatprep.subr.mxu0 0.0
  %5278 = vmatpush2.msra.mxu0 0.0
  %5279 = vmatprep.subr.mxu0 0.0
  %5280 = vmatpush2.msra.mxu0 0.0
  %5281 = vmatprep.subr.mxu0 0.0
  %5282 = vmatpush2.msra.mxu0 0.0
  %5283 = vmatprep.subr.mxu0 0.0
  %5284 = vmatpush2.msra.mxu0 0.0
  %5285 = vmatprep.subr.mxu0 0.0
  %5286 = vmatpush2.msra.mxu0 0.0
  %5287 = vmatprep.mubr.f32.mxu0 0.0
  %5288 = vmatmul.mubr.f32.gmra.mxu0 %v5221
  %v5289 = vpop.f32.mrf.mxu0
  %v5290 = vadd.f32 0.0, %v5289
  %v5291 = vpop.f32.mrf.mxu0
  %5292 = vdwg.mxu0
  %5299 = vrot.lane.b32.xlu0 %v2918, 8
  %v5300 = vpop.permute.xlu0 %5299
  %5301 = vrot.lane.b32.xlu0 %v2994, 8
  %v5302 = vpop.permute.xlu0 %5301
  %5303 = vrot.lane.b32.xlu0 %v3070, 8
  %v5304 = vpop.permute.xlu0 %5303
  %5305 = vrot.lane.b32.xlu0 %v3146, 8
  %v5306 = vpop.permute.xlu0 %5305
  %5307 = vrot.lane.b32.xlu0 %v3222, 8
  %v5308 = vpop.permute.xlu0 %5307
  %5309 = vrot.lane.b32.xlu0 %v3298, 8
  %v5310 = vpop.permute.xlu0 %5309
  %5323 = vrot.lane.b32.xlu0 %v3914, 16
  %v5324 = vpop.permute.xlu0 %5323
  %5325 = vrot.lane.b32.xlu0 %v3990, 16
  %v5326 = vpop.permute.xlu0 %5325
  %5327 = vrot.lane.b32.xlu0 %v4066, 16
  %v5328 = vpop.permute.xlu0 %5327
  %5329 = vrot.lane.b32.xlu0 %v4142, 16
  %v5330 = vpop.permute.xlu0 %5329
  %5331 = vrot.lane.b32.xlu0 %v4218, 16
  %v5332 = vpop.permute.xlu0 %5331
  %5333 = vrot.lane.b32.xlu0 %v4294, 16
  %v5334 = vpop.permute.xlu0 %5333
  %5347 = vrot.lane.b32.xlu0 %v4910, 24
  %v5348 = vpop.permute.xlu0 %5347
  %5349 = vrot.lane.b32.xlu0 %v4986, 24
  %v5350 = vpop.permute.xlu0 %5349
  %5351 = vrot.lane.b32.xlu0 %v5062, 24
  %v5352 = vpop.permute.xlu0 %5351
  %5353 = vrot.lane.b32.xlu0 %v5138, 24
  %v5354 = vpop.permute.xlu0 %5353
  %5355 = vrot.lane.b32.xlu0 %v5214, 24
  %v5356 = vpop.permute.xlu0 %5355
  %5357 = vrot.lane.b32.xlu0 %v5290, 24
  %v5358 = vpop.permute.xlu0 %5357
  %v5365 = vsel %vm1317, %v1922, %v5300
  %v5366 = vsel %vm1317, %v1998, %v5302
  %v5367 = vsel %vm1317, %v2074, %v5304
  %v5368 = vsel %vm1317, %v2150, %v5306
  %v5369 = vsel %vm1317, %v2226, %v5308
  %v5370 = vsel %vm1317, %v2302, %v5310
  %vm5371 = vcmask 130048
  %v5372 = vsel %vm5371, %v5365, %v5324
  %v5373 = vsel %vm5371, %v5366, %v5326
  %v5374 = vsel %vm5371, %v5367, %v5328
  %v5375 = vsel %vm5371, %v5368, %v5330
  %v5376 = vsel %vm5371, %v5369, %v5332
  %v5377 = vsel %vm5371, %v5370, %v5334
  %vm5378 = vcmask 195584
  %v5379 = vsel %vm5378, %v5372, %v5348
  %v5380 = vsel %vm5378, %v5373, %v5350
  %v5381 = vsel %vm5378, %v5374, %v5352
  %v5382 = vsel %vm5378, %v5375, %v5354
  %v5383 = vsel %vm5378, %v5376, %v5356
  %v5384 = vsel %vm5378, %v5377, %v5358
  %v5385 = vld [vmem:[%s7] sm:$0xf]
  %v5386 = vld [vmem:[%s7 + $0x4] sm:$0xf]
  %v5387 = vld [vmem:[%s7 + $0x8] sm:$0xf]
  %v5388 = vld [vmem:[%s7 + $0xc] sm:$0xf]
  %v5389 = vld [vmem:[%s8] sm:$0x1]
  %v5390 = vpack.c.bf16 %v5380, %v5379
  %v5391 = vpack.c.bf16 %v5382, %v5381
  %v5392 = vpack.c.bf16 %v5384, %v5383
  %v5394 = vlaneseq
  %v5395 = vshrl.u32 %v5394, 7
  %v5396 = vsub.s32 0, %v5395
  %v5397 = vrot.slane %v5389, %v5396
  %v5403 = vunpack.c.l.b16 %v5385
  %v5404 = vunpack.c.l.b16 %v5386
  %v5405 = vunpack.c.l.b16 %v5387
  %v5406 = vunpack.c.l.b16 %v5388
  %v5407 = vpack.c.b16 %v5404, %v5403
  %v5408 = vpack.c.b16 %v5406, %v5405
  %v5412 = vsel %vm531, %v5390, 0
  %v5415 = vsel %vm531, %v5391, 0
  %v5418 = vsel %vm531, %v5392, 0
  %5420 = vmatprep.subr.bf16.mxu0 0
  %5421 = vmatpush1.bf16.msra.mxu0 0
  %5422 = vmatprep.subr.bf16.mxu0 0
  %5423 = vmatpush1.bf16.msra.mxu0 0
  %5424 = vmatprep.subr.bf16.mxu0 0
  %5425 = vmatpush1.bf16.msra.mxu0 0
  %5426 = vmatprep.subr.bf16.mxu0 0
  %5427 = vmatpush1.bf16.msra.mxu0 0
  %5428 = vmatprep.subr.bf16.mxu0 0
  %5429 = vmatpush1.bf16.msra.mxu0 0
  %5430 = vmatprep.subr.bf16.mxu0 0
  %5431 = vmatpush1.bf16.msra.mxu0 0
  %5432 = vmatprep.subr.bf16.mxu0 0
  %5433 = vmatpush1.bf16.msra.mxu0 %v5408
  %5434 = vmatprep.subr.bf16.mxu0 0
  %5435 = vmatpush1.bf16.msra.mxu0 %v5407
  %5436 = vmatprep.subr.bf16.mxu0 0
  %5437 = vmatpush2.bf16.msra.mxu0 0
  %5438 = vmatprep.subr.bf16.mxu0 0
  %5439 = vmatpush2.bf16.msra.mxu0 0
  %5440 = vmatprep.subr.bf16.mxu0 0
  %5441 = vmatpush2.bf16.msra.mxu0 0
  %5442 = vmatprep.subr.bf16.mxu0 0
  %5443 = vmatpush2.bf16.msra.mxu0 0
  %5444 = vmatprep.subr.bf16.mxu0 0
  %5445 = vmatpush2.bf16.msra.mxu0 0
  %5446 = vmatprep.subr.bf16.mxu0 0
  %5447 = vmatpush2.bf16.msra.mxu0 0
  %5448 = vmatprep.subr.bf16.mxu0 0
  %5449 = vmatpush2.bf16.msra.mxu0 0
  %5450 = vmatprep.subr.bf16.mxu0 0
  %5451 = vmatpush2.bf16.msra.mxu0 0
  %5452 = vmatprep.mubr.bf16.mxu0 0
  %5453 = vmatmul.mubr.bf16.gmra.mxu0 %v5412
  %v5454 = vpop.f32.mrf.mxu0
  %v5455 = vadd.f32 %v5397, %v5454
  %v5456 = vpop.f32.mrf.mxu0
  %v5457 = vpop.f32.mrf.mxu0
  %v5458 = vadd.f32 %v5397, %v5457
  %v5459 = vpop.f32.mrf.mxu0
  %5460 = vmatprep.mubr.bf16.mxu0 0
  %5461 = vmatmul.mubr.bf16.gmra.mxu0 %v5415
  %v5462 = vpop.f32.mrf.mxu0
  %v5463 = vadd.f32 %v5397, %v5462
  %v5464 = vpop.f32.mrf.mxu0
  %v5465 = vpop.f32.mrf.mxu0
  %v5466 = vadd.f32 %v5397, %v5465
  %v5467 = vpop.f32.mrf.mxu0
  %5468 = vmatprep.mubr.bf16.mxu0 0
  %5469 = vmatmul.mubr.bf16.gmra.mxu0 %v5418
  %v5470 = vpop.f32.mrf.mxu0
  %v5471 = vadd.f32 %v5397, %v5470
  %v5472 = vpop.f32.mrf.mxu0
  %v5473 = vpop.f32.mrf.mxu0
  %v5474 = vadd.f32 %v5397, %v5473
  %v5475 = vpop.f32.mrf.mxu0
  %5476 = vdwg.mxu0
  %v5477 = vld [vmem:[%s9] sm:$0x1]
  %v5478 = vld [vmem:[%s10] sm:$0x1]
  %v5479 = vsel %vm531, %v5455, 0.0
  %5480 = vadd.xlane.f32.xlu0 %v5479
  %v5481 = vpop.xlane.xlu0 %5480
  %v5482 = vsel %vm531, %v5458, 0.0
  %5483 = vadd.xlane.f32.xlu0 %v5482
  %v5484 = vpop.xlane.xlu0 %5483
  %v5485 = vsel %vm531, %v5463, 0.0
  %5486 = vadd.xlane.f32.xlu0 %v5485
  %v5487 = vpop.xlane.xlu0 %5486
  %v5488 = vsel %vm531, %v5466, 0.0
  %5489 = vadd.xlane.f32.xlu0 %v5488
  %v5490 = vpop.xlane.xlu0 %5489
  %v5491 = vsel %vm531, %v5471, 0.0
  %5492 = vadd.xlane.f32.xlu0 %v5491
  %v5493 = vpop.xlane.xlu0 %5492
  %v5494 = vsel %vm531, %v5474, 0.0
  %5495 = vadd.xlane.f32.xlu0 %v5494
  %v5496 = vpop.xlane.xlu0 %5495
  %v5497 = vrcp.pop 32.0
  %v5498 = vmul.f32 %v5481, %v5497
  %v5499 = vmul.f32 %v5484, %v5497
  %v5500 = vmul.f32 %v5487, %v5497
  %v5501 = vmul.f32 %v5490, %v5497
  %v5502 = vmul.f32 %v5493, %v5497
  %v5503 = vmul.f32 %v5496, %v5497
  %v5504 = vsub.f32 %v5455, %v5498
  %v5505 = vsub.f32 %v5458, %v5499
  %v5506 = vsub.f32 %v5463, %v5500
  %v5507 = vsub.f32 %v5466, %v5501
  %v5508 = vsub.f32 %v5471, %v5502
  %v5509 = vsub.f32 %v5474, %v5503
  %v5510 = vmul.f32 %v5504, %v5504
  %v5511 = vmul.f32 %v5505, %v5505
  %v5512 = vmul.f32 %v5506, %v5506
  %v5513 = vmul.f32 %v5507, %v5507
  %v5514 = vmul.f32 %v5508, %v5508
  %v5515 = vmul.f32 %v5509, %v5509
  %v5516 = vsel %vm531, %v5510, 0.0
  %5517 = vadd.xlane.f32.xlu0 %v5516
  %v5518 = vpop.xlane.xlu0 %5517
  %v5519 = vsel %vm531, %v5511, 0.0
  %5520 = vadd.xlane.f32.xlu0 %v5519
  %v5521 = vpop.xlane.xlu0 %5520
  %v5522 = vsel %vm531, %v5512, 0.0
  %5523 = vadd.xlane.f32.xlu0 %v5522
  %v5524 = vpop.xlane.xlu0 %5523
  %v5525 = vsel %vm531, %v5513, 0.0
  %5526 = vadd.xlane.f32.xlu0 %v5525
  %v5527 = vpop.xlane.xlu0 %5526
  %v5528 = vsel %vm531, %v5514, 0.0
  %5529 = vadd.xlane.f32.xlu0 %v5528
  %v5530 = vpop.xlane.xlu0 %5529
  %v5531 = vsel %vm531, %v5515, 0.0
  %5532 = vadd.xlane.f32.xlu0 %v5531
  %v5533 = vpop.xlane.xlu0 %5532
  %v5534 = vmul.f32 %v5518, %v5497
  %v5535 = vmul.f32 %v5521, %v5497
  %v5536 = vmul.f32 %v5524, %v5497
  %v5537 = vmul.f32 %v5527, %v5497
  %v5538 = vmul.f32 %v5530, %v5497
  %v5539 = vmul.f32 %v5533, %v5497
  %v5540 = vadd.f32 %v5534, 1e-05
  %v5541 = vadd.f32 %v5535, 1e-05
  %v5542 = vadd.f32 %v5536, 1e-05
  %v5543 = vadd.f32 %v5537, 1e-05
  %v5544 = vadd.f32 %v5538, 1e-05
  %v5545 = vadd.f32 %v5539, 1e-05
  %v5546 = vrsqrt.pop %v5540
  %v5547 = vrsqrt.pop %v5541
  %v5548 = vrsqrt.pop %v5542
  %v5549 = vrsqrt.pop %v5543
  %v5550 = vrsqrt.pop %v5544
  %v5551 = vrsqrt.pop %v5545
  %v5552 = vmul.f32 %v5504, %v5546
  %v5553 = vmul.f32 %v5505, %v5547
  %v5554 = vmul.f32 %v5506, %v5548
  %v5555 = vmul.f32 %v5507, %v5549
  %v5556 = vmul.f32 %v5508, %v5550
  %v5557 = vmul.f32 %v5509, %v5551
  %v5559 = vlaneseq
  %v5560 = vshrl.u32 %v5559, 7
  %v5561 = vsub.s32 0, %v5560
  %v5562 = vrot.slane %v5477, %v5561
  %v5564 = vmul.f32 %v5552, %v5562
  %v5565 = vmul.f32 %v5553, %v5562
  %v5566 = vmul.f32 %v5554, %v5562
  %v5567 = vmul.f32 %v5555, %v5562
  %v5568 = vmul.f32 %v5556, %v5562
  %v5569 = vmul.f32 %v5557, %v5562
  %v5571 = vlaneseq
  %v5572 = vshrl.u32 %v5571, 7
  %v5573 = vsub.s32 0, %v5572
  %v5574 = vrot.slane %v5478, %v5573
  %v5576 = vadd.f32 %v5564, %v5574
  %v5577 = vadd.f32 %v5565, %v5574
  %v5578 = vadd.f32 %v5566, %v5574
  %v5579 = vadd.f32 %v5567, %v5574
  %v5580 = vadd.f32 %v5568, %v5574
  %v5581 = vadd.f32 %v5569, %v5574
  %v5582 = vld [vmem:[%s11] sm:$0xf]
  %v5583 = vld [vmem:[%s11 + $0x4] sm:$0xf]
  %v5584 = vld [vmem:[%s11 + $0x8] sm:$0xf]
  %v5585 = vld [vmem:[%s11 + $0xc] sm:$0xf]
  %v5586 = vld [vmem:[%s12] sm:$0x1]
  %v5587 = vpack.c.bf16 %v5577, %v5576
  %v5588 = vpack.c.bf16 %v5579, %v5578
  %v5589 = vpack.c.bf16 %v5581, %v5580
  %v5591 = vlaneseq
  %v5592 = vshrl.u32 %v5591, 7
  %v5593 = vsub.s32 0, %v5592
  %v5594 = vrot.slane %v5586, %v5593
  %v5600 = vunpack.c.l.b16 %v5582
  %v5601 = vunpack.c.l.b16 %v5583
  %v5602 = vunpack.c.l.b16 %v5584
  %v5603 = vunpack.c.l.b16 %v5585
  %v5604 = vpack.c.b16 %v5601, %v5600
  %v5605 = vpack.c.b16 %v5603, %v5602
  %v5609 = vsel %vm531, %v5587, 0
  %v5612 = vsel %vm531, %v5588, 0
  %v5615 = vsel %vm531, %v5589, 0
  %5617 = vmatprep.subr.bf16.mxu0 0
  %5618 = vmatpush1.bf16.msra.mxu0 0
  %5619 = vmatprep.subr.bf16.mxu0 0
  %5620 = vmatpush1.bf16.msra.mxu0 0
  %5621 = vmatprep.subr.bf16.mxu0 0
  %5622 = vmatpush1.bf16.msra.mxu0 0
  %5623 = vmatprep.subr.bf16.mxu0 0
  %5624 = vmatpush1.bf16.msra.mxu0 0
  %5625 = vmatprep.subr.bf16.mxu0 0
  %5626 = vmatpush1.bf16.msra.mxu0 0
  %5627 = vmatprep.subr.bf16.mxu0 0
  %5628 = vmatpush1.bf16.msra.mxu0 0
  %5629 = vmatprep.subr.bf16.mxu0 0
  %5630 = vmatpush1.bf16.msra.mxu0 %v5605
  %5631 = vmatprep.subr.bf16.mxu0 0
  %5632 = vmatpush1.bf16.msra.mxu0 %v5604
  %5633 = vmatprep.subr.bf16.mxu0 0
  %5634 = vmatpush2.bf16.msra.mxu0 0
  %5635 = vmatprep.subr.bf16.mxu0 0
  %5636 = vmatpush2.bf16.msra.mxu0 0
  %5637 = vmatprep.subr.bf16.mxu0 0
  %5638 = vmatpush2.bf16.msra.mxu0 0
  %5639 = vmatprep.subr.bf16.mxu0 0
  %5640 = vmatpush2.bf16.msra.mxu0 0
  %5641 = vmatprep.subr.bf16.mxu0 0
  %5642 = vmatpush2.bf16.msra.mxu0 0
  %5643 = vmatprep.subr.bf16.mxu0 0
  %5644 = vmatpush2.bf16.msra.mxu0 0
  %5645 = vmatprep.subr.bf16.mxu0 0
  %5646 = vmatpush2.bf16.msra.mxu0 0
  %5647 = vmatprep.subr.bf16.mxu0 0
  %5648 = vmatpush2.bf16.msra.mxu0 0
  %5649 = vmatprep.mubr.bf16.mxu0 0
  %5650 = vmatmul.mubr.bf16.gmra.mxu0 %v5609
  %v5651 = vpop.f32.mrf.mxu0
  %v5652 = vadd.f32 %v5594, %v5651
  %v5653 = vpop.f32.mrf.mxu0
  %v5654 = vpop.f32.mrf.mxu0
  %v5655 = vadd.f32 %v5594, %v5654
  %v5656 = vpop.f32.mrf.mxu0
  %5657 = vmatprep.mubr.bf16.mxu0 0
  %5658 = vmatmul.mubr.bf16.gmra.mxu0 %v5612
  %v5659 = vpop.f32.mrf.mxu0
  %v5660 = vadd.f32 %v5594, %v5659
  %v5661 = vpop.f32.mrf.mxu0
  %v5662 = vpop.f32.mrf.mxu0
  %v5663 = vadd.f32 %v5594, %v5662
  %v5664 = vpop.f32.mrf.mxu0
  %5665 = vmatprep.mubr.bf16.mxu0 0
  %5666 = vmatmul.mubr.bf16.gmra.mxu0 %v5615
  %v5667 = vpop.f32.mrf.mxu0
  %v5668 = vadd.f32 %v5594, %v5667
  %v5669 = vpop.f32.mrf.mxu0
  %v5670 = vpop.f32.mrf.mxu0
  %v5671 = vadd.f32 %v5594, %v5670
  %v5672 = vpop.f32.mrf.mxu0
  %5673 = vdwg.mxu0
  %v5674 = vmul.f32 %v5652, 0.5
  %v5675 = vmul.f32 %v5655, 0.5
  %v5676 = vmul.f32 %v5660, 0.5
  %v5677 = vmul.f32 %v5663, 0.5
  %v5678 = vmul.f32 %v5668, 0.5
  %v5679 = vmul.f32 %v5671, 0.5
  %v5680 = vmul.f32 %v5652, 0.70710677
  %v5681 = vmul.f32 %v5655, 0.70710677
  %v5682 = vmul.f32 %v5660, 0.70710677
  %v5683 = vmul.f32 %v5663, 0.70710677
  %v5684 = vmul.f32 %v5668, 0.70710677
  %v5685 = vmul.f32 %v5671, 0.70710677
  %v5686 = verf.f32.pop %v5680
  %v5687 = verf.f32.pop %v5681
  %v5688 = verf.f32.pop %v5682
  %v5689 = verf.f32.pop %v5683
  %v5690 = verf.f32.pop %v5684
  %v5691 = verf.f32.pop %v5685
  %v5692 = vadd.f32 %v5686, 1.0
  %v5693 = vadd.f32 %v5687, 1.0
  %v5694 = vadd.f32 %v5688, 1.0
  %v5695 = vadd.f32 %v5689, 1.0
  %v5696 = vadd.f32 %v5690, 1.0
  %v5697 = vadd.f32 %v5691, 1.0
  %v5698 = vmul.f32 %v5674, %v5692
  %v5699 = vmul.f32 %v5675, %v5693
  %v5700 = vmul.f32 %v5676, %v5694
  %v5701 = vmul.f32 %v5677, %v5695
  %v5702 = vmul.f32 %v5678, %v5696
  %v5703 = vmul.f32 %v5679, %v5697
  %v5704 = vld [vmem:[%s13] sm:$0xf]
  %v5705 = vld [vmem:[%s13 + $0x4] sm:$0xf]
  %v5706 = vld [vmem:[%s13 + $0x8] sm:$0xf]
  %v5707 = vld [vmem:[%s13 + $0xc] sm:$0xf]
  %v5708 = vld [vmem:[%s13 + $0x10] sm:$0xf]
  %v5709 = vld [vmem:[%s13 + $0x14] sm:$0xf]
  %v5710 = vld [vmem:[%s13 + $0x18] sm:$0xf]
  %v5711 = vld [vmem:[%s13 + $0x1c] sm:$0xf]
  %v5712 = vld [vmem:[%s14] sm:$0x1]
  %v5713 = vpack.c.bf16 %v5699, %v5698
  %v5714 = vpack.c.bf16 %v5701, %v5700
  %v5715 = vpack.c.bf16 %v5703, %v5702
  %v5717 = vlaneseq
  %v5718 = vshrl.u32 %v5717, 7
  %v5719 = vsub.s32 0, %v5718
  %v5720 = vrot.slane %v5712, %v5719
  %v5730 = vunpack.c.l.b16 %v5704
  %v5731 = vunpack.c.l.b16 %v5705
  %v5732 = vunpack.c.l.b16 %v5706
  %v5733 = vunpack.c.l.b16 %v5707
  %v5734 = vunpack.c.l.b16 %v5708
  %v5735 = vunpack.c.l.b16 %v5709
  %v5736 = vunpack.c.l.b16 %v5710
  %v5737 = vunpack.c.l.b16 %v5711
  %v5738 = vpack.c.b16 %v5731, %v5730
  %v5739 = vpack.c.b16 %v5733, %v5732
  %v5740 = vpack.c.b16 %v5735, %v5734
  %v5741 = vpack.c.b16 %v5737, %v5736
  %vm5746 = vcmask 523264
  %v5748 = vsel %vm5746, %v5713, 0
  %v5751 = vsel %vm5746, %v5714, 0
  %v5754 = vsel %vm5746, %v5715, 0
  %5756 = vmatprep.subr.bf16.mxu0 0
  %5757 = vmatpush1.bf16.msra.mxu0 0
  %5758 = vmatprep.subr.bf16.mxu0 0
  %5759 = vmatpush1.bf16.msra.mxu0 0
  %5760 = vmatprep.subr.bf16.mxu0 0
  %5761 = vmatpush1.bf16.msra.mxu0 0
  %5762 = vmatprep.subr.bf16.mxu0 0
  %5763 = vmatpush1.bf16.msra.mxu0 0
  %5764 = vmatprep.subr.bf16.mxu0 0
  %5765 = vmatpush1.bf16.msra.mxu0 %v5741
  %5766 = vmatprep.subr.bf16.mxu0 0
  %5767 = vmatpush1.bf16.msra.mxu0 %v5740
  %5768 = vmatprep.subr.bf16.mxu0 0
  %5769 = vmatpush1.bf16.msra.mxu0 %v5739
  %5770 = vmatprep.subr.bf16.mxu0 0
  %5771 = vmatpush1.bf16.msra.mxu0 %v5738
  %5772 = vmatprep.subr.bf16.mxu0 0
  %5773 = vmatpush2.bf16.msra.mxu0 0
  %5774 = vmatprep.subr.bf16.mxu0 0
  %5775 = vmatpush2.bf16.msra.mxu0 0
  %5776 = vmatprep.subr.bf16.mxu0 0
  %5777 = vmatpush2.bf16.msra.mxu0 0
  %5778 = vmatprep.subr.bf16.mxu0 0
  %5779 = vmatpush2.bf16.msra.mxu0 0
  %5780 = vmatprep.subr.bf16.mxu0 0
  %5781 = vmatpush2.bf16.msra.mxu0 0
  %5782 = vmatprep.subr.bf16.mxu0 0
  %5783 = vmatpush2.bf16.msra.mxu0 0
  %5784 = vmatprep.subr.bf16.mxu0 0
  %5785 = vmatpush2.bf16.msra.mxu0 0
  %5786 = vmatprep.subr.bf16.mxu0 0
  %5787 = vmatpush2.bf16.msra.mxu0 0
  %5788 = vmatprep.mubr.bf16.mxu0 0
  %5789 = vmatmul.mubr.bf16.gmra.mxu0 %v5748
  %v5790 = vpop.f32.mrf.mxu0
  %v5791 = vadd.f32 %v5720, %v5790
  %v5792 = vpop.f32.mrf.mxu0
  %v5793 = vpop.f32.mrf.mxu0
  %v5794 = vadd.f32 %v5720, %v5793
  %v5795 = vpop.f32.mrf.mxu0
  %5796 = vmatprep.mubr.bf16.mxu0 0
  %5797 = vmatmul.mubr.bf16.gmra.mxu0 %v5751
  %v5798 = vpop.f32.mrf.mxu0
  %v5799 = vadd.f32 %v5720, %v5798
  %v5800 = vpop.f32.mrf.mxu0
  %v5801 = vpop.f32.mrf.mxu0
  %v5802 = vadd.f32 %v5720, %v5801
  %v5803 = vpop.f32.mrf.mxu0
  %5804 = vmatprep.mubr.bf16.mxu0 0
  %5805 = vmatmul.mubr.bf16.gmra.mxu0 %v5754
  %v5806 = vpop.f32.mrf.mxu0
  %v5807 = vadd.f32 %v5720, %v5806
  %v5808 = vpop.f32.mrf.mxu0
  %v5809 = vpop.f32.mrf.mxu0
  %v5810 = vadd.f32 %v5720, %v5809
  %v5811 = vpop.f32.mrf.mxu0
  %5812 = vdwg.mxu0
  %v5813 = vadd.f32 %v5576, %v5791
  %v5814 = vadd.f32 %v5577, %v5794
  %v5815 = vadd.f32 %v5578, %v5799
  %v5816 = vadd.f32 %v5579, %v5802
  %v5817 = vadd.f32 %v5580, %v5807
  %v5818 = vadd.f32 %v5581, %v5810
  %v5819 = vld [vmem:[%s15] sm:$0x1]
  %v5820 = vld [vmem:[%s16] sm:$0x1]
  %v5821 = vsel %vm531, %v5813, 0.0
  %5822 = vadd.xlane.f32.xlu0 %v5821
  %v5823 = vpop.xlane.xlu0 %5822
  %v5824 = vsel %vm531, %v5814, 0.0
  %5825 = vadd.xlane.f32.xlu0 %v5824
  %v5826 = vpop.xlane.xlu0 %5825
  %v5827 = vsel %vm531, %v5815, 0.0
  %5828 = vadd.xlane.f32.xlu0 %v5827
  %v5829 = vpop.xlane.xlu0 %5828
  %v5830 = vsel %vm531, %v5816, 0.0
  %5831 = vadd.xlane.f32.xlu0 %v5830
  %v5832 = vpop.xlane.xlu0 %5831
  %v5833 = vsel %vm531, %v5817, 0.0
  %5834 = vadd.xlane.f32.xlu0 %v5833
  %v5835 = vpop.xlane.xlu0 %5834
  %v5836 = vsel %vm531, %v5818, 0.0
  %5837 = vadd.xlane.f32.xlu0 %v5836
  %v5838 = vpop.xlane.xlu0 %5837
  %v5839 = vmul.f32 %v5823, %v5497
  %v5840 = vmul.f32 %v5826, %v5497
  %v5841 = vmul.f32 %v5829, %v5497
  %v5842 = vmul.f32 %v5832, %v5497
  %v5843 = vmul.f32 %v5835, %v5497
  %v5844 = vmul.f32 %v5838, %v5497
  %v5845 = vsub.f32 %v5813, %v5839
  %v5846 = vsub.f32 %v5814, %v5840
  %v5847 = vsub.f32 %v5815, %v5841
  %v5848 = vsub.f32 %v5816, %v5842
  %v5849 = vsub.f32 %v5817, %v5843
  %v5850 = vsub.f32 %v5818, %v5844
  %v5851 = vmul.f32 %v5845, %v5845
  %v5852 = vmul.f32 %v5846, %v5846
  %v5853 = vmul.f32 %v5847, %v5847
  %v5854 = vmul.f32 %v5848, %v5848
  %v5855 = vmul.f32 %v5849, %v5849
  %v5856 = vmul.f32 %v5850, %v5850
  %v5857 = vsel %vm531, %v5851, 0.0
  %5858 = vadd.xlane.f32.xlu0 %v5857
  %v5859 = vpop.xlane.xlu0 %5858
  %v5860 = vsel %vm531, %v5852, 0.0
  %5861 = vadd.xlane.f32.xlu0 %v5860
  %v5862 = vpop.xlane.xlu0 %5861
  %v5863 = vsel %vm531, %v5853, 0.0
  %5864 = vadd.xlane.f32.xlu0 %v5863
  %v5865 = vpop.xlane.xlu0 %5864
  %v5866 = vsel %vm531, %v5854, 0.0
  %5867 = vadd.xlane.f32.xlu0 %v5866
  %v5868 = vpop.xlane.xlu0 %5867
  %v5869 = vsel %vm531, %v5855, 0.0
  %5870 = vadd.xlane.f32.xlu0 %v5869
  %v5871 = vpop.xlane.xlu0 %5870
  %v5872 = vsel %vm531, %v5856, 0.0
  %5873 = vadd.xlane.f32.xlu0 %v5872
  %v5874 = vpop.xlane.xlu0 %5873
  %v5875 = vmul.f32 %v5859, %v5497
  %v5876 = vmul.f32 %v5862, %v5497
  %v5877 = vmul.f32 %v5865, %v5497
  %v5878 = vmul.f32 %v5868, %v5497
  %v5879 = vmul.f32 %v5871, %v5497
  %v5880 = vmul.f32 %v5874, %v5497
  %v5881 = vadd.f32 %v5875, 1e-05
  %v5882 = vadd.f32 %v5876, 1e-05
  %v5883 = vadd.f32 %v5877, 1e-05
  %v5884 = vadd.f32 %v5878, 1e-05
  %v5885 = vadd.f32 %v5879, 1e-05
  %v5886 = vadd.f32 %v5880, 1e-05
  %v5887 = vrsqrt.pop %v5881
  %v5888 = vrsqrt.pop %v5882
  %v5889 = vrsqrt.pop %v5883
  %v5890 = vrsqrt.pop %v5884
  %v5891 = vrsqrt.pop %v5885
  %v5892 = vrsqrt.pop %v5886
  %v5893 = vmul.f32 %v5845, %v5887
  %v5894 = vmul.f32 %v5846, %v5888
  %v5895 = vmul.f32 %v5847, %v5889
  %v5896 = vmul.f32 %v5848, %v5890
  %v5897 = vmul.f32 %v5849, %v5891
  %v5898 = vmul.f32 %v5850, %v5892
  %v5900 = vlaneseq
  %v5901 = vshrl.u32 %v5900, 7
  %v5902 = vsub.s32 0, %v5901
  %v5903 = vrot.slane %v5819, %v5902
  %v5905 = vmul.f32 %v5893, %v5903
  %v5906 = vmul.f32 %v5894, %v5903
  %v5907 = vmul.f32 %v5895, %v5903
  %v5908 = vmul.f32 %v5896, %v5903
  %v5909 = vmul.f32 %v5897, %v5903
  %v5910 = vmul.f32 %v5898, %v5903
  %v5912 = vlaneseq
  %v5913 = vshrl.u32 %v5912, 7
  %v5914 = vsub.s32 0, %v5913
  %v5915 = vrot.slane %v5820, %v5914
  %v5917 = vadd.f32 %v5905, %v5915
  %v5918 = vadd.f32 %v5906, %v5915
  %v5919 = vadd.f32 %v5907, %v5915
  %v5920 = vadd.f32 %v5908, %v5915
  %v5921 = vadd.f32 %v5909, %v5915
  %v5922 = vadd.f32 %v5910, %v5915
  %s5923 = scalar_lea.vmem %s5, 16
  %v5924 = vld [vmem:[%s5923] sm:$0xf]
  %v5925 = vld [vmem:[%s5923 + $0x4] sm:$0xf]
  %v5926 = vld [vmem:[%s5923 + $0x8] sm:$0xf]
  %v5927 = vld [vmem:[%s5923 + $0xc] sm:$0xf]
  %s5928 = scalar_lea.vmem %s6, 1
  %v5929 = vld [vmem:[%s5928] sm:$0x1]
  %v5930 = vpack.c.bf16 %v5918, %v5917
  %v5931 = vpack.c.bf16 %v5920, %v5919
  %v5932 = vpack.c.bf16 %v5922, %v5921
  %v5934 = vlaneseq
  %v5935 = vshrl.u32 %v5934, 7
  %v5936 = vsub.s32 0, %v5935
  %v5937 = vrot.slane %v5929, %v5936
  %v5943 = vunpack.c.l.b16 %v5924
  %v5944 = vunpack.c.l.b16 %v5925
  %v5945 = vunpack.c.l.b16 %v5926
  %v5946 = vunpack.c.l.b16 %v5927
  %v5947 = vpack.c.b16 %v5944, %v5943
  %v5948 = vpack.c.b16 %v5946, %v5945
  %v5952 = vsel %vm531, %v5930, 0
  %v5955 = vsel %vm531, %v5931, 0
  %v5958 = vsel %vm531, %v5932, 0
  %5960 = vmatprep.subr.bf16.mxu0 0
  %5961 = vmatpush1.bf16.msra.mxu0 0
  %5962 = vmatprep.subr.bf16.mxu0 0
  %5963 = vmatpush1.bf16.msra.mxu0 0
  %5964 = vmatprep.subr.bf16.mxu0 0
  %5965 = vmatpush1.bf16.msra.mxu0 0
  %5966 = vmatprep.subr.bf16.mxu0 0
  %5967 = vmatpush1.bf16.msra.mxu0 0
  %5968 = vmatprep.subr.bf16.mxu0 0
  %5969 = vmatpush1.bf16.msra.mxu0 0
  %5970 = vmatprep.subr.bf16.mxu0 0
  %5971 = vmatpush1.bf16.msra.mxu0 0
  %5972 = vmatprep.subr.bf16.mxu0 0
  %5973 = vmatpush1.bf16.msra.mxu0 %v5948
  %5974 = vmatprep.subr.bf16.mxu0 0
  %5975 = vmatpush1.bf16.msra.mxu0 %v5947
  %5976 = vmatprep.subr.bf16.mxu0 0
  %5977 = vmatpush2.bf16.msra.mxu0 0
  %5978 = vmatprep.subr.bf16.mxu0 0
  %5979 = vmatpush2.bf16.msra.mxu0 0
  %5980 = vmatprep.subr.bf16.mxu0 0
  %5981 = vmatpush2.bf16.msra.mxu0 0
  %5982 = vmatprep.subr.bf16.mxu0 0
  %5983 = vmatpush2.bf16.msra.mxu0 0
  %5984 = vmatprep.subr.bf16.mxu0 0
  %5985 = vmatpush2.bf16.msra.mxu0 0
  %5986 = vmatprep.subr.bf16.mxu0 0
  %5987 = vmatpush2.bf16.msra.mxu0 0
  %5988 = vmatprep.subr.bf16.mxu0 0
  %5989 = vmatpush2.bf16.msra.mxu0 0
  %5990 = vmatprep.subr.bf16.mxu0 0
  %5991 = vmatpush2.bf16.msra.mxu0 0
  %5992 = vmatprep.mubr.bf16.mxu0 0
  %5993 = vmatmul.mubr.bf16.gmra.mxu0 %v5952
  %v5994 = vpop.f32.mrf.mxu0
  %v5995 = vadd.f32 %v5937, %v5994
  %v5996 = vpop.f32.mrf.mxu0
  %v5997 = vpop.f32.mrf.mxu0
  %v5998 = vadd.f32 %v5937, %v5997
  %v5999 = vpop.f32.mrf.mxu0
  %6000 = vmatprep.mubr.bf16.mxu0 0
  %6001 = vmatmul.mubr.bf16.gmra.mxu0 %v5955
  %v6002 = vpop.f32.mrf.mxu0
  %v6003 = vadd.f32 %v5937, %v6002
  %v6004 = vpop.f32.mrf.mxu0
  %v6005 = vpop.f32.mrf.mxu0
  %v6006 = vadd.f32 %v5937, %v6005
  %v6007 = vpop.f32.mrf.mxu0
  %6008 = vmatprep.mubr.bf16.mxu0 0
  %6009 = vmatmul.mubr.bf16.gmra.mxu0 %v5958
  %v6010 = vpop.f32.mrf.mxu0
  %v6011 = vadd.f32 %v5937, %v6010
  %v6012 = vpop.f32.mrf.mxu0
  %v6013 = vpop.f32.mrf.mxu0
  %v6014 = vadd.f32 %v5937, %v6013
  %v6015 = vpop.f32.mrf.mxu0
  %6016 = vdwg.mxu0
  %6018 = vrot.lane.b32.xlu0 %v5995, 96
  %v6019 = vpop.permute.xlu0 %6018
  %v6020 = vsel %vm1317, %v5995, 0
  %v6022 = vsel %vm1317, %v6019, 0
  %6024 = vmatprep.subr.mxu0 0.0
  %6025 = vmatpush1.xpose.msra.mxu0 0.0
  %6026 = vmatprep.subr.mxu0 0.0
  %6027 = vmatpush1.xpose.msra.mxu0 0.0
  %6028 = vmatprep.subr.mxu0 0.0
  %6029 = vmatpush1.xpose.msra.mxu0 0.0
  %6030 = vmatprep.subr.mxu0 0.0
  %6031 = vmatpush1.xpose.msra.mxu0 0.0
  %6032 = vmatprep.subr.mxu0 0.0
  %6033 = vmatpush1.xpose.msra.mxu0 0.0
  %6034 = vmatprep.subr.mxu0 0.0
  %6035 = vmatpush1.xpose.msra.mxu0 0.0
  %6036 = vmatprep.subr.mxu0 0.0
  %6037 = vmatpush1.xpose.msra.mxu0 0.0
  %6038 = vmatprep.subr.mxu0 0.0
  %6039 = vmatpush1.xpose.msra.mxu0 0.0
  %6040 = vmatprep.subr.mxu0 0.0
  %6041 = vmatpush1.xpose.msra.mxu0 0.0
  %6042 = vmatprep.subr.mxu0 0.0
  %6043 = vmatpush1.xpose.msra.mxu0 0.0
  %6044 = vmatprep.subr.mxu0 0.0
  %6045 = vmatpush1.xpose.msra.mxu0 0.0
  %6046 = vmatprep.subr.mxu0 0.0
  %6047 = vmatpush1.xpose.msra.mxu0 0.0
  %6048 = vmatprep.subr.mxu0 0.0
  %6049 = vmatpush1.xpose.msra.mxu0 0.0
  %6050 = vmatprep.subr.mxu0 0.0
  %6051 = vmatpush1.xpose.msra.mxu0 0.0
  %6052 = vmatprep.subr.mxu0 0.0
  %6053 = vmatpush1.xpose.msra.mxu0 0.0
  %6054 = vmatprep.subr.mxu0 0.0
  %6055 = vmatpush1.xpose.msra.mxu0 %v6022
  %6056 = vmatprep.subr.mxu0 0.0
  %6057 = vmatpush2.xpose.msra.mxu0 0.0
  %6058 = vmatprep.subr.mxu0 0.0
  %6059 = vmatpush2.xpose.msra.mxu0 0.0
  %6060 = vmatprep.subr.mxu0 0.0
  %6061 = vmatpush2.xpose.msra.mxu0 0.0
  %6062 = vmatprep.subr.mxu0 0.0
  %6063 = vmatpush2.xpose.msra.mxu0 0.0
  %6064 = vmatprep.subr.mxu0 0.0
  %6065 = vmatpush2.xpose.msra.mxu0 0.0
  %6066 = vmatprep.subr.mxu0 0.0
  %6067 = vmatpush2.xpose.msra.mxu0 0.0
  %6068 = vmatprep.subr.mxu0 0.0
  %6069 = vmatpush2.xpose.msra.mxu0 0.0
  %6070 = vmatprep.subr.mxu0 0.0
  %6071 = vmatpush2.xpose.msra.mxu0 0.0
  %6072 = vmatprep.subr.mxu0 0.0
  %6073 = vmatpush2.xpose.msra.mxu0 0.0
  %6074 = vmatprep.subr.mxu0 0.0
  %6075 = vmatpush2.xpose.msra.mxu0 0.0
  %6076 = vmatprep.subr.mxu0 0.0
  %6077 = vmatpush2.xpose.msra.mxu0 0.0
  %6078 = vmatprep.subr.mxu0 0.0
  %6079 = vmatpush2.xpose.msra.mxu0 0.0
  %6080 = vmatprep.subr.mxu0 0.0
  %6081 = vmatpush2.xpose.msra.mxu0 0.0
  %6082 = vmatprep.subr.mxu0 0.0
  %6083 = vmatpush2.xpose.msra.mxu0 0.0
  %6084 = vmatprep.subr.mxu0 0.0
  %6085 = vmatpush2.xpose.msra.mxu0 0.0
  %6086 = vmatprep.subr.mxu0 0.0
  %6087 = vmatpush2.xpose.msra.mxu0 0.0
  %6088 = vmatprep.mubr.f32.mxu0 0.0
  %6089 = vmatmul.mubr.f32.gmra.mxu0 %v6020
  %v6090 = vpop.f32.mrf.mxu0
  %v6091 = vadd.f32 0.0, %v6090
  %v6092 = vpop.f32.mrf.mxu0
  %6093 = vdwg.mxu0
  %6095 = vrot.lane.b32.xlu0 %v5998, 96
  %v6096 = vpop.permute.xlu0 %6095
  %v6097 = vsel %vm1317, %v5998, 0
  %v6099 = vsel %vm1317, %v6096, 0
  %6101 = vmatprep.subr.mxu0 0.0
  %6102 = vmatpush1.xpose.msra.mxu0 0.0
  %6103 = vmatprep.subr.mxu0 0.0
  %6104 = vmatpush1.xpose.msra.mxu0 0.0
  %6105 = vmatprep.subr.mxu0 0.0
  %6106 = vmatpush1.xpose.msra.mxu0 0.0
  %6107 = vmatprep.subr.mxu0 0.0
  %6108 = vmatpush1.xpose.msra.mxu0 0.0
  %6109 = vmatprep.subr.mxu0 0.0
  %6110 = vmatpush1.xpose.msra.mxu0 0.0
  %6111 = vmatprep.subr.mxu0 0.0
  %6112 = vmatpush1.xpose.msra.mxu0 0.0
  %6113 = vmatprep.subr.mxu0 0.0
  %6114 = vmatpush1.xpose.msra.mxu0 0.0
  %6115 = vmatprep.subr.mxu0 0.0
  %6116 = vmatpush1.xpose.msra.mxu0 0.0
  %6117 = vmatprep.subr.mxu0 0.0
  %6118 = vmatpush1.xpose.msra.mxu0 0.0
  %6119 = vmatprep.subr.mxu0 0.0
  %6120 = vmatpush1.xpose.msra.mxu0 0.0
  %6121 = vmatprep.subr.mxu0 0.0
  %6122 = vmatpush1.xpose.msra.mxu0 0.0
  %6123 = vmatprep.subr.mxu0 0.0
  %6124 = vmatpush1.xpose.msra.mxu0 0.0
  %6125 = vmatprep.subr.mxu0 0.0
  %6126 = vmatpush1.xpose.msra.mxu0 0.0
  %6127 = vmatprep.subr.mxu0 0.0
  %6128 = vmatpush1.xpose.msra.mxu0 0.0
  %6129 = vmatprep.subr.mxu0 0.0
  %6130 = vmatpush1.xpose.msra.mxu0 0.0
  %6131 = vmatprep.subr.mxu0 0.0
  %6132 = vmatpush1.xpose.msra.mxu0 %v6099
  %6133 = vmatprep.subr.mxu0 0.0
  %6134 = vmatpush2.xpose.msra.mxu0 0.0
  %6135 = vmatprep.subr.mxu0 0.0
  %6136 = vmatpush2.xpose.msra.mxu0 0.0
  %6137 = vmatprep.subr.mxu0 0.0
  %6138 = vmatpush2.xpose.msra.mxu0 0.0
  %6139 = vmatprep.subr.mxu0 0.0
  %6140 = vmatpush2.xpose.msra.mxu0 0.0
  %6141 = vmatprep.subr.mxu0 0.0
  %6142 = vmatpush2.xpose.msra.mxu0 0.0
  %6143 = vmatprep.subr.mxu0 0.0
  %6144 = vmatpush2.xpose.msra.mxu0 0.0
  %6145 = vmatprep.subr.mxu0 0.0
  %6146 = vmatpush2.xpose.msra.mxu0 0.0
  %6147 = vmatprep.subr.mxu0 0.0
  %6148 = vmatpush2.xpose.msra.mxu0 0.0
  %6149 = vmatprep.subr.mxu0 0.0
  %6150 = vmatpush2.xpose.msra.mxu0 0.0
  %6151 = vmatprep.subr.mxu0 0.0
  %6152 = vmatpush2.xpose.msra.mxu0 0.0
  %6153 = vmatprep.subr.mxu0 0.0
  %6154 = vmatpush2.xpose.msra.mxu0 0.0
  %6155 = vmatprep.subr.mxu0 0.0
  %6156 = vmatpush2.xpose.msra.mxu0 0.0
  %6157 = vmatprep.subr.mxu0 0.0
  %6158 = vmatpush2.xpose.msra.mxu0 0.0
  %6159 = vmatprep.subr.mxu0 0.0
  %6160 = vmatpush2.xpose.msra.mxu0 0.0
  %6161 = vmatprep.subr.mxu0 0.0
  %6162 = vmatpush2.xpose.msra.mxu0 0.0
  %6163 = vmatprep.subr.mxu0 0.0
  %6164 = vmatpush2.xpose.msra.mxu0 0.0
  %6165 = vmatprep.mubr.f32.mxu0 0.0
  %6166 = vmatmul.mubr.f32.gmra.mxu0 %v6097
  %v6167 = vpop.f32.mrf.mxu0
  %v6168 = vadd.f32 0.0, %v6167
  %v6169 = vpop.f32.mrf.mxu0
  %6170 = vdwg.mxu0
  %6172 = vrot.lane.b32.xlu0 %v6003, 96
  %v6173 = vpop.permute.xlu0 %6172
  %v6174 = vsel %vm1317, %v6003, 0
  %v6176 = vsel %vm1317, %v6173, 0
  %6178 = vmatprep.subr.mxu0 0.0
  %6179 = vmatpush1.xpose.msra.mxu0 0.0
  %6180 = vmatprep.subr.mxu0 0.0
  %6181 = vmatpush1.xpose.msra.mxu0 0.0
  %6182 = vmatprep.subr.mxu0 0.0
  %6183 = vmatpush1.xpose.msra.mxu0 0.0
  %6184 = vmatprep.subr.mxu0 0.0
  %6185 = vmatpush1.xpose.msra.mxu0 0.0
  %6186 = vmatprep.subr.mxu0 0.0
  %6187 = vmatpush1.xpose.msra.mxu0 0.0
  %6188 = vmatprep.subr.mxu0 0.0
  %6189 = vmatpush1.xpose.msra.mxu0 0.0
  %6190 = vmatprep.subr.mxu0 0.0
  %6191 = vmatpush1.xpose.msra.mxu0 0.0
  %6192 = vmatprep.subr.mxu0 0.0
  %6193 = vmatpush1.xpose.msra.mxu0 0.0
  %6194 = vmatprep.subr.mxu0 0.0
  %6195 = vmatpush1.xpose.msra.mxu0 0.0
  %6196 = vmatprep.subr.mxu0 0.0
  %6197 = vmatpush1.xpose.msra.mxu0 0.0
  %6198 = vmatprep.subr.mxu0 0.0
  %6199 = vmatpush1.xpose.msra.mxu0 0.0
  %6200 = vmatprep.subr.mxu0 0.0
  %6201 = vmatpush1.xpose.msra.mxu0 0.0
  %6202 = vmatprep.subr.mxu0 0.0
  %6203 = vmatpush1.xpose.msra.mxu0 0.0
  %6204 = vmatprep.subr.mxu0 0.0
  %6205 = vmatpush1.xpose.msra.mxu0 0.0
  %6206 = vmatprep.subr.mxu0 0.0
  %6207 = vmatpush1.xpose.msra.mxu0 0.0
  %6208 = vmatprep.subr.mxu0 0.0
  %6209 = vmatpush1.xpose.msra.mxu0 %v6176
  %6210 = vmatprep.subr.mxu0 0.0
  %6211 = vmatpush2.xpose.msra.mxu0 0.0
  %6212 = vmatprep.subr.mxu0 0.0
  %6213 = vmatpush2.xpose.msra.mxu0 0.0
  %6214 = vmatprep.subr.mxu0 0.0
  %6215 = vmatpush2.xpose.msra.mxu0 0.0
  %6216 = vmatprep.subr.mxu0 0.0
  %6217 = vmatpush2.xpose.msra.mxu0 0.0
  %6218 = vmatprep.subr.mxu0 0.0
  %6219 = vmatpush2.xpose.msra.mxu0 0.0
  %6220 = vmatprep.subr.mxu0 0.0
  %6221 = vmatpush2.xpose.msra.mxu0 0.0
  %6222 = vmatprep.subr.mxu0 0.0
  %6223 = vmatpush2.xpose.msra.mxu0 0.0
  %6224 = vmatprep.subr.mxu0 0.0
  %6225 = vmatpush2.xpose.msra.mxu0 0.0
  %6226 = vmatprep.subr.mxu0 0.0
  %6227 = vmatpush2.xpose.msra.mxu0 0.0
  %6228 = vmatprep.subr.mxu0 0.0
  %6229 = vmatpush2.xpose.msra.mxu0 0.0
  %6230 = vmatprep.subr.mxu0 0.0
  %6231 = vmatpush2.xpose.msra.mxu0 0.0
  %6232 = vmatprep.subr.mxu0 0.0
  %6233 = vmatpush2.xpose.msra.mxu0 0.0
  %6234 = vmatprep.subr.mxu0 0.0
  %6235 = vmatpush2.xpose.msra.mxu0 0.0
  %6236 = vmatprep.subr.mxu0 0.0
  %6237 = vmatpush2.xpose.msra.mxu0 0.0
  %6238 = vmatprep.subr.mxu0 0.0
  %6239 = vmatpush2.xpose.msra.mxu0 0.0
  %6240 = vmatprep.subr.mxu0 0.0
  %6241 = vmatpush2.xpose.msra.mxu0 0.0
  %6242 = vmatprep.mubr.f32.mxu0 0.0
  %6243 = vmatmul.mubr.f32.gmra.mxu0 %v6174
  %v6244 = vpop.f32.mrf.mxu0
  %v6245 = vadd.f32 0.0, %v6244
  %v6246 = vpop.f32.mrf.mxu0
  %6247 = vdwg.mxu0
  %6249 = vrot.lane.b32.xlu0 %v6006, 96
  %v6250 = vpop.permute.xlu0 %6249
  %v6251 = vsel %vm1317, %v6006, 0
  %v6253 = vsel %vm1317, %v6250, 0
  %6255 = vmatprep.subr.mxu0 0.0
  %6256 = vmatpush1.xpose.msra.mxu0 0.0
  %6257 = vmatprep.subr.mxu0 0.0
  %6258 = vmatpush1.xpose.msra.mxu0 0.0
  %6259 = vmatprep.subr.mxu0 0.0
  %6260 = vmatpush1.xpose.msra.mxu0 0.0
  %6261 = vmatprep.subr.mxu0 0.0
  %6262 = vmatpush1.xpose.msra.mxu0 0.0
  %6263 = vmatprep.subr.mxu0 0.0
  %6264 = vmatpush1.xpose.msra.mxu0 0.0
  %6265 = vmatprep.subr.mxu0 0.0
  %6266 = vmatpush1.xpose.msra.mxu0 0.0
  %6267 = vmatprep.subr.mxu0 0.0
  %6268 = vmatpush1.xpose.msra.mxu0 0.0
  %6269 = vmatprep.subr.mxu0 0.0
  %6270 = vmatpush1.xpose.msra.mxu0 0.0
  %6271 = vmatprep.subr.mxu0 0.0
  %6272 = vmatpush1.xpose.msra.mxu0 0.0
  %6273 = vmatprep.subr.mxu0 0.0
  %6274 = vmatpush1.xpose.msra.mxu0 0.0
  %6275 = vmatprep.subr.mxu0 0.0
  %6276 = vmatpush1.xpose.msra.mxu0 0.0
  %6277 = vmatprep.subr.mxu0 0.0
  %6278 = vmatpush1.xpose.msra.mxu0 0.0
  %6279 = vmatprep.subr.mxu0 0.0
  %6280 = vmatpush1.xpose.msra.mxu0 0.0
  %6281 = vmatprep.subr.mxu0 0.0
  %6282 = vmatpush1.xpose.msra.mxu0 0.0
  %6283 = vmatprep.subr.mxu0 0.0
  %6284 = vmatpush1.xpose.msra.mxu0 0.0
  %6285 = vmatprep.subr.mxu0 0.0
  %6286 = vmatpush1.xpose.msra.mxu0 %v6253
  %6287 = vmatprep.subr.mxu0 0.0
  %6288 = vmatpush2.xpose.msra.mxu0 0.0
  %6289 = vmatprep.subr.mxu0 0.0
  %6290 = vmatpush2.xpose.msra.mxu0 0.0
  %6291 = vmatprep.subr.mxu0 0.0
  %6292 = vmatpush2.xpose.msra.mxu0 0.0
  %6293 = vmatprep.subr.mxu0 0.0
  %6294 = vmatpush2.xpose.msra.mxu0 0.0
  %6295 = vmatprep.subr.mxu0 0.0
  %6296 = vmatpush2.xpose.msra.mxu0 0.0
  %6297 = vmatprep.subr.mxu0 0.0
  %6298 = vmatpush2.xpose.msra.mxu0 0.0
  %6299 = vmatprep.subr.mxu0 0.0
  %6300 = vmatpush2.xpose.msra.mxu0 0.0
  %6301 = vmatprep.subr.mxu0 0.0
  %6302 = vmatpush2.xpose.msra.mxu0 0.0
  %6303 = vmatprep.subr.mxu0 0.0
  %6304 = vmatpush2.xpose.msra.mxu0 0.0
  %6305 = vmatprep.subr.mxu0 0.0
  %6306 = vmatpush2.xpose.msra.mxu0 0.0
  %6307 = vmatprep.subr.mxu0 0.0
  %6308 = vmatpush2.xpose.msra.mxu0 0.0
  %6309 = vmatprep.subr.mxu0 0.0
  %6310 = vmatpush2.xpose.msra.mxu0 0.0
  %6311 = vmatprep.subr.mxu0 0.0
  %6312 = vmatpush2.xpose.msra.mxu0 0.0
  %6313 = vmatprep.subr.mxu0 0.0
  %6314 = vmatpush2.xpose.msra.mxu0 0.0
  %6315 = vmatprep.subr.mxu0 0.0
  %6316 = vmatpush2.xpose.msra.mxu0 0.0
  %6317 = vmatprep.subr.mxu0 0.0
  %6318 = vmatpush2.xpose.msra.mxu0 0.0
  %6319 = vmatprep.mubr.f32.mxu0 0.0
  %6320 = vmatmul.mubr.f32.gmra.mxu0 %v6251
  %v6321 = vpop.f32.mrf.mxu0
  %v6322 = vadd.f32 0.0, %v6321
  %v6323 = vpop.f32.mrf.mxu0
  %6324 = vdwg.mxu0
  %6326 = vrot.lane.b32.xlu0 %v6011, 96
  %v6327 = vpop.permute.xlu0 %6326
  %v6328 = vsel %vm1317, %v6011, 0
  %v6330 = vsel %vm1317, %v6327, 0
  %6332 = vmatprep.subr.mxu0 0.0
  %6333 = vmatpush1.xpose.msra.mxu0 0.0
  %6334 = vmatprep.subr.mxu0 0.0
  %6335 = vmatpush1.xpose.msra.mxu0 0.0
  %6336 = vmatprep.subr.mxu0 0.0
  %6337 = vmatpush1.xpose.msra.mxu0 0.0
  %6338 = vmatprep.subr.mxu0 0.0
  %6339 = vmatpush1.xpose.msra.mxu0 0.0
  %6340 = vmatprep.subr.mxu0 0.0
  %6341 = vmatpush1.xpose.msra.mxu0 0.0
  %6342 = vmatprep.subr.mxu0 0.0
  %6343 = vmatpush1.xpose.msra.mxu0 0.0
  %6344 = vmatprep.subr.mxu0 0.0
  %6345 = vmatpush1.xpose.msra.mxu0 0.0
  %6346 = vmatprep.subr.mxu0 0.0
  %6347 = vmatpush1.xpose.msra.mxu0 0.0
  %6348 = vmatprep.subr.mxu0 0.0
  %6349 = vmatpush1.xpose.msra.mxu0 0.0
  %6350 = vmatprep.subr.mxu0 0.0
  %6351 = vmatpush1.xpose.msra.mxu0 0.0
  %6352 = vmatprep.subr.mxu0 0.0
  %6353 = vmatpush1.xpose.msra.mxu0 0.0
  %6354 = vmatprep.subr.mxu0 0.0
  %6355 = vmatpush1.xpose.msra.mxu0 0.0
  %6356 = vmatprep.subr.mxu0 0.0
  %6357 = vmatpush1.xpose.msra.mxu0 0.0
  %6358 = vmatprep.subr.mxu0 0.0
  %6359 = vmatpush1.xpose.msra.mxu0 0.0
  %6360 = vmatprep.subr.mxu0 0.0
  %6361 = vmatpush1.xpose.msra.mxu0 0.0
  %6362 = vmatprep.subr.mxu0 0.0
  %6363 = vmatpush1.xpose.msra.mxu0 %v6330
  %6364 = vmatprep.subr.mxu0 0.0
  %6365 = vmatpush2.xpose.msra.mxu0 0.0
  %6366 = vmatprep.subr.mxu0 0.0
  %6367 = vmatpush2.xpose.msra.mxu0 0.0
  %6368 = vmatprep.subr.mxu0 0.0
  %6369 = vmatpush2.xpose.msra.mxu0 0.0
  %6370 = vmatprep.subr.mxu0 0.0
  %6371 = vmatpush2.xpose.msra.mxu0 0.0
  %6372 = vmatprep.subr.mxu0 0.0
  %6373 = vmatpush2.xpose.msra.mxu0 0.0
  %6374 = vmatprep.subr.mxu0 0.0
  %6375 = vmatpush2.xpose.msra.mxu0 0.0
  %6376 = vmatprep.subr.mxu0 0.0
  %6377 = vmatpush2.xpose.msra.mxu0 0.0
  %6378 = vmatprep.subr.mxu0 0.0
  %6379 = vmatpush2.xpose.msra.mxu0 0.0
  %6380 = vmatprep.subr.mxu0 0.0
  %6381 = vmatpush2.xpose.msra.mxu0 0.0
  %6382 = vmatprep.subr.mxu0 0.0
  %6383 = vmatpush2.xpose.msra.mxu0 0.0
  %6384 = vmatprep.subr.mxu0 0.0
  %6385 = vmatpush2.xpose.msra.mxu0 0.0
  %6386 = vmatprep.subr.mxu0 0.0
  %6387 = vmatpush2.xpose.msra.mxu0 0.0
  %6388 = vmatprep.subr.mxu0 0.0
  %6389 = vmatpush2.xpose.msra.mxu0 0.0
  %6390 = vmatprep.subr.mxu0 0.0
  %6391 = vmatpush2.xpose.msra.mxu0 0.0
  %6392 = vmatprep.subr.mxu0 0.0
  %6393 = vmatpush2.xpose.msra.mxu0 0.0
  %6394 = vmatprep.subr.mxu0 0.0
  %6395 = vmatpush2.xpose.msra.mxu0 0.0
  %6396 = vmatprep.mubr.f32.mxu0 0.0
  %6397 = vmatmul.mubr.f32.gmra.mxu0 %v6328
  %v6398 = vpop.f32.mrf.mxu0
  %v6399 = vadd.f32 0.0, %v6398
  %v6400 = vpop.f32.mrf.mxu0
  %6401 = vdwg.mxu0
  %6403 = vrot.lane.b32.xlu0 %v6014, 96
  %v6404 = vpop.permute.xlu0 %6403
  %v6405 = vsel %vm1317, %v6014, 0
  %v6407 = vsel %vm1317, %v6404, 0
  %6409 = vmatprep.subr.mxu0 0.0
  %6410 = vmatpush1.xpose.msra.mxu0 0.0
  %6411 = vmatprep.subr.mxu0 0.0
  %6412 = vmatpush1.xpose.msra.mxu0 0.0
  %6413 = vmatprep.subr.mxu0 0.0
  %6414 = vmatpush1.xpose.msra.mxu0 0.0
  %6415 = vmatprep.subr.mxu0 0.0
  %6416 = vmatpush1.xpose.msra.mxu0 0.0
  %6417 = vmatprep.subr.mxu0 0.0
  %6418 = vmatpush1.xpose.msra.mxu0 0.0
  %6419 = vmatprep.subr.mxu0 0.0
  %6420 = vmatpush1.xpose.msra.mxu0 0.0
  %6421 = vmatprep.subr.mxu0 0.0
  %6422 = vmatpush1.xpose.msra.mxu0 0.0
  %6423 = vmatprep.subr.mxu0 0.0
  %6424 = vmatpush1.xpose.msra.mxu0 0.0
  %6425 = vmatprep.subr.mxu0 0.0
  %6426 = vmatpush1.xpose.msra.mxu0 0.0
  %6427 = vmatprep.subr.mxu0 0.0
  %6428 = vmatpush1.xpose.msra.mxu0 0.0
  %6429 = vmatprep.subr.mxu0 0.0
  %6430 = vmatpush1.xpose.msra.mxu0 0.0
  %6431 = vmatprep.subr.mxu0 0.0
  %6432 = vmatpush1.xpose.msra.mxu0 0.0
  %6433 = vmatprep.subr.mxu0 0.0
  %6434 = vmatpush1.xpose.msra.mxu0 0.0
  %6435 = vmatprep.subr.mxu0 0.0
  %6436 = vmatpush1.xpose.msra.mxu0 0.0
  %6437 = vmatprep.subr.mxu0 0.0
  %6438 = vmatpush1.xpose.msra.mxu0 0.0
  %6439 = vmatprep.subr.mxu0 0.0
  %6440 = vmatpush1.xpose.msra.mxu0 %v6407
  %6441 = vmatprep.subr.mxu0 0.0
  %6442 = vmatpush2.xpose.msra.mxu0 0.0
  %6443 = vmatprep.subr.mxu0 0.0
  %6444 = vmatpush2.xpose.msra.mxu0 0.0
  %6445 = vmatprep.subr.mxu0 0.0
  %6446 = vmatpush2.xpose.msra.mxu0 0.0
  %6447 = vmatprep.subr.mxu0 0.0
  %6448 = vmatpush2.xpose.msra.mxu0 0.0
  %6449 = vmatprep.subr.mxu0 0.0
  %6450 = vmatpush2.xpose.msra.mxu0 0.0
  %6451 = vmatprep.subr.mxu0 0.0
  %6452 = vmatpush2.xpose.msra.mxu0 0.0
  %6453 = vmatprep.subr.mxu0 0.0
  %6454 = vmatpush2.xpose.msra.mxu0 0.0
  %6455 = vmatprep.subr.mxu0 0.0
  %6456 = vmatpush2.xpose.msra.mxu0 0.0
  %6457 = vmatprep.subr.mxu0 0.0
  %6458 = vmatpush2.xpose.msra.mxu0 0.0
  %6459 = vmatprep.subr.mxu0 0.0
  %6460 = vmatpush2.xpose.msra.mxu0 0.0
  %6461 = vmatprep.subr.mxu0 0.0
  %6462 = vmatpush2.xpose.msra.mxu0 0.0
  %6463 = vmatprep.subr.mxu0 0.0
  %6464 = vmatpush2.xpose.msra.mxu0 0.0
  %6465 = vmatprep.subr.mxu0 0.0
  %6466 = vmatpush2.xpose.msra.mxu0 0.0
  %6467 = vmatprep.subr.mxu0 0.0
  %6468 = vmatpush2.xpose.msra.mxu0 0.0
  %6469 = vmatprep.subr.mxu0 0.0
  %6470 = vmatpush2.xpose.msra.mxu0 0.0
  %6471 = vmatprep.subr.mxu0 0.0
  %6472 = vmatpush2.xpose.msra.mxu0 0.0
  %6473 = vmatprep.mubr.f32.mxu0 0.0
  %6474 = vmatmul.mubr.f32.gmra.mxu0 %v6405
  %v6475 = vpop.f32.mrf.mxu0
  %v6476 = vadd.f32 0.0, %v6475
  %v6477 = vpop.f32.mrf.mxu0
  %6478 = vdwg.mxu0
  %v6479 = vmul.f32 %v6091, 0.35355338
  %v6480 = vmul.f32 %v6168, 0.35355338
  %v6481 = vmul.f32 %v6245, 0.35355338
  %v6482 = vmul.f32 %v6322, 0.35355338
  %v6483 = vmul.f32 %v6399, 0.35355338
  %v6484 = vmul.f32 %v6476, 0.35355338
  %v6485 = vadd.f32 %v6479, %v1777
  %v6486 = vadd.f32 %v6480, %v1778
  %v6487 = vadd.f32 %v6481, %v1779
  %v6488 = vadd.f32 %v6482, %v1780
  %v6489 = vadd.f32 %v6483, %v1781
  %v6490 = vadd.f32 %v6484, %v1782
  %v6491 = vsel %vm1317, %v6485, -inf
  %6492 = vmax.xlane.f32.xlu0 %v6491
  %v6493 = vpop.xlane.xlu0 %6492
  %v6494 = vsel %vm1317, %v6486, -inf
  %6495 = vmax.xlane.f32.xlu0 %v6494
  %v6496 = vpop.xlane.xlu0 %6495
  %v6497 = vsel %vm1317, %v6487, -inf
  %6498 = vmax.xlane.f32.xlu0 %v6497
  %v6499 = vpop.xlane.xlu0 %6498
  %v6500 = vsel %vm1317, %v6488, -inf
  %6501 = vmax.xlane.f32.xlu0 %v6500
  %v6502 = vpop.xlane.xlu0 %6501
  %v6503 = vsel %vm1317, %v6489, -inf
  %6504 = vmax.xlane.f32.xlu0 %v6503
  %v6505 = vpop.xlane.xlu0 %6504
  %v6506 = vsel %vm1317, %v6490, -inf
  %6507 = vmax.xlane.f32.xlu0 %v6506
  %v6508 = vpop.xlane.xlu0 %6507
  %v6509 = vsub.f32 %v6485, %v6493
  %v6510 = vsub.f32 %v6486, %v6496
  %v6511 = vsub.f32 %v6487, %v6499
  %v6512 = vsub.f32 %v6488, %v6502
  %v6513 = vsub.f32 %v6489, %v6505
  %v6514 = vsub.f32 %v6490, %v6508
  %v6515 = vmul.f32 %v6509, 1.442695
  %v6516 = vpow.pop %v6515
  %v6517 = vmul.f32 %v6510, 1.442695
  %v6518 = vpow.pop %v6517
  %v6519 = vmul.f32 %v6511, 1.442695
  %v6520 = vpow.pop %v6519
  %v6521 = vmul.f32 %v6512, 1.442695
  %v6522 = vpow.pop %v6521
  %v6523 = vmul.f32 %v6513, 1.442695
  %v6524 = vpow.pop %v6523
  %v6525 = vmul.f32 %v6514, 1.442695
  %v6526 = vpow.pop %v6525
  %v6527 = vsel %vm1317, %v6516, 0.0
  %6528 = vadd.xlane.f32.xlu0 %v6527
  %v6529 = vpop.xlane.xlu0 %6528
  %v6530 = vsel %vm1317, %v6518, 0.0
  %6531 = vadd.xlane.f32.xlu0 %v6530
  %v6532 = vpop.xlane.xlu0 %6531
  %v6533 = vsel %vm1317, %v6520, 0.0
  %6534 = vadd.xlane.f32.xlu0 %v6533
  %v6535 = vpop.xlane.xlu0 %6534
  %v6536 = vsel %vm1317, %v6522, 0.0
  %6537 = vadd.xlane.f32.xlu0 %v6536
  %v6538 = vpop.xlane.xlu0 %6537
  %v6539 = vsel %vm1317, %v6524, 0.0
  %6540 = vadd.xlane.f32.xlu0 %v6539
  %v6541 = vpop.xlane.xlu0 %6540
  %v6542 = vsel %vm1317, %v6526, 0.0
  %6543 = vadd.xlane.f32.xlu0 %v6542
  %v6544 = vpop.xlane.xlu0 %6543
  %v6545 = vrcp.pop %v6529
  %v6546 = vrcp.pop %v6532
  %v6547 = vrcp.pop %v6535
  %v6548 = vrcp.pop %v6538
  %v6549 = vrcp.pop %v6541
  %v6550 = vrcp.pop %v6544
  %v6551 = vmul.f32 %v6516, %v6545
  %v6552 = vmul.f32 %v6518, %v6546
  %v6553 = vmul.f32 %v6520, %v6547
  %v6554 = vmul.f32 %v6522, %v6548
  %v6555 = vmul.f32 %v6524, %v6549
  %v6556 = vmul.f32 %v6526, %v6550
  %6557 = vrot.lane.b32.xlu0 %v5995, 64
  %v6558 = vpop.permute.xlu0 %6557
  %v6561 = vsel %vm1317, %v6551, 0
  %6563 = vmatprep.subr.mxu0 0.0
  %6564 = vmatpush1.msra.mxu0 0.0
  %6565 = vmatprep.subr.mxu0 0.0
  %6566 = vmatpush1.msra.mxu0 0.0
  %6567 = vmatprep.subr.mxu0 0.0
  %6568 = vmatpush1.msra.mxu0 0.0
  %6569 = vmatprep.subr.mxu0 0.0
  %6570 = vmatpush1.msra.mxu0 0.0
  %6571 = vmatprep.subr.mxu0 0.0
  %6572 = vmatpush1.msra.mxu0 0.0
  %6573 = vmatprep.subr.mxu0 0.0
  %6574 = vmatpush1.msra.mxu0 0.0
  %6575 = vmatprep.subr.mxu0 0.0
  %6576 = vmatpush1.msra.mxu0 0.0
  %6577 = vmatprep.subr.mxu0 0.0
  %6578 = vmatpush1.msra.mxu0 0.0
  %6579 = vmatprep.subr.mxu0 0.0
  %6580 = vmatpush1.msra.mxu0 0.0
  %6581 = vmatprep.subr.mxu0 0.0
  %6582 = vmatpush1.msra.mxu0 0.0
  %6583 = vmatprep.subr.mxu0 0.0
  %6584 = vmatpush1.msra.mxu0 0.0
  %6585 = vmatprep.subr.mxu0 0.0
  %6586 = vmatpush1.msra.mxu0 0.0
  %6587 = vmatprep.subr.mxu0 0.0
  %6588 = vmatpush1.msra.mxu0 0.0
  %6589 = vmatprep.subr.mxu0 0.0
  %6590 = vmatpush1.msra.mxu0 0.0
  %6591 = vmatprep.subr.mxu0 0.0
  %6592 = vmatpush1.msra.mxu0 0.0
  %6593 = vmatprep.subr.mxu0 0.0
  %6594 = vmatpush1.msra.mxu0 %v6558
  %6595 = vmatprep.subr.mxu0 0.0
  %6596 = vmatpush2.msra.mxu0 0.0
  %6597 = vmatprep.subr.mxu0 0.0
  %6598 = vmatpush2.msra.mxu0 0.0
  %6599 = vmatprep.subr.mxu0 0.0
  %6600 = vmatpush2.msra.mxu0 0.0
  %6601 = vmatprep.subr.mxu0 0.0
  %6602 = vmatpush2.msra.mxu0 0.0
  %6603 = vmatprep.subr.mxu0 0.0
  %6604 = vmatpush2.msra.mxu0 0.0
  %6605 = vmatprep.subr.mxu0 0.0
  %6606 = vmatpush2.msra.mxu0 0.0
  %6607 = vmatprep.subr.mxu0 0.0
  %6608 = vmatpush2.msra.mxu0 0.0
  %6609 = vmatprep.subr.mxu0 0.0
  %6610 = vmatpush2.msra.mxu0 0.0
  %6611 = vmatprep.subr.mxu0 0.0
  %6612 = vmatpush2.msra.mxu0 0.0
  %6613 = vmatprep.subr.mxu0 0.0
  %6614 = vmatpush2.msra.mxu0 0.0
  %6615 = vmatprep.subr.mxu0 0.0
  %6616 = vmatpush2.msra.mxu0 0.0
  %6617 = vmatprep.subr.mxu0 0.0
  %6618 = vmatpush2.msra.mxu0 0.0
  %6619 = vmatprep.subr.mxu0 0.0
  %6620 = vmatpush2.msra.mxu0 0.0
  %6621 = vmatprep.subr.mxu0 0.0
  %6622 = vmatpush2.msra.mxu0 0.0
  %6623 = vmatprep.subr.mxu0 0.0
  %6624 = vmatpush2.msra.mxu0 0.0
  %6625 = vmatprep.subr.mxu0 0.0
  %6626 = vmatpush2.msra.mxu0 0.0
  %6627 = vmatprep.mubr.f32.mxu0 0.0
  %6628 = vmatmul.mubr.f32.gmra.mxu0 %v6561
  %v6629 = vpop.f32.mrf.mxu0
  %v6630 = vadd.f32 0.0, %v6629
  %v6631 = vpop.f32.mrf.mxu0
  %6632 = vdwg.mxu0
  %6633 = vrot.lane.b32.xlu0 %v5998, 64
  %v6634 = vpop.permute.xlu0 %6633
  %v6637 = vsel %vm1317, %v6552, 0
  %6639 = vmatprep.subr.mxu0 0.0
  %6640 = vmatpush1.msra.mxu0 0.0
  %6641 = vmatprep.subr.mxu0 0.0
  %6642 = vmatpush1.msra.mxu0 0.0
  %6643 = vmatprep.subr.mxu0 0.0
  %6644 = vmatpush1.msra.mxu0 0.0
  %6645 = vmatprep.subr.mxu0 0.0
  %6646 = vmatpush1.msra.mxu0 0.0
  %6647 = vmatprep.subr.mxu0 0.0
  %6648 = vmatpush1.msra.mxu0 0.0
  %6649 = vmatprep.subr.mxu0 0.0
  %6650 = vmatpush1.msra.mxu0 0.0
  %6651 = vmatprep.subr.mxu0 0.0
  %6652 = vmatpush1.msra.mxu0 0.0
  %6653 = vmatprep.subr.mxu0 0.0
  %6654 = vmatpush1.msra.mxu0 0.0
  %6655 = vmatprep.subr.mxu0 0.0
  %6656 = vmatpush1.msra.mxu0 0.0
  %6657 = vmatprep.subr.mxu0 0.0
  %6658 = vmatpush1.msra.mxu0 0.0
  %6659 = vmatprep.subr.mxu0 0.0
  %6660 = vmatpush1.msra.mxu0 0.0
  %6661 = vmatprep.subr.mxu0 0.0
  %6662 = vmatpush1.msra.mxu0 0.0
  %6663 = vmatprep.subr.mxu0 0.0
  %6664 = vmatpush1.msra.mxu0 0.0
  %6665 = vmatprep.subr.mxu0 0.0
  %6666 = vmatpush1.msra.mxu0 0.0
  %6667 = vmatprep.subr.mxu0 0.0
  %6668 = vmatpush1.msra.mxu0 0.0
  %6669 = vmatprep.subr.mxu0 0.0
  %6670 = vmatpush1.msra.mxu0 %v6634
  %6671 = vmatprep.subr.mxu0 0.0
  %6672 = vmatpush2.msra.mxu0 0.0
  %6673 = vmatprep.subr.mxu0 0.0
  %6674 = vmatpush2.msra.mxu0 0.0
  %6675 = vmatprep.subr.mxu0 0.0
  %6676 = vmatpush2.msra.mxu0 0.0
  %6677 = vmatprep.subr.mxu0 0.0
  %6678 = vmatpush2.msra.mxu0 0.0
  %6679 = vmatprep.subr.mxu0 0.0
  %6680 = vmatpush2.msra.mxu0 0.0
  %6681 = vmatprep.subr.mxu0 0.0
  %6682 = vmatpush2.msra.mxu0 0.0
  %6683 = vmatprep.subr.mxu0 0.0
  %6684 = vmatpush2.msra.mxu0 0.0
  %6685 = vmatprep.subr.mxu0 0.0
  %6686 = vmatpush2.msra.mxu0 0.0
  %6687 = vmatprep.subr.mxu0 0.0
  %6688 = vmatpush2.msra.mxu0 0.0
  %6689 = vmatprep.subr.mxu0 0.0
  %6690 = vmatpush2.msra.mxu0 0.0
  %6691 = vmatprep.subr.mxu0 0.0
  %6692 = vmatpush2.msra.mxu0 0.0
  %6693 = vmatprep.subr.mxu0 0.0
  %6694 = vmatpush2.msra.mxu0 0.0
  %6695 = vmatprep.subr.mxu0 0.0
  %6696 = vmatpush2.msra.mxu0 0.0
  %6697 = vmatprep.subr.mxu0 0.0
  %6698 = vmatpush2.msra.mxu0 0.0
  %6699 = vmatprep.subr.mxu0 0.0
  %6700 = vmatpush2.msra.mxu0 0.0
  %6701 = vmatprep.subr.mxu0 0.0
  %6702 = vmatpush2.msra.mxu0 0.0
  %6703 = vmatprep.mubr.f32.mxu0 0.0
  %6704 = vmatmul.mubr.f32.gmra.mxu0 %v6637
  %v6705 = vpop.f32.mrf.mxu0
  %v6706 = vadd.f32 0.0, %v6705
  %v6707 = vpop.f32.mrf.mxu0
  %6708 = vdwg.mxu0
  %6709 = vrot.lane.b32.xlu0 %v6003, 64
  %v6710 = vpop.permute.xlu0 %6709
  %v6713 = vsel %vm1317, %v6553, 0
  %6715 = vmatprep.subr.mxu0 0.0
  %6716 = vmatpush1.msra.mxu0 0.0
  %6717 = vmatprep.subr.mxu0 0.0
  %6718 = vmatpush1.msra.mxu0 0.0
  %6719 = vmatprep.subr.mxu0 0.0
  %6720 = vmatpush1.msra.mxu0 0.0
  %6721 = vmatprep.subr.mxu0 0.0
  %6722 = vmatpush1.msra.mxu0 0.0
  %6723 = vmatprep.subr.mxu0 0.0
  %6724 = vmatpush1.msra.mxu0 0.0
  %6725 = vmatprep.subr.mxu0 0.0
  %6726 = vmatpush1.msra.mxu0 0.0
  %6727 = vmatprep.subr.mxu0 0.0
  %6728 = vmatpush1.msra.mxu0 0.0
  %6729 = vmatprep.subr.mxu0 0.0
  %6730 = vmatpush1.msra.mxu0 0.0
  %6731 = vmatprep.subr.mxu0 0.0
  %6732 = vmatpush1.msra.mxu0 0.0
  %6733 = vmatprep.subr.mxu0 0.0
  %6734 = vmatpush1.msra.mxu0 0.0
  %6735 = vmatprep.subr.mxu0 0.0
  %6736 = vmatpush1.msra.mxu0 0.0
  %6737 = vmatprep.subr.mxu0 0.0
  %6738 = vmatpush1.msra.mxu0 0.0
  %6739 = vmatprep.subr.mxu0 0.0
  %6740 = vmatpush1.msra.mxu0 0.0
  %6741 = vmatprep.subr.mxu0 0.0
  %6742 = vmatpush1.msra.mxu0 0.0
  %6743 = vmatprep.subr.mxu0 0.0
  %6744 = vmatpush1.msra.mxu0 0.0
  %6745 = vmatprep.subr.mxu0 0.0
  %6746 = vmatpush1.msra.mxu0 %v6710
  %6747 = vmatprep.subr.mxu0 0.0
  %6748 = vmatpush2.msra.mxu0 0.0
  %6749 = vmatprep.subr.mxu0 0.0
  %6750 = vmatpush2.msra.mxu0 0.0
  %6751 = vmatprep.subr.mxu0 0.0
  %6752 = vmatpush2.msra.mxu0 0.0
  %6753 = vmatprep.subr.mxu0 0.0
  %6754 = vmatpush2.msra.mxu0 0.0
  %6755 = vmatprep.subr.mxu0 0.0
  %6756 = vmatpush2.msra.mxu0 0.0
  %6757 = vmatprep.subr.mxu0 0.0
  %6758 = vmatpush2.msra.mxu0 0.0
  %6759 = vmatprep.subr.mxu0 0.0
  %6760 = vmatpush2.msra.mxu0 0.0
  %6761 = vmatprep.subr.mxu0 0.0
  %6762 = vmatpush2.msra.mxu0 0.0
  %6763 = vmatprep.subr.mxu0 0.0
  %6764 = vmatpush2.msra.mxu0 0.0
  %6765 = vmatprep.subr.mxu0 0.0
  %6766 = vmatpush2.msra.mxu0 0.0
  %6767 = vmatprep.subr.mxu0 0.0
  %6768 = vmatpush2.msra.mxu0 0.0
  %6769 = vmatprep.subr.mxu0 0.0
  %6770 = vmatpush2.msra.mxu0 0.0
  %6771 = vmatprep.subr.mxu0 0.0
  %6772 = vmatpush2.msra.mxu0 0.0
  %6773 = vmatprep.subr.mxu0 0.0
  %6774 = vmatpush2.msra.mxu0 0.0
  %6775 = vmatprep.subr.mxu0 0.0
  %6776 = vmatpush2.msra.mxu0 0.0
  %6777 = vmatprep.subr.mxu0 0.0
  %6778 = vmatpush2.msra.mxu0 0.0
  %6779 = vmatprep.mubr.f32.mxu0 0.0
  %6780 = vmatmul.mubr.f32.gmra.mxu0 %v6713
  %v6781 = vpop.f32.mrf.mxu0
  %v6782 = vadd.f32 0.0, %v6781
  %v6783 = vpop.f32.mrf.mxu0
  %6784 = vdwg.mxu0
  %6785 = vrot.lane.b32.xlu0 %v6006, 64
  %v6786 = vpop.permute.xlu0 %6785
  %v6789 = vsel %vm1317, %v6554, 0
  %6791 = vmatprep.subr.mxu0 0.0
  %6792 = vmatpush1.msra.mxu0 0.0
  %6793 = vmatprep.subr.mxu0 0.0
  %6794 = vmatpush1.msra.mxu0 0.0
  %6795 = vmatprep.subr.mxu0 0.0
  %6796 = vmatpush1.msra.mxu0 0.0
  %6797 = vmatprep.subr.mxu0 0.0
  %6798 = vmatpush1.msra.mxu0 0.0
  %6799 = vmatprep.subr.mxu0 0.0
  %6800 = vmatpush1.msra.mxu0 0.0
  %6801 = vmatprep.subr.mxu0 0.0
  %6802 = vmatpush1.msra.mxu0 0.0
  %6803 = vmatprep.subr.mxu0 0.0
  %6804 = vmatpush1.msra.mxu0 0.0
  %6805 = vmatprep.subr.mxu0 0.0
  %6806 = vmatpush1.msra.mxu0 0.0
  %6807 = vmatprep.subr.mxu0 0.0
  %6808 = vmatpush1.msra.mxu0 0.0
  %6809 = vmatprep.subr.mxu0 0.0
  %6810 = vmatpush1.msra.mxu0 0.0
  %6811 = vmatprep.subr.mxu0 0.0
  %6812 = vmatpush1.msra.mxu0 0.0
  %6813 = vmatprep.subr.mxu0 0.0
  %6814 = vmatpush1.msra.mxu0 0.0
  %6815 = vmatprep.subr.mxu0 0.0
  %6816 = vmatpush1.msra.mxu0 0.0
  %6817 = vmatprep.subr.mxu0 0.0
  %6818 = vmatpush1.msra.mxu0 0.0
  %6819 = vmatprep.subr.mxu0 0.0
  %6820 = vmatpush1.msra.mxu0 0.0
  %6821 = vmatprep.subr.mxu0 0.0
  %6822 = vmatpush1.msra.mxu0 %v6786
  %6823 = vmatprep.subr.mxu0 0.0
  %6824 = vmatpush2.msra.mxu0 0.0
  %6825 = vmatprep.subr.mxu0 0.0
  %6826 = vmatpush2.msra.mxu0 0.0
  %6827 = vmatprep.subr.mxu0 0.0
  %6828 = vmatpush2.msra.mxu0 0.0
  %6829 = vmatprep.subr.mxu0 0.0
  %6830 = vmatpush2.msra.mxu0 0.0
  %6831 = vmatprep.subr.mxu0 0.0
  %6832 = vmatpush2.msra.mxu0 0.0
  %6833 = vmatprep.subr.mxu0 0.0
  %6834 = vmatpush2.msra.mxu0 0.0
  %6835 = vmatprep.subr.mxu0 0.0
  %6836 = vmatpush2.msra.mxu0 0.0
  %6837 = vmatprep.subr.mxu0 0.0
  %6838 = vmatpush2.msra.mxu0 0.0
  %6839 = vmatprep.subr.mxu0 0.0
  %6840 = vmatpush2.msra.mxu0 0.0
  %6841 = vmatprep.subr.mxu0 0.0
  %6842 = vmatpush2.msra.mxu0 0.0
  %6843 = vmatprep.subr.mxu0 0.0
  %6844 = vmatpush2.msra.mxu0 0.0
  %6845 = vmatprep.subr.mxu0 0.0
  %6846 = vmatpush2.msra.mxu0 0.0
  %6847 = vmatprep.subr.mxu0 0.0
  %6848 = vmatpush2.msra.mxu0 0.0
  %6849 = vmatprep.subr.mxu0 0.0
  %6850 = vmatpush2.msra.mxu0 0.0
  %6851 = vmatprep.subr.mxu0 0.0
  %6852 = vmatpush2.msra.mxu0 0.0
  %6853 = vmatprep.subr.mxu0 0.0
  %6854 = vmatpush2.msra.mxu0 0.0
  %6855 = vmatprep.mubr.f32.mxu0 0.0
  %6856 = vmatmul.mubr.f32.gmra.mxu0 %v6789
  %v6857 = vpop.f32.mrf.mxu0
  %v6858 = vadd.f32 0.0, %v6857
  %v6859 = vpop.f32.mrf.mxu0
  %6860 = vdwg.mxu0
  %6861 = vrot.lane.b32.xlu0 %v6011, 64
  %v6862 = vpop.permute.xlu0 %6861
  %v6865 = vsel %vm1317, %v6555, 0
  %6867 = vmatprep.subr.mxu0 0.0
  %6868 = vmatpush1.msra.mxu0 0.0
  %6869 = vmatprep.subr.mxu0 0.0
  %6870 = vmatpush1.msra.mxu0 0.0
  %6871 = vmatprep.subr.mxu0 0.0
  %6872 = vmatpush1.msra.mxu0 0.0
  %6873 = vmatprep.subr.mxu0 0.0
  %6874 = vmatpush1.msra.mxu0 0.0
  %6875 = vmatprep.subr.mxu0 0.0
  %6876 = vmatpush1.msra.mxu0 0.0
  %6877 = vmatprep.subr.mxu0 0.0
  %6878 = vmatpush1.msra.mxu0 0.0
  %6879 = vmatprep.subr.mxu0 0.0
  %6880 = vmatpush1.msra.mxu0 0.0
  %6881 = vmatprep.subr.mxu0 0.0
  %6882 = vmatpush1.msra.mxu0 0.0
  %6883 = vmatprep.subr.mxu0 0.0
  %6884 = vmatpush1.msra.mxu0 0.0
  %6885 = vmatprep.subr.mxu0 0.0
  %6886 = vmatpush1.msra.mxu0 0.0
  %6887 = vmatprep.subr.mxu0 0.0
  %6888 = vmatpush1.msra.mxu0 0.0
  %6889 = vmatprep.subr.mxu0 0.0
  %6890 = vmatpush1.msra.mxu0 0.0
  %6891 = vmatprep.subr.mxu0 0.0
  %6892 = vmatpush1.msra.mxu0 0.0
  %6893 = vmatprep.subr.mxu0 0.0
  %6894 = vmatpush1.msra.mxu0 0.0
  %6895 = vmatprep.subr.mxu0 0.0
  %6896 = vmatpush1.msra.mxu0 0.0
  %6897 = vmatprep.subr.mxu0 0.0
  %6898 = vmatpush1.msra.mxu0 %v6862
  %6899 = vmatprep.subr.mxu0 0.0
  %6900 = vmatpush2.msra.mxu0 0.0
  %6901 = vmatprep.subr.mxu0 0.0
  %6902 = vmatpush2.msra.mxu0 0.0
  %6903 = vmatprep.subr.mxu0 0.0
  %6904 = vmatpush2.msra.mxu0 0.0
  %6905 = vmatprep.subr.mxu0 0.0
  %6906 = vmatpush2.msra.mxu0 0.0
  %6907 = vmatprep.subr.mxu0 0.0
  %6908 = vmatpush2.msra.mxu0 0.0
  %6909 = vmatprep.subr.mxu0 0.0
  %6910 = vmatpush2.msra.mxu0 0.0
  %6911 = vmatprep.subr.mxu0 0.0
  %6912 = vmatpush2.msra.mxu0 0.0
  %6913 = vmatprep.subr.mxu0 0.0
  %6914 = vmatpush2.msra.mxu0 0.0
  %6915 = vmatprep.subr.mxu0 0.0
  %6916 = vmatpush2.msra.mxu0 0.0
  %6917 = vmatprep.subr.mxu0 0.0
  %6918 = vmatpush2.msra.mxu0 0.0
  %6919 = vmatprep.subr.mxu0 0.0
  %6920 = vmatpush2.msra.mxu0 0.0
  %6921 = vmatprep.subr.mxu0 0.0
  %6922 = vmatpush2.msra.mxu0 0.0
  %6923 = vmatprep.subr.mxu0 0.0
  %6924 = vmatpush2.msra.mxu0 0.0
  %6925 = vmatprep.subr.mxu0 0.0
  %6926 = vmatpush2.msra.mxu0 0.0
  %6927 = vmatprep.subr.mxu0 0.0
  %6928 = vmatpush2.msra.mxu0 0.0
  %6929 = vmatprep.subr.mxu0 0.0
  %6930 = vmatpush2.msra.mxu0 0.0
  %6931 = vmatprep.mubr.f32.mxu0 0.0
  %6932 = vmatmul.mubr.f32.gmra.mxu0 %v6865
  %v6933 = vpop.f32.mrf.mxu0
  %v6934 = vadd.f32 0.0, %v6933
  %v6935 = vpop.f32.mrf.mxu0
  %6936 = vdwg.mxu0
  %6937 = vrot.lane.b32.xlu0 %v6014, 64
  %v6938 = vpop.permute.xlu0 %6937
  %v6941 = vsel %vm1317, %v6556, 0
  %6943 = vmatprep.subr.mxu0 0.0
  %6944 = vmatpush1.msra.mxu0 0.0
  %6945 = vmatprep.subr.mxu0 0.0
  %6946 = vmatpush1.msra.mxu0 0.0
  %6947 = vmatprep.subr.mxu0 0.0
  %6948 = vmatpush1.msra.mxu0 0.0
  %6949 = vmatprep.subr.mxu0 0.0
  %6950 = vmatpush1.msra.mxu0 0.0
  %6951 = vmatprep.subr.mxu0 0.0
  %6952 = vmatpush1.msra.mxu0 0.0
  %6953 = vmatprep.subr.mxu0 0.0
  %6954 = vmatpush1.msra.mxu0 0.0
  %6955 = vmatprep.subr.mxu0 0.0
  %6956 = vmatpush1.msra.mxu0 0.0
  %6957 = vmatprep.subr.mxu0 0.0
  %6958 = vmatpush1.msra.mxu0 0.0
  %6959 = vmatprep.subr.mxu0 0.0
  %6960 = vmatpush1.msra.mxu0 0.0
  %6961 = vmatprep.subr.mxu0 0.0
  %6962 = vmatpush1.msra.mxu0 0.0
  %6963 = vmatprep.subr.mxu0 0.0
  %6964 = vmatpush1.msra.mxu0 0.0
  %6965 = vmatprep.subr.mxu0 0.0
  %6966 = vmatpush1.msra.mxu0 0.0
  %6967 = vmatprep.subr.mxu0 0.0
  %6968 = vmatpush1.msra.mxu0 0.0
  %6969 = vmatprep.subr.mxu0 0.0
  %6970 = vmatpush1.msra.mxu0 0.0
  %6971 = vmatprep.subr.mxu0 0.0
  %6972 = vmatpush1.msra.mxu0 0.0
  %6973 = vmatprep.subr.mxu0 0.0
  %6974 = vmatpush1.msra.mxu0 %v6938
  %6975 = vmatprep.subr.mxu0 0.0
  %6976 = vmatpush2.msra.mxu0 0.0
  %6977 = vmatprep.subr.mxu0 0.0
  %6978 = vmatpush2.msra.mxu0 0.0
  %6979 = vmatprep.subr.mxu0 0.0
  %6980 = vmatpush2.msra.mxu0 0.0
  %6981 = vmatprep.subr.mxu0 0.0
  %6982 = vmatpush2.msra.mxu0 0.0
  %6983 = vmatprep.subr.mxu0 0.0
  %6984 = vmatpush2.msra.mxu0 0.0
  %6985 = vmatprep.subr.mxu0 0.0
  %6986 = vmatpush2.msra.mxu0 0.0
  %6987 = vmatprep.subr.mxu0 0.0
  %6988 = vmatpush2.msra.mxu0 0.0
  %6989 = vmatprep.subr.mxu0 0.0
  %6990 = vmatpush2.msra.mxu0 0.0
  %6991 = vmatprep.subr.mxu0 0.0
  %6992 = vmatpush2.msra.mxu0 0.0
  %6993 = vmatprep.subr.mxu0 0.0
  %6994 = vmatpush2.msra.mxu0 0.0
  %6995 = vmatprep.subr.mxu0 0.0
  %6996 = vmatpush2.msra.mxu0 0.0
  %6997 = vmatprep.subr.mxu0 0.0
  %6998 = vmatpush2.msra.mxu0 0.0
  %6999 = vmatprep.subr.mxu0 0.0
  %7000 = vmatpush2.msra.mxu0 0.0
  %7001 = vmatprep.subr.mxu0 0.0
  %7002 = vmatpush2.msra.mxu0 0.0
  %7003 = vmatprep.subr.mxu0 0.0
  %7004 = vmatpush2.msra.mxu0 0.0
  %7005 = vmatprep.subr.mxu0 0.0
  %7006 = vmatpush2.msra.mxu0 0.0
  %7007 = vmatprep.mubr.f32.mxu0 0.0
  %7008 = vmatmul.mubr.f32.gmra.mxu0 %v6941
  %v7009 = vpop.f32.mrf.mxu0
  %v7010 = vadd.f32 0.0, %v7009
  %v7011 = vpop.f32.mrf.mxu0
  %7012 = vdwg.mxu0
  %7013 = vrot.lane.b32.xlu0 %v5995, 120
  %v7014 = vpop.permute.xlu0 %7013
  %7015 = vrot.lane.b32.xlu0 %v5995, 88
  %v7016 = vpop.permute.xlu0 %7015
  %v7017 = vsel %vm1317, %v7014, 0
  %v7019 = vsel %vm1317, %v7016, 0
  %7021 = vmatprep.subr.mxu0 0.0
  %7022 = vmatpush1.xpose.msra.mxu0 0.0
  %7023 = vmatprep.subr.mxu0 0.0
  %7024 = vmatpush1.xpose.msra.mxu0 0.0
  %7025 = vmatprep.subr.mxu0 0.0
  %7026 = vmatpush1.xpose.msra.mxu0 0.0
  %7027 = vmatprep.subr.mxu0 0.0
  %7028 = vmatpush1.xpose.msra.mxu0 0.0
  %7029 = vmatprep.subr.mxu0 0.0
  %7030 = vmatpush1.xpose.msra.mxu0 0.0
  %7031 = vmatprep.subr.mxu0 0.0
  %7032 = vmatpush1.xpose.msra.mxu0 0.0
  %7033 = vmatprep.subr.mxu0 0.0
  %7034 = vmatpush1.xpose.msra.mxu0 0.0
  %7035 = vmatprep.subr.mxu0 0.0
  %7036 = vmatpush1.xpose.msra.mxu0 0.0
  %7037 = vmatprep.subr.mxu0 0.0
  %7038 = vmatpush1.xpose.msra.mxu0 0.0
  %7039 = vmatprep.subr.mxu0 0.0
  %7040 = vmatpush1.xpose.msra.mxu0 0.0
  %7041 = vmatprep.subr.mxu0 0.0
  %7042 = vmatpush1.xpose.msra.mxu0 0.0
  %7043 = vmatprep.subr.mxu0 0.0
  %7044 = vmatpush1.xpose.msra.mxu0 0.0
  %7045 = vmatprep.subr.mxu0 0.0
  %7046 = vmatpush1.xpose.msra.mxu0 0.0
  %7047 = vmatprep.subr.mxu0 0.0
  %7048 = vmatpush1.xpose.msra.mxu0 0.0
  %7049 = vmatprep.subr.mxu0 0.0
  %7050 = vmatpush1.xpose.msra.mxu0 0.0
  %7051 = vmatprep.subr.mxu0 0.0
  %7052 = vmatpush1.xpose.msra.mxu0 %v7019
  %7053 = vmatprep.subr.mxu0 0.0
  %7054 = vmatpush2.xpose.msra.mxu0 0.0
  %7055 = vmatprep.subr.mxu0 0.0
  %7056 = vmatpush2.xpose.msra.mxu0 0.0
  %7057 = vmatprep.subr.mxu0 0.0
  %7058 = vmatpush2.xpose.msra.mxu0 0.0
  %7059 = vmatprep.subr.mxu0 0.0
  %7060 = vmatpush2.xpose.msra.mxu0 0.0
  %7061 = vmatprep.subr.mxu0 0.0
  %7062 = vmatpush2.xpose.msra.mxu0 0.0
  %7063 = vmatprep.subr.mxu0 0.0
  %7064 = vmatpush2.xpose.msra.mxu0 0.0
  %7065 = vmatprep.subr.mxu0 0.0
  %7066 = vmatpush2.xpose.msra.mxu0 0.0
  %7067 = vmatprep.subr.mxu0 0.0
  %7068 = vmatpush2.xpose.msra.mxu0 0.0
  %7069 = vmatprep.subr.mxu0 0.0
  %7070 = vmatpush2.xpose.msra.mxu0 0.0
  %7071 = vmatprep.subr.mxu0 0.0
  %7072 = vmatpush2.xpose.msra.mxu0 0.0
  %7073 = vmatprep.subr.mxu0 0.0
  %7074 = vmatpush2.xpose.msra.mxu0 0.0
  %7075 = vmatprep.subr.mxu0 0.0
  %7076 = vmatpush2.xpose.msra.mxu0 0.0
  %7077 = vmatprep.subr.mxu0 0.0
  %7078 = vmatpush2.xpose.msra.mxu0 0.0
  %7079 = vmatprep.subr.mxu0 0.0
  %7080 = vmatpush2.xpose.msra.mxu0 0.0
  %7081 = vmatprep.subr.mxu0 0.0
  %7082 = vmatpush2.xpose.msra.mxu0 0.0
  %7083 = vmatprep.subr.mxu0 0.0
  %7084 = vmatpush2.xpose.msra.mxu0 0.0
  %7085 = vmatprep.mubr.f32.mxu0 0.0
  %7086 = vmatmul.mubr.f32.gmra.mxu0 %v7017
  %v7087 = vpop.f32.mrf.mxu0
  %v7088 = vadd.f32 0.0, %v7087
  %v7089 = vpop.f32.mrf.mxu0
  %7090 = vdwg.mxu0
  %7091 = vrot.lane.b32.xlu0 %v5998, 120
  %v7092 = vpop.permute.xlu0 %7091
  %7093 = vrot.lane.b32.xlu0 %v5998, 88
  %v7094 = vpop.permute.xlu0 %7093
  %v7095 = vsel %vm1317, %v7092, 0
  %v7097 = vsel %vm1317, %v7094, 0
  %7099 = vmatprep.subr.mxu0 0.0
  %7100 = vmatpush1.xpose.msra.mxu0 0.0
  %7101 = vmatprep.subr.mxu0 0.0
  %7102 = vmatpush1.xpose.msra.mxu0 0.0
  %7103 = vmatprep.subr.mxu0 0.0
  %7104 = vmatpush1.xpose.msra.mxu0 0.0
  %7105 = vmatprep.subr.mxu0 0.0
  %7106 = vmatpush1.xpose.msra.mxu0 0.0
  %7107 = vmatprep.subr.mxu0 0.0
  %7108 = vmatpush1.xpose.msra.mxu0 0.0
  %7109 = vmatprep.subr.mxu0 0.0
  %7110 = vmatpush1.xpose.msra.mxu0 0.0
  %7111 = vmatprep.subr.mxu0 0.0
  %7112 = vmatpush1.xpose.msra.mxu0 0.0
  %7113 = vmatprep.subr.mxu0 0.0
  %7114 = vmatpush1.xpose.msra.mxu0 0.0
  %7115 = vmatprep.subr.mxu0 0.0
  %7116 = vmatpush1.xpose.msra.mxu0 0.0
  %7117 = vmatprep.subr.mxu0 0.0
  %7118 = vmatpush1.xpose.msra.mxu0 0.0
  %7119 = vmatprep.subr.mxu0 0.0
  %7120 = vmatpush1.xpose.msra.mxu0 0.0
  %7121 = vmatprep.subr.mxu0 0.0
  %7122 = vmatpush1.xpose.msra.mxu0 0.0
  %7123 = vmatprep.subr.mxu0 0.0
  %7124 = vmatpush1.xpose.msra.mxu0 0.0
  %7125 = vmatprep.subr.mxu0 0.0
  %7126 = vmatpush1.xpose.msra.mxu0 0.0
  %7127 = vmatprep.subr.mxu0 0.0
  %7128 = vmatpush1.xpose.msra.mxu0 0.0
  %7129 = vmatprep.subr.mxu0 0.0
  %7130 = vmatpush1.xpose.msra.mxu0 %v7097
  %7131 = vmatprep.subr.mxu0 0.0
  %7132 = vmatpush2.xpose.msra.mxu0 0.0
  %7133 = vmatprep.subr.mxu0 0.0
  %7134 = vmatpush2.xpose.msra.mxu0 0.0
  %7135 = vmatprep.subr.mxu0 0.0
  %7136 = vmatpush2.xpose.msra.mxu0 0.0
  %7137 = vmatprep.subr.mxu0 0.0
  %7138 = vmatpush2.xpose.msra.mxu0 0.0
  %7139 = vmatprep.subr.mxu0 0.0
  %7140 = vmatpush2.xpose.msra.mxu0 0.0
  %7141 = vmatprep.subr.mxu0 0.0
  %7142 = vmatpush2.xpose.msra.mxu0 0.0
  %7143 = vmatprep.subr.mxu0 0.0
  %7144 = vmatpush2.xpose.msra.mxu0 0.0
  %7145 = vmatprep.subr.mxu0 0.0
  %7146 = vmatpush2.xpose.msra.mxu0 0.0
  %7147 = vmatprep.subr.mxu0 0.0
  %7148 = vmatpush2.xpose.msra.mxu0 0.0
  %7149 = vmatprep.subr.mxu0 0.0
  %7150 = vmatpush2.xpose.msra.mxu0 0.0
  %7151 = vmatprep.subr.mxu0 0.0
  %7152 = vmatpush2.xpose.msra.mxu0 0.0
  %7153 = vmatprep.subr.mxu0 0.0
  %7154 = vmatpush2.xpose.msra.mxu0 0.0
  %7155 = vmatprep.subr.mxu0 0.0
  %7156 = vmatpush2.xpose.msra.mxu0 0.0
  %7157 = vmatprep.subr.mxu0 0.0
  %7158 = vmatpush2.xpose.msra.mxu0 0.0
  %7159 = vmatprep.subr.mxu0 0.0
  %7160 = vmatpush2.xpose.msra.mxu0 0.0
  %7161 = vmatprep.subr.mxu0 0.0
  %7162 = vmatpush2.xpose.msra.mxu0 0.0
  %7163 = vmatprep.mubr.f32.mxu0 0.0
  %7164 = vmatmul.mubr.f32.gmra.mxu0 %v7095
  %v7165 = vpop.f32.mrf.mxu0
  %v7166 = vadd.f32 0.0, %v7165
  %v7167 = vpop.f32.mrf.mxu0
  %7168 = vdwg.mxu0
  %7169 = vrot.lane.b32.xlu0 %v6003, 120
  %v7170 = vpop.permute.xlu0 %7169
  %7171 = vrot.lane.b32.xlu0 %v6003, 88
  %v7172 = vpop.permute.xlu0 %7171
  %v7173 = vsel %vm1317, %v7170, 0
  %v7175 = vsel %vm1317, %v7172, 0
  %7177 = vmatprep.subr.mxu0 0.0
  %7178 = vmatpush1.xpose.msra.mxu0 0.0
  %7179 = vmatprep.subr.mxu0 0.0
  %7180 = vmatpush1.xpose.msra.mxu0 0.0
  %7181 = vmatprep.subr.mxu0 0.0
  %7182 = vmatpush1.xpose.msra.mxu0 0.0
  %7183 = vmatprep.subr.mxu0 0.0
  %7184 = vmatpush1.xpose.msra.mxu0 0.0
  %7185 = vmatprep.subr.mxu0 0.0
  %7186 = vmatpush1.xpose.msra.mxu0 0.0
  %7187 = vmatprep.subr.mxu0 0.0
  %7188 = vmatpush1.xpose.msra.mxu0 0.0
  %7189 = vmatprep.subr.mxu0 0.0
  %7190 = vmatpush1.xpose.msra.mxu0 0.0
  %7191 = vmatprep.subr.mxu0 0.0
  %7192 = vmatpush1.xpose.msra.mxu0 0.0
  %7193 = vmatprep.subr.mxu0 0.0
  %7194 = vmatpush1.xpose.msra.mxu0 0.0
  %7195 = vmatprep.subr.mxu0 0.0
  %7196 = vmatpush1.xpose.msra.mxu0 0.0
  %7197 = vmatprep.subr.mxu0 0.0
  %7198 = vmatpush1.xpose.msra.mxu0 0.0
  %7199 = vmatprep.subr.mxu0 0.0
  %7200 = vmatpush1.xpose.msra.mxu0 0.0
  %7201 = vmatprep.subr.mxu0 0.0
  %7202 = vmatpush1.xpose.msra.mxu0 0.0
  %7203 = vmatprep.subr.mxu0 0.0
  %7204 = vmatpush1.xpose.msra.mxu0 0.0
  %7205 = vmatprep.subr.mxu0 0.0
  %7206 = vmatpush1.xpose.msra.mxu0 0.0
  %7207 = vmatprep.subr.mxu0 0.0
  %7208 = vmatpush1.xpose.msra.mxu0 %v7175
  %7209 = vmatprep.subr.mxu0 0.0
  %7210 = vmatpush2.xpose.msra.mxu0 0.0
  %7211 = vmatprep.subr.mxu0 0.0
  %7212 = vmatpush2.xpose.msra.mxu0 0.0
  %7213 = vmatprep.subr.mxu0 0.0
  %7214 = vmatpush2.xpose.msra.mxu0 0.0
  %7215 = vmatprep.subr.mxu0 0.0
  %7216 = vmatpush2.xpose.msra.mxu0 0.0
  %7217 = vmatprep.subr.mxu0 0.0
  %7218 = vmatpush2.xpose.msra.mxu0 0.0
  %7219 = vmatprep.subr.mxu0 0.0
  %7220 = vmatpush2.xpose.msra.mxu0 0.0
  %7221 = vmatprep.subr.mxu0 0.0
  %7222 = vmatpush2.xpose.msra.mxu0 0.0
  %7223 = vmatprep.subr.mxu0 0.0
  %7224 = vmatpush2.xpose.msra.mxu0 0.0
  %7225 = vmatprep.subr.mxu0 0.0
  %7226 = vmatpush2.xpose.msra.mxu0 0.0
  %7227 = vmatprep.subr.mxu0 0.0
  %7228 = vmatpush2.xpose.msra.mxu0 0.0
  %7229 = vmatprep.subr.mxu0 0.0
  %7230 = vmatpush2.xpose.msra.mxu0 0.0
  %7231 = vmatprep.subr.mxu0 0.0
  %7232 = vmatpush2.xpose.msra.mxu0 0.0
  %7233 = vmatprep.subr.mxu0 0.0
  %7234 = vmatpush2.xpose.msra.mxu0 0.0
  %7235 = vmatprep.subr.mxu0 0.0
  %7236 = vmatpush2.xpose.msra.mxu0 0.0
  %7237 = vmatprep.subr.mxu0 0.0
  %7238 = vmatpush2.xpose.msra.mxu0 0.0
  %7239 = vmatprep.subr.mxu0 0.0
  %7240 = vmatpush2.xpose.msra.mxu0 0.0
  %7241 = vmatprep.mubr.f32.mxu0 0.0
  %7242 = vmatmul.mubr.f32.gmra.mxu0 %v7173
  %v7243 = vpop.f32.mrf.mxu0
  %v7244 = vadd.f32 0.0, %v7243
  %v7245 = vpop.f32.mrf.mxu0
  %7246 = vdwg.mxu0
  %7247 = vrot.lane.b32.xlu0 %v6006, 120
  %v7248 = vpop.permute.xlu0 %7247
  %7249 = vrot.lane.b32.xlu0 %v6006, 88
  %v7250 = vpop.permute.xlu0 %7249
  %v7251 = vsel %vm1317, %v7248, 0
  %v7253 = vsel %vm1317, %v7250, 0
  %7255 = vmatprep.subr.mxu0 0.0
  %7256 = vmatpush1.xpose.msra.mxu0 0.0
  %7257 = vmatprep.subr.mxu0 0.0
  %7258 = vmatpush1.xpose.msra.mxu0 0.0
  %7259 = vmatprep.subr.mxu0 0.0
  %7260 = vmatpush1.xpose.msra.mxu0 0.0
  %7261 = vmatprep.subr.mxu0 0.0
  %7262 = vmatpush1.xpose.msra.mxu0 0.0
  %7263 = vmatprep.subr.mxu0 0.0
  %7264 = vmatpush1.xpose.msra.mxu0 0.0
  %7265 = vmatprep.subr.mxu0 0.0
  %7266 = vmatpush1.xpose.msra.mxu0 0.0
  %7267 = vmatprep.subr.mxu0 0.0
  %7268 = vmatpush1.xpose.msra.mxu0 0.0
  %7269 = vmatprep.subr.mxu0 0.0
  %7270 = vmatpush1.xpose.msra.mxu0 0.0
  %7271 = vmatprep.subr.mxu0 0.0
  %7272 = vmatpush1.xpose.msra.mxu0 0.0
  %7273 = vmatprep.subr.mxu0 0.0
  %7274 = vmatpush1.xpose.msra.mxu0 0.0
  %7275 = vmatprep.subr.mxu0 0.0
  %7276 = vmatpush1.xpose.msra.mxu0 0.0
  %7277 = vmatprep.subr.mxu0 0.0
  %7278 = vmatpush1.xpose.msra.mxu0 0.0
  %7279 = vmatprep.subr.mxu0 0.0
  %7280 = vmatpush1.xpose.msra.mxu0 0.0
  %7281 = vmatprep.subr.mxu0 0.0
  %7282 = vmatpush1.xpose.msra.mxu0 0.0
  %7283 = vmatprep.subr.mxu0 0.0
  %7284 = vmatpush1.xpose.msra.mxu0 0.0
  %7285 = vmatprep.subr.mxu0 0.0
  %7286 = vmatpush1.xpose.msra.mxu0 %v7253
  %7287 = vmatprep.subr.mxu0 0.0
  %7288 = vmatpush2.xpose.msra.mxu0 0.0
  %7289 = vmatprep.subr.mxu0 0.0
  %7290 = vmatpush2.xpose.msra.mxu0 0.0
  %7291 = vmatprep.subr.mxu0 0.0
  %7292 = vmatpush2.xpose.msra.mxu0 0.0
  %7293 = vmatprep.subr.mxu0 0.0
  %7294 = vmatpush2.xpose.msra.mxu0 0.0
  %7295 = vmatprep.subr.mxu0 0.0
  %7296 = vmatpush2.xpose.msra.mxu0 0.0
  %7297 = vmatprep.subr.mxu0 0.0
  %7298 = vmatpush2.xpose.msra.mxu0 0.0
  %7299 = vmatprep.subr.mxu0 0.0
  %7300 = vmatpush2.xpose.msra.mxu0 0.0
  %7301 = vmatprep.subr.mxu0 0.0
  %7302 = vmatpush2.xpose.msra.mxu0 0.0
  %7303 = vmatprep.subr.mxu0 0.0
  %7304 = vmatpush2.xpose.msra.mxu0 0.0
  %7305 = vmatprep.subr.mxu0 0.0
  %7306 = vmatpush2.xpose.msra.mxu0 0.0
  %7307 = vmatprep.subr.mxu0 0.0
  %7308 = vmatpush2.xpose.msra.mxu0 0.0
  %7309 = vmatprep.subr.mxu0 0.0
  %7310 = vmatpush2.xpose.msra.mxu0 0.0
  %7311 = vmatprep.subr.mxu0 0.0
  %7312 = vmatpush2.xpose.msra.mxu0 0.0
  %7313 = vmatprep.subr.mxu0 0.0
  %7314 = vmatpush2.xpose.msra.mxu0 0.0
  %7315 = vmatprep.subr.mxu0 0.0
  %7316 = vmatpush2.xpose.msra.mxu0 0.0
  %7317 = vmatprep.subr.mxu0 0.0
  %7318 = vmatpush2.xpose.msra.mxu0 0.0
  %7319 = vmatprep.mubr.f32.mxu0 0.0
  %7320 = vmatmul.mubr.f32.gmra.mxu0 %v7251
  %v7321 = vpop.f32.mrf.mxu0
  %v7322 = vadd.f32 0.0, %v7321
  %v7323 = vpop.f32.mrf.mxu0
  %7324 = vdwg.mxu0
  %7325 = vrot.lane.b32.xlu0 %v6011, 120
  %v7326 = vpop.permute.xlu0 %7325
  %7327 = vrot.lane.b32.xlu0 %v6011, 88
  %v7328 = vpop.permute.xlu0 %7327
  %v7329 = vsel %vm1317, %v7326, 0
  %v7331 = vsel %vm1317, %v7328, 0
  %7333 = vmatprep.subr.mxu0 0.0
  %7334 = vmatpush1.xpose.msra.mxu0 0.0
  %7335 = vmatprep.subr.mxu0 0.0
  %7336 = vmatpush1.xpose.msra.mxu0 0.0
  %7337 = vmatprep.subr.mxu0 0.0
  %7338 = vmatpush1.xpose.msra.mxu0 0.0
  %7339 = vmatprep.subr.mxu0 0.0
  %7340 = vmatpush1.xpose.msra.mxu0 0.0
  %7341 = vmatprep.subr.mxu0 0.0
  %7342 = vmatpush1.xpose.msra.mxu0 0.0
  %7343 = vmatprep.subr.mxu0 0.0
  %7344 = vmatpush1.xpose.msra.mxu0 0.0
  %7345 = vmatprep.subr.mxu0 0.0
  %7346 = vmatpush1.xpose.msra.mxu0 0.0
  %7347 = vmatprep.subr.mxu0 0.0
  %7348 = vmatpush1.xpose.msra.mxu0 0.0
  %7349 = vmatprep.subr.mxu0 0.0
  %7350 = vmatpush1.xpose.msra.mxu0 0.0
  %7351 = vmatprep.subr.mxu0 0.0
  %7352 = vmatpush1.xpose.msra.mxu0 0.0
  %7353 = vmatprep.subr.mxu0 0.0
  %7354 = vmatpush1.xpose.msra.mxu0 0.0
  %7355 = vmatprep.subr.mxu0 0.0
  %7356 = vmatpush1.xpose.msra.mxu0 0.0
  %7357 = vmatprep.subr.mxu0 0.0
  %7358 = vmatpush1.xpose.msra.mxu0 0.0
  %7359 = vmatprep.subr.mxu0 0.0
  %7360 = vmatpush1.xpose.msra.mxu0 0.0
  %7361 = vmatprep.subr.mxu0 0.0
  %7362 = vmatpush1.xpose.msra.mxu0 0.0
  %7363 = vmatprep.subr.mxu0 0.0
  %7364 = vmatpush1.xpose.msra.mxu0 %v7331
  %7365 = vmatprep.subr.mxu0 0.0
  %7366 = vmatpush2.xpose.msra.mxu0 0.0
  %7367 = vmatprep.subr.mxu0 0.0
  %7368 = vmatpush2.xpose.msra.mxu0 0.0
  %7369 = vmatprep.subr.mxu0 0.0
  %7370 = vmatpush2.xpose.msra.mxu0 0.0
  %7371 = vmatprep.subr.mxu0 0.0
  %7372 = vmatpush2.xpose.msra.mxu0 0.0
  %7373 = vmatprep.subr.mxu0 0.0
  %7374 = vmatpush2.xpose.msra.mxu0 0.0
  %7375 = vmatprep.subr.mxu0 0.0
  %7376 = vmatpush2.xpose.msra.mxu0 0.0
  %7377 = vmatprep.subr.mxu0 0.0
  %7378 = vmatpush2.xpose.msra.mxu0 0.0
  %7379 = vmatprep.subr.mxu0 0.0
  %7380 = vmatpush2.xpose.msra.mxu0 0.0
  %7381 = vmatprep.subr.mxu0 0.0
  %7382 = vmatpush2.xpose.msra.mxu0 0.0
  %7383 = vmatprep.subr.mxu0 0.0
  %7384 = vmatpush2.xpose.msra.mxu0 0.0
  %7385 = vmatprep.subr.mxu0 0.0
  %7386 = vmatpush2.xpose.msra.mxu0 0.0
  %7387 = vmatprep.subr.mxu0 0.0
  %7388 = vmatpush2.xpose.msra.mxu0 0.0
  %7389 = vmatprep.subr.mxu0 0.0
  %7390 = vmatpush2.xpose.msra.mxu0 0.0
  %7391 = vmatprep.subr.mxu0 0.0
  %7392 = vmatpush2.xpose.msra.mxu0 0.0
  %7393 = vmatprep.subr.mxu0 0.0
  %7394 = vmatpush2.xpose.msra.mxu0 0.0
  %7395 = vmatprep.subr.mxu0 0.0
  %7396 = vmatpush2.xpose.msra.mxu0 0.0
  %7397 = vmatprep.mubr.f32.mxu0 0.0
  %7398 = vmatmul.mubr.f32.gmra.mxu0 %v7329
  %v7399 = vpop.f32.mrf.mxu0
  %v7400 = vadd.f32 0.0, %v7399
  %v7401 = vpop.f32.mrf.mxu0
  %7402 = vdwg.mxu0
  %7403 = vrot.lane.b32.xlu0 %v6014, 120
  %v7404 = vpop.permute.xlu0 %7403
  %7405 = vrot.lane.b32.xlu0 %v6014, 88
  %v7406 = vpop.permute.xlu0 %7405
  %v7407 = vsel %vm1317, %v7404, 0
  %v7409 = vsel %vm1317, %v7406, 0
  %7411 = vmatprep.subr.mxu0 0.0
  %7412 = vmatpush1.xpose.msra.mxu0 0.0
  %7413 = vmatprep.subr.mxu0 0.0
  %7414 = vmatpush1.xpose.msra.mxu0 0.0
  %7415 = vmatprep.subr.mxu0 0.0
  %7416 = vmatpush1.xpose.msra.mxu0 0.0
  %7417 = vmatprep.subr.mxu0 0.0
  %7418 = vmatpush1.xpose.msra.mxu0 0.0
  %7419 = vmatprep.subr.mxu0 0.0
  %7420 = vmatpush1.xpose.msra.mxu0 0.0
  %7421 = vmatprep.subr.mxu0 0.0
  %7422 = vmatpush1.xpose.msra.mxu0 0.0
  %7423 = vmatprep.subr.mxu0 0.0
  %7424 = vmatpush1.xpose.msra.mxu0 0.0
  %7425 = vmatprep.subr.mxu0 0.0
  %7426 = vmatpush1.xpose.msra.mxu0 0.0
  %7427 = vmatprep.subr.mxu0 0.0
  %7428 = vmatpush1.xpose.msra.mxu0 0.0
  %7429 = vmatprep.subr.mxu0 0.0
  %7430 = vmatpush1.xpose.msra.mxu0 0.0
  %7431 = vmatprep.subr.mxu0 0.0
  %7432 = vmatpush1.xpose.msra.mxu0 0.0
  %7433 = vmatprep.subr.mxu0 0.0
  %7434 = vmatpush1.xpose.msra.mxu0 0.0
  %7435 = vmatprep.subr.mxu0 0.0
  %7436 = vmatpush1.xpose.msra.mxu0 0.0
  %7437 = vmatprep.subr.mxu0 0.0
  %7438 = vmatpush1.xpose.msra.mxu0 0.0
  %7439 = vmatprep.subr.mxu0 0.0
  %7440 = vmatpush1.xpose.msra.mxu0 0.0
  %7441 = vmatprep.subr.mxu0 0.0
  %7442 = vmatpush1.xpose.msra.mxu0 %v7409
  %7443 = vmatprep.subr.mxu0 0.0
  %7444 = vmatpush2.xpose.msra.mxu0 0.0
  %7445 = vmatprep.subr.mxu0 0.0
  %7446 = vmatpush2.xpose.msra.mxu0 0.0
  %7447 = vmatprep.subr.mxu0 0.0
  %7448 = vmatpush2.xpose.msra.mxu0 0.0
  %7449 = vmatprep.subr.mxu0 0.0
  %7450 = vmatpush2.xpose.msra.mxu0 0.0
  %7451 = vmatprep.subr.mxu0 0.0
  %7452 = vmatpush2.xpose.msra.mxu0 0.0
  %7453 = vmatprep.subr.mxu0 0.0
  %7454 = vmatpush2.xpose.msra.mxu0 0.0
  %7455 = vmatprep.subr.mxu0 0.0
  %7456 = vmatpush2.xpose.msra.mxu0 0.0
  %7457 = vmatprep.subr.mxu0 0.0
  %7458 = vmatpush2.xpose.msra.mxu0 0.0
  %7459 = vmatprep.subr.mxu0 0.0
  %7460 = vmatpush2.xpose.msra.mxu0 0.0
  %7461 = vmatprep.subr.mxu0 0.0
  %7462 = vmatpush2.xpose.msra.mxu0 0.0
  %7463 = vmatprep.subr.mxu0 0.0
  %7464 = vmatpush2.xpose.msra.mxu0 0.0
  %7465 = vmatprep.subr.mxu0 0.0
  %7466 = vmatpush2.xpose.msra.mxu0 0.0
  %7467 = vmatprep.subr.mxu0 0.0
  %7468 = vmatpush2.xpose.msra.mxu0 0.0
  %7469 = vmatprep.subr.mxu0 0.0
  %7470 = vmatpush2.xpose.msra.mxu0 0.0
  %7471 = vmatprep.subr.mxu0 0.0
  %7472 = vmatpush2.xpose.msra.mxu0 0.0
  %7473 = vmatprep.subr.mxu0 0.0
  %7474 = vmatpush2.xpose.msra.mxu0 0.0
  %7475 = vmatprep.mubr.f32.mxu0 0.0
  %7476 = vmatmul.mubr.f32.gmra.mxu0 %v7407
  %v7477 = vpop.f32.mrf.mxu0
  %v7478 = vadd.f32 0.0, %v7477
  %v7479 = vpop.f32.mrf.mxu0
  %7480 = vdwg.mxu0
  %v7481 = vmul.f32 %v7088, 0.35355338
  %v7482 = vmul.f32 %v7166, 0.35355338
  %v7483 = vmul.f32 %v7244, 0.35355338
  %v7484 = vmul.f32 %v7322, 0.35355338
  %v7485 = vmul.f32 %v7400, 0.35355338
  %v7486 = vmul.f32 %v7478, 0.35355338
  %v7487 = vadd.f32 %v7481, %v2773
  %v7488 = vadd.f32 %v7482, %v2774
  %v7489 = vadd.f32 %v7483, %v2775
  %v7490 = vadd.f32 %v7484, %v2776
  %v7491 = vadd.f32 %v7485, %v2777
  %v7492 = vadd.f32 %v7486, %v2778
  %v7493 = vsel %vm1317, %v7487, -inf
  %7494 = vmax.xlane.f32.xlu0 %v7493
  %v7495 = vpop.xlane.xlu0 %7494
  %v7496 = vsel %vm1317, %v7488, -inf
  %7497 = vmax.xlane.f32.xlu0 %v7496
  %v7498 = vpop.xlane.xlu0 %7497
  %v7499 = vsel %vm1317, %v7489, -inf
  %7500 = vmax.xlane.f32.xlu0 %v7499
  %v7501 = vpop.xlane.xlu0 %7500
  %v7502 = vsel %vm1317, %v7490, -inf
  %7503 = vmax.xlane.f32.xlu0 %v7502
  %v7504 = vpop.xlane.xlu0 %7503
  %v7505 = vsel %vm1317, %v7491, -inf
  %7506 = vmax.xlane.f32.xlu0 %v7505
  %v7507 = vpop.xlane.xlu0 %7506
  %v7508 = vsel %vm1317, %v7492, -inf
  %7509 = vmax.xlane.f32.xlu0 %v7508
  %v7510 = vpop.xlane.xlu0 %7509
  %v7511 = vsub.f32 %v7487, %v7495
  %v7512 = vsub.f32 %v7488, %v7498
  %v7513 = vsub.f32 %v7489, %v7501
  %v7514 = vsub.f32 %v7490, %v7504
  %v7515 = vsub.f32 %v7491, %v7507
  %v7516 = vsub.f32 %v7492, %v7510
  %v7517 = vmul.f32 %v7511, 1.442695
  %v7518 = vpow.pop %v7517
  %v7519 = vmul.f32 %v7512, 1.442695
  %v7520 = vpow.pop %v7519
  %v7521 = vmul.f32 %v7513, 1.442695
  %v7522 = vpow.pop %v7521
  %v7523 = vmul.f32 %v7514, 1.442695
  %v7524 = vpow.pop %v7523
  %v7525 = vmul.f32 %v7515, 1.442695
  %v7526 = vpow.pop %v7525
  %v7527 = vmul.f32 %v7516, 1.442695
  %v7528 = vpow.pop %v7527
  %v7529 = vsel %vm1317, %v7518, 0.0
  %7530 = vadd.xlane.f32.xlu0 %v7529
  %v7531 = vpop.xlane.xlu0 %7530
  %v7532 = vsel %vm1317, %v7520, 0.0
  %7533 = vadd.xlane.f32.xlu0 %v7532
  %v7534 = vpop.xlane.xlu0 %7533
  %v7535 = vsel %vm1317, %v7522, 0.0
  %7536 = vadd.xlane.f32.xlu0 %v7535
  %v7537 = vpop.xlane.xlu0 %7536
  %v7538 = vsel %vm1317, %v7524, 0.0
  %7539 = vadd.xlane.f32.xlu0 %v7538
  %v7540 = vpop.xlane.xlu0 %7539
  %v7541 = vsel %vm1317, %v7526, 0.0
  %7542 = vadd.xlane.f32.xlu0 %v7541
  %v7543 = vpop.xlane.xlu0 %7542
  %v7544 = vsel %vm1317, %v7528, 0.0
  %7545 = vadd.xlane.f32.xlu0 %v7544
  %v7546 = vpop.xlane.xlu0 %7545
  %v7547 = vrcp.pop %v7531
  %v7548 = vrcp.pop %v7534
  %v7549 = vrcp.pop %v7537
  %v7550 = vrcp.pop %v7540
  %v7551 = vrcp.pop %v7543
  %v7552 = vrcp.pop %v7546
  %v7553 = vmul.f32 %v7518, %v7547
  %v7554 = vmul.f32 %v7520, %v7548
  %v7555 = vmul.f32 %v7522, %v7549
  %v7556 = vmul.f32 %v7524, %v7550
  %v7557 = vmul.f32 %v7526, %v7551
  %v7558 = vmul.f32 %v7528, %v7552
  %7559 = vrot.lane.b32.xlu0 %v5995, 56
  %v7560 = vpop.permute.xlu0 %7559
  %v7563 = vsel %vm1317, %v7553, 0
  %7565 = vmatprep.subr.mxu0 0.0
  %7566 = vmatpush1.msra.mxu0 0.0
  %7567 = vmatprep.subr.mxu0 0.0
  %7568 = vmatpush1.msra.mxu0 0.0
  %7569 = vmatprep.subr.mxu0 0.0
  %7570 = vmatpush1.msra.mxu0 0.0
  %7571 = vmatprep.subr.mxu0 0.0
  %7572 = vmatpush1.msra.mxu0 0.0
  %7573 = vmatprep.subr.mxu0 0.0
  %7574 = vmatpush1.msra.mxu0 0.0
  %7575 = vmatprep.subr.mxu0 0.0
  %7576 = vmatpush1.msra.mxu0 0.0
  %7577 = vmatprep.subr.mxu0 0.0
  %7578 = vmatpush1.msra.mxu0 0.0
  %7579 = vmatprep.subr.mxu0 0.0
  %7580 = vmatpush1.msra.mxu0 0.0
  %7581 = vmatprep.subr.mxu0 0.0
  %7582 = vmatpush1.msra.mxu0 0.0
  %7583 = vmatprep.subr.mxu0 0.0
  %7584 = vmatpush1.msra.mxu0 0.0
  %7585 = vmatprep.subr.mxu0 0.0
  %7586 = vmatpush1.msra.mxu0 0.0
  %7587 = vmatprep.subr.mxu0 0.0
  %7588 = vmatpush1.msra.mxu0 0.0
  %7589 = vmatprep.subr.mxu0 0.0
  %7590 = vmatpush1.msra.mxu0 0.0
  %7591 = vmatprep.subr.mxu0 0.0
  %7592 = vmatpush1.msra.mxu0 0.0
  %7593 = vmatprep.subr.mxu0 0.0
  %7594 = vmatpush1.msra.mxu0 0.0
  %7595 = vmatprep.subr.mxu0 0.0
  %7596 = vmatpush1.msra.mxu0 %v7560
  %7597 = vmatprep.subr.mxu0 0.0
  %7598 = vmatpush2.msra.mxu0 0.0
  %7599 = vmatprep.subr.mxu0 0.0
  %7600 = vmatpush2.msra.mxu0 0.0
  %7601 = vmatprep.subr.mxu0 0.0
  %7602 = vmatpush2.msra.mxu0 0.0
  %7603 = vmatprep.subr.mxu0 0.0
  %7604 = vmatpush2.msra.mxu0 0.0
  %7605 = vmatprep.subr.mxu0 0.0
  %7606 = vmatpush2.msra.mxu0 0.0
  %7607 = vmatprep.subr.mxu0 0.0
  %7608 = vmatpush2.msra.mxu0 0.0
  %7609 = vmatprep.subr.mxu0 0.0
  %7610 = vmatpush2.msra.mxu0 0.0
  %7611 = vmatprep.subr.mxu0 0.0
  %7612 = vmatpush2.msra.mxu0 0.0
  %7613 = vmatprep.subr.mxu0 0.0
  %7614 = vmatpush2.msra.mxu0 0.0
  %7615 = vmatprep.subr.mxu0 0.0
  %7616 = vmatpush2.msra.mxu0 0.0
  %7617 = vmatprep.subr.mxu0 0.0
  %7618 = vmatpush2.msra.mxu0 0.0
  %7619 = vmatprep.subr.mxu0 0.0
  %7620 = vmatpush2.msra.mxu0 0.0
  %7621 = vmatprep.subr.mxu0 0.0
  %7622 = vmatpush2.msra.mxu0 0.0
  %7623 = vmatprep.subr.mxu0 0.0
  %7624 = vmatpush2.msra.mxu0 0.0
  %7625 = vmatprep.subr.mxu0 0.0
  %7626 = vmatpush2.msra.mxu0 0.0
  %7627 = vmatprep.subr.mxu0 0.0
  %7628 = vmatpush2.msra.mxu0 0.0
  %7629 = vmatprep.mubr.f32.mxu0 0.0
  %7630 = vmatmul.mubr.f32.gmra.mxu0 %v7563
  %v7631 = vpop.f32.mrf.mxu0
  %v7632 = vadd.f32 0.0, %v7631
  %v7633 = vpop.f32.mrf.mxu0
  %7634 = vdwg.mxu0
  %7635 = vrot.lane.b32.xlu0 %v5998, 56
  %v7636 = vpop.permute.xlu0 %7635
  %v7639 = vsel %vm1317, %v7554, 0
  %7641 = vmatprep.subr.mxu0 0.0
  %7642 = vmatpush1.msra.mxu0 0.0
  %7643 = vmatprep.subr.mxu0 0.0
  %7644 = vmatpush1.msra.mxu0 0.0
  %7645 = vmatprep.subr.mxu0 0.0
  %7646 = vmatpush1.msra.mxu0 0.0
  %7647 = vmatprep.subr.mxu0 0.0
  %7648 = vmatpush1.msra.mxu0 0.0
  %7649 = vmatprep.subr.mxu0 0.0
  %7650 = vmatpush1.msra.mxu0 0.0
  %7651 = vmatprep.subr.mxu0 0.0
  %7652 = vmatpush1.msra.mxu0 0.0
  %7653 = vmatprep.subr.mxu0 0.0
  %7654 = vmatpush1.msra.mxu0 0.0
  %7655 = vmatprep.subr.mxu0 0.0
  %7656 = vmatpush1.msra.mxu0 0.0
  %7657 = vmatprep.subr.mxu0 0.0
  %7658 = vmatpush1.msra.mxu0 0.0
  %7659 = vmatprep.subr.mxu0 0.0
  %7660 = vmatpush1.msra.mxu0 0.0
  %7661 = vmatprep.subr.mxu0 0.0
  %7662 = vmatpush1.msra.mxu0 0.0
  %7663 = vmatprep.subr.mxu0 0.0
  %7664 = vmatpush1.msra.mxu0 0.0
  %7665 = vmatprep.subr.mxu0 0.0
  %7666 = vmatpush1.msra.mxu0 0.0
  %7667 = vmatprep.subr.mxu0 0.0
  %7668 = vmatpush1.msra.mxu0 0.0
  %7669 = vmatprep.subr.mxu0 0.0
  %7670 = vmatpush1.msra.mxu0 0.0
  %7671 = vmatprep.subr.mxu0 0.0
  %7672 = vmatpush1.msra.mxu0 %v7636
  %7673 = vmatprep.subr.mxu0 0.0
  %7674 = vmatpush2.msra.mxu0 0.0
  %7675 = vmatprep.subr.mxu0 0.0
  %7676 = vmatpush2.msra.mxu0 0.0
  %7677 = vmatprep.subr.mxu0 0.0
  %7678 = vmatpush2.msra.mxu0 0.0
  %7679 = vmatprep.subr.mxu0 0.0
  %7680 = vmatpush2.msra.mxu0 0.0
  %7681 = vmatprep.subr.mxu0 0.0
  %7682 = vmatpush2.msra.mxu0 0.0
  %7683 = vmatprep.subr.mxu0 0.0
  %7684 = vmatpush2.msra.mxu0 0.0
  %7685 = vmatprep.subr.mxu0 0.0
  %7686 = vmatpush2.msra.mxu0 0.0
  %7687 = vmatprep.subr.mxu0 0.0
  %7688 = vmatpush2.msra.mxu0 0.0
  %7689 = vmatprep.subr.mxu0 0.0
  %7690 = vmatpush2.msra.mxu0 0.0
  %7691 = vmatprep.subr.mxu0 0.0
  %7692 = vmatpush2.msra.mxu0 0.0
  %7693 = vmatprep.subr.mxu0 0.0
  %7694 = vmatpush2.msra.mxu0 0.0
  %7695 = vmatprep.subr.mxu0 0.0
  %7696 = vmatpush2.msra.mxu0 0.0
  %7697 = vmatprep.subr.mxu0 0.0
  %7698 = vmatpush2.msra.mxu0 0.0
  %7699 = vmatprep.subr.mxu0 0.0
  %7700 = vmatpush2.msra.mxu0 0.0
  %7701 = vmatprep.subr.mxu0 0.0
  %7702 = vmatpush2.msra.mxu0 0.0
  %7703 = vmatprep.subr.mxu0 0.0
  %7704 = vmatpush2.msra.mxu0 0.0
  %7705 = vmatprep.mubr.f32.mxu0 0.0
  %7706 = vmatmul.mubr.f32.gmra.mxu0 %v7639
  %v7707 = vpop.f32.mrf.mxu0
  %v7708 = vadd.f32 0.0, %v7707
  %v7709 = vpop.f32.mrf.mxu0
  %7710 = vdwg.mxu0
  %7711 = vrot.lane.b32.xlu0 %v6003, 56
  %v7712 = vpop.permute.xlu0 %7711
  %v7715 = vsel %vm1317, %v7555, 0
  %7717 = vmatprep.subr.mxu0 0.0
  %7718 = vmatpush1.msra.mxu0 0.0
  %7719 = vmatprep.subr.mxu0 0.0
  %7720 = vmatpush1.msra.mxu0 0.0
  %7721 = vmatprep.subr.mxu0 0.0
  %7722 = vmatpush1.msra.mxu0 0.0
  %7723 = vmatprep.subr.mxu0 0.0
  %7724 = vmatpush1.msra.mxu0 0.0
  %7725 = vmatprep.subr.mxu0 0.0
  %7726 = vmatpush1.msra.mxu0 0.0
  %7727 = vmatprep.subr.mxu0 0.0
  %7728 = vmatpush1.msra.mxu0 0.0
  %7729 = vmatprep.subr.mxu0 0.0
  %7730 = vmatpush1.msra.mxu0 0.0
  %7731 = vmatprep.subr.mxu0 0.0
  %7732 = vmatpush1.msra.mxu0 0.0
  %7733 = vmatprep.subr.mxu0 0.0
  %7734 = vmatpush1.msra.mxu0 0.0
  %7735 = vmatprep.subr.mxu0 0.0
  %7736 = vmatpush1.msra.mxu0 0.0
  %7737 = vmatprep.subr.mxu0 0.0
  %7738 = vmatpush1.msra.mxu0 0.0
  %7739 = vmatprep.subr.mxu0 0.0
  %7740 = vmatpush1.msra.mxu0 0.0
  %7741 = vmatprep.subr.mxu0 0.0
  %7742 = vmatpush1.msra.mxu0 0.0
  %7743 = vmatprep.subr.mxu0 0.0
  %7744 = vmatpush1.msra.mxu0 0.0
  %7745 = vmatprep.subr.mxu0 0.0
  %7746 = vmatpush1.msra.mxu0 0.0
  %7747 = vmatprep.subr.mxu0 0.0
  %7748 = vmatpush1.msra.mxu0 %v7712
  %7749 = vmatprep.subr.mxu0 0.0
  %7750 = vmatpush2.msra.mxu0 0.0
  %7751 = vmatprep.subr.mxu0 0.0
  %7752 = vmatpush2.msra.mxu0 0.0
  %7753 = vmatprep.subr.mxu0 0.0
  %7754 = vmatpush2.msra.mxu0 0.0
  %7755 = vmatprep.subr.mxu0 0.0
  %7756 = vmatpush2.msra.mxu0 0.0
  %7757 = vmatprep.subr.mxu0 0.0
  %7758 = vmatpush2.msra.mxu0 0.0
  %7759 = vmatprep.subr.mxu0 0.0
  %7760 = vmatpush2.msra.mxu0 0.0
  %7761 = vmatprep.subr.mxu0 0.0
  %7762 = vmatpush2.msra.mxu0 0.0
  %7763 = vmatprep.subr.mxu0 0.0
  %7764 = vmatpush2.msra.mxu0 0.0
  %7765 = vmatprep.subr.mxu0 0.0
  %7766 = vmatpush2.msra.mxu0 0.0
  %7767 = vmatprep.subr.mxu0 0.0
  %7768 = vmatpush2.msra.mxu0 0.0
  %7769 = vmatprep.subr.mxu0 0.0
  %7770 = vmatpush2.msra.mxu0 0.0
  %7771 = vmatprep.subr.mxu0 0.0
  %7772 = vmatpush2.msra.mxu0 0.0
  %7773 = vmatprep.subr.mxu0 0.0
  %7774 = vmatpush2.msra.mxu0 0.0
  %7775 = vmatprep.subr.mxu0 0.0
  %7776 = vmatpush2.msra.mxu0 0.0
  %7777 = vmatprep.subr.mxu0 0.0
  %7778 = vmatpush2.msra.mxu0 0.0
  %7779 = vmatprep.subr.mxu0 0.0
  %7780 = vmatpush2.msra.mxu0 0.0
  %7781 = vmatprep.mubr.f32.mxu0 0.0
  %7782 = vmatmul.mubr.f32.gmra.mxu0 %v7715
  %v7783 = vpop.f32.mrf.mxu0
  %v7784 = vadd.f32 0.0, %v7783
  %v7785 = vpop.f32.mrf.mxu0
  %7786 = vdwg.mxu0
  %7787 = vrot.lane.b32.xlu0 %v6006, 56
  %v7788 = vpop.permute.xlu0 %7787
  %v7791 = vsel %vm1317, %v7556, 0
  %7793 = vmatprep.subr.mxu0 0.0
  %7794 = vmatpush1.msra.mxu0 0.0
  %7795 = vmatprep.subr.mxu0 0.0
  %7796 = vmatpush1.msra.mxu0 0.0
  %7797 = vmatprep.subr.mxu0 0.0
  %7798 = vmatpush1.msra.mxu0 0.0
  %7799 = vmatprep.subr.mxu0 0.0
  %7800 = vmatpush1.msra.mxu0 0.0
  %7801 = vmatprep.subr.mxu0 0.0
  %7802 = vmatpush1.msra.mxu0 0.0
  %7803 = vmatprep.subr.mxu0 0.0
  %7804 = vmatpush1.msra.mxu0 0.0
  %7805 = vmatprep.subr.mxu0 0.0
  %7806 = vmatpush1.msra.mxu0 0.0
  %7807 = vmatprep.subr.mxu0 0.0
  %7808 = vmatpush1.msra.mxu0 0.0
  %7809 = vmatprep.subr.mxu0 0.0
  %7810 = vmatpush1.msra.mxu0 0.0
  %7811 = vmatprep.subr.mxu0 0.0
  %7812 = vmatpush1.msra.mxu0 0.0
  %7813 = vmatprep.subr.mxu0 0.0
  %7814 = vmatpush1.msra.mxu0 0.0
  %7815 = vmatprep.subr.mxu0 0.0
  %7816 = vmatpush1.msra.mxu0 0.0
  %7817 = vmatprep.subr.mxu0 0.0
  %7818 = vmatpush1.msra.mxu0 0.0
  %7819 = vmatprep.subr.mxu0 0.0
  %7820 = vmatpush1.msra.mxu0 0.0
  %7821 = vmatprep.subr.mxu0 0.0
  %7822 = vmatpush1.msra.mxu0 0.0
  %7823 = vmatprep.subr.mxu0 0.0
  %7824 = vmatpush1.msra.mxu0 %v7788
  %7825 = vmatprep.subr.mxu0 0.0
  %7826 = vmatpush2.msra.mxu0 0.0
  %7827 = vmatprep.subr.mxu0 0.0
  %7828 = vmatpush2.msra.mxu0 0.0
  %7829 = vmatprep.subr.mxu0 0.0
  %7830 = vmatpush2.msra.mxu0 0.0
  %7831 = vmatprep.subr.mxu0 0.0
  %7832 = vmatpush2.msra.mxu0 0.0
  %7833 = vmatprep.subr.mxu0 0.0
  %7834 = vmatpush2.msra.mxu0 0.0
  %7835 = vmatprep.subr.mxu0 0.0
  %7836 = vmatpush2.msra.mxu0 0.0
  %7837 = vmatprep.subr.mxu0 0.0
  %7838 = vmatpush2.msra.mxu0 0.0
  %7839 = vmatprep.subr.mxu0 0.0
  %7840 = vmatpush2.msra.mxu0 0.0
  %7841 = vmatprep.subr.mxu0 0.0
  %7842 = vmatpush2.msra.mxu0 0.0
  %7843 = vmatprep.subr.mxu0 0.0
  %7844 = vmatpush2.msra.mxu0 0.0
  %7845 = vmatprep.subr.mxu0 0.0
  %7846 = vmatpush2.msra.mxu0 0.0
  %7847 = vmatprep.subr.mxu0 0.0
  %7848 = vmatpush2.msra.mxu0 0.0
  %7849 = vmatprep.subr.mxu0 0.0
  %7850 = vmatpush2.msra.mxu0 0.0
  %7851 = vmatprep.subr.mxu0 0.0
  %7852 = vmatpush2.msra.mxu0 0.0
  %7853 = vmatprep.subr.mxu0 0.0
  %7854 = vmatpush2.msra.mxu0 0.0
  %7855 = vmatprep.subr.mxu0 0.0
  %7856 = vmatpush2.msra.mxu0 0.0
  %7857 = vmatprep.mubr.f32.mxu0 0.0
  %7858 = vmatmul.mubr.f32.gmra.mxu0 %v7791
  %v7859 = vpop.f32.mrf.mxu0
  %v7860 = vadd.f32 0.0, %v7859
  %v7861 = vpop.f32.mrf.mxu0
  %7862 = vdwg.mxu0
  %7863 = vrot.lane.b32.xlu0 %v6011, 56
  %v7864 = vpop.permute.xlu0 %7863
  %v7867 = vsel %vm1317, %v7557, 0
  %7869 = vmatprep.subr.mxu0 0.0
  %7870 = vmatpush1.msra.mxu0 0.0
  %7871 = vmatprep.subr.mxu0 0.0
  %7872 = vmatpush1.msra.mxu0 0.0
  %7873 = vmatprep.subr.mxu0 0.0
  %7874 = vmatpush1.msra.mxu0 0.0
  %7875 = vmatprep.subr.mxu0 0.0
  %7876 = vmatpush1.msra.mxu0 0.0
  %7877 = vmatprep.subr.mxu0 0.0
  %7878 = vmatpush1.msra.mxu0 0.0
  %7879 = vmatprep.subr.mxu0 0.0
  %7880 = vmatpush1.msra.mxu0 0.0
  %7881 = vmatprep.subr.mxu0 0.0
  %7882 = vmatpush1.msra.mxu0 0.0
  %7883 = vmatprep.subr.mxu0 0.0
  %7884 = vmatpush1.msra.mxu0 0.0
  %7885 = vmatprep.subr.mxu0 0.0
  %7886 = vmatpush1.msra.mxu0 0.0
  %7887 = vmatprep.subr.mxu0 0.0
  %7888 = vmatpush1.msra.mxu0 0.0
  %7889 = vmatprep.subr.mxu0 0.0
  %7890 = vmatpush1.msra.mxu0 0.0
  %7891 = vmatprep.subr.mxu0 0.0
  %7892 = vmatpush1.msra.mxu0 0.0
  %7893 = vmatprep.subr.mxu0 0.0
  %7894 = vmatpush1.msra.mxu0 0.0
  %7895 = vmatprep.subr.mxu0 0.0
  %7896 = vmatpush1.msra.mxu0 0.0
  %7897 = vmatprep.subr.mxu0 0.0
  %7898 = vmatpush1.msra.mxu0 0.0
  %7899 = vmatprep.subr.mxu0 0.0
  %7900 = vmatpush1.msra.mxu0 %v7864
  %7901 = vmatprep.subr.mxu0 0.0
  %7902 = vmatpush2.msra.mxu0 0.0
  %7903 = vmatprep.subr.mxu0 0.0
  %7904 = vmatpush2.msra.mxu0 0.0
  %7905 = vmatprep.subr.mxu0 0.0
  %7906 = vmatpush2.msra.mxu0 0.0
  %7907 = vmatprep.subr.mxu0 0.0
  %7908 = vmatpush2.msra.mxu0 0.0
  %7909 = vmatprep.subr.mxu0 0.0
  %7910 = vmatpush2.msra.mxu0 0.0
  %7911 = vmatprep.subr.mxu0 0.0
  %7912 = vmatpush2.msra.mxu0 0.0
  %7913 = vmatprep.subr.mxu0 0.0
  %7914 = vmatpush2.msra.mxu0 0.0
  %7915 = vmatprep.subr.mxu0 0.0
  %7916 = vmatpush2.msra.mxu0 0.0
  %7917 = vmatprep.subr.mxu0 0.0
  %7918 = vmatpush2.msra.mxu0 0.0
  %7919 = vmatprep.subr.mxu0 0.0
  %7920 = vmatpush2.msra.mxu0 0.0
  %7921 = vmatprep.subr.mxu0 0.0
  %7922 = vmatpush2.msra.mxu0 0.0
  %7923 = vmatprep.subr.mxu0 0.0
  %7924 = vmatpush2.msra.mxu0 0.0
  %7925 = vmatprep.subr.mxu0 0.0
  %7926 = vmatpush2.msra.mxu0 0.0
  %7927 = vmatprep.subr.mxu0 0.0
  %7928 = vmatpush2.msra.mxu0 0.0
  %7929 = vmatprep.subr.mxu0 0.0
  %7930 = vmatpush2.msra.mxu0 0.0
  %7931 = vmatprep.subr.mxu0 0.0
  %7932 = vmatpush2.msra.mxu0 0.0
  %7933 = vmatprep.mubr.f32.mxu0 0.0
  %7934 = vmatmul.mubr.f32.gmra.mxu0 %v7867
  %v7935 = vpop.f32.mrf.mxu0
  %v7936 = vadd.f32 0.0, %v7935
  %v7937 = vpop.f32.mrf.mxu0
  %7938 = vdwg.mxu0
  %7939 = vrot.lane.b32.xlu0 %v6014, 56
  %v7940 = vpop.permute.xlu0 %7939
  %v7943 = vsel %vm1317, %v7558, 0
  %7945 = vmatprep.subr.mxu0 0.0
  %7946 = vmatpush1.msra.mxu0 0.0
  %7947 = vmatprep.subr.mxu0 0.0
  %7948 = vmatpush1.msra.mxu0 0.0
  %7949 = vmatprep.subr.mxu0 0.0
  %7950 = vmatpush1.msra.mxu0 0.0
  %7951 = vmatprep.subr.mxu0 0.0
  %7952 = vmatpush1.msra.mxu0 0.0
  %7953 = vmatprep.subr.mxu0 0.0
  %7954 = vmatpush1.msra.mxu0 0.0
  %7955 = vmatprep.subr.mxu0 0.0
  %7956 = vmatpush1.msra.mxu0 0.0
  %7957 = vmatprep.subr.mxu0 0.0
  %7958 = vmatpush1.msra.mxu0 0.0
  %7959 = vmatprep.subr.mxu0 0.0
  %7960 = vmatpush1.msra.mxu0 0.0
  %7961 = vmatprep.subr.mxu0 0.0
  %7962 = vmatpush1.msra.mxu0 0.0
  %7963 = vmatprep.subr.mxu0 0.0
  %7964 = vmatpush1.msra.mxu0 0.0
  %7965 = vmatprep.subr.mxu0 0.0
  %7966 = vmatpush1.msra.mxu0 0.0
  %7967 = vmatprep.subr.mxu0 0.0
  %7968 = vmatpush1.msra.mxu0 0.0
  %7969 = vmatprep.subr.mxu0 0.0
  %7970 = vmatpush1.msra.mxu0 0.0
  %7971 = vmatprep.subr.mxu0 0.0
  %7972 = vmatpush1.msra.mxu0 0.0
  %7973 = vmatprep.subr.mxu0 0.0
  %7974 = vmatpush1.msra.mxu0 0.0
  %7975 = vmatprep.subr.mxu0 0.0
  %7976 = vmatpush1.msra.mxu0 %v7940
  %7977 = vmatprep.subr.mxu0 0.0
  %7978 = vmatpush2.msra.mxu0 0.0
  %7979 = vmatprep.subr.mxu0 0.0
  %7980 = vmatpush2.msra.mxu0 0.0
  %7981 = vmatprep.subr.mxu0 0.0
  %7982 = vmatpush2.msra.mxu0 0.0
  %7983 = vmatprep.subr.mxu0 0.0
  %7984 = vmatpush2.msra.mxu0 0.0
  %7985 = vmatprep.subr.mxu0 0.0
  %7986 = vmatpush2.msra.mxu0 0.0
  %7987 = vmatprep.subr.mxu0 0.0
  %7988 = vmatpush2.msra.mxu0 0.0
  %7989 = vmatprep.subr.mxu0 0.0
  %7990 = vmatpush2.msra.mxu0 0.0
  %7991 = vmatprep.subr.mxu0 0.0
  %7992 = vmatpush2.msra.mxu0 0.0
  %7993 = vmatprep.subr.mxu0 0.0
  %7994 = vmatpush2.msra.mxu0 0.0
  %7995 = vmatprep.subr.mxu0 0.0
  %7996 = vmatpush2.msra.mxu0 0.0
  %7997 = vmatprep.subr.mxu0 0.0
  %7998 = vmatpush2.msra.mxu0 0.0
  %7999 = vmatprep.subr.mxu0 0.0
  %8000 = vmatpush2.msra.mxu0 0.0
  %8001 = vmatprep.subr.mxu0 0.0
  %8002 = vmatpush2.msra.mxu0 0.0
  %8003 = vmatprep.subr.mxu0 0.0
  %8004 = vmatpush2.msra.mxu0 0.0
  %8005 = vmatprep.subr.mxu0 0.0
  %8006 = vmatpush2.msra.mxu0 0.0
  %8007 = vmatprep.subr.mxu0 0.0
  %8008 = vmatpush2.msra.mxu0 0.0
  %8009 = vmatprep.mubr.f32.mxu0 0.0
  %8010 = vmatmul.mubr.f32.gmra.mxu0 %v7943
  %v8011 = vpop.f32.mrf.mxu0
  %v8012 = vadd.f32 0.0, %v8011
  %v8013 = vpop.f32.mrf.mxu0
  %8014 = vdwg.mxu0
  %8015 = vrot.lane.b32.xlu0 %v5995, 112
  %v8016 = vpop.permute.xlu0 %8015
  %8017 = vrot.lane.b32.xlu0 %v5995, 80
  %v8018 = vpop.permute.xlu0 %8017
  %v8019 = vsel %vm1317, %v8016, 0
  %v8021 = vsel %vm1317, %v8018, 0
  %8023 = vmatprep.subr.mxu0 0.0
  %8024 = vmatpush1.xpose.msra.mxu0 0.0
  %8025 = vmatprep.subr.mxu0 0.0
  %8026 = vmatpush1.xpose.msra.mxu0 0.0
  %8027 = vmatprep.subr.mxu0 0.0
  %8028 = vmatpush1.xpose.msra.mxu0 0.0
  %8029 = vmatprep.subr.mxu0 0.0
  %8030 = vmatpush1.xpose.msra.mxu0 0.0
  %8031 = vmatprep.subr.mxu0 0.0
  %8032 = vmatpush1.xpose.msra.mxu0 0.0
  %8033 = vmatprep.subr.mxu0 0.0
  %8034 = vmatpush1.xpose.msra.mxu0 0.0
  %8035 = vmatprep.subr.mxu0 0.0
  %8036 = vmatpush1.xpose.msra.mxu0 0.0
  %8037 = vmatprep.subr.mxu0 0.0
  %8038 = vmatpush1.xpose.msra.mxu0 0.0
  %8039 = vmatprep.subr.mxu0 0.0
  %8040 = vmatpush1.xpose.msra.mxu0 0.0
  %8041 = vmatprep.subr.mxu0 0.0
  %8042 = vmatpush1.xpose.msra.mxu0 0.0
  %8043 = vmatprep.subr.mxu0 0.0
  %8044 = vmatpush1.xpose.msra.mxu0 0.0
  %8045 = vmatprep.subr.mxu0 0.0
  %8046 = vmatpush1.xpose.msra.mxu0 0.0
  %8047 = vmatprep.subr.mxu0 0.0
  %8048 = vmatpush1.xpose.msra.mxu0 0.0
  %8049 = vmatprep.subr.mxu0 0.0
  %8050 = vmatpush1.xpose.msra.mxu0 0.0
  %8051 = vmatprep.subr.mxu0 0.0
  %8052 = vmatpush1.xpose.msra.mxu0 0.0
  %8053 = vmatprep.subr.mxu0 0.0
  %8054 = vmatpush1.xpose.msra.mxu0 %v8021
  %8055 = vmatprep.subr.mxu0 0.0
  %8056 = vmatpush2.xpose.msra.mxu0 0.0
  %8057 = vmatprep.subr.mxu0 0.0
  %8058 = vmatpush2.xpose.msra.mxu0 0.0
  %8059 = vmatprep.subr.mxu0 0.0
  %8060 = vmatpush2.xpose.msra.mxu0 0.0
  %8061 = vmatprep.subr.mxu0 0.0
  %8062 = vmatpush2.xpose.msra.mxu0 0.0
  %8063 = vmatprep.subr.mxu0 0.0
  %8064 = vmatpush2.xpose.msra.mxu0 0.0
  %8065 = vmatprep.subr.mxu0 0.0
  %8066 = vmatpush2.xpose.msra.mxu0 0.0
  %8067 = vmatprep.subr.mxu0 0.0
  %8068 = vmatpush2.xpose.msra.mxu0 0.0
  %8069 = vmatprep.subr.mxu0 0.0
  %8070 = vmatpush2.xpose.msra.mxu0 0.0
  %8071 = vmatprep.subr.mxu0 0.0
  %8072 = vmatpush2.xpose.msra.mxu0 0.0
  %8073 = vmatprep.subr.mxu0 0.0
  %8074 = vmatpush2.xpose.msra.mxu0 0.0
  %8075 = vmatprep.subr.mxu0 0.0
  %8076 = vmatpush2.xpose.msra.mxu0 0.0
  %8077 = vmatprep.subr.mxu0 0.0
  %8078 = vmatpush2.xpose.msra.mxu0 0.0
  %8079 = vmatprep.subr.mxu0 0.0
  %8080 = vmatpush2.xpose.msra.mxu0 0.0
  %8081 = vmatprep.subr.mxu0 0.0
  %8082 = vmatpush2.xpose.msra.mxu0 0.0
  %8083 = vmatprep.subr.mxu0 0.0
  %8084 = vmatpush2.xpose.msra.mxu0 0.0
  %8085 = vmatprep.subr.mxu0 0.0
  %8086 = vmatpush2.xpose.msra.mxu0 0.0
  %8087 = vmatprep.mubr.f32.mxu0 0.0
  %8088 = vmatmul.mubr.f32.gmra.mxu0 %v8019
  %v8089 = vpop.f32.mrf.mxu0
  %v8090 = vadd.f32 0.0, %v8089
  %v8091 = vpop.f32.mrf.mxu0
  %8092 = vdwg.mxu0
  %8093 = vrot.lane.b32.xlu0 %v5998, 112
  %v8094 = vpop.permute.xlu0 %8093
  %8095 = vrot.lane.b32.xlu0 %v5998, 80
  %v8096 = vpop.permute.xlu0 %8095
  %v8097 = vsel %vm1317, %v8094, 0
  %v8099 = vsel %vm1317, %v8096, 0
  %8101 = vmatprep.subr.mxu0 0.0
  %8102 = vmatpush1.xpose.msra.mxu0 0.0
  %8103 = vmatprep.subr.mxu0 0.0
  %8104 = vmatpush1.xpose.msra.mxu0 0.0
  %8105 = vmatprep.subr.mxu0 0.0
  %8106 = vmatpush1.xpose.msra.mxu0 0.0
  %8107 = vmatprep.subr.mxu0 0.0
  %8108 = vmatpush1.xpose.msra.mxu0 0.0
  %8109 = vmatprep.subr.mxu0 0.0
  %8110 = vmatpush1.xpose.msra.mxu0 0.0
  %8111 = vmatprep.subr.mxu0 0.0
  %8112 = vmatpush1.xpose.msra.mxu0 0.0
  %8113 = vmatprep.subr.mxu0 0.0
  %8114 = vmatpush1.xpose.msra.mxu0 0.0
  %8115 = vmatprep.subr.mxu0 0.0
  %8116 = vmatpush1.xpose.msra.mxu0 0.0
  %8117 = vmatprep.subr.mxu0 0.0
  %8118 = vmatpush1.xpose.msra.mxu0 0.0
  %8119 = vmatprep.subr.mxu0 0.0
  %8120 = vmatpush1.xpose.msra.mxu0 0.0
  %8121 = vmatprep.subr.mxu0 0.0
  %8122 = vmatpush1.xpose.msra.mxu0 0.0
  %8123 = vmatprep.subr.mxu0 0.0
  %8124 = vmatpush1.xpose.msra.mxu0 0.0
  %8125 = vmatprep.subr.mxu0 0.0
  %8126 = vmatpush1.xpose.msra.mxu0 0.0
  %8127 = vmatprep.subr.mxu0 0.0
  %8128 = vmatpush1.xpose.msra.mxu0 0.0
  %8129 = vmatprep.subr.mxu0 0.0
  %8130 = vmatpush1.xpose.msra.mxu0 0.0
  %8131 = vmatprep.subr.mxu0 0.0
  %8132 = vmatpush1.xpose.msra.mxu0 %v8099
  %8133 = vmatprep.subr.mxu0 0.0
  %8134 = vmatpush2.xpose.msra.mxu0 0.0
  %8135 = vmatprep.subr.mxu0 0.0
  %8136 = vmatpush2.xpose.msra.mxu0 0.0
  %8137 = vmatprep.subr.mxu0 0.0
  %8138 = vmatpush2.xpose.msra.mxu0 0.0
  %8139 = vmatprep.subr.mxu0 0.0
  %8140 = vmatpush2.xpose.msra.mxu0 0.0
  %8141 = vmatprep.subr.mxu0 0.0
  %8142 = vmatpush2.xpose.msra.mxu0 0.0
  %8143 = vmatprep.subr.mxu0 0.0
  %8144 = vmatpush2.xpose.msra.mxu0 0.0
  %8145 = vmatprep.subr.mxu0 0.0
  %8146 = vmatpush2.xpose.msra.mxu0 0.0
  %8147 = vmatprep.subr.mxu0 0.0
  %8148 = vmatpush2.xpose.msra.mxu0 0.0
  %8149 = vmatprep.subr.mxu0 0.0
  %8150 = vmatpush2.xpose.msra.mxu0 0.0
  %8151 = vmatprep.subr.mxu0 0.0
  %8152 = vmatpush2.xpose.msra.mxu0 0.0
  %8153 = vmatprep.subr.mxu0 0.0
  %8154 = vmatpush2.xpose.msra.mxu0 0.0
  %8155 = vmatprep.subr.mxu0 0.0
  %8156 = vmatpush2.xpose.msra.mxu0 0.0
  %8157 = vmatprep.subr.mxu0 0.0
  %8158 = vmatpush2.xpose.msra.mxu0 0.0
  %8159 = vmatprep.subr.mxu0 0.0
  %8160 = vmatpush2.xpose.msra.mxu0 0.0
  %8161 = vmatprep.subr.mxu0 0.0
  %8162 = vmatpush2.xpose.msra.mxu0 0.0
  %8163 = vmatprep.subr.mxu0 0.0
  %8164 = vmatpush2.xpose.msra.mxu0 0.0
  %8165 = vmatprep.mubr.f32.mxu0 0.0
  %8166 = vmatmul.mubr.f32.gmra.mxu0 %v8097
  %v8167 = vpop.f32.mrf.mxu0
  %v8168 = vadd.f32 0.0, %v8167
  %v8169 = vpop.f32.mrf.mxu0
  %8170 = vdwg.mxu0
  %8171 = vrot.lane.b32.xlu0 %v6003, 112
  %v8172 = vpop.permute.xlu0 %8171
  %8173 = vrot.lane.b32.xlu0 %v6003, 80
  %v8174 = vpop.permute.xlu0 %8173
  %v8175 = vsel %vm1317, %v8172, 0
  %v8177 = vsel %vm1317, %v8174, 0
  %8179 = vmatprep.subr.mxu0 0.0
  %8180 = vmatpush1.xpose.msra.mxu0 0.0
  %8181 = vmatprep.subr.mxu0 0.0
  %8182 = vmatpush1.xpose.msra.mxu0 0.0
  %8183 = vmatprep.subr.mxu0 0.0
  %8184 = vmatpush1.xpose.msra.mxu0 0.0
  %8185 = vmatprep.subr.mxu0 0.0
  %8186 = vmatpush1.xpose.msra.mxu0 0.0
  %8187 = vmatprep.subr.mxu0 0.0
  %8188 = vmatpush1.xpose.msra.mxu0 0.0
  %8189 = vmatprep.subr.mxu0 0.0
  %8190 = vmatpush1.xpose.msra.mxu0 0.0
  %8191 = vmatprep.subr.mxu0 0.0
  %8192 = vmatpush1.xpose.msra.mxu0 0.0
  %8193 = vmatprep.subr.mxu0 0.0
  %8194 = vmatpush1.xpose.msra.mxu0 0.0
  %8195 = vmatprep.subr.mxu0 0.0
  %8196 = vmatpush1.xpose.msra.mxu0 0.0
  %8197 = vmatprep.subr.mxu0 0.0
  %8198 = vmatpush1.xpose.msra.mxu0 0.0
  %8199 = vmatprep.subr.mxu0 0.0
  %8200 = vmatpush1.xpose.msra.mxu0 0.0
  %8201 = vmatprep.subr.mxu0 0.0
  %8202 = vmatpush1.xpose.msra.mxu0 0.0
  %8203 = vmatprep.subr.mxu0 0.0
  %8204 = vmatpush1.xpose.msra.mxu0 0.0
  %8205 = vmatprep.subr.mxu0 0.0
  %8206 = vmatpush1.xpose.msra.mxu0 0.0
  %8207 = vmatprep.subr.mxu0 0.0
  %8208 = vmatpush1.xpose.msra.mxu0 0.0
  %8209 = vmatprep.subr.mxu0 0.0
  %8210 = vmatpush1.xpose.msra.mxu0 %v8177
  %8211 = vmatprep.subr.mxu0 0.0
  %8212 = vmatpush2.xpose.msra.mxu0 0.0
  %8213 = vmatprep.subr.mxu0 0.0
  %8214 = vmatpush2.xpose.msra.mxu0 0.0
  %8215 = vmatprep.subr.mxu0 0.0
  %8216 = vmatpush2.xpose.msra.mxu0 0.0
  %8217 = vmatprep.subr.mxu0 0.0
  %8218 = vmatpush2.xpose.msra.mxu0 0.0
  %8219 = vmatprep.subr.mxu0 0.0
  %8220 = vmatpush2.xpose.msra.mxu0 0.0
  %8221 = vmatprep.subr.mxu0 0.0
  %8222 = vmatpush2.xpose.msra.mxu0 0.0
  %8223 = vmatprep.subr.mxu0 0.0
  %8224 = vmatpush2.xpose.msra.mxu0 0.0
  %8225 = vmatprep.subr.mxu0 0.0
  %8226 = vmatpush2.xpose.msra.mxu0 0.0
  %8227 = vmatprep.subr.mxu0 0.0
  %8228 = vmatpush2.xpose.msra.mxu0 0.0
  %8229 = vmatprep.subr.mxu0 0.0
  %8230 = vmatpush2.xpose.msra.mxu0 0.0
  %8231 = vmatprep.subr.mxu0 0.0
  %8232 = vmatpush2.xpose.msra.mxu0 0.0
  %8233 = vmatprep.subr.mxu0 0.0
  %8234 = vmatpush2.xpose.msra.mxu0 0.0
  %8235 = vmatprep.subr.mxu0 0.0
  %8236 = vmatpush2.xpose.msra.mxu0 0.0
  %8237 = vmatprep.subr.mxu0 0.0
  %8238 = vmatpush2.xpose.msra.mxu0 0.0
  %8239 = vmatprep.subr.mxu0 0.0
  %8240 = vmatpush2.xpose.msra.mxu0 0.0
  %8241 = vmatprep.subr.mxu0 0.0
  %8242 = vmatpush2.xpose.msra.mxu0 0.0
  %8243 = vmatprep.mubr.f32.mxu0 0.0
  %8244 = vmatmul.mubr.f32.gmra.mxu0 %v8175
  %v8245 = vpop.f32.mrf.mxu0
  %v8246 = vadd.f32 0.0, %v8245
  %v8247 = vpop.f32.mrf.mxu0
  %8248 = vdwg.mxu0
  %8249 = vrot.lane.b32.xlu0 %v6006, 112
  %v8250 = vpop.permute.xlu0 %8249
  %8251 = vrot.lane.b32.xlu0 %v6006, 80
  %v8252 = vpop.permute.xlu0 %8251
  %v8253 = vsel %vm1317, %v8250, 0
  %v8255 = vsel %vm1317, %v8252, 0
  %8257 = vmatprep.subr.mxu0 0.0
  %8258 = vmatpush1.xpose.msra.mxu0 0.0
  %8259 = vmatprep.subr.mxu0 0.0
  %8260 = vmatpush1.xpose.msra.mxu0 0.0
  %8261 = vmatprep.subr.mxu0 0.0
  %8262 = vmatpush1.xpose.msra.mxu0 0.0
  %8263 = vmatprep.subr.mxu0 0.0
  %8264 = vmatpush1.xpose.msra.mxu0 0.0
  %8265 = vmatprep.subr.mxu0 0.0
  %8266 = vmatpush1.xpose.msra.mxu0 0.0
  %8267 = vmatprep.subr.mxu0 0.0
  %8268 = vmatpush1.xpose.msra.mxu0 0.0
  %8269 = vmatprep.subr.mxu0 0.0
  %8270 = vmatpush1.xpose.msra.mxu0 0.0
  %8271 = vmatprep.subr.mxu0 0.0
  %8272 = vmatpush1.xpose.msra.mxu0 0.0
  %8273 = vmatprep.subr.mxu0 0.0
  %8274 = vmatpush1.xpose.msra.mxu0 0.0
  %8275 = vmatprep.subr.mxu0 0.0
  %8276 = vmatpush1.xpose.msra.mxu0 0.0
  %8277 = vmatprep.subr.mxu0 0.0
  %8278 = vmatpush1.xpose.msra.mxu0 0.0
  %8279 = vmatprep.subr.mxu0 0.0
  %8280 = vmatpush1.xpose.msra.mxu0 0.0
  %8281 = vmatprep.subr.mxu0 0.0
  %8282 = vmatpush1.xpose.msra.mxu0 0.0
  %8283 = vmatprep.subr.mxu0 0.0
  %8284 = vmatpush1.xpose.msra.mxu0 0.0
  %8285 = vmatprep.subr.mxu0 0.0
  %8286 = vmatpush1.xpose.msra.mxu0 0.0
  %8287 = vmatprep.subr.mxu0 0.0
  %8288 = vmatpush1.xpose.msra.mxu0 %v8255
  %8289 = vmatprep.subr.mxu0 0.0
  %8290 = vmatpush2.xpose.msra.mxu0 0.0
  %8291 = vmatprep.subr.mxu0 0.0
  %8292 = vmatpush2.xpose.msra.mxu0 0.0
  %8293 = vmatprep.subr.mxu0 0.0
  %8294 = vmatpush2.xpose.msra.mxu0 0.0
  %8295 = vmatprep.subr.mxu0 0.0
  %8296 = vmatpush2.xpose.msra.mxu0 0.0
  %8297 = vmatprep.subr.mxu0 0.0
  %8298 = vmatpush2.xpose.msra.mxu0 0.0
  %8299 = vmatprep.subr.mxu0 0.0
  %8300 = vmatpush2.xpose.msra.mxu0 0.0
  %8301 = vmatprep.subr.mxu0 0.0
  %8302 = vmatpush2.xpose.msra.mxu0 0.0
  %8303 = vmatprep.subr.mxu0 0.0
  %8304 = vmatpush2.xpose.msra.mxu0 0.0
  %8305 = vmatprep.subr.mxu0 0.0
  %8306 = vmatpush2.xpose.msra.mxu0 0.0
  %8307 = vmatprep.subr.mxu0 0.0
  %8308 = vmatpush2.xpose.msra.mxu0 0.0
  %8309 = vmatprep.subr.mxu0 0.0
  %8310 = vmatpush2.xpose.msra.mxu0 0.0
  %8311 = vmatprep.subr.mxu0 0.0
  %8312 = vmatpush2.xpose.msra.mxu0 0.0
  %8313 = vmatprep.subr.mxu0 0.0
  %8314 = vmatpush2.xpose.msra.mxu0 0.0
  %8315 = vmatprep.subr.mxu0 0.0
  %8316 = vmatpush2.xpose.msra.mxu0 0.0
  %8317 = vmatprep.subr.mxu0 0.0
  %8318 = vmatpush2.xpose.msra.mxu0 0.0
  %8319 = vmatprep.subr.mxu0 0.0
  %8320 = vmatpush2.xpose.msra.mxu0 0.0
  %8321 = vmatprep.mubr.f32.mxu0 0.0
  %8322 = vmatmul.mubr.f32.gmra.mxu0 %v8253
  %v8323 = vpop.f32.mrf.mxu0
  %v8324 = vadd.f32 0.0, %v8323
  %v8325 = vpop.f32.mrf.mxu0
  %8326 = vdwg.mxu0
  %8327 = vrot.lane.b32.xlu0 %v6011, 112
  %v8328 = vpop.permute.xlu0 %8327
  %8329 = vrot.lane.b32.xlu0 %v6011, 80
  %v8330 = vpop.permute.xlu0 %8329
  %v8331 = vsel %vm1317, %v8328, 0
  %v8333 = vsel %vm1317, %v8330, 0
  %8335 = vmatprep.subr.mxu0 0.0
  %8336 = vmatpush1.xpose.msra.mxu0 0.0
  %8337 = vmatprep.subr.mxu0 0.0
  %8338 = vmatpush1.xpose.msra.mxu0 0.0
  %8339 = vmatprep.subr.mxu0 0.0
  %8340 = vmatpush1.xpose.msra.mxu0 0.0
  %8341 = vmatprep.subr.mxu0 0.0
  %8342 = vmatpush1.xpose.msra.mxu0 0.0
  %8343 = vmatprep.subr.mxu0 0.0
  %8344 = vmatpush1.xpose.msra.mxu0 0.0
  %8345 = vmatprep.subr.mxu0 0.0
  %8346 = vmatpush1.xpose.msra.mxu0 0.0
  %8347 = vmatprep.subr.mxu0 0.0
  %8348 = vmatpush1.xpose.msra.mxu0 0.0
  %8349 = vmatprep.subr.mxu0 0.0
  %8350 = vmatpush1.xpose.msra.mxu0 0.0
  %8351 = vmatprep.subr.mxu0 0.0
  %8352 = vmatpush1.xpose.msra.mxu0 0.0
  %8353 = vmatprep.subr.mxu0 0.0
  %8354 = vmatpush1.xpose.msra.mxu0 0.0
  %8355 = vmatprep.subr.mxu0 0.0
  %8356 = vmatpush1.xpose.msra.mxu0 0.0
  %8357 = vmatprep.subr.mxu0 0.0
  %8358 = vmatpush1.xpose.msra.mxu0 0.0
  %8359 = vmatprep.subr.mxu0 0.0
  %8360 = vmatpush1.xpose.msra.mxu0 0.0
  %8361 = vmatprep.subr.mxu0 0.0
  %8362 = vmatpush1.xpose.msra.mxu0 0.0
  %8363 = vmatprep.subr.mxu0 0.0
  %8364 = vmatpush1.xpose.msra.mxu0 0.0
  %8365 = vmatprep.subr.mxu0 0.0
  %8366 = vmatpush1.xpose.msra.mxu0 %v8333
  %8367 = vmatprep.subr.mxu0 0.0
  %8368 = vmatpush2.xpose.msra.mxu0 0.0
  %8369 = vmatprep.subr.mxu0 0.0
  %8370 = vmatpush2.xpose.msra.mxu0 0.0
  %8371 = vmatprep.subr.mxu0 0.0
  %8372 = vmatpush2.xpose.msra.mxu0 0.0
  %8373 = vmatprep.subr.mxu0 0.0
  %8374 = vmatpush2.xpose.msra.mxu0 0.0
  %8375 = vmatprep.subr.mxu0 0.0
  %8376 = vmatpush2.xpose.msra.mxu0 0.0
  %8377 = vmatprep.subr.mxu0 0.0
  %8378 = vmatpush2.xpose.msra.mxu0 0.0
  %8379 = vmatprep.subr.mxu0 0.0
  %8380 = vmatpush2.xpose.msra.mxu0 0.0
  %8381 = vmatprep.subr.mxu0 0.0
  %8382 = vmatpush2.xpose.msra.mxu0 0.0
  %8383 = vmatprep.subr.mxu0 0.0
  %8384 = vmatpush2.xpose.msra.mxu0 0.0
  %8385 = vmatprep.subr.mxu0 0.0
  %8386 = vmatpush2.xpose.msra.mxu0 0.0
  %8387 = vmatprep.subr.mxu0 0.0
  %8388 = vmatpush2.xpose.msra.mxu0 0.0
  %8389 = vmatprep.subr.mxu0 0.0
  %8390 = vmatpush2.xpose.msra.mxu0 0.0
  %8391 = vmatprep.subr.mxu0 0.0
  %8392 = vmatpush2.xpose.msra.mxu0 0.0
  %8393 = vmatprep.subr.mxu0 0.0
  %8394 = vmatpush2.xpose.msra.mxu0 0.0
  %8395 = vmatprep.subr.mxu0 0.0
  %8396 = vmatpush2.xpose.msra.mxu0 0.0
  %8397 = vmatprep.subr.mxu0 0.0
  %8398 = vmatpush2.xpose.msra.mxu0 0.0
  %8399 = vmatprep.mubr.f32.mxu0 0.0
  %8400 = vmatmul.mubr.f32.gmra.mxu0 %v8331
  %v8401 = vpop.f32.mrf.mxu0
  %v8402 = vadd.f32 0.0, %v8401
  %v8403 = vpop.f32.mrf.mxu0
  %8404 = vdwg.mxu0
  %8405 = vrot.lane.b32.xlu0 %v6014, 112
  %v8406 = vpop.permute.xlu0 %8405
  %8407 = vrot.lane.b32.xlu0 %v6014, 80
  %v8408 = vpop.permute.xlu0 %8407
  %v8409 = vsel %vm1317, %v8406, 0
  %v8411 = vsel %vm1317, %v8408, 0
  %8413 = vmatprep.subr.mxu0 0.0
  %8414 = vmatpush1.xpose.msra.mxu0 0.0
  %8415 = vmatprep.subr.mxu0 0.0
  %8416 = vmatpush1.xpose.msra.mxu0 0.0
  %8417 = vmatprep.subr.mxu0 0.0
  %8418 = vmatpush1.xpose.msra.mxu0 0.0
  %8419 = vmatprep.subr.mxu0 0.0
  %8420 = vmatpush1.xpose.msra.mxu0 0.0
  %8421 = vmatprep.subr.mxu0 0.0
  %8422 = vmatpush1.xpose.msra.mxu0 0.0
  %8423 = vmatprep.subr.mxu0 0.0
  %8424 = vmatpush1.xpose.msra.mxu0 0.0
  %8425 = vmatprep.subr.mxu0 0.0
  %8426 = vmatpush1.xpose.msra.mxu0 0.0
  %8427 = vmatprep.subr.mxu0 0.0
  %8428 = vmatpush1.xpose.msra.mxu0 0.0
  %8429 = vmatprep.subr.mxu0 0.0
  %8430 = vmatpush1.xpose.msra.mxu0 0.0
  %8431 = vmatprep.subr.mxu0 0.0
  %8432 = vmatpush1.xpose.msra.mxu0 0.0
  %8433 = vmatprep.subr.mxu0 0.0
  %8434 = vmatpush1.xpose.msra.mxu0 0.0
  %8435 = vmatprep.subr.mxu0 0.0
  %8436 = vmatpush1.xpose.msra.mxu0 0.0
  %8437 = vmatprep.subr.mxu0 0.0
  %8438 = vmatpush1.xpose.msra.mxu0 0.0
  %8439 = vmatprep.subr.mxu0 0.0
  %8440 = vmatpush1.xpose.msra.mxu0 0.0
  %8441 = vmatprep.subr.mxu0 0.0
  %8442 = vmatpush1.xpose.msra.mxu0 0.0
  %8443 = vmatprep.subr.mxu0 0.0
  %8444 = vmatpush1.xpose.msra.mxu0 %v8411
  %8445 = vmatprep.subr.mxu0 0.0
  %8446 = vmatpush2.xpose.msra.mxu0 0.0
  %8447 = vmatprep.subr.mxu0 0.0
  %8448 = vmatpush2.xpose.msra.mxu0 0.0
  %8449 = vmatprep.subr.mxu0 0.0
  %8450 = vmatpush2.xpose.msra.mxu0 0.0
  %8451 = vmatprep.subr.mxu0 0.0
  %8452 = vmatpush2.xpose.msra.mxu0 0.0
  %8453 = vmatprep.subr.mxu0 0.0
  %8454 = vmatpush2.xpose.msra.mxu0 0.0
  %8455 = vmatprep.subr.mxu0 0.0
  %8456 = vmatpush2.xpose.msra.mxu0 0.0
  %8457 = vmatprep.subr.mxu0 0.0
  %8458 = vmatpush2.xpose.msra.mxu0 0.0
  %8459 = vmatprep.subr.mxu0 0.0
  %8460 = vmatpush2.xpose.msra.mxu0 0.0
  %8461 = vmatprep.subr.mxu0 0.0
  %8462 = vmatpush2.xpose.msra.mxu0 0.0
  %8463 = vmatprep.subr.mxu0 0.0
  %8464 = vmatpush2.xpose.msra.mxu0 0.0
  %8465 = vmatprep.subr.mxu0 0.0
  %8466 = vmatpush2.xpose.msra.mxu0 0.0
  %8467 = vmatprep.subr.mxu0 0.0
  %8468 = vmatpush2.xpose.msra.mxu0 0.0
  %8469 = vmatprep.subr.mxu0 0.0
  %8470 = vmatpush2.xpose.msra.mxu0 0.0
  %8471 = vmatprep.subr.mxu0 0.0
  %8472 = vmatpush2.xpose.msra.mxu0 0.0
  %8473 = vmatprep.subr.mxu0 0.0
  %8474 = vmatpush2.xpose.msra.mxu0 0.0
  %8475 = vmatprep.subr.mxu0 0.0
  %8476 = vmatpush2.xpose.msra.mxu0 0.0
  %8477 = vmatprep.mubr.f32.mxu0 0.0
  %8478 = vmatmul.mubr.f32.gmra.mxu0 %v8409
  %v8479 = vpop.f32.mrf.mxu0
  %v8480 = vadd.f32 0.0, %v8479
  %v8481 = vpop.f32.mrf.mxu0
  %8482 = vdwg.mxu0
  %v8483 = vmul.f32 %v8090, 0.35355338
  %v8484 = vmul.f32 %v8168, 0.35355338
  %v8485 = vmul.f32 %v8246, 0.35355338
  %v8486 = vmul.f32 %v8324, 0.35355338
  %v8487 = vmul.f32 %v8402, 0.35355338
  %v8488 = vmul.f32 %v8480, 0.35355338
  %v8489 = vadd.f32 %v8483, %v3769
  %v8490 = vadd.f32 %v8484, %v3770
  %v8491 = vadd.f32 %v8485, %v3771
  %v8492 = vadd.f32 %v8486, %v3772
  %v8493 = vadd.f32 %v8487, %v3773
  %v8494 = vadd.f32 %v8488, %v3774
  %v8495 = vsel %vm1317, %v8489, -inf
  %8496 = vmax.xlane.f32.xlu0 %v8495
  %v8497 = vpop.xlane.xlu0 %8496
  %v8498 = vsel %vm1317, %v8490, -inf
  %8499 = vmax.xlane.f32.xlu0 %v8498
  %v8500 = vpop.xlane.xlu0 %8499
  %v8501 = vsel %vm1317, %v8491, -inf
  %8502 = vmax.xlane.f32.xlu0 %v8501
  %v8503 = vpop.xlane.xlu0 %8502
  %v8504 = vsel %vm1317, %v8492, -inf
  %8505 = vmax.xlane.f32.xlu0 %v8504
  %v8506 = vpop.xlane.xlu0 %8505
  %v8507 = vsel %vm1317, %v8493, -inf
  %8508 = vmax.xlane.f32.xlu0 %v8507
  %v8509 = vpop.xlane.xlu0 %8508
  %v8510 = vsel %vm1317, %v8494, -inf
  %8511 = vmax.xlane.f32.xlu0 %v8510
  %v8512 = vpop.xlane.xlu0 %8511
  %v8513 = vsub.f32 %v8489, %v8497
  %v8514 = vsub.f32 %v8490, %v8500
  %v8515 = vsub.f32 %v8491, %v8503
  %v8516 = vsub.f32 %v8492, %v8506
  %v8517 = vsub.f32 %v8493, %v8509
  %v8518 = vsub.f32 %v8494, %v8512
  %v8519 = vmul.f32 %v8513, 1.442695
  %v8520 = vpow.pop %v8519
  %v8521 = vmul.f32 %v8514, 1.442695
  %v8522 = vpow.pop %v8521
  %v8523 = vmul.f32 %v8515, 1.442695
  %v8524 = vpow.pop %v8523
  %v8525 = vmul.f32 %v8516, 1.442695
  %v8526 = vpow.pop %v8525
  %v8527 = vmul.f32 %v8517, 1.442695
  %v8528 = vpow.pop %v8527
  %v8529 = vmul.f32 %v8518, 1.442695
  %v8530 = vpow.pop %v8529
  %v8531 = vsel %vm1317, %v8520, 0.0
  %8532 = vadd.xlane.f32.xlu0 %v8531
  %v8533 = vpop.xlane.xlu0 %8532
  %v8534 = vsel %vm1317, %v8522, 0.0
  %8535 = vadd.xlane.f32.xlu0 %v8534
  %v8536 = vpop.xlane.xlu0 %8535
  %v8537 = vsel %vm1317, %v8524, 0.0
  %8538 = vadd.xlane.f32.xlu0 %v8537
  %v8539 = vpop.xlane.xlu0 %8538
  %v8540 = vsel %vm1317, %v8526, 0.0
  %8541 = vadd.xlane.f32.xlu0 %v8540
  %v8542 = vpop.xlane.xlu0 %8541
  %v8543 = vsel %vm1317, %v8528, 0.0
  %8544 = vadd.xlane.f32.xlu0 %v8543
  %v8545 = vpop.xlane.xlu0 %8544
  %v8546 = vsel %vm1317, %v8530, 0.0
  %8547 = vadd.xlane.f32.xlu0 %v8546
  %v8548 = vpop.xlane.xlu0 %8547
  %v8549 = vrcp.pop %v8533
  %v8550 = vrcp.pop %v8536
  %v8551 = vrcp.pop %v8539
  %v8552 = vrcp.pop %v8542
  %v8553 = vrcp.pop %v8545
  %v8554 = vrcp.pop %v8548
  %v8555 = vmul.f32 %v8520, %v8549
  %v8556 = vmul.f32 %v8522, %v8550
  %v8557 = vmul.f32 %v8524, %v8551
  %v8558 = vmul.f32 %v8526, %v8552
  %v8559 = vmul.f32 %v8528, %v8553
  %v8560 = vmul.f32 %v8530, %v8554
  %8561 = vrot.lane.b32.xlu0 %v5995, 48
  %v8562 = vpop.permute.xlu0 %8561
  %v8565 = vsel %vm1317, %v8555, 0
  %8567 = vmatprep.subr.mxu0 0.0
  %8568 = vmatpush1.msra.mxu0 0.0
  %8569 = vmatprep.subr.mxu0 0.0
  %8570 = vmatpush1.msra.mxu0 0.0
  %8571 = vmatprep.subr.mxu0 0.0
  %8572 = vmatpush1.msra.mxu0 0.0
  %8573 = vmatprep.subr.mxu0 0.0
  %8574 = vmatpush1.msra.mxu0 0.0
  %8575 = vmatprep.subr.mxu0 0.0
  %8576 = vmatpush1.msra.mxu0 0.0
  %8577 = vmatprep.subr.mxu0 0.0
  %8578 = vmatpush1.msra.mxu0 0.0
  %8579 = vmatprep.subr.mxu0 0.0
  %8580 = vmatpush1.msra.mxu0 0.0
  %8581 = vmatprep.subr.mxu0 0.0
  %8582 = vmatpush1.msra.mxu0 0.0
  %8583 = vmatprep.subr.mxu0 0.0
  %8584 = vmatpush1.msra.mxu0 0.0
  %8585 = vmatprep.subr.mxu0 0.0
  %8586 = vmatpush1.msra.mxu0 0.0
  %8587 = vmatprep.subr.mxu0 0.0
  %8588 = vmatpush1.msra.mxu0 0.0
  %8589 = vmatprep.subr.mxu0 0.0
  %8590 = vmatpush1.msra.mxu0 0.0
  %8591 = vmatprep.subr.mxu0 0.0
  %8592 = vmatpush1.msra.mxu0 0.0
  %8593 = vmatprep.subr.mxu0 0.0
  %8594 = vmatpush1.msra.mxu0 0.0
  %8595 = vmatprep.subr.mxu0 0.0
  %8596 = vmatpush1.msra.mxu0 0.0
  %8597 = vmatprep.subr.mxu0 0.0
  %8598 = vmatpush1.msra.mxu0 %v8562
  %8599 = vmatprep.subr.mxu0 0.0
  %8600 = vmatpush2.msra.mxu0 0.0
  %8601 = vmatprep.subr.mxu0 0.0
  %8602 = vmatpush2.msra.mxu0 0.0
  %8603 = vmatprep.subr.mxu0 0.0
  %8604 = vmatpush2.msra.mxu0 0.0
  %8605 = vmatprep.subr.mxu0 0.0
  %8606 = vmatpush2.msra.mxu0 0.0
  %8607 = vmatprep.subr.mxu0 0.0
  %8608 = vmatpush2.msra.mxu0 0.0
  %8609 = vmatprep.subr.mxu0 0.0
  %8610 = vmatpush2.msra.mxu0 0.0
  %8611 = vmatprep.subr.mxu0 0.0
  %8612 = vmatpush2.msra.mxu0 0.0
  %8613 = vmatprep.subr.mxu0 0.0
  %8614 = vmatpush2.msra.mxu0 0.0
  %8615 = vmatprep.subr.mxu0 0.0
  %8616 = vmatpush2.msra.mxu0 0.0
  %8617 = vmatprep.subr.mxu0 0.0
  %8618 = vmatpush2.msra.mxu0 0.0
  %8619 = vmatprep.subr.mxu0 0.0
  %8620 = vmatpush2.msra.mxu0 0.0
  %8621 = vmatprep.subr.mxu0 0.0
  %8622 = vmatpush2.msra.mxu0 0.0
  %8623 = vmatprep.subr.mxu0 0.0
  %8624 = vmatpush2.msra.mxu0 0.0
  %8625 = vmatprep.subr.mxu0 0.0
  %8626 = vmatpush2.msra.mxu0 0.0
  %8627 = vmatprep.subr.mxu0 0.0
  %8628 = vmatpush2.msra.mxu0 0.0
  %8629 = vmatprep.subr.mxu0 0.0
  %8630 = vmatpush2.msra.mxu0 0.0
  %8631 = vmatprep.mubr.f32.mxu0 0.0
  %8632 = vmatmul.mubr.f32.gmra.mxu0 %v8565
  %v8633 = vpop.f32.mrf.mxu0
  %v8634 = vadd.f32 0.0, %v8633
  %v8635 = vpop.f32.mrf.mxu0
  %8636 = vdwg.mxu0
  %8637 = vrot.lane.b32.xlu0 %v5998, 48
  %v8638 = vpop.permute.xlu0 %8637
  %v8641 = vsel %vm1317, %v8556, 0
  %8643 = vmatprep.subr.mxu0 0.0
  %8644 = vmatpush1.msra.mxu0 0.0
  %8645 = vmatprep.subr.mxu0 0.0
  %8646 = vmatpush1.msra.mxu0 0.0
  %8647 = vmatprep.subr.mxu0 0.0
  %8648 = vmatpush1.msra.mxu0 0.0
  %8649 = vmatprep.subr.mxu0 0.0
  %8650 = vmatpush1.msra.mxu0 0.0
  %8651 = vmatprep.subr.mxu0 0.0
  %8652 = vmatpush1.msra.mxu0 0.0
  %8653 = vmatprep.subr.mxu0 0.0
  %8654 = vmatpush1.msra.mxu0 0.0
  %8655 = vmatprep.subr.mxu0 0.0
  %8656 = vmatpush1.msra.mxu0 0.0
  %8657 = vmatprep.subr.mxu0 0.0
  %8658 = vmatpush1.msra.mxu0 0.0
  %8659 = vmatprep.subr.mxu0 0.0
  %8660 = vmatpush1.msra.mxu0 0.0
  %8661 = vmatprep.subr.mxu0 0.0
  %8662 = vmatpush1.msra.mxu0 0.0
  %8663 = vmatprep.subr.mxu0 0.0
  %8664 = vmatpush1.msra.mxu0 0.0
  %8665 = vmatprep.subr.mxu0 0.0
  %8666 = vmatpush1.msra.mxu0 0.0
  %8667 = vmatprep.subr.mxu0 0.0
  %8668 = vmatpush1.msra.mxu0 0.0
  %8669 = vmatprep.subr.mxu0 0.0
  %8670 = vmatpush1.msra.mxu0 0.0
  %8671 = vmatprep.subr.mxu0 0.0
  %8672 = vmatpush1.msra.mxu0 0.0
  %8673 = vmatprep.subr.mxu0 0.0
  %8674 = vmatpush1.msra.mxu0 %v8638
  %8675 = vmatprep.subr.mxu0 0.0
  %8676 = vmatpush2.msra.mxu0 0.0
  %8677 = vmatprep.subr.mxu0 0.0
  %8678 = vmatpush2.msra.mxu0 0.0
  %8679 = vmatprep.subr.mxu0 0.0
  %8680 = vmatpush2.msra.mxu0 0.0
  %8681 = vmatprep.subr.mxu0 0.0
  %8682 = vmatpush2.msra.mxu0 0.0
  %8683 = vmatprep.subr.mxu0 0.0
  %8684 = vmatpush2.msra.mxu0 0.0
  %8685 = vmatprep.subr.mxu0 0.0
  %8686 = vmatpush2.msra.mxu0 0.0
  %8687 = vmatprep.subr.mxu0 0.0
  %8688 = vmatpush2.msra.mxu0 0.0
  %8689 = vmatprep.subr.mxu0 0.0
  %8690 = vmatpush2.msra.mxu0 0.0
  %8691 = vmatprep.subr.mxu0 0.0
  %8692 = vmatpush2.msra.mxu0 0.0
  %8693 = vmatprep.subr.mxu0 0.0
  %8694 = vmatpush2.msra.mxu0 0.0
  %8695 = vmatprep.subr.mxu0 0.0
  %8696 = vmatpush2.msra.mxu0 0.0
  %8697 = vmatprep.subr.mxu0 0.0
  %8698 = vmatpush2.msra.mxu0 0.0
  %8699 = vmatprep.subr.mxu0 0.0
  %8700 = vmatpush2.msra.mxu0 0.0
  %8701 = vmatprep.subr.mxu0 0.0
  %8702 = vmatpush2.msra.mxu0 0.0
  %8703 = vmatprep.subr.mxu0 0.0
  %8704 = vmatpush2.msra.mxu0 0.0
  %8705 = vmatprep.subr.mxu0 0.0
  %8706 = vmatpush2.msra.mxu0 0.0
  %8707 = vmatprep.mubr.f32.mxu0 0.0
  %8708 = vmatmul.mubr.f32.gmra.mxu0 %v8641
  %v8709 = vpop.f32.mrf.mxu0
  %v8710 = vadd.f32 0.0, %v8709
  %v8711 = vpop.f32.mrf.mxu0
  %8712 = vdwg.mxu0
  %8713 = vrot.lane.b32.xlu0 %v6003, 48
  %v8714 = vpop.permute.xlu0 %8713
  %v8717 = vsel %vm1317, %v8557, 0
  %8719 = vmatprep.subr.mxu0 0.0
  %8720 = vmatpush1.msra.mxu0 0.0
  %8721 = vmatprep.subr.mxu0 0.0
  %8722 = vmatpush1.msra.mxu0 0.0
  %8723 = vmatprep.subr.mxu0 0.0
  %8724 = vmatpush1.msra.mxu0 0.0
  %8725 = vmatprep.subr.mxu0 0.0
  %8726 = vmatpush1.msra.mxu0 0.0
  %8727 = vmatprep.subr.mxu0 0.0
  %8728 = vmatpush1.msra.mxu0 0.0
  %8729 = vmatprep.subr.mxu0 0.0
  %8730 = vmatpush1.msra.mxu0 0.0
  %8731 = vmatprep.subr.mxu0 0.0
  %8732 = vmatpush1.msra.mxu0 0.0
  %8733 = vmatprep.subr.mxu0 0.0
  %8734 = vmatpush1.msra.mxu0 0.0
  %8735 = vmatprep.subr.mxu0 0.0
  %8736 = vmatpush1.msra.mxu0 0.0
  %8737 = vmatprep.subr.mxu0 0.0
  %8738 = vmatpush1.msra.mxu0 0.0
  %8739 = vmatprep.subr.mxu0 0.0
  %8740 = vmatpush1.msra.mxu0 0.0
  %8741 = vmatprep.subr.mxu0 0.0
  %8742 = vmatpush1.msra.mxu0 0.0
  %8743 = vmatprep.subr.mxu0 0.0
  %8744 = vmatpush1.msra.mxu0 0.0
  %8745 = vmatprep.subr.mxu0 0.0
  %8746 = vmatpush1.msra.mxu0 0.0
  %8747 = vmatprep.subr.mxu0 0.0
  %8748 = vmatpush1.msra.mxu0 0.0
  %8749 = vmatprep.subr.mxu0 0.0
  %8750 = vmatpush1.msra.mxu0 %v8714
  %8751 = vmatprep.subr.mxu0 0.0
  %8752 = vmatpush2.msra.mxu0 0.0
  %8753 = vmatprep.subr.mxu0 0.0
  %8754 = vmatpush2.msra.mxu0 0.0
  %8755 = vmatprep.subr.mxu0 0.0
  %8756 = vmatpush2.msra.mxu0 0.0
  %8757 = vmatprep.subr.mxu0 0.0
  %8758 = vmatpush2.msra.mxu0 0.0
  %8759 = vmatprep.subr.mxu0 0.0
  %8760 = vmatpush2.msra.mxu0 0.0
  %8761 = vmatprep.subr.mxu0 0.0
  %8762 = vmatpush2.msra.mxu0 0.0
  %8763 = vmatprep.subr.mxu0 0.0
  %8764 = vmatpush2.msra.mxu0 0.0
  %8765 = vmatprep.subr.mxu0 0.0
  %8766 = vmatpush2.msra.mxu0 0.0
  %8767 = vmatprep.subr.mxu0 0.0
  %8768 = vmatpush2.msra.mxu0 0.0
  %8769 = vmatprep.subr.mxu0 0.0
  %8770 = vmatpush2.msra.mxu0 0.0
  %8771 = vmatprep.subr.mxu0 0.0
  %8772 = vmatpush2.msra.mxu0 0.0
  %8773 = vmatprep.subr.mxu0 0.0
  %8774 = vmatpush2.msra.mxu0 0.0
  %8775 = vmatprep.subr.mxu0 0.0
  %8776 = vmatpush2.msra.mxu0 0.0
  %8777 = vmatprep.subr.mxu0 0.0
  %8778 = vmatpush2.msra.mxu0 0.0
  %8779 = vmatprep.subr.mxu0 0.0
  %8780 = vmatpush2.msra.mxu0 0.0
  %8781 = vmatprep.subr.mxu0 0.0
  %8782 = vmatpush2.msra.mxu0 0.0
  %8783 = vmatprep.mubr.f32.mxu0 0.0
  %8784 = vmatmul.mubr.f32.gmra.mxu0 %v8717
  %v8785 = vpop.f32.mrf.mxu0
  %v8786 = vadd.f32 0.0, %v8785
  %v8787 = vpop.f32.mrf.mxu0
  %8788 = vdwg.mxu0
  %8789 = vrot.lane.b32.xlu0 %v6006, 48
  %v8790 = vpop.permute.xlu0 %8789
  %v8793 = vsel %vm1317, %v8558, 0
  %8795 = vmatprep.subr.mxu0 0.0
  %8796 = vmatpush1.msra.mxu0 0.0
  %8797 = vmatprep.subr.mxu0 0.0
  %8798 = vmatpush1.msra.mxu0 0.0
  %8799 = vmatprep.subr.mxu0 0.0
  %8800 = vmatpush1.msra.mxu0 0.0
  %8801 = vmatprep.subr.mxu0 0.0
  %8802 = vmatpush1.msra.mxu0 0.0
  %8803 = vmatprep.subr.mxu0 0.0
  %8804 = vmatpush1.msra.mxu0 0.0
  %8805 = vmatprep.subr.mxu0 0.0
  %8806 = vmatpush1.msra.mxu0 0.0
  %8807 = vmatprep.subr.mxu0 0.0
  %8808 = vmatpush1.msra.mxu0 0.0
  %8809 = vmatprep.subr.mxu0 0.0
  %8810 = vmatpush1.msra.mxu0 0.0
  %8811 = vmatprep.subr.mxu0 0.0
  %8812 = vmatpush1.msra.mxu0 0.0
  %8813 = vmatprep.subr.mxu0 0.0
  %8814 = vmatpush1.msra.mxu0 0.0
  %8815 = vmatprep.subr.mxu0 0.0
  %8816 = vmatpush1.msra.mxu0 0.0
  %8817 = vmatprep.subr.mxu0 0.0
  %8818 = vmatpush1.msra.mxu0 0.0
  %8819 = vmatprep.subr.mxu0 0.0
  %8820 = vmatpush1.msra.mxu0 0.0
  %8821 = vmatprep.subr.mxu0 0.0
  %8822 = vmatpush1.msra.mxu0 0.0
  %8823 = vmatprep.subr.mxu0 0.0
  %8824 = vmatpush1.msra.mxu0 0.0
  %8825 = vmatprep.subr.mxu0 0.0
  %8826 = vmatpush1.msra.mxu0 %v8790
  %8827 = vmatprep.subr.mxu0 0.0
  %8828 = vmatpush2.msra.mxu0 0.0
  %8829 = vmatprep.subr.mxu0 0.0
  %8830 = vmatpush2.msra.mxu0 0.0
  %8831 = vmatprep.subr.mxu0 0.0
  %8832 = vmatpush2.msra.mxu0 0.0
  %8833 = vmatprep.subr.mxu0 0.0
  %8834 = vmatpush2.msra.mxu0 0.0
  %8835 = vmatprep.subr.mxu0 0.0
  %8836 = vmatpush2.msra.mxu0 0.0
  %8837 = vmatprep.subr.mxu0 0.0
  %8838 = vmatpush2.msra.mxu0 0.0
  %8839 = vmatprep.subr.mxu0 0.0
  %8840 = vmatpush2.msra.mxu0 0.0
  %8841 = vmatprep.subr.mxu0 0.0
  %8842 = vmatpush2.msra.mxu0 0.0
  %8843 = vmatprep.subr.mxu0 0.0
  %8844 = vmatpush2.msra.mxu0 0.0
  %8845 = vmatprep.subr.mxu0 0.0
  %8846 = vmatpush2.msra.mxu0 0.0
  %8847 = vmatprep.subr.mxu0 0.0
  %8848 = vmatpush2.msra.mxu0 0.0
  %8849 = vmatprep.subr.mxu0 0.0
  %8850 = vmatpush2.msra.mxu0 0.0
  %8851 = vmatprep.subr.mxu0 0.0
  %8852 = vmatpush2.msra.mxu0 0.0
  %8853 = vmatprep.subr.mxu0 0.0
  %8854 = vmatpush2.msra.mxu0 0.0
  %8855 = vmatprep.subr.mxu0 0.0
  %8856 = vmatpush2.msra.mxu0 0.0
  %8857 = vmatprep.subr.mxu0 0.0
  %8858 = vmatpush2.msra.mxu0 0.0
  %8859 = vmatprep.mubr.f32.mxu0 0.0
  %8860 = vmatmul.mubr.f32.gmra.mxu0 %v8793
  %v8861 = vpop.f32.mrf.mxu0
  %v8862 = vadd.f32 0.0, %v8861
  %v8863 = vpop.f32.mrf.mxu0
  %8864 = vdwg.mxu0
  %8865 = vrot.lane.b32.xlu0 %v6011, 48
  %v8866 = vpop.permute.xlu0 %8865
  %v8869 = vsel %vm1317, %v8559, 0
  %8871 = vmatprep.subr.mxu0 0.0
  %8872 = vmatpush1.msra.mxu0 0.0
  %8873 = vmatprep.subr.mxu0 0.0
  %8874 = vmatpush1.msra.mxu0 0.0
  %8875 = vmatprep.subr.mxu0 0.0
  %8876 = vmatpush1.msra.mxu0 0.0
  %8877 = vmatprep.subr.mxu0 0.0
  %8878 = vmatpush1.msra.mxu0 0.0
  %8879 = vmatprep.subr.mxu0 0.0
  %8880 = vmatpush1.msra.mxu0 0.0
  %8881 = vmatprep.subr.mxu0 0.0
  %8882 = vmatpush1.msra.mxu0 0.0
  %8883 = vmatprep.subr.mxu0 0.0
  %8884 = vmatpush1.msra.mxu0 0.0
  %8885 = vmatprep.subr.mxu0 0.0
  %8886 = vmatpush1.msra.mxu0 0.0
  %8887 = vmatprep.subr.mxu0 0.0
  %8888 = vmatpush1.msra.mxu0 0.0
  %8889 = vmatprep.subr.mxu0 0.0
  %8890 = vmatpush1.msra.mxu0 0.0
  %8891 = vmatprep.subr.mxu0 0.0
  %8892 = vmatpush1.msra.mxu0 0.0
  %8893 = vmatprep.subr.mxu0 0.0
  %8894 = vmatpush1.msra.mxu0 0.0
  %8895 = vmatprep.subr.mxu0 0.0
  %8896 = vmatpush1.msra.mxu0 0.0
  %8897 = vmatprep.subr.mxu0 0.0
  %8898 = vmatpush1.msra.mxu0 0.0
  %8899 = vmatprep.subr.mxu0 0.0
  %8900 = vmatpush1.msra.mxu0 0.0
  %8901 = vmatprep.subr.mxu0 0.0
  %8902 = vmatpush1.msra.mxu0 %v8866
  %8903 = vmatprep.subr.mxu0 0.0
  %8904 = vmatpush2.msra.mxu0 0.0
  %8905 = vmatprep.subr.mxu0 0.0
  %8906 = vmatpush2.msra.mxu0 0.0
  %8907 = vmatprep.subr.mxu0 0.0
  %8908 = vmatpush2.msra.mxu0 0.0
  %8909 = vmatprep.subr.mxu0 0.0
  %8910 = vmatpush2.msra.mxu0 0.0
  %8911 = vmatprep.subr.mxu0 0.0
  %8912 = vmatpush2.msra.mxu0 0.0
  %8913 = vmatprep.subr.mxu0 0.0
  %8914 = vmatpush2.msra.mxu0 0.0
  %8915 = vmatprep.subr.mxu0 0.0
  %8916 = vmatpush2.msra.mxu0 0.0
  %8917 = vmatprep.subr.mxu0 0.0
  %8918 = vmatpush2.msra.mxu0 0.0
  %8919 = vmatprep.subr.mxu0 0.0
  %8920 = vmatpush2.msra.mxu0 0.0
  %8921 = vmatprep.subr.mxu0 0.0
  %8922 = vmatpush2.msra.mxu0 0.0
  %8923 = vmatprep.subr.mxu0 0.0
  %8924 = vmatpush2.msra.mxu0 0.0
  %8925 = vmatprep.subr.mxu0 0.0
  %8926 = vmatpush2.msra.mxu0 0.0
  %8927 = vmatprep.subr.mxu0 0.0
  %8928 = vmatpush2.msra.mxu0 0.0
  %8929 = vmatprep.subr.mxu0 0.0
  %8930 = vmatpush2.msra.mxu0 0.0
  %8931 = vmatprep.subr.mxu0 0.0
  %8932 = vmatpush2.msra.mxu0 0.0
  %8933 = vmatprep.subr.mxu0 0.0
  %8934 = vmatpush2.msra.mxu0 0.0
  %8935 = vmatprep.mubr.f32.mxu0 0.0
  %8936 = vmatmul.mubr.f32.gmra.mxu0 %v8869
  %v8937 = vpop.f32.mrf.mxu0
  %v8938 = vadd.f32 0.0, %v8937
  %v8939 = vpop.f32.mrf.mxu0
  %8940 = vdwg.mxu0
  %8941 = vrot.lane.b32.xlu0 %v6014, 48
  %v8942 = vpop.permute.xlu0 %8941
  %v8945 = vsel %vm1317, %v8560, 0
  %8947 = vmatprep.subr.mxu0 0.0
  %8948 = vmatpush1.msra.mxu0 0.0
  %8949 = vmatprep.subr.mxu0 0.0
  %8950 = vmatpush1.msra.mxu0 0.0
  %8951 = vmatprep.subr.mxu0 0.0
  %8952 = vmatpush1.msra.mxu0 0.0
  %8953 = vmatprep.subr.mxu0 0.0
  %8954 = vmatpush1.msra.mxu0 0.0
  %8955 = vmatprep.subr.mxu0 0.0
  %8956 = vmatpush1.msra.mxu0 0.0
  %8957 = vmatprep.subr.mxu0 0.0
  %8958 = vmatpush1.msra.mxu0 0.0
  %8959 = vmatprep.subr.mxu0 0.0
  %8960 = vmatpush1.msra.mxu0 0.0
  %8961 = vmatprep.subr.mxu0 0.0
  %8962 = vmatpush1.msra.mxu0 0.0
  %8963 = vmatprep.subr.mxu0 0.0
  %8964 = vmatpush1.msra.mxu0 0.0
  %8965 = vmatprep.subr.mxu0 0.0
  %8966 = vmatpush1.msra.mxu0 0.0
  %8967 = vmatprep.subr.mxu0 0.0
  %8968 = vmatpush1.msra.mxu0 0.0
  %8969 = vmatprep.subr.mxu0 0.0
  %8970 = vmatpush1.msra.mxu0 0.0
  %8971 = vmatprep.subr.mxu0 0.0
  %8972 = vmatpush1.msra.mxu0 0.0
  %8973 = vmatprep.subr.mxu0 0.0
  %8974 = vmatpush1.msra.mxu0 0.0
  %8975 = vmatprep.subr.mxu0 0.0
  %8976 = vmatpush1.msra.mxu0 0.0
  %8977 = vmatprep.subr.mxu0 0.0
  %8978 = vmatpush1.msra.mxu0 %v8942
  %8979 = vmatprep.subr.mxu0 0.0
  %8980 = vmatpush2.msra.mxu0 0.0
  %8981 = vmatprep.subr.mxu0 0.0
  %8982 = vmatpush2.msra.mxu0 0.0
  %8983 = vmatprep.subr.mxu0 0.0
  %8984 = vmatpush2.msra.mxu0 0.0
  %8985 = vmatprep.subr.mxu0 0.0
  %8986 = vmatpush2.msra.mxu0 0.0
  %8987 = vmatprep.subr.mxu0 0.0
  %8988 = vmatpush2.msra.mxu0 0.0
  %8989 = vmatprep.subr.mxu0 0.0
  %8990 = vmatpush2.msra.mxu0 0.0
  %8991 = vmatprep.subr.mxu0 0.0
  %8992 = vmatpush2.msra.mxu0 0.0
  %8993 = vmatprep.subr.mxu0 0.0
  %8994 = vmatpush2.msra.mxu0 0.0
  %8995 = vmatprep.subr.mxu0 0.0
  %8996 = vmatpush2.msra.mxu0 0.0
  %8997 = vmatprep.subr.mxu0 0.0
  %8998 = vmatpush2.msra.mxu0 0.0
  %8999 = vmatprep.subr.mxu0 0.0
  %9000 = vmatpush2.msra.mxu0 0.0
  %9001 = vmatprep.subr.mxu0 0.0
  %9002 = vmatpush2.msra.mxu0 0.0
  %9003 = vmatprep.subr.mxu0 0.0
  %9004 = vmatpush2.msra.mxu0 0.0
  %9005 = vmatprep.subr.mxu0 0.0
  %9006 = vmatpush2.msra.mxu0 0.0
  %9007 = vmatprep.subr.mxu0 0.0
  %9008 = vmatpush2.msra.mxu0 0.0
  %9009 = vmatprep.subr.mxu0 0.0
  %9010 = vmatpush2.msra.mxu0 0.0
  %9011 = vmatprep.mubr.f32.mxu0 0.0
  %9012 = vmatmul.mubr.f32.gmra.mxu0 %v8945
  %v9013 = vpop.f32.mrf.mxu0
  %v9014 = vadd.f32 0.0, %v9013
  %v9015 = vpop.f32.mrf.mxu0
  %9016 = vdwg.mxu0
  %9017 = vrot.lane.b32.xlu0 %v5995, 104
  %v9018 = vpop.permute.xlu0 %9017
  %9019 = vrot.lane.b32.xlu0 %v5995, 72
  %v9020 = vpop.permute.xlu0 %9019
  %v9021 = vsel %vm1317, %v9018, 0
  %v9023 = vsel %vm1317, %v9020, 0
  %9025 = vmatprep.subr.mxu0 0.0
  %9026 = vmatpush1.xpose.msra.mxu0 0.0
  %9027 = vmatprep.subr.mxu0 0.0
  %9028 = vmatpush1.xpose.msra.mxu0 0.0
  %9029 = vmatprep.subr.mxu0 0.0
  %9030 = vmatpush1.xpose.msra.mxu0 0.0
  %9031 = vmatprep.subr.mxu0 0.0
  %9032 = vmatpush1.xpose.msra.mxu0 0.0
  %9033 = vmatprep.subr.mxu0 0.0
  %9034 = vmatpush1.xpose.msra.mxu0 0.0
  %9035 = vmatprep.subr.mxu0 0.0
  %9036 = vmatpush1.xpose.msra.mxu0 0.0
  %9037 = vmatprep.subr.mxu0 0.0
  %9038 = vmatpush1.xpose.msra.mxu0 0.0
  %9039 = vmatprep.subr.mxu0 0.0
  %9040 = vmatpush1.xpose.msra.mxu0 0.0
  %9041 = vmatprep.subr.mxu0 0.0
  %9042 = vmatpush1.xpose.msra.mxu0 0.0
  %9043 = vmatprep.subr.mxu0 0.0
  %9044 = vmatpush1.xpose.msra.mxu0 0.0
  %9045 = vmatprep.subr.mxu0 0.0
  %9046 = vmatpush1.xpose.msra.mxu0 0.0
  %9047 = vmatprep.subr.mxu0 0.0
  %9048 = vmatpush1.xpose.msra.mxu0 0.0
  %9049 = vmatprep.subr.mxu0 0.0
  %9050 = vmatpush1.xpose.msra.mxu0 0.0
  %9051 = vmatprep.subr.mxu0 0.0
  %9052 = vmatpush1.xpose.msra.mxu0 0.0
  %9053 = vmatprep.subr.mxu0 0.0
  %9054 = vmatpush1.xpose.msra.mxu0 0.0
  %9055 = vmatprep.subr.mxu0 0.0
  %9056 = vmatpush1.xpose.msra.mxu0 %v9023
  %9057 = vmatprep.subr.mxu0 0.0
  %9058 = vmatpush2.xpose.msra.mxu0 0.0
  %9059 = vmatprep.subr.mxu0 0.0
  %9060 = vmatpush2.xpose.msra.mxu0 0.0
  %9061 = vmatprep.subr.mxu0 0.0
  %9062 = vmatpush2.xpose.msra.mxu0 0.0
  %9063 = vmatprep.subr.mxu0 0.0
  %9064 = vmatpush2.xpose.msra.mxu0 0.0
  %9065 = vmatprep.subr.mxu0 0.0
  %9066 = vmatpush2.xpose.msra.mxu0 0.0
  %9067 = vmatprep.subr.mxu0 0.0
  %9068 = vmatpush2.xpose.msra.mxu0 0.0
  %9069 = vmatprep.subr.mxu0 0.0
  %9070 = vmatpush2.xpose.msra.mxu0 0.0
  %9071 = vmatprep.subr.mxu0 0.0
  %9072 = vmatpush2.xpose.msra.mxu0 0.0
  %9073 = vmatprep.subr.mxu0 0.0
  %9074 = vmatpush2.xpose.msra.mxu0 0.0
  %9075 = vmatprep.subr.mxu0 0.0
  %9076 = vmatpush2.xpose.msra.mxu0 0.0
  %9077 = vmatprep.subr.mxu0 0.0
  %9078 = vmatpush2.xpose.msra.mxu0 0.0
  %9079 = vmatprep.subr.mxu0 0.0
  %9080 = vmatpush2.xpose.msra.mxu0 0.0
  %9081 = vmatprep.subr.mxu0 0.0
  %9082 = vmatpush2.xpose.msra.mxu0 0.0
  %9083 = vmatprep.subr.mxu0 0.0
  %9084 = vmatpush2.xpose.msra.mxu0 0.0
  %9085 = vmatprep.subr.mxu0 0.0
  %9086 = vmatpush2.xpose.msra.mxu0 0.0
  %9087 = vmatprep.subr.mxu0 0.0
  %9088 = vmatpush2.xpose.msra.mxu0 0.0
  %9089 = vmatprep.mubr.f32.mxu0 0.0
  %9090 = vmatmul.mubr.f32.gmra.mxu0 %v9021
  %v9091 = vpop.f32.mrf.mxu0
  %v9092 = vadd.f32 0.0, %v9091
  %v9093 = vpop.f32.mrf.mxu0
  %9094 = vdwg.mxu0
  %9095 = vrot.lane.b32.xlu0 %v5998, 104
  %v9096 = vpop.permute.xlu0 %9095
  %9097 = vrot.lane.b32.xlu0 %v5998, 72
  %v9098 = vpop.permute.xlu0 %9097
  %v9099 = vsel %vm1317, %v9096, 0
  %v9101 = vsel %vm1317, %v9098, 0
  %9103 = vmatprep.subr.mxu0 0.0
  %9104 = vmatpush1.xpose.msra.mxu0 0.0
  %9105 = vmatprep.subr.mxu0 0.0
  %9106 = vmatpush1.xpose.msra.mxu0 0.0
  %9107 = vmatprep.subr.mxu0 0.0
  %9108 = vmatpush1.xpose.msra.mxu0 0.0
  %9109 = vmatprep.subr.mxu0 0.0
  %9110 = vmatpush1.xpose.msra.mxu0 0.0
  %9111 = vmatprep.subr.mxu0 0.0
  %9112 = vmatpush1.xpose.msra.mxu0 0.0
  %9113 = vmatprep.subr.mxu0 0.0
  %9114 = vmatpush1.xpose.msra.mxu0 0.0
  %9115 = vmatprep.subr.mxu0 0.0
  %9116 = vmatpush1.xpose.msra.mxu0 0.0
  %9117 = vmatprep.subr.mxu0 0.0
  %9118 = vmatpush1.xpose.msra.mxu0 0.0
  %9119 = vmatprep.subr.mxu0 0.0
  %9120 = vmatpush1.xpose.msra.mxu0 0.0
  %9121 = vmatprep.subr.mxu0 0.0
  %9122 = vmatpush1.xpose.msra.mxu0 0.0
  %9123 = vmatprep.subr.mxu0 0.0
  %9124 = vmatpush1.xpose.msra.mxu0 0.0
  %9125 = vmatprep.subr.mxu0 0.0
  %9126 = vmatpush1.xpose.msra.mxu0 0.0
  %9127 = vmatprep.subr.mxu0 0.0
  %9128 = vmatpush1.xpose.msra.mxu0 0.0
  %9129 = vmatprep.subr.mxu0 0.0
  %9130 = vmatpush1.xpose.msra.mxu0 0.0
  %9131 = vmatprep.subr.mxu0 0.0
  %9132 = vmatpush1.xpose.msra.mxu0 0.0
  %9133 = vmatprep.subr.mxu0 0.0
  %9134 = vmatpush1.xpose.msra.mxu0 %v9101
  %9135 = vmatprep.subr.mxu0 0.0
  %9136 = vmatpush2.xpose.msra.mxu0 0.0
  %9137 = vmatprep.subr.mxu0 0.0
  %9138 = vmatpush2.xpose.msra.mxu0 0.0
  %9139 = vmatprep.subr.mxu0 0.0
  %9140 = vmatpush2.xpose.msra.mxu0 0.0
  %9141 = vmatprep.subr.mxu0 0.0
  %9142 = vmatpush2.xpose.msra.mxu0 0.0
  %9143 = vmatprep.subr.mxu0 0.0
  %9144 = vmatpush2.xpose.msra.mxu0 0.0
  %9145 = vmatprep.subr.mxu0 0.0
  %9146 = vmatpush2.xpose.msra.mxu0 0.0
  %9147 = vmatprep.subr.mxu0 0.0
  %9148 = vmatpush2.xpose.msra.mxu0 0.0
  %9149 = vmatprep.subr.mxu0 0.0
  %9150 = vmatpush2.xpose.msra.mxu0 0.0
  %9151 = vmatprep.subr.mxu0 0.0
  %9152 = vmatpush2.xpose.msra.mxu0 0.0
  %9153 = vmatprep.subr.mxu0 0.0
  %9154 = vmatpush2.xpose.msra.mxu0 0.0
  %9155 = vmatprep.subr.mxu0 0.0
  %9156 = vmatpush2.xpose.msra.mxu0 0.0
  %9157 = vmatprep.subr.mxu0 0.0
  %9158 = vmatpush2.xpose.msra.mxu0 0.0
  %9159 = vmatprep.subr.mxu0 0.0
  %9160 = vmatpush2.xpose.msra.mxu0 0.0
  %9161 = vmatprep.subr.mxu0 0.0
  %9162 = vmatpush2.xpose.msra.mxu0 0.0
  %9163 = vmatprep.subr.mxu0 0.0
  %9164 = vmatpush2.xpose.msra.mxu0 0.0
  %9165 = vmatprep.subr.mxu0 0.0
  %9166 = vmatpush2.xpose.msra.mxu0 0.0
  %9167 = vmatprep.mubr.f32.mxu0 0.0
  %9168 = vmatmul.mubr.f32.gmra.mxu0 %v9099
  %v9169 = vpop.f32.mrf.mxu0
  %v9170 = vadd.f32 0.0, %v9169
  %v9171 = vpop.f32.mrf.mxu0
  %9172 = vdwg.mxu0
  %9173 = vrot.lane.b32.xlu0 %v6003, 104
  %v9174 = vpop.permute.xlu0 %9173
  %9175 = vrot.lane.b32.xlu0 %v6003, 72
  %v9176 = vpop.permute.xlu0 %9175
  %v9177 = vsel %vm1317, %v9174, 0
  %v9179 = vsel %vm1317, %v9176, 0
  %9181 = vmatprep.subr.mxu0 0.0
  %9182 = vmatpush1.xpose.msra.mxu0 0.0
  %9183 = vmatprep.subr.mxu0 0.0
  %9184 = vmatpush1.xpose.msra.mxu0 0.0
  %9185 = vmatprep.subr.mxu0 0.0
  %9186 = vmatpush1.xpose.msra.mxu0 0.0
  %9187 = vmatprep.subr.mxu0 0.0
  %9188 = vmatpush1.xpose.msra.mxu0 0.0
  %9189 = vmatprep.subr.mxu0 0.0
  %9190 = vmatpush1.xpose.msra.mxu0 0.0
  %9191 = vmatprep.subr.mxu0 0.0
  %9192 = vmatpush1.xpose.msra.mxu0 0.0
  %9193 = vmatprep.subr.mxu0 0.0
  %9194 = vmatpush1.xpose.msra.mxu0 0.0
  %9195 = vmatprep.subr.mxu0 0.0
  %9196 = vmatpush1.xpose.msra.mxu0 0.0
  %9197 = vmatprep.subr.mxu0 0.0
  %9198 = vmatpush1.xpose.msra.mxu0 0.0
  %9199 = vmatprep.subr.mxu0 0.0
  %9200 = vmatpush1.xpose.msra.mxu0 0.0
  %9201 = vmatprep.subr.mxu0 0.0
  %9202 = vmatpush1.xpose.msra.mxu0 0.0
  %9203 = vmatprep.subr.mxu0 0.0
  %9204 = vmatpush1.xpose.msra.mxu0 0.0
  %9205 = vmatprep.subr.mxu0 0.0
  %9206 = vmatpush1.xpose.msra.mxu0 0.0
  %9207 = vmatprep.subr.mxu0 0.0
  %9208 = vmatpush1.xpose.msra.mxu0 0.0
  %9209 = vmatprep.subr.mxu0 0.0
  %9210 = vmatpush1.xpose.msra.mxu0 0.0
  %9211 = vmatprep.subr.mxu0 0.0
  %9212 = vmatpush1.xpose.msra.mxu0 %v9179
  %9213 = vmatprep.subr.mxu0 0.0
  %9214 = vmatpush2.xpose.msra.mxu0 0.0
  %9215 = vmatprep.subr.mxu0 0.0
  %9216 = vmatpush2.xpose.msra.mxu0 0.0
  %9217 = vmatprep.subr.mxu0 0.0
  %9218 = vmatpush2.xpose.msra.mxu0 0.0
  %9219 = vmatprep.subr.mxu0 0.0
  %9220 = vmatpush2.xpose.msra.mxu0 0.0
  %9221 = vmatprep.subr.mxu0 0.0
  %9222 = vmatpush2.xpose.msra.mxu0 0.0
  %9223 = vmatprep.subr.mxu0 0.0
  %9224 = vmatpush2.xpose.msra.mxu0 0.0
  %9225 = vmatprep.subr.mxu0 0.0
  %9226 = vmatpush2.xpose.msra.mxu0 0.0
  %9227 = vmatprep.subr.mxu0 0.0
  %9228 = vmatpush2.xpose.msra.mxu0 0.0
  %9229 = vmatprep.subr.mxu0 0.0
  %9230 = vmatpush2.xpose.msra.mxu0 0.0
  %9231 = vmatprep.subr.mxu0 0.0
  %9232 = vmatpush2.xpose.msra.mxu0 0.0
  %9233 = vmatprep.subr.mxu0 0.0
  %9234 = vmatpush2.xpose.msra.mxu0 0.0
  %9235 = vmatprep.subr.mxu0 0.0
  %9236 = vmatpush2.xpose.msra.mxu0 0.0
  %9237 = vmatprep.subr.mxu0 0.0
  %9238 = vmatpush2.xpose.msra.mxu0 0.0
  %9239 = vmatprep.subr.mxu0 0.0
  %9240 = vmatpush2.xpose.msra.mxu0 0.0
  %9241 = vmatprep.subr.mxu0 0.0
  %9242 = vmatpush2.xpose.msra.mxu0 0.0
  %9243 = vmatprep.subr.mxu0 0.0
  %9244 = vmatpush2.xpose.msra.mxu0 0.0
  %9245 = vmatprep.mubr.f32.mxu0 0.0
  %9246 = vmatmul.mubr.f32.gmra.mxu0 %v9177
  %v9247 = vpop.f32.mrf.mxu0
  %v9248 = vadd.f32 0.0, %v9247
  %v9249 = vpop.f32.mrf.mxu0
  %9250 = vdwg.mxu0
  %9251 = vrot.lane.b32.xlu0 %v6006, 104
  %v9252 = vpop.permute.xlu0 %9251
  %9253 = vrot.lane.b32.xlu0 %v6006, 72
  %v9254 = vpop.permute.xlu0 %9253
  %v9255 = vsel %vm1317, %v9252, 0
  %v9257 = vsel %vm1317, %v9254, 0
  %9259 = vmatprep.subr.mxu0 0.0
  %9260 = vmatpush1.xpose.msra.mxu0 0.0
  %9261 = vmatprep.subr.mxu0 0.0
  %9262 = vmatpush1.xpose.msra.mxu0 0.0
  %9263 = vmatprep.subr.mxu0 0.0
  %9264 = vmatpush1.xpose.msra.mxu0 0.0
  %9265 = vmatprep.subr.mxu0 0.0
  %9266 = vmatpush1.xpose.msra.mxu0 0.0
  %9267 = vmatprep.subr.mxu0 0.0
  %9268 = vmatpush1.xpose.msra.mxu0 0.0
  %9269 = vmatprep.subr.mxu0 0.0
  %9270 = vmatpush1.xpose.msra.mxu0 0.0
  %9271 = vmatprep.subr.mxu0 0.0
  %9272 = vmatpush1.xpose.msra.mxu0 0.0
  %9273 = vmatprep.subr.mxu0 0.0
  %9274 = vmatpush1.xpose.msra.mxu0 0.0
  %9275 = vmatprep.subr.mxu0 0.0
  %9276 = vmatpush1.xpose.msra.mxu0 0.0
  %9277 = vmatprep.subr.mxu0 0.0
  %9278 = vmatpush1.xpose.msra.mxu0 0.0
  %9279 = vmatprep.subr.mxu0 0.0
  %9280 = vmatpush1.xpose.msra.mxu0 0.0
  %9281 = vmatprep.subr.mxu0 0.0
  %9282 = vmatpush1.xpose.msra.mxu0 0.0
  %9283 = vmatprep.subr.mxu0 0.0
  %9284 = vmatpush1.xpose.msra.mxu0 0.0
  %9285 = vmatprep.subr.mxu0 0.0
  %9286 = vmatpush1.xpose.msra.mxu0 0.0
  %9287 = vmatprep.subr.mxu0 0.0
  %9288 = vmatpush1.xpose.msra.mxu0 0.0
  %9289 = vmatprep.subr.mxu0 0.0
  %9290 = vmatpush1.xpose.msra.mxu0 %v9257
  %9291 = vmatprep.subr.mxu0 0.0
  %9292 = vmatpush2.xpose.msra.mxu0 0.0
  %9293 = vmatprep.subr.mxu0 0.0
  %9294 = vmatpush2.xpose.msra.mxu0 0.0
  %9295 = vmatprep.subr.mxu0 0.0
  %9296 = vmatpush2.xpose.msra.mxu0 0.0
  %9297 = vmatprep.subr.mxu0 0.0
  %9298 = vmatpush2.xpose.msra.mxu0 0.0
  %9299 = vmatprep.subr.mxu0 0.0
  %9300 = vmatpush2.xpose.msra.mxu0 0.0
  %9301 = vmatprep.subr.mxu0 0.0
  %9302 = vmatpush2.xpose.msra.mxu0 0.0
  %9303 = vmatprep.subr.mxu0 0.0
  %9304 = vmatpush2.xpose.msra.mxu0 0.0
  %9305 = vmatprep.subr.mxu0 0.0
  %9306 = vmatpush2.xpose.msra.mxu0 0.0
  %9307 = vmatprep.subr.mxu0 0.0
  %9308 = vmatpush2.xpose.msra.mxu0 0.0
  %9309 = vmatprep.subr.mxu0 0.0
  %9310 = vmatpush2.xpose.msra.mxu0 0.0
  %9311 = vmatprep.subr.mxu0 0.0
  %9312 = vmatpush2.xpose.msra.mxu0 0.0
  %9313 = vmatprep.subr.mxu0 0.0
  %9314 = vmatpush2.xpose.msra.mxu0 0.0
  %9315 = vmatprep.subr.mxu0 0.0
  %9316 = vmatpush2.xpose.msra.mxu0 0.0
  %9317 = vmatprep.subr.mxu0 0.0
  %9318 = vmatpush2.xpose.msra.mxu0 0.0
  %9319 = vmatprep.subr.mxu0 0.0
  %9320 = vmatpush2.xpose.msra.mxu0 0.0
  %9321 = vmatprep.subr.mxu0 0.0
  %9322 = vmatpush2.xpose.msra.mxu0 0.0
  %9323 = vmatprep.mubr.f32.mxu0 0.0
  %9324 = vmatmul.mubr.f32.gmra.mxu0 %v9255
  %v9325 = vpop.f32.mrf.mxu0
  %v9326 = vadd.f32 0.0, %v9325
  %v9327 = vpop.f32.mrf.mxu0
  %9328 = vdwg.mxu0
  %9329 = vrot.lane.b32.xlu0 %v6011, 104
  %v9330 = vpop.permute.xlu0 %9329
  %9331 = vrot.lane.b32.xlu0 %v6011, 72
  %v9332 = vpop.permute.xlu0 %9331
  %v9333 = vsel %vm1317, %v9330, 0
  %v9335 = vsel %vm1317, %v9332, 0
  %9337 = vmatprep.subr.mxu0 0.0
  %9338 = vmatpush1.xpose.msra.mxu0 0.0
  %9339 = vmatprep.subr.mxu0 0.0
  %9340 = vmatpush1.xpose.msra.mxu0 0.0
  %9341 = vmatprep.subr.mxu0 0.0
  %9342 = vmatpush1.xpose.msra.mxu0 0.0
  %9343 = vmatprep.subr.mxu0 0.0
  %9344 = vmatpush1.xpose.msra.mxu0 0.0
  %9345 = vmatprep.subr.mxu0 0.0
  %9346 = vmatpush1.xpose.msra.mxu0 0.0
  %9347 = vmatprep.subr.mxu0 0.0
  %9348 = vmatpush1.xpose.msra.mxu0 0.0
  %9349 = vmatprep.subr.mxu0 0.0
  %9350 = vmatpush1.xpose.msra.mxu0 0.0
  %9351 = vmatprep.subr.mxu0 0.0
  %9352 = vmatpush1.xpose.msra.mxu0 0.0
  %9353 = vmatprep.subr.mxu0 0.0
  %9354 = vmatpush1.xpose.msra.mxu0 0.0
  %9355 = vmatprep.subr.mxu0 0.0
  %9356 = vmatpush1.xpose.msra.mxu0 0.0
  %9357 = vmatprep.subr.mxu0 0.0
  %9358 = vmatpush1.xpose.msra.mxu0 0.0
  %9359 = vmatprep.subr.mxu0 0.0
  %9360 = vmatpush1.xpose.msra.mxu0 0.0
  %9361 = vmatprep.subr.mxu0 0.0
  %9362 = vmatpush1.xpose.msra.mxu0 0.0
  %9363 = vmatprep.subr.mxu0 0.0
  %9364 = vmatpush1.xpose.msra.mxu0 0.0
  %9365 = vmatprep.subr.mxu0 0.0
  %9366 = vmatpush1.xpose.msra.mxu0 0.0
  %9367 = vmatprep.subr.mxu0 0.0
  %9368 = vmatpush1.xpose.msra.mxu0 %v9335
  %9369 = vmatprep.subr.mxu0 0.0
  %9370 = vmatpush2.xpose.msra.mxu0 0.0
  %9371 = vmatprep.subr.mxu0 0.0
  %9372 = vmatpush2.xpose.msra.mxu0 0.0
  %9373 = vmatprep.subr.mxu0 0.0
  %9374 = vmatpush2.xpose.msra.mxu0 0.0
  %9375 = vmatprep.subr.mxu0 0.0
  %9376 = vmatpush2.xpose.msra.mxu0 0.0
  %9377 = vmatprep.subr.mxu0 0.0
  %9378 = vmatpush2.xpose.msra.mxu0 0.0
  %9379 = vmatprep.subr.mxu0 0.0
  %9380 = vmatpush2.xpose.msra.mxu0 0.0
  %9381 = vmatprep.subr.mxu0 0.0
  %9382 = vmatpush2.xpose.msra.mxu0 0.0
  %9383 = vmatprep.subr.mxu0 0.0
  %9384 = vmatpush2.xpose.msra.mxu0 0.0
  %9385 = vmatprep.subr.mxu0 0.0
  %9386 = vmatpush2.xpose.msra.mxu0 0.0
  %9387 = vmatprep.subr.mxu0 0.0
  %9388 = vmatpush2.xpose.msra.mxu0 0.0
  %9389 = vmatprep.subr.mxu0 0.0
  %9390 = vmatpush2.xpose.msra.mxu0 0.0
  %9391 = vmatprep.subr.mxu0 0.0
  %9392 = vmatpush2.xpose.msra.mxu0 0.0
  %9393 = vmatprep.subr.mxu0 0.0
  %9394 = vmatpush2.xpose.msra.mxu0 0.0
  %9395 = vmatprep.subr.mxu0 0.0
  %9396 = vmatpush2.xpose.msra.mxu0 0.0
  %9397 = vmatprep.subr.mxu0 0.0
  %9398 = vmatpush2.xpose.msra.mxu0 0.0
  %9399 = vmatprep.subr.mxu0 0.0
  %9400 = vmatpush2.xpose.msra.mxu0 0.0
  %9401 = vmatprep.mubr.f32.mxu0 0.0
  %9402 = vmatmul.mubr.f32.gmra.mxu0 %v9333
  %v9403 = vpop.f32.mrf.mxu0
  %v9404 = vadd.f32 0.0, %v9403
  %v9405 = vpop.f32.mrf.mxu0
  %9406 = vdwg.mxu0
  %9407 = vrot.lane.b32.xlu0 %v6014, 104
  %v9408 = vpop.permute.xlu0 %9407
  %9409 = vrot.lane.b32.xlu0 %v6014, 72
  %v9410 = vpop.permute.xlu0 %9409
  %v9411 = vsel %vm1317, %v9408, 0
  %v9413 = vsel %vm1317, %v9410, 0
  %9415 = vmatprep.subr.mxu0 0.0
  %9416 = vmatpush1.xpose.msra.mxu0 0.0
  %9417 = vmatprep.subr.mxu0 0.0
  %9418 = vmatpush1.xpose.msra.mxu0 0.0
  %9419 = vmatprep.subr.mxu0 0.0
  %9420 = vmatpush1.xpose.msra.mxu0 0.0
  %9421 = vmatprep.subr.mxu0 0.0
  %9422 = vmatpush1.xpose.msra.mxu0 0.0
  %9423 = vmatprep.subr.mxu0 0.0
  %9424 = vmatpush1.xpose.msra.mxu0 0.0
  %9425 = vmatprep.subr.mxu0 0.0
  %9426 = vmatpush1.xpose.msra.mxu0 0.0
  %9427 = vmatprep.subr.mxu0 0.0
  %9428 = vmatpush1.xpose.msra.mxu0 0.0
  %9429 = vmatprep.subr.mxu0 0.0
  %9430 = vmatpush1.xpose.msra.mxu0 0.0
  %9431 = vmatprep.subr.mxu0 0.0
  %9432 = vmatpush1.xpose.msra.mxu0 0.0
  %9433 = vmatprep.subr.mxu0 0.0
  %9434 = vmatpush1.xpose.msra.mxu0 0.0
  %9435 = vmatprep.subr.mxu0 0.0
  %9436 = vmatpush1.xpose.msra.mxu0 0.0
  %9437 = vmatprep.subr.mxu0 0.0
  %9438 = vmatpush1.xpose.msra.mxu0 0.0
  %9439 = vmatprep.subr.mxu0 0.0
  %9440 = vmatpush1.xpose.msra.mxu0 0.0
  %9441 = vmatprep.subr.mxu0 0.0
  %9442 = vmatpush1.xpose.msra.mxu0 0.0
  %9443 = vmatprep.subr.mxu0 0.0
  %9444 = vmatpush1.xpose.msra.mxu0 0.0
  %9445 = vmatprep.subr.mxu0 0.0
  %9446 = vmatpush1.xpose.msra.mxu0 %v9413
  %9447 = vmatprep.subr.mxu0 0.0
  %9448 = vmatpush2.xpose.msra.mxu0 0.0
  %9449 = vmatprep.subr.mxu0 0.0
  %9450 = vmatpush2.xpose.msra.mxu0 0.0
  %9451 = vmatprep.subr.mxu0 0.0
  %9452 = vmatpush2.xpose.msra.mxu0 0.0
  %9453 = vmatprep.subr.mxu0 0.0
  %9454 = vmatpush2.xpose.msra.mxu0 0.0
  %9455 = vmatprep.subr.mxu0 0.0
  %9456 = vmatpush2.xpose.msra.mxu0 0.0
  %9457 = vmatprep.subr.mxu0 0.0
  %9458 = vmatpush2.xpose.msra.mxu0 0.0
  %9459 = vmatprep.subr.mxu0 0.0
  %9460 = vmatpush2.xpose.msra.mxu0 0.0
  %9461 = vmatprep.subr.mxu0 0.0
  %9462 = vmatpush2.xpose.msra.mxu0 0.0
  %9463 = vmatprep.subr.mxu0 0.0
  %9464 = vmatpush2.xpose.msra.mxu0 0.0
  %9465 = vmatprep.subr.mxu0 0.0
  %9466 = vmatpush2.xpose.msra.mxu0 0.0
  %9467 = vmatprep.subr.mxu0 0.0
  %9468 = vmatpush2.xpose.msra.mxu0 0.0
  %9469 = vmatprep.subr.mxu0 0.0
  %9470 = vmatpush2.xpose.msra.mxu0 0.0
  %9471 = vmatprep.subr.mxu0 0.0
  %9472 = vmatpush2.xpose.msra.mxu0 0.0
  %9473 = vmatprep.subr.mxu0 0.0
  %9474 = vmatpush2.xpose.msra.mxu0 0.0
  %9475 = vmatprep.subr.mxu0 0.0
  %9476 = vmatpush2.xpose.msra.mxu0 0.0
  %9477 = vmatprep.subr.mxu0 0.0
  %9478 = vmatpush2.xpose.msra.mxu0 0.0
  %9479 = vmatprep.mubr.f32.mxu0 0.0
  %9480 = vmatmul.mubr.f32.gmra.mxu0 %v9411
  %v9481 = vpop.f32.mrf.mxu0
  %v9482 = vadd.f32 0.0, %v9481
  %v9483 = vpop.f32.mrf.mxu0
  %9484 = vdwg.mxu0
  %v9485 = vmul.f32 %v9092, 0.35355338
  %v9486 = vmul.f32 %v9170, 0.35355338
  %v9487 = vmul.f32 %v9248, 0.35355338
  %v9488 = vmul.f32 %v9326, 0.35355338
  %v9489 = vmul.f32 %v9404, 0.35355338
  %v9490 = vmul.f32 %v9482, 0.35355338
  %v9491 = vadd.f32 %v9485, %v4765
  %v9492 = vadd.f32 %v9486, %v4766
  %v9493 = vadd.f32 %v9487, %v4767
  %v9494 = vadd.f32 %v9488, %v4768
  %v9495 = vadd.f32 %v9489, %v4769
  %v9496 = vadd.f32 %v9490, %v4770
  %v9497 = vsel %vm1317, %v9491, -inf
  %9498 = vmax.xlane.f32.xlu0 %v9497
  %v9499 = vpop.xlane.xlu0 %9498
  %v9500 = vsel %vm1317, %v9492, -inf
  %9501 = vmax.xlane.f32.xlu0 %v9500
  %v9502 = vpop.xlane.xlu0 %9501
  %v9503 = vsel %vm1317, %v9493, -inf
  %9504 = vmax.xlane.f32.xlu0 %v9503
  %v9505 = vpop.xlane.xlu0 %9504
  %v9506 = vsel %vm1317, %v9494, -inf
  %9507 = vmax.xlane.f32.xlu0 %v9506
  %v9508 = vpop.xlane.xlu0 %9507
  %v9509 = vsel %vm1317, %v9495, -inf
  %9510 = vmax.xlane.f32.xlu0 %v9509
  %v9511 = vpop.xlane.xlu0 %9510
  %v9512 = vsel %vm1317, %v9496, -inf
  %9513 = vmax.xlane.f32.xlu0 %v9512
  %v9514 = vpop.xlane.xlu0 %9513
  %v9515 = vsub.f32 %v9491, %v9499
  %v9516 = vsub.f32 %v9492, %v9502
  %v9517 = vsub.f32 %v9493, %v9505
  %v9518 = vsub.f32 %v9494, %v9508
  %v9519 = vsub.f32 %v9495, %v9511
  %v9520 = vsub.f32 %v9496, %v9514
  %v9521 = vmul.f32 %v9515, 1.442695
  %v9522 = vpow.pop %v9521
  %v9523 = vmul.f32 %v9516, 1.442695
  %v9524 = vpow.pop %v9523
  %v9525 = vmul.f32 %v9517, 1.442695
  %v9526 = vpow.pop %v9525
  %v9527 = vmul.f32 %v9518, 1.442695
  %v9528 = vpow.pop %v9527
  %v9529 = vmul.f32 %v9519, 1.442695
  %v9530 = vpow.pop %v9529
  %v9531 = vmul.f32 %v9520, 1.442695
  %v9532 = vpow.pop %v9531
  %v9533 = vsel %vm1317, %v9522, 0.0
  %9534 = vadd.xlane.f32.xlu0 %v9533
  %v9535 = vpop.xlane.xlu0 %9534
  %v9536 = vsel %vm1317, %v9524, 0.0
  %9537 = vadd.xlane.f32.xlu0 %v9536
  %v9538 = vpop.xlane.xlu0 %9537
  %v9539 = vsel %vm1317, %v9526, 0.0
  %9540 = vadd.xlane.f32.xlu0 %v9539
  %v9541 = vpop.xlane.xlu0 %9540
  %v9542 = vsel %vm1317, %v9528, 0.0
  %9543 = vadd.xlane.f32.xlu0 %v9542
  %v9544 = vpop.xlane.xlu0 %9543
  %v9545 = vsel %vm1317, %v9530, 0.0
  %9546 = vadd.xlane.f32.xlu0 %v9545
  %v9547 = vpop.xlane.xlu0 %9546
  %v9548 = vsel %vm1317, %v9532, 0.0
  %9549 = vadd.xlane.f32.xlu0 %v9548
  %v9550 = vpop.xlane.xlu0 %9549
  %v9551 = vrcp.pop %v9535
  %v9552 = vrcp.pop %v9538
  %v9553 = vrcp.pop %v9541
  %v9554 = vrcp.pop %v9544
  %v9555 = vrcp.pop %v9547
  %v9556 = vrcp.pop %v9550
  %v9557 = vmul.f32 %v9522, %v9551
  %v9558 = vmul.f32 %v9524, %v9552
  %v9559 = vmul.f32 %v9526, %v9553
  %v9560 = vmul.f32 %v9528, %v9554
  %v9561 = vmul.f32 %v9530, %v9555
  %v9562 = vmul.f32 %v9532, %v9556
  %9563 = vrot.lane.b32.xlu0 %v5995, 40
  %v9564 = vpop.permute.xlu0 %9563
  %v9567 = vsel %vm1317, %v9557, 0
  %9569 = vmatprep.subr.mxu0 0.0
  %9570 = vmatpush1.msra.mxu0 0.0
  %9571 = vmatprep.subr.mxu0 0.0
  %9572 = vmatpush1.msra.mxu0 0.0
  %9573 = vmatprep.subr.mxu0 0.0
  %9574 = vmatpush1.msra.mxu0 0.0
  %9575 = vmatprep.subr.mxu0 0.0
  %9576 = vmatpush1.msra.mxu0 0.0
  %9577 = vmatprep.subr.mxu0 0.0
  %9578 = vmatpush1.msra.mxu0 0.0
  %9579 = vmatprep.subr.mxu0 0.0
  %9580 = vmatpush1.msra.mxu0 0.0
  %9581 = vmatprep.subr.mxu0 0.0
  %9582 = vmatpush1.msra.mxu0 0.0
  %9583 = vmatprep.subr.mxu0 0.0
  %9584 = vmatpush1.msra.mxu0 0.0
  %9585 = vmatprep.subr.mxu0 0.0
  %9586 = vmatpush1.msra.mxu0 0.0
  %9587 = vmatprep.subr.mxu0 0.0
  %9588 = vmatpush1.msra.mxu0 0.0
  %9589 = vmatprep.subr.mxu0 0.0
  %9590 = vmatpush1.msra.mxu0 0.0
  %9591 = vmatprep.subr.mxu0 0.0
  %9592 = vmatpush1.msra.mxu0 0.0
  %9593 = vmatprep.subr.mxu0 0.0
  %9594 = vmatpush1.msra.mxu0 0.0
  %9595 = vmatprep.subr.mxu0 0.0
  %9596 = vmatpush1.msra.mxu0 0.0
  %9597 = vmatprep.subr.mxu0 0.0
  %9598 = vmatpush1.msra.mxu0 0.0
  %9599 = vmatprep.subr.mxu0 0.0
  %9600 = vmatpush1.msra.mxu0 %v9564
  %9601 = vmatprep.subr.mxu0 0.0
  %9602 = vmatpush2.msra.mxu0 0.0
  %9603 = vmatprep.subr.mxu0 0.0
  %9604 = vmatpush2.msra.mxu0 0.0
  %9605 = vmatprep.subr.mxu0 0.0
  %9606 = vmatpush2.msra.mxu0 0.0
  %9607 = vmatprep.subr.mxu0 0.0
  %9608 = vmatpush2.msra.mxu0 0.0
  %9609 = vmatprep.subr.mxu0 0.0
  %9610 = vmatpush2.msra.mxu0 0.0
  %9611 = vmatprep.subr.mxu0 0.0
  %9612 = vmatpush2.msra.mxu0 0.0
  %9613 = vmatprep.subr.mxu0 0.0
  %9614 = vmatpush2.msra.mxu0 0.0
  %9615 = vmatprep.subr.mxu0 0.0
  %9616 = vmatpush2.msra.mxu0 0.0
  %9617 = vmatprep.subr.mxu0 0.0
  %9618 = vmatpush2.msra.mxu0 0.0
  %9619 = vmatprep.subr.mxu0 0.0
  %9620 = vmatpush2.msra.mxu0 0.0
  %9621 = vmatprep.subr.mxu0 0.0
  %9622 = vmatpush2.msra.mxu0 0.0
  %9623 = vmatprep.subr.mxu0 0.0
  %9624 = vmatpush2.msra.mxu0 0.0
  %9625 = vmatprep.subr.mxu0 0.0
  %9626 = vmatpush2.msra.mxu0 0.0
  %9627 = vmatprep.subr.mxu0 0.0
  %9628 = vmatpush2.msra.mxu0 0.0
  %9629 = vmatprep.subr.mxu0 0.0
  %9630 = vmatpush2.msra.mxu0 0.0
  %9631 = vmatprep.subr.mxu0 0.0
  %9632 = vmatpush2.msra.mxu0 0.0
  %9633 = vmatprep.mubr.f32.mxu0 0.0
  %9634 = vmatmul.mubr.f32.gmra.mxu0 %v9567
  %v9635 = vpop.f32.mrf.mxu0
  %v9636 = vadd.f32 0.0, %v9635
  %v9637 = vpop.f32.mrf.mxu0
  %9638 = vdwg.mxu0
  %9639 = vrot.lane.b32.xlu0 %v5998, 40
  %v9640 = vpop.permute.xlu0 %9639
  %v9643 = vsel %vm1317, %v9558, 0
  %9645 = vmatprep.subr.mxu0 0.0
  %9646 = vmatpush1.msra.mxu0 0.0
  %9647 = vmatprep.subr.mxu0 0.0
  %9648 = vmatpush1.msra.mxu0 0.0
  %9649 = vmatprep.subr.mxu0 0.0
  %9650 = vmatpush1.msra.mxu0 0.0
  %9651 = vmatprep.subr.mxu0 0.0
  %9652 = vmatpush1.msra.mxu0 0.0
  %9653 = vmatprep.subr.mxu0 0.0
  %9654 = vmatpush1.msra.mxu0 0.0
  %9655 = vmatprep.subr.mxu0 0.0
  %9656 = vmatpush1.msra.mxu0 0.0
  %9657 = vmatprep.subr.mxu0 0.0
  %9658 = vmatpush1.msra.mxu0 0.0
  %9659 = vmatprep.subr.mxu0 0.0
  %9660 = vmatpush1.msra.mxu0 0.0
  %9661 = vmatprep.subr.mxu0 0.0
  %9662 = vmatpush1.msra.mxu0 0.0
  %9663 = vmatprep.subr.mxu0 0.0
  %9664 = vmatpush1.msra.mxu0 0.0
  %9665 = vmatprep.subr.mxu0 0.0
  %9666 = vmatpush1.msra.mxu0 0.0
  %9667 = vmatprep.subr.mxu0 0.0
  %9668 = vmatpush1.msra.mxu0 0.0
  %9669 = vmatprep.subr.mxu0 0.0
  %9670 = vmatpush1.msra.mxu0 0.0
  %9671 = vmatprep.subr.mxu0 0.0
  %9672 = vmatpush1.msra.mxu0 0.0
  %9673 = vmatprep.subr.mxu0 0.0
  %9674 = vmatpush1.msra.mxu0 0.0
  %9675 = vmatprep.subr.mxu0 0.0
  %9676 = vmatpush1.msra.mxu0 %v9640
  %9677 = vmatprep.subr.mxu0 0.0
  %9678 = vmatpush2.msra.mxu0 0.0
  %9679 = vmatprep.subr.mxu0 0.0
  %9680 = vmatpush2.msra.mxu0 0.0
  %9681 = vmatprep.subr.mxu0 0.0
  %9682 = vmatpush2.msra.mxu0 0.0
  %9683 = vmatprep.subr.mxu0 0.0
  %9684 = vmatpush2.msra.mxu0 0.0
  %9685 = vmatprep.subr.mxu0 0.0
  %9686 = vmatpush2.msra.mxu0 0.0
  %9687 = vmatprep.subr.mxu0 0.0
  %9688 = vmatpush2.msra.mxu0 0.0
  %9689 = vmatprep.subr.mxu0 0.0
  %9690 = vmatpush2.msra.mxu0 0.0
  %9691 = vmatprep.subr.mxu0 0.0
  %9692 = vmatpush2.msra.mxu0 0.0
  %9693 = vmatprep.subr.mxu0 0.0
  %9694 = vmatpush2.msra.mxu0 0.0
  %9695 = vmatprep.subr.mxu0 0.0
  %9696 = vmatpush2.msra.mxu0 0.0
  %9697 = vmatprep.subr.mxu0 0.0
  %9698 = vmatpush2.msra.mxu0 0.0
  %9699 = vmatprep.subr.mxu0 0.0
  %9700 = vmatpush2.msra.mxu0 0.0
  %9701 = vmatprep.subr.mxu0 0.0
  %9702 = vmatpush2.msra.mxu0 0.0
  %9703 = vmatprep.subr.mxu0 0.0
  %9704 = vmatpush2.msra.mxu0 0.0
  %9705 = vmatprep.subr.mxu0 0.0
  %9706 = vmatpush2.msra.mxu0 0.0
  %9707 = vmatprep.subr.mxu0 0.0
  %9708 = vmatpush2.msra.mxu0 0.0
  %9709 = vmatprep.mubr.f32.mxu0 0.0
  %9710 = vmatmul.mubr.f32.gmra.mxu0 %v9643
  %v9711 = vpop.f32.mrf.mxu0
  %v9712 = vadd.f32 0.0, %v9711
  %v9713 = vpop.f32.mrf.mxu0
  %9714 = vdwg.mxu0
  %9715 = vrot.lane.b32.xlu0 %v6003, 40
  %v9716 = vpop.permute.xlu0 %9715
  %v9719 = vsel %vm1317, %v9559, 0
  %9721 = vmatprep.subr.mxu0 0.0
  %9722 = vmatpush1.msra.mxu0 0.0
  %9723 = vmatprep.subr.mxu0 0.0
  %9724 = vmatpush1.msra.mxu0 0.0
  %9725 = vmatprep.subr.mxu0 0.0
  %9726 = vmatpush1.msra.mxu0 0.0
  %9727 = vmatprep.subr.mxu0 0.0
  %9728 = vmatpush1.msra.mxu0 0.0
  %9729 = vmatprep.subr.mxu0 0.0
  %9730 = vmatpush1.msra.mxu0 0.0
  %9731 = vmatprep.subr.mxu0 0.0
  %9732 = vmatpush1.msra.mxu0 0.0
  %9733 = vmatprep.subr.mxu0 0.0
  %9734 = vmatpush1.msra.mxu0 0.0
  %9735 = vmatprep.subr.mxu0 0.0
  %9736 = vmatpush1.msra.mxu0 0.0
  %9737 = vmatprep.subr.mxu0 0.0
  %9738 = vmatpush1.msra.mxu0 0.0
  %9739 = vmatprep.subr.mxu0 0.0
  %9740 = vmatpush1.msra.mxu0 0.0
  %9741 = vmatprep.subr.mxu0 0.0
  %9742 = vmatpush1.msra.mxu0 0.0
  %9743 = vmatprep.subr.mxu0 0.0
  %9744 = vmatpush1.msra.mxu0 0.0
  %9745 = vmatprep.subr.mxu0 0.0
  %9746 = vmatpush1.msra.mxu0 0.0
  %9747 = vmatprep.subr.mxu0 0.0
  %9748 = vmatpush1.msra.mxu0 0.0
  %9749 = vmatprep.subr.mxu0 0.0
  %9750 = vmatpush1.msra.mxu0 0.0
  %9751 = vmatprep.subr.mxu0 0.0
  %9752 = vmatpush1.msra.mxu0 %v9716
  %9753 = vmatprep.subr.mxu0 0.0
  %9754 = vmatpush2.msra.mxu0 0.0
  %9755 = vmatprep.subr.mxu0 0.0
  %9756 = vmatpush2.msra.mxu0 0.0
  %9757 = vmatprep.subr.mxu0 0.0
  %9758 = vmatpush2.msra.mxu0 0.0
  %9759 = vmatprep.subr.mxu0 0.0
  %9760 = vmatpush2.msra.mxu0 0.0
  %9761 = vmatprep.subr.mxu0 0.0
  %9762 = vmatpush2.msra.mxu0 0.0
  %9763 = vmatprep.subr.mxu0 0.0
  %9764 = vmatpush2.msra.mxu0 0.0
  %9765 = vmatprep.subr.mxu0 0.0
  %9766 = vmatpush2.msra.mxu0 0.0
  %9767 = vmatprep.subr.mxu0 0.0
  %9768 = vmatpush2.msra.mxu0 0.0
  %9769 = vmatprep.subr.mxu0 0.0
  %9770 = vmatpush2.msra.mxu0 0.0
  %9771 = vmatprep.subr.mxu0 0.0
  %9772 = vmatpush2.msra.mxu0 0.0
  %9773 = vmatprep.subr.mxu0 0.0
  %9774 = vmatpush2.msra.mxu0 0.0
  %9775 = vmatprep.subr.mxu0 0.0
  %9776 = vmatpush2.msra.mxu0 0.0
  %9777 = vmatprep.subr.mxu0 0.0
  %9778 = vmatpush2.msra.mxu0 0.0
  %9779 = vmatprep.subr.mxu0 0.0
  %9780 = vmatpush2.msra.mxu0 0.0
  %9781 = vmatprep.subr.mxu0 0.0
  %9782 = vmatpush2.msra.mxu0 0.0
  %9783 = vmatprep.subr.mxu0 0.0
  %9784 = vmatpush2.msra.mxu0 0.0
  %9785 = vmatprep.mubr.f32.mxu0 0.0
  %9786 = vmatmul.mubr.f32.gmra.mxu0 %v9719
  %v9787 = vpop.f32.mrf.mxu0
  %v9788 = vadd.f32 0.0, %v9787
  %v9789 = vpop.f32.mrf.mxu0
  %9790 = vdwg.mxu0
  %9791 = vrot.lane.b32.xlu0 %v6006, 40
  %v9792 = vpop.permute.xlu0 %9791
  %v9795 = vsel %vm1317, %v9560, 0
  %9797 = vmatprep.subr.mxu0 0.0
  %9798 = vmatpush1.msra.mxu0 0.0
  %9799 = vmatprep.subr.mxu0 0.0
  %9800 = vmatpush1.msra.mxu0 0.0
  %9801 = vmatprep.subr.mxu0 0.0
  %9802 = vmatpush1.msra.mxu0 0.0
  %9803 = vmatprep.subr.mxu0 0.0
  %9804 = vmatpush1.msra.mxu0 0.0
  %9805 = vmatprep.subr.mxu0 0.0
  %9806 = vmatpush1.msra.mxu0 0.0
  %9807 = vmatprep.subr.mxu0 0.0
  %9808 = vmatpush1.msra.mxu0 0.0
  %9809 = vmatprep.subr.mxu0 0.0
  %9810 = vmatpush1.msra.mxu0 0.0
  %9811 = vmatprep.subr.mxu0 0.0
  %9812 = vmatpush1.msra.mxu0 0.0
  %9813 = vmatprep.subr.mxu0 0.0
  %9814 = vmatpush1.msra.mxu0 0.0
  %9815 = vmatprep.subr.mxu0 0.0
  %9816 = vmatpush1.msra.mxu0 0.0
  %9817 = vmatprep.subr.mxu0 0.0
  %9818 = vmatpush1.msra.mxu0 0.0
  %9819 = vmatprep.subr.mxu0 0.0
  %9820 = vmatpush1.msra.mxu0 0.0
  %9821 = vmatprep.subr.mxu0 0.0
  %9822 = vmatpush1.msra.mxu0 0.0
  %9823 = vmatprep.subr.mxu0 0.0
  %9824 = vmatpush1.msra.mxu0 0.0
  %9825 = vmatprep.subr.mxu0 0.0
  %9826 = vmatpush1.msra.mxu0 0.0
  %9827 = vmatprep.subr.mxu0 0.0
  %9828 = vmatpush1.msra.mxu0 %v9792
  %9829 = vmatprep.subr.mxu0 0.0
  %9830 = vmatpush2.msra.mxu0 0.0
  %9831 = vmatprep.subr.mxu0 0.0
  %9832 = vmatpush2.msra.mxu0 0.0
  %9833 = vmatprep.subr.mxu0 0.0
  %9834 = vmatpush2.msra.mxu0 0.0
  %9835 = vmatprep.subr.mxu0 0.0
  %9836 = vmatpush2.msra.mxu0 0.0
  %9837 = vmatprep.subr.mxu0 0.0
  %9838 = vmatpush2.msra.mxu0 0.0
  %9839 = vmatprep.subr.mxu0 0.0
  %9840 = vmatpush2.msra.mxu0 0.0
  %9841 = vmatprep.subr.mxu0 0.0
  %9842 = vmatpush2.msra.mxu0 0.0
  %9843 = vmatprep.subr.mxu0 0.0
  %9844 = vmatpush2.msra.mxu0 0.0
  %9845 = vmatprep.subr.mxu0 0.0
  %9846 = vmatpush2.msra.mxu0 0.0
  %9847 = vmatprep.subr.mxu0 0.0
  %9848 = vmatpush2.msra.mxu0 0.0
  %9849 = vmatprep.subr.mxu0 0.0
  %9850 = vmatpush2.msra.mxu0 0.0
  %9851 = vmatprep.subr.mxu0 0.0
  %9852 = vmatpush2.msra.mxu0 0.0
  %9853 = vmatprep.subr.mxu0 0.0
  %9854 = vmatpush2.msra.mxu0 0.0
  %9855 = vmatprep.subr.mxu0 0.0
  %9856 = vmatpush2.msra.mxu0 0.0
  %9857 = vmatprep.subr.mxu0 0.0
  %9858 = vmatpush2.msra.mxu0 0.0
  %9859 = vmatprep.subr.mxu0 0.0
  %9860 = vmatpush2.msra.mxu0 0.0
  %9861 = vmatprep.mubr.f32.mxu0 0.0
  %9862 = vmatmul.mubr.f32.gmra.mxu0 %v9795
  %v9863 = vpop.f32.mrf.mxu0
  %v9864 = vadd.f32 0.0, %v9863
  %v9865 = vpop.f32.mrf.mxu0
  %9866 = vdwg.mxu0
  %9867 = vrot.lane.b32.xlu0 %v6011, 40
  %v9868 = vpop.permute.xlu0 %9867
  %v9871 = vsel %vm1317, %v9561, 0
  %9873 = vmatprep.subr.mxu0 0.0
  %9874 = vmatpush1.msra.mxu0 0.0
  %9875 = vmatprep.subr.mxu0 0.0
  %9876 = vmatpush1.msra.mxu0 0.0
  %9877 = vmatprep.subr.mxu0 0.0
  %9878 = vmatpush1.msra.mxu0 0.0
  %9879 = vmatprep.subr.mxu0 0.0
  %9880 = vmatpush1.msra.mxu0 0.0
  %9881 = vmatprep.subr.mxu0 0.0
  %9882 = vmatpush1.msra.mxu0 0.0
  %9883 = vmatprep.subr.mxu0 0.0
  %9884 = vmatpush1.msra.mxu0 0.0
  %9885 = vmatprep.subr.mxu0 0.0
  %9886 = vmatpush1.msra.mxu0 0.0
  %9887 = vmatprep.subr.mxu0 0.0
  %9888 = vmatpush1.msra.mxu0 0.0
  %9889 = vmatprep.subr.mxu0 0.0
  %9890 = vmatpush1.msra.mxu0 0.0
  %9891 = vmatprep.subr.mxu0 0.0
  %9892 = vmatpush1.msra.mxu0 0.0
  %9893 = vmatprep.subr.mxu0 0.0
  %9894 = vmatpush1.msra.mxu0 0.0
  %9895 = vmatprep.subr.mxu0 0.0
  %9896 = vmatpush1.msra.mxu0 0.0
  %9897 = vmatprep.subr.mxu0 0.0
  %9898 = vmatpush1.msra.mxu0 0.0
  %9899 = vmatprep.subr.mxu0 0.0
  %9900 = vmatpush1.msra.mxu0 0.0
  %9901 = vmatprep.subr.mxu0 0.0
  %9902 = vmatpush1.msra.mxu0 0.0
  %9903 = vmatprep.subr.mxu0 0.0
  %9904 = vmatpush1.msra.mxu0 %v9868
  %9905 = vmatprep.subr.mxu0 0.0
  %9906 = vmatpush2.msra.mxu0 0.0
  %9907 = vmatprep.subr.mxu0 0.0
  %9908 = vmatpush2.msra.mxu0 0.0
  %9909 = vmatprep.subr.mxu0 0.0
  %9910 = vmatpush2.msra.mxu0 0.0
  %9911 = vmatprep.subr.mxu0 0.0
  %9912 = vmatpush2.msra.mxu0 0.0
  %9913 = vmatprep.subr.mxu0 0.0
  %9914 = vmatpush2.msra.mxu0 0.0
  %9915 = vmatprep.subr.mxu0 0.0
  %9916 = vmatpush2.msra.mxu0 0.0
  %9917 = vmatprep.subr.mxu0 0.0
  %9918 = vmatpush2.msra.mxu0 0.0
  %9919 = vmatprep.subr.mxu0 0.0
  %9920 = vmatpush2.msra.mxu0 0.0
  %9921 = vmatprep.subr.mxu0 0.0
  %9922 = vmatpush2.msra.mxu0 0.0
  %9923 = vmatprep.subr.mxu0 0.0
  %9924 = vmatpush2.msra.mxu0 0.0
  %9925 = vmatprep.subr.mxu0 0.0
  %9926 = vmatpush2.msra.mxu0 0.0
  %9927 = vmatprep.subr.mxu0 0.0
  %9928 = vmatpush2.msra.mxu0 0.0
  %9929 = vmatprep.subr.mxu0 0.0
  %9930 = vmatpush2.msra.mxu0 0.0
  %9931 = vmatprep.subr.mxu0 0.0
  %9932 = vmatpush2.msra.mxu0 0.0
  %9933 = vmatprep.subr.mxu0 0.0
  %9934 = vmatpush2.msra.mxu0 0.0
  %9935 = vmatprep.subr.mxu0 0.0
  %9936 = vmatpush2.msra.mxu0 0.0
  %9937 = vmatprep.mubr.f32.mxu0 0.0
  %9938 = vmatmul.mubr.f32.gmra.mxu0 %v9871
  %v9939 = vpop.f32.mrf.mxu0
  %v9940 = vadd.f32 0.0, %v9939
  %v9941 = vpop.f32.mrf.mxu0
  %9942 = vdwg.mxu0
  %9943 = vrot.lane.b32.xlu0 %v6014, 40
  %v9944 = vpop.permute.xlu0 %9943
  %v9947 = vsel %vm1317, %v9562, 0
  %9949 = vmatprep.subr.mxu0 0.0
  %9950 = vmatpush1.msra.mxu0 0.0
  %9951 = vmatprep.subr.mxu0 0.0
  %9952 = vmatpush1.msra.mxu0 0.0
  %9953 = vmatprep.subr.mxu0 0.0
  %9954 = vmatpush1.msra.mxu0 0.0
  %9955 = vmatprep.subr.mxu0 0.0
  %9956 = vmatpush1.msra.mxu0 0.0
  %9957 = vmatprep.subr.mxu0 0.0
  %9958 = vmatpush1.msra.mxu0 0.0
  %9959 = vmatprep.subr.mxu0 0.0
  %9960 = vmatpush1.msra.mxu0 0.0
  %9961 = vmatprep.subr.mxu0 0.0
  %9962 = vmatpush1.msra.mxu0 0.0
  %9963 = vmatprep.subr.mxu0 0.0
  %9964 = vmatpush1.msra.mxu0 0.0
  %9965 = vmatprep.subr.mxu0 0.0
  %9966 = vmatpush1.msra.mxu0 0.0
  %9967 = vmatprep.subr.mxu0 0.0
  %9968 = vmatpush1.msra.mxu0 0.0
  %9969 = vmatprep.subr.mxu0 0.0
  %9970 = vmatpush1.msra.mxu0 0.0
  %9971 = vmatprep.subr.mxu0 0.0
  %9972 = vmatpush1.msra.mxu0 0.0
  %9973 = vmatprep.subr.mxu0 0.0
  %9974 = vmatpush1.msra.mxu0 0.0
  %9975 = vmatprep.subr.mxu0 0.0
  %9976 = vmatpush1.msra.mxu0 0.0
  %9977 = vmatprep.subr.mxu0 0.0
  %9978 = vmatpush1.msra.mxu0 0.0
  %9979 = vmatprep.subr.mxu0 0.0
  %9980 = vmatpush1.msra.mxu0 %v9944
  %9981 = vmatprep.subr.mxu0 0.0
  %9982 = vmatpush2.msra.mxu0 0.0
  %9983 = vmatprep.subr.mxu0 0.0
  %9984 = vmatpush2.msra.mxu0 0.0
  %9985 = vmatprep.subr.mxu0 0.0
  %9986 = vmatpush2.msra.mxu0 0.0
  %9987 = vmatprep.subr.mxu0 0.0
  %9988 = vmatpush2.msra.mxu0 0.0
  %9989 = vmatprep.subr.mxu0 0.0
  %9990 = vmatpush2.msra.mxu0 0.0
  %9991 = vmatprep.subr.mxu0 0.0
  %9992 = vmatpush2.msra.mxu0 0.0
  %9993 = vmatprep.subr.mxu0 0.0
  %9994 = vmatpush2.msra.mxu0 0.0
  %9995 = vmatprep.subr.mxu0 0.0
  %9996 = vmatpush2.msra.mxu0 0.0
  %9997 = vmatprep.subr.mxu0 0.0
  %9998 = vmatpush2.msra.mxu0 0.0
  %9999 = vmatprep.subr.mxu0 0.0
  %10000 = vmatpush2.msra.mxu0 0.0
  %10001 = vmatprep.subr.mxu0 0.0
  %10002 = vmatpush2.msra.mxu0 0.0
  %10003 = vmatprep.subr.mxu0 0.0
  %10004 = vmatpush2.msra.mxu0 0.0
  %10005 = vmatprep.subr.mxu0 0.0
  %10006 = vmatpush2.msra.mxu0 0.0
  %10007 = vmatprep.subr.mxu0 0.0
  %10008 = vmatpush2.msra.mxu0 0.0
  %10009 = vmatprep.subr.mxu0 0.0
  %10010 = vmatpush2.msra.mxu0 0.0
  %10011 = vmatprep.subr.mxu0 0.0
  %10012 = vmatpush2.msra.mxu0 0.0
  %10013 = vmatprep.mubr.f32.mxu0 0.0
  %10014 = vmatmul.mubr.f32.gmra.mxu0 %v9947
  %v10015 = vpop.f32.mrf.mxu0
  %v10016 = vadd.f32 0.0, %v10015
  %v10017 = vpop.f32.mrf.mxu0
  %10018 = vdwg.mxu0
  %10025 = vrot.lane.b32.xlu0 %v7632, 8
  %v10026 = vpop.permute.xlu0 %10025
  %10027 = vrot.lane.b32.xlu0 %v7708, 8
  %v10028 = vpop.permute.xlu0 %10027
  %10029 = vrot.lane.b32.xlu0 %v7784, 8
  %v10030 = vpop.permute.xlu0 %10029
  %10031 = vrot.lane.b32.xlu0 %v7860, 8
  %v10032 = vpop.permute.xlu0 %10031
  %10033 = vrot.lane.b32.xlu0 %v7936, 8
  %v10034 = vpop.permute.xlu0 %10033
  %10035 = vrot.lane.b32.xlu0 %v8012, 8
  %v10036 = vpop.permute.xlu0 %10035
  %10049 = vrot.lane.b32.xlu0 %v8634, 16
  %v10050 = vpop.permute.xlu0 %10049
  %10051 = vrot.lane.b32.xlu0 %v8710, 16
  %v10052 = vpop.permute.xlu0 %10051
  %10053 = vrot.lane.b32.xlu0 %v8786, 16
  %v10054 = vpop.permute.xlu0 %10053
  %10055 = vrot.lane.b32.xlu0 %v8862, 16
  %v10056 = vpop.permute.xlu0 %10055
  %10057 = vrot.lane.b32.xlu0 %v8938, 16
  %v10058 = vpop.permute.xlu0 %10057
  %10059 = vrot.lane.b32.xlu0 %v9014, 16
  %v10060 = vpop.permute.xlu0 %10059
  %10073 = vrot.lane.b32.xlu0 %v9636, 24
  %v10074 = vpop.permute.xlu0 %10073
  %10075 = vrot.lane.b32.xlu0 %v9712, 24
  %v10076 = vpop.permute.xlu0 %10075
  %10077 = vrot.lane.b32.xlu0 %v9788, 24
  %v10078 = vpop.permute.xlu0 %10077
  %10079 = vrot.lane.b32.xlu0 %v9864, 24
  %v10080 = vpop.permute.xlu0 %10079
  %10081 = vrot.lane.b32.xlu0 %v9940, 24
  %v10082 = vpop.permute.xlu0 %10081
  %10083 = vrot.lane.b32.xlu0 %v10016, 24
  %v10084 = vpop.permute.xlu0 %10083
  %v10091 = vsel %vm1317, %v6630, %v10026
  %v10092 = vsel %vm1317, %v6706, %v10028
  %v10093 = vsel %vm1317, %v6782, %v10030
  %v10094 = vsel %vm1317, %v6858, %v10032
  %v10095 = vsel %vm1317, %v6934, %v10034
  %v10096 = vsel %vm1317, %v7010, %v10036
  %v10097 = vsel %vm5371, %v10091, %v10050
  %v10098 = vsel %vm5371, %v10092, %v10052
  %v10099 = vsel %vm5371, %v10093, %v10054
  %v10100 = vsel %vm5371, %v10094, %v10056
  %v10101 = vsel %vm5371, %v10095, %v10058
  %v10102 = vsel %vm5371, %v10096, %v10060
  %v10103 = vsel %vm5378, %v10097, %v10074
  %v10104 = vsel %vm5378, %v10098, %v10076
  %v10105 = vsel %vm5378, %v10099, %v10078
  %v10106 = vsel %vm5378, %v10100, %v10080
  %v10107 = vsel %vm5378, %v10101, %v10082
  %v10108 = vsel %vm5378, %v10102, %v10084
  %s10109 = scalar_lea.vmem %s7, 16
  %v10110 = vld [vmem:[%s10109] sm:$0xf]
  %v10111 = vld [vmem:[%s10109 + $0x4] sm:$0xf]
  %v10112 = vld [vmem:[%s10109 + $0x8] sm:$0xf]
  %v10113 = vld [vmem:[%s10109 + $0xc] sm:$0xf]
  %s10114 = scalar_lea.vmem %s8, 1
  %v10115 = vld [vmem:[%s10114] sm:$0x1]
  %v10116 = vpack.c.bf16 %v10104, %v10103
  %v10117 = vpack.c.bf16 %v10106, %v10105
  %v10118 = vpack.c.bf16 %v10108, %v10107
  %v10120 = vlaneseq
  %v10121 = vshrl.u32 %v10120, 7
  %v10122 = vsub.s32 0, %v10121
  %v10123 = vrot.slane %v10115, %v10122
  %v10129 = vunpack.c.l.b16 %v10110
  %v10130 = vunpack.c.l.b16 %v10111
  %v10131 = vunpack.c.l.b16 %v10112
  %v10132 = vunpack.c.l.b16 %v10113
  %v10133 = vpack.c.b16 %v10130, %v10129
  %v10134 = vpack.c.b16 %v10132, %v10131
  %v10138 = vsel %vm531, %v10116, 0
  %v10141 = vsel %vm531, %v10117, 0
  %v10144 = vsel %vm531, %v10118, 0
  %10146 = vmatprep.subr.bf16.mxu0 0
  %10147 = vmatpush1.bf16.msra.mxu0 0
  %10148 = vmatprep.subr.bf16.mxu0 0
  %10149 = vmatpush1.bf16.msra.mxu0 0
  %10150 = vmatprep.subr.bf16.mxu0 0
  %10151 = vmatpush1.bf16.msra.mxu0 0
  %10152 = vmatprep.subr.bf16.mxu0 0
  %10153 = vmatpush1.bf16.msra.mxu0 0
  %10154 = vmatprep.subr.bf16.mxu0 0
  %10155 = vmatpush1.bf16.msra.mxu0 0
  %10156 = vmatprep.subr.bf16.mxu0 0
  %10157 = vmatpush1.bf16.msra.mxu0 0
  %10158 = vmatprep.subr.bf16.mxu0 0
  %10159 = vmatpush1.bf16.msra.mxu0 %v10134
  %10160 = vmatprep.subr.bf16.mxu0 0
  %10161 = vmatpush1.bf16.msra.mxu0 %v10133
  %10162 = vmatprep.subr.bf16.mxu0 0
  %10163 = vmatpush2.bf16.msra.mxu0 0
  %10164 = vmatprep.subr.bf16.mxu0 0
  %10165 = vmatpush2.bf16.msra.mxu0 0
  %10166 = vmatprep.subr.bf16.mxu0 0
  %10167 = vmatpush2.bf16.msra.mxu0 0
  %10168 = vmatprep.subr.bf16.mxu0 0
  %10169 = vmatpush2.bf16.msra.mxu0 0
  %10170 = vmatprep.subr.bf16.mxu0 0
  %10171 = vmatpush2.bf16.msra.mxu0 0
  %10172 = vmatprep.subr.bf16.mxu0 0
  %10173 = vmatpush2.bf16.msra.mxu0 0
  %10174 = vmatprep.subr.bf16.mxu0 0
  %10175 = vmatpush2.bf16.msra.mxu0 0
  %10176 = vmatprep.subr.bf16.mxu0 0
  %10177 = vmatpush2.bf16.msra.mxu0 0
  %10178 = vmatprep.mubr.bf16.mxu0 0
  %10179 = vmatmul.mubr.bf16.gmra.mxu0 %v10138
  %v10180 = vpop.f32.mrf.mxu0
  %v10181 = vadd.f32 %v10123, %v10180
  %v10182 = vpop.f32.mrf.mxu0
  %v10183 = vpop.f32.mrf.mxu0
  %v10184 = vadd.f32 %v10123, %v10183
  %v10185 = vpop.f32.mrf.mxu0
  %10186 = vmatprep.mubr.bf16.mxu0 0
  %10187 = vmatmul.mubr.bf16.gmra.mxu0 %v10141
  %v10188 = vpop.f32.mrf.mxu0
  %v10189 = vadd.f32 %v10123, %v10188
  %v10190 = vpop.f32.mrf.mxu0
  %v10191 = vpop.f32.mrf.mxu0
  %v10192 = vadd.f32 %v10123, %v10191
  %v10193 = vpop.f32.mrf.mxu0
  %10194 = vmatprep.mubr.bf16.mxu0 0
  %10195 = vmatmul.mubr.bf16.gmra.mxu0 %v10144
  %v10196 = vpop.f32.mrf.mxu0
  %v10197 = vadd.f32 %v10123, %v10196
  %v10198 = vpop.f32.mrf.mxu0
  %v10199 = vpop.f32.mrf.mxu0
  %v10200 = vadd.f32 %v10123, %v10199
  %v10201 = vpop.f32.mrf.mxu0
  %10202 = vdwg.mxu0
  %s10203 = scalar_lea.vmem %s9, 1
  %v10204 = vld [vmem:[%s10203] sm:$0x1]
  %s10205 = scalar_lea.vmem %s10, 1
  %v10206 = vld [vmem:[%s10205] sm:$0x1]
  %v10207 = vsel %vm531, %v10181, 0.0
  %10208 = vadd.xlane.f32.xlu0 %v10207
  %v10209 = vpop.xlane.xlu0 %10208
  %v10210 = vsel %vm531, %v10184, 0.0
  %10211 = vadd.xlane.f32.xlu0 %v10210
  %v10212 = vpop.xlane.xlu0 %10211
  %v10213 = vsel %vm531, %v10189, 0.0
  %10214 = vadd.xlane.f32.xlu0 %v10213
  %v10215 = vpop.xlane.xlu0 %10214
  %v10216 = vsel %vm531, %v10192, 0.0
  %10217 = vadd.xlane.f32.xlu0 %v10216
  %v10218 = vpop.xlane.xlu0 %10217
  %v10219 = vsel %vm531, %v10197, 0.0
  %10220 = vadd.xlane.f32.xlu0 %v10219
  %v10221 = vpop.xlane.xlu0 %10220
  %v10222 = vsel %vm531, %v10200, 0.0
  %10223 = vadd.xlane.f32.xlu0 %v10222
  %v10224 = vpop.xlane.xlu0 %10223
  %v10225 = vmul.f32 %v10209, %v5497
  %v10226 = vmul.f32 %v10212, %v5497
  %v10227 = vmul.f32 %v10215, %v5497
  %v10228 = vmul.f32 %v10218, %v5497
  %v10229 = vmul.f32 %v10221, %v5497
  %v10230 = vmul.f32 %v10224, %v5497
  %v10231 = vsub.f32 %v10181, %v10225
  %v10232 = vsub.f32 %v10184, %v10226
  %v10233 = vsub.f32 %v10189, %v10227
  %v10234 = vsub.f32 %v10192, %v10228
  %v10235 = vsub.f32 %v10197, %v10229
  %v10236 = vsub.f32 %v10200, %v10230
  %v10237 = vmul.f32 %v10231, %v10231
  %v10238 = vmul.f32 %v10232, %v10232
  %v10239 = vmul.f32 %v10233, %v10233
  %v10240 = vmul.f32 %v10234, %v10234
  %v10241 = vmul.f32 %v10235, %v10235
  %v10242 = vmul.f32 %v10236, %v10236
  %v10243 = vsel %vm531, %v10237, 0.0
  %10244 = vadd.xlane.f32.xlu0 %v10243
  %v10245 = vpop.xlane.xlu0 %10244
  %v10246 = vsel %vm531, %v10238, 0.0
  %10247 = vadd.xlane.f32.xlu0 %v10246
  %v10248 = vpop.xlane.xlu0 %10247
  %v10249 = vsel %vm531, %v10239, 0.0
  %10250 = vadd.xlane.f32.xlu0 %v10249
  %v10251 = vpop.xlane.xlu0 %10250
  %v10252 = vsel %vm531, %v10240, 0.0
  %10253 = vadd.xlane.f32.xlu0 %v10252
  %v10254 = vpop.xlane.xlu0 %10253
  %v10255 = vsel %vm531, %v10241, 0.0
  %10256 = vadd.xlane.f32.xlu0 %v10255
  %v10257 = vpop.xlane.xlu0 %10256
  %v10258 = vsel %vm531, %v10242, 0.0
  %10259 = vadd.xlane.f32.xlu0 %v10258
  %v10260 = vpop.xlane.xlu0 %10259
  %v10261 = vmul.f32 %v10245, %v5497
  %v10262 = vmul.f32 %v10248, %v5497
  %v10263 = vmul.f32 %v10251, %v5497
  %v10264 = vmul.f32 %v10254, %v5497
  %v10265 = vmul.f32 %v10257, %v5497
  %v10266 = vmul.f32 %v10260, %v5497
  %v10267 = vadd.f32 %v10261, 1e-05
  %v10268 = vadd.f32 %v10262, 1e-05
  %v10269 = vadd.f32 %v10263, 1e-05
  %v10270 = vadd.f32 %v10264, 1e-05
  %v10271 = vadd.f32 %v10265, 1e-05
  %v10272 = vadd.f32 %v10266, 1e-05
  %v10273 = vrsqrt.pop %v10267
  %v10274 = vrsqrt.pop %v10268
  %v10275 = vrsqrt.pop %v10269
  %v10276 = vrsqrt.pop %v10270
  %v10277 = vrsqrt.pop %v10271
  %v10278 = vrsqrt.pop %v10272
  %v10279 = vmul.f32 %v10231, %v10273
  %v10280 = vmul.f32 %v10232, %v10274
  %v10281 = vmul.f32 %v10233, %v10275
  %v10282 = vmul.f32 %v10234, %v10276
  %v10283 = vmul.f32 %v10235, %v10277
  %v10284 = vmul.f32 %v10236, %v10278
  %v10286 = vlaneseq
  %v10287 = vshrl.u32 %v10286, 7
  %v10288 = vsub.s32 0, %v10287
  %v10289 = vrot.slane %v10204, %v10288
  %v10291 = vmul.f32 %v10279, %v10289
  %v10292 = vmul.f32 %v10280, %v10289
  %v10293 = vmul.f32 %v10281, %v10289
  %v10294 = vmul.f32 %v10282, %v10289
  %v10295 = vmul.f32 %v10283, %v10289
  %v10296 = vmul.f32 %v10284, %v10289
  %v10298 = vlaneseq
  %v10299 = vshrl.u32 %v10298, 7
  %v10300 = vsub.s32 0, %v10299
  %v10301 = vrot.slane %v10206, %v10300
  %v10303 = vadd.f32 %v10291, %v10301
  %v10304 = vadd.f32 %v10292, %v10301
  %v10305 = vadd.f32 %v10293, %v10301
  %v10306 = vadd.f32 %v10294, %v10301
  %v10307 = vadd.f32 %v10295, %v10301
  %v10308 = vadd.f32 %v10296, %v10301
  %s10309 = scalar_lea.vmem %s11, 16
  %v10310 = vld [vmem:[%s10309] sm:$0xf]
  %v10311 = vld [vmem:[%s10309 + $0x4] sm:$0xf]
  %v10312 = vld [vmem:[%s10309 + $0x8] sm:$0xf]
  %v10313 = vld [vmem:[%s10309 + $0xc] sm:$0xf]
  %s10314 = scalar_lea.vmem %s12, 1
  %v10315 = vld [vmem:[%s10314] sm:$0x1]
  %v10316 = vpack.c.bf16 %v10304, %v10303
  %v10317 = vpack.c.bf16 %v10306, %v10305
  %v10318 = vpack.c.bf16 %v10308, %v10307
  %v10320 = vlaneseq
  %v10321 = vshrl.u32 %v10320, 7
  %v10322 = vsub.s32 0, %v10321
  %v10323 = vrot.slane %v10315, %v10322
  %v10329 = vunpack.c.l.b16 %v10310
  %v10330 = vunpack.c.l.b16 %v10311
  %v10331 = vunpack.c.l.b16 %v10312
  %v10332 = vunpack.c.l.b16 %v10313
  %v10333 = vpack.c.b16 %v10330, %v10329
  %v10334 = vpack.c.b16 %v10332, %v10331
  %v10338 = vsel %vm531, %v10316, 0
  %v10341 = vsel %vm531, %v10317, 0
  %v10344 = vsel %vm531, %v10318, 0
  %10346 = vmatprep.subr.bf16.mxu0 0
  %10347 = vmatpush1.bf16.msra.mxu0 0
  %10348 = vmatprep.subr.bf16.mxu0 0
  %10349 = vmatpush1.bf16.msra.mxu0 0
  %10350 = vmatprep.subr.bf16.mxu0 0
  %10351 = vmatpush1.bf16.msra.mxu0 0
  %10352 = vmatprep.subr.bf16.mxu0 0
  %10353 = vmatpush1.bf16.msra.mxu0 0
  %10354 = vmatprep.subr.bf16.mxu0 0
  %10355 = vmatpush1.bf16.msra.mxu0 0
  %10356 = vmatprep.subr.bf16.mxu0 0
  %10357 = vmatpush1.bf16.msra.mxu0 0
  %10358 = vmatprep.subr.bf16.mxu0 0
  %10359 = vmatpush1.bf16.msra.mxu0 %v10334
  %10360 = vmatprep.subr.bf16.mxu0 0
  %10361 = vmatpush1.bf16.msra.mxu0 %v10333
  %10362 = vmatprep.subr.bf16.mxu0 0
  %10363 = vmatpush2.bf16.msra.mxu0 0
  %10364 = vmatprep.subr.bf16.mxu0 0
  %10365 = vmatpush2.bf16.msra.mxu0 0
  %10366 = vmatprep.subr.bf16.mxu0 0
  %10367 = vmatpush2.bf16.msra.mxu0 0
  %10368 = vmatprep.subr.bf16.mxu0 0
  %10369 = vmatpush2.bf16.msra.mxu0 0
  %10370 = vmatprep.subr.bf16.mxu0 0
  %10371 = vmatpush2.bf16.msra.mxu0 0
  %10372 = vmatprep.subr.bf16.mxu0 0
  %10373 = vmatpush2.bf16.msra.mxu0 0
  %10374 = vmatprep.subr.bf16.mxu0 0
  %10375 = vmatpush2.bf16.msra.mxu0 0
  %10376 = vmatprep.subr.bf16.mxu0 0
  %10377 = vmatpush2.bf16.msra.mxu0 0
  %10378 = vmatprep.mubr.bf16.mxu0 0
  %10379 = vmatmul.mubr.bf16.gmra.mxu0 %v10338
  %v10380 = vpop.f32.mrf.mxu0
  %v10381 = vadd.f32 %v10323, %v10380
  %v10382 = vpop.f32.mrf.mxu0
  %v10383 = vpop.f32.mrf.mxu0
  %v10384 = vadd.f32 %v10323, %v10383
  %v10385 = vpop.f32.mrf.mxu0
  %10386 = vmatprep.mubr.bf16.mxu0 0
  %10387 = vmatmul.mubr.bf16.gmra.mxu0 %v10341
  %v10388 = vpop.f32.mrf.mxu0
  %v10389 = vadd.f32 %v10323, %v10388
  %v10390 = vpop.f32.mrf.mxu0
  %v10391 = vpop.f32.mrf.mxu0
  %v10392 = vadd.f32 %v10323, %v10391
  %v10393 = vpop.f32.mrf.mxu0
  %10394 = vmatprep.mubr.bf16.mxu0 0
  %10395 = vmatmul.mubr.bf16.gmra.mxu0 %v10344
  %v10396 = vpop.f32.mrf.mxu0
  %v10397 = vadd.f32 %v10323, %v10396
  %v10398 = vpop.f32.mrf.mxu0
  %v10399 = vpop.f32.mrf.mxu0
  %v10400 = vadd.f32 %v10323, %v10399
  %v10401 = vpop.f32.mrf.mxu0
  %10402 = vdwg.mxu0
  %v10403 = vmul.f32 %v10381, 0.5
  %v10404 = vmul.f32 %v10384, 0.5
  %v10405 = vmul.f32 %v10389, 0.5
  %v10406 = vmul.f32 %v10392, 0.5
  %v10407 = vmul.f32 %v10397, 0.5
  %v10408 = vmul.f32 %v10400, 0.5
  %v10409 = vmul.f32 %v10381, 0.70710677
  %v10410 = vmul.f32 %v10384, 0.70710677
  %v10411 = vmul.f32 %v10389, 0.70710677
  %v10412 = vmul.f32 %v10392, 0.70710677
  %v10413 = vmul.f32 %v10397, 0.70710677
  %v10414 = vmul.f32 %v10400, 0.70710677
  %v10415 = verf.f32.pop %v10409
  %v10416 = verf.f32.pop %v10410
  %v10417 = verf.f32.pop %v10411
  %v10418 = verf.f32.pop %v10412
  %v10419 = verf.f32.pop %v10413
  %v10420 = verf.f32.pop %v10414
  %v10421 = vadd.f32 %v10415, 1.0
  %v10422 = vadd.f32 %v10416, 1.0
  %v10423 = vadd.f32 %v10417, 1.0
  %v10424 = vadd.f32 %v10418, 1.0
  %v10425 = vadd.f32 %v10419, 1.0
  %v10426 = vadd.f32 %v10420, 1.0
  %v10427 = vmul.f32 %v10403, %v10421
  %v10428 = vmul.f32 %v10404, %v10422
  %v10429 = vmul.f32 %v10405, %v10423
  %v10430 = vmul.f32 %v10406, %v10424
  %v10431 = vmul.f32 %v10407, %v10425
  %v10432 = vmul.f32 %v10408, %v10426
  %s10433 = scalar_lea.vmem %s13, 32
  %v10434 = vld [vmem:[%s10433] sm:$0xf]
  %v10435 = vld [vmem:[%s10433 + $0x4] sm:$0xf]
  %v10436 = vld [vmem:[%s10433 + $0x8] sm:$0xf]
  %v10437 = vld [vmem:[%s10433 + $0xc] sm:$0xf]
  %v10438 = vld [vmem:[%s10433 + $0x10] sm:$0xf]
  %v10439 = vld [vmem:[%s10433 + $0x14] sm:$0xf]
  %v10440 = vld [vmem:[%s10433 + $0x18] sm:$0xf]
  %v10441 = vld [vmem:[%s10433 + $0x1c] sm:$0xf]
  %s10442 = scalar_lea.vmem %s14, 1
  %v10443 = vld [vmem:[%s10442] sm:$0x1]
  %v10444 = vpack.c.bf16 %v10428, %v10427
  %v10445 = vpack.c.bf16 %v10430, %v10429
  %v10446 = vpack.c.bf16 %v10432, %v10431
  %v10448 = vlaneseq
  %v10449 = vshrl.u32 %v10448, 7
  %v10450 = vsub.s32 0, %v10449
  %v10451 = vrot.slane %v10443, %v10450
  %v10461 = vunpack.c.l.b16 %v10434
  %v10462 = vunpack.c.l.b16 %v10435
  %v10463 = vunpack.c.l.b16 %v10436
  %v10464 = vunpack.c.l.b16 %v10437
  %v10465 = vunpack.c.l.b16 %v10438
  %v10466 = vunpack.c.l.b16 %v10439
  %v10467 = vunpack.c.l.b16 %v10440
  %v10468 = vunpack.c.l.b16 %v10441
  %v10469 = vpack.c.b16 %v10462, %v10461
  %v10470 = vpack.c.b16 %v10464, %v10463
  %v10471 = vpack.c.b16 %v10466, %v10465
  %v10472 = vpack.c.b16 %v10468, %v10467
  %v10478 = vsel %vm5746, %v10444, 0
  %v10481 = vsel %vm5746, %v10445, 0
  %v10484 = vsel %vm5746, %v10446, 0
  %10486 = vmatprep.subr.bf16.mxu0 0
  %10487 = vmatpush1.bf16.msra.mxu0 0
  %10488 = vmatprep.subr.bf16.mxu0 0
  %10489 = vmatpush1.bf16.msra.mxu0 0
  %10490 = vmatprep.subr.bf16.mxu0 0
  %10491 = vmatpush1.bf16.msra.mxu0 0
  %10492 = vmatprep.subr.bf16.mxu0 0
  %10493 = vmatpush1.bf16.msra.mxu0 0
  %10494 = vmatprep.subr.bf16.mxu0 0
  %10495 = vmatpush1.bf16.msra.mxu0 %v10472
  %10496 = vmatprep.subr.bf16.mxu0 0
  %10497 = vmatpush1.bf16.msra.mxu0 %v10471
  %10498 = vmatprep.subr.bf16.mxu0 0
  %10499 = vmatpush1.bf16.msra.mxu0 %v10470
  %10500 = vmatprep.subr.bf16.mxu0 0
  %10501 = vmatpush1.bf16.msra.mxu0 %v10469
  %10502 = vmatprep.subr.bf16.mxu0 0
  %10503 = vmatpush2.bf16.msra.mxu0 0
  %10504 = vmatprep.subr.bf16.mxu0 0
  %10505 = vmatpush2.bf16.msra.mxu0 0
  %10506 = vmatprep.subr.bf16.mxu0 0
  %10507 = vmatpush2.bf16.msra.mxu0 0
  %10508 = vmatprep.subr.bf16.mxu0 0
  %10509 = vmatpush2.bf16.msra.mxu0 0
  %10510 = vmatprep.subr.bf16.mxu0 0
  %10511 = vmatpush2.bf16.msra.mxu0 0
  %10512 = vmatprep.subr.bf16.mxu0 0
  %10513 = vmatpush2.bf16.msra.mxu0 0
  %10514 = vmatprep.subr.bf16.mxu0 0
  %10515 = vmatpush2.bf16.msra.mxu0 0
  %10516 = vmatprep.subr.bf16.mxu0 0
  %10517 = vmatpush2.bf16.msra.mxu0 0
  %10518 = vmatprep.mubr.bf16.mxu0 0
  %10519 = vmatmul.mubr.bf16.gmra.mxu0 %v10478
  %v10520 = vpop.f32.mrf.mxu0
  %v10521 = vadd.f32 %v10451, %v10520
  %v10522 = vpop.f32.mrf.mxu0
  %v10523 = vpop.f32.mrf.mxu0
  %v10524 = vadd.f32 %v10451, %v10523
  %v10525 = vpop.f32.mrf.mxu0
  %10526 = vmatprep.mubr.bf16.mxu0 0
  %10527 = vmatmul.mubr.bf16.gmra.mxu0 %v10481
  %v10528 = vpop.f32.mrf.mxu0
  %v10529 = vadd.f32 %v10451, %v10528
  %v10530 = vpop.f32.mrf.mxu0
  %v10531 = vpop.f32.mrf.mxu0
  %v10532 = vadd.f32 %v10451, %v10531
  %v10533 = vpop.f32.mrf.mxu0
  %10534 = vmatprep.mubr.bf16.mxu0 0
  %10535 = vmatmul.mubr.bf16.gmra.mxu0 %v10484
  %v10536 = vpop.f32.mrf.mxu0
  %v10537 = vadd.f32 %v10451, %v10536
  %v10538 = vpop.f32.mrf.mxu0
  %v10539 = vpop.f32.mrf.mxu0
  %v10540 = vadd.f32 %v10451, %v10539
  %v10541 = vpop.f32.mrf.mxu0
  %10542 = vdwg.mxu0
  %v10543 = vadd.f32 %v10303, %v10521
  %v10544 = vadd.f32 %v10304, %v10524
  %v10545 = vadd.f32 %v10305, %v10529
  %v10546 = vadd.f32 %v10306, %v10532
  %v10547 = vadd.f32 %v10307, %v10537
  %v10548 = vadd.f32 %v10308, %v10540
  %s10549 = scalar_lea.vmem %s15, 1
  %v10550 = vld [vmem:[%s10549] sm:$0x1]
  %s10551 = scalar_lea.vmem %s16, 1
  %v10552 = vld [vmem:[%s10551] sm:$0x1]
  %v10553 = vsel %vm531, %v10543, 0.0
  %10554 = vadd.xlane.f32.xlu0 %v10553
  %v10555 = vpop.xlane.xlu0 %10554
  %v10556 = vsel %vm531, %v10544, 0.0
  %10557 = vadd.xlane.f32.xlu0 %v10556
  %v10558 = vpop.xlane.xlu0 %10557
  %v10559 = vsel %vm531, %v10545, 0.0
  %10560 = vadd.xlane.f32.xlu0 %v10559
  %v10561 = vpop.xlane.xlu0 %10560
  %v10562 = vsel %vm531, %v10546, 0.0
  %10563 = vadd.xlane.f32.xlu0 %v10562
  %v10564 = vpop.xlane.xlu0 %10563
  %v10565 = vsel %vm531, %v10547, 0.0
  %10566 = vadd.xlane.f32.xlu0 %v10565
  %v10567 = vpop.xlane.xlu0 %10566
  %v10568 = vsel %vm531, %v10548, 0.0
  %10569 = vadd.xlane.f32.xlu0 %v10568
  %v10570 = vpop.xlane.xlu0 %10569
  %v10571 = vmul.f32 %v10555, %v5497
  %v10572 = vmul.f32 %v10558, %v5497
  %v10573 = vmul.f32 %v10561, %v5497
  %v10574 = vmul.f32 %v10564, %v5497
  %v10575 = vmul.f32 %v10567, %v5497
  %v10576 = vmul.f32 %v10570, %v5497
  %v10577 = vsub.f32 %v10543, %v10571
  %v10578 = vsub.f32 %v10544, %v10572
  %v10579 = vsub.f32 %v10545, %v10573
  %v10580 = vsub.f32 %v10546, %v10574
  %v10581 = vsub.f32 %v10547, %v10575
  %v10582 = vsub.f32 %v10548, %v10576
  %v10583 = vmul.f32 %v10577, %v10577
  %v10584 = vmul.f32 %v10578, %v10578
  %v10585 = vmul.f32 %v10579, %v10579
  %v10586 = vmul.f32 %v10580, %v10580
  %v10587 = vmul.f32 %v10581, %v10581
  %v10588 = vmul.f32 %v10582, %v10582
  %v10589 = vsel %vm531, %v10583, 0.0
  %10590 = vadd.xlane.f32.xlu0 %v10589
  %v10591 = vpop.xlane.xlu0 %10590
  %v10592 = vsel %vm531, %v10584, 0.0
  %10593 = vadd.xlane.f32.xlu0 %v10592
  %v10594 = vpop.xlane.xlu0 %10593
  %v10595 = vsel %vm531, %v10585, 0.0
  %10596 = vadd.xlane.f32.xlu0 %v10595
  %v10597 = vpop.xlane.xlu0 %10596
  %v10598 = vsel %vm531, %v10586, 0.0
  %10599 = vadd.xlane.f32.xlu0 %v10598
  %v10600 = vpop.xlane.xlu0 %10599
  %v10601 = vsel %vm531, %v10587, 0.0
  %10602 = vadd.xlane.f32.xlu0 %v10601
  %v10603 = vpop.xlane.xlu0 %10602
  %v10604 = vsel %vm531, %v10588, 0.0
  %10605 = vadd.xlane.f32.xlu0 %v10604
  %v10606 = vpop.xlane.xlu0 %10605
  %v10607 = vmul.f32 %v10591, %v5497
  %v10608 = vmul.f32 %v10594, %v5497
  %v10609 = vmul.f32 %v10597, %v5497
  %v10610 = vmul.f32 %v10600, %v5497
  %v10611 = vmul.f32 %v10603, %v5497
  %v10612 = vmul.f32 %v10606, %v5497
  %v10613 = vadd.f32 %v10607, 1e-05
  %v10614 = vadd.f32 %v10608, 1e-05
  %v10615 = vadd.f32 %v10609, 1e-05
  %v10616 = vadd.f32 %v10610, 1e-05
  %v10617 = vadd.f32 %v10611, 1e-05
  %v10618 = vadd.f32 %v10612, 1e-05
  %v10619 = vrsqrt.pop %v10613
  %v10620 = vrsqrt.pop %v10614
  %v10621 = vrsqrt.pop %v10615
  %v10622 = vrsqrt.pop %v10616
  %v10623 = vrsqrt.pop %v10617
  %v10624 = vrsqrt.pop %v10618
  %v10625 = vmul.f32 %v10577, %v10619
  %v10626 = vmul.f32 %v10578, %v10620
  %v10627 = vmul.f32 %v10579, %v10621
  %v10628 = vmul.f32 %v10580, %v10622
  %v10629 = vmul.f32 %v10581, %v10623
  %v10630 = vmul.f32 %v10582, %v10624
  %v10632 = vlaneseq
  %v10633 = vshrl.u32 %v10632, 7
  %v10634 = vsub.s32 0, %v10633
  %v10635 = vrot.slane %v10550, %v10634
  %v10637 = vmul.f32 %v10625, %v10635
  %v10638 = vmul.f32 %v10626, %v10635
  %v10639 = vmul.f32 %v10627, %v10635
  %v10640 = vmul.f32 %v10628, %v10635
  %v10641 = vmul.f32 %v10629, %v10635
  %v10642 = vmul.f32 %v10630, %v10635
  %v10644 = vlaneseq
  %v10645 = vshrl.u32 %v10644, 7
  %v10646 = vsub.s32 0, %v10645
  %v10647 = vrot.slane %v10552, %v10646
  %v10649 = vadd.f32 %v10637, %v10647
  %v10650 = vadd.f32 %v10638, %v10647
  %v10651 = vadd.f32 %v10639, %v10647
  %v10652 = vadd.f32 %v10640, %v10647
  %v10653 = vadd.f32 %v10641, %v10647
  %v10654 = vadd.f32 %v10642, %v10647
  %v10661 = vcombine.high %v10649, %v10649
  %v10663 = vunpack.c.l.s4 1966171168
  %v10664 = vunpack.c.0.s8 %v10663
  %v10665 = vlaneseq
  %v10666 = vshrl.u32 %v10665, 7
  %v10667 = vsub.s32 %v10664, %v10666
  %v10668 = vrot.slane %v10661, %v10667
  %v10669 = vcombine.high %v10668, %v10668
  %v10671 = vunpack.c.l.s4 1966171168
  %v10672 = vunpack.c.0.s8 %v10671
  %v10673 = vlaneseq
  %v10674 = vshrl.u32 %v10673, 7
  %v10675 = vsub.s32 %v10672, %v10674
  %v10676 = vrot.slane %v10668, %v10675
  %v10678 = vunpack.c.l.s4 1966171168
  %v10679 = vunpack.c.0.s8 %v10678
  %v10680 = vlaneseq
  %v10681 = vshrl.u32 %v10680, 7
  %v10682 = vsub.s32 %v10679, %v10681
  %v10683 = vrot.slane %v10669, %v10682
  %v10684 = vcombine.high %v10676, %v10676
  %v10685 = vcombine.high %v10683, %v10683
  %v10686 = vcombine.high %v10650, %v10650
  %v10688 = vunpack.c.l.s4 1966171168
  %v10689 = vunpack.c.0.s8 %v10688
  %v10690 = vlaneseq
  %v10691 = vshrl.u32 %v10690, 7
  %v10692 = vsub.s32 %v10689, %v10691
  %v10693 = vrot.slane %v10686, %v10692
  %v10694 = vcombine.high %v10693, %v10693
  %v10696 = vunpack.c.l.s4 1966171168
  %v10697 = vunpack.c.0.s8 %v10696
  %v10698 = vlaneseq
  %v10699 = vshrl.u32 %v10698, 7
  %v10700 = vsub.s32 %v10697, %v10699
  %v10701 = vrot.slane %v10693, %v10700
  %v10703 = vunpack.c.l.s4 1966171168
  %v10704 = vunpack.c.0.s8 %v10703
  %v10705 = vlaneseq
  %v10706 = vshrl.u32 %v10705, 7
  %v10707 = vsub.s32 %v10704, %v10706
  %v10708 = vrot.slane %v10694, %v10707
  %v10709 = vcombine.high %v10701, %v10701
  %v10710 = vcombine.high %v10708, %v10708
  %v10711 = vcombine.high %v10651, %v10651
  %v10713 = vunpack.c.l.s4 1966171168
  %v10714 = vunpack.c.0.s8 %v10713
  %v10715 = vlaneseq
  %v10716 = vshrl.u32 %v10715, 7
  %v10717 = vsub.s32 %v10714, %v10716
  %v10718 = vrot.slane %v10711, %v10717
  %v10719 = vcombine.high %v10718, %v10718
  %v10721 = vunpack.c.l.s4 1966171168
  %v10722 = vunpack.c.0.s8 %v10721
  %v10723 = vlaneseq
  %v10724 = vshrl.u32 %v10723, 7
  %v10725 = vsub.s32 %v10722, %v10724
  %v10726 = vrot.slane %v10718, %v10725
  %v10728 = vunpack.c.l.s4 1966171168
  %v10729 = vunpack.c.0.s8 %v10728
  %v10730 = vlaneseq
  %v10731 = vshrl.u32 %v10730, 7
  %v10732 = vsub.s32 %v10729, %v10731
  %v10733 = vrot.slane %v10719, %v10732
  %v10734 = vcombine.high %v10726, %v10726
  %v10735 = vcombine.high %v10733, %v10733
  %v10736 = vcombine.high %v10652, %v10652
  %v10738 = vunpack.c.l.s4 1966171168
  %v10739 = vunpack.c.0.s8 %v10738
  %v10740 = vlaneseq
  %v10741 = vshrl.u32 %v10740, 7
  %v10742 = vsub.s32 %v10739, %v10741
  %v10743 = vrot.slane %v10736, %v10742
  %v10744 = vcombine.high %v10743, %v10743
  %v10746 = vunpack.c.l.s4 1966171168
  %v10747 = vunpack.c.0.s8 %v10746
  %v10748 = vlaneseq
  %v10749 = vshrl.u32 %v10748, 7
  %v10750 = vsub.s32 %v10747, %v10749
  %v10751 = vrot.slane %v10743, %v10750
  %v10753 = vunpack.c.l.s4 1966171168
  %v10754 = vunpack.c.0.s8 %v10753
  %v10755 = vlaneseq
  %v10756 = vshrl.u32 %v10755, 7
  %v10757 = vsub.s32 %v10754, %v10756
  %v10758 = vrot.slane %v10744, %v10757
  %v10759 = vcombine.high %v10751, %v10751
  %v10760 = vcombine.high %v10758, %v10758
  %v10761 = vcombine.high %v10653, %v10653
  %v10763 = vunpack.c.l.s4 1966171168
  %v10764 = vunpack.c.0.s8 %v10763
  %v10765 = vlaneseq
  %v10766 = vshrl.u32 %v10765, 7
  %v10767 = vsub.s32 %v10764, %v10766
  %v10768 = vrot.slane %v10761, %v10767
  %v10769 = vcombine.high %v10768, %v10768
  %v10771 = vunpack.c.l.s4 1966171168
  %v10772 = vunpack.c.0.s8 %v10771
  %v10773 = vlaneseq
  %v10774 = vshrl.u32 %v10773, 7
  %v10775 = vsub.s32 %v10772, %v10774
  %v10776 = vrot.slane %v10768, %v10775
  %v10778 = vunpack.c.l.s4 1966171168
  %v10779 = vunpack.c.0.s8 %v10778
  %v10780 = vlaneseq
  %v10781 = vshrl.u32 %v10780, 7
  %v10782 = vsub.s32 %v10779, %v10781
  %v10783 = vrot.slane %v10769, %v10782
  %v10784 = vcombine.high %v10776, %v10776
  %v10785 = vcombine.high %v10783, %v10783
  %v10786 = vcombine.high %v10654, %v10654
  %v10788 = vunpack.c.l.s4 1966171168
  %v10789 = vunpack.c.0.s8 %v10788
  %v10790 = vlaneseq
  %v10791 = vshrl.u32 %v10790, 7
  %v10792 = vsub.s32 %v10789, %v10791
  %v10793 = vrot.slane %v10786, %v10792
  %v10794 = vcombine.high %v10793, %v10793
  %v10796 = vunpack.c.l.s4 1966171168
  %v10797 = vunpack.c.0.s8 %v10796
  %v10798 = vlaneseq
  %v10799 = vshrl.u32 %v10798, 7
  %v10800 = vsub.s32 %v10797, %v10799
  %v10801 = vrot.slane %v10793, %v10800
  %v10803 = vunpack.c.l.s4 1966171168
  %v10804 = vunpack.c.0.s8 %v10803
  %v10805 = vlaneseq
  %v10806 = vshrl.u32 %v10805, 7
  %v10807 = vsub.s32 %v10804, %v10806
  %v10808 = vrot.slane %v10794, %v10807
  %v10809 = vcombine.high %v10801, %v10801
  %v10810 = vcombine.high %v10808, %v10808
  %v10829 = vld [vmem:[%s17] sm:$0x1]
  %v10830 = vld [vmem:[%s18] sm:$0x1]
  %v10831 = vcombine.low %v10683, %v10684
  %v10832 = vcombine.low %v10685, %v10708
  %v10833 = vcombine.low %v10709, %v10710
  %v10834 = vcombine.low %v10733, %v10734
  %v10836 = vunpack.c.l.s4 1966171168
  %v10837 = vunpack.c.0.s8 %v10836
  %v10838 = vlaneseq
  %v10839 = vshrl.u32 %v10838, 7
  %v10840 = vsub.s32 %v10837, %v10839
  %v10841 = vrot.slane %v10831, %v10840
  %v10843 = vunpack.c.l.s4 1966171168
  %v10844 = vunpack.c.0.s8 %v10843
  %v10845 = vlaneseq
  %v10846 = vshrl.u32 %v10845, 7
  %v10847 = vsub.s32 %v10844, %v10846
  %v10848 = vrot.slane %v10832, %v10847
  %v10850 = vunpack.c.l.s4 1966171168
  %v10851 = vunpack.c.0.s8 %v10850
  %v10852 = vlaneseq
  %v10853 = vshrl.u32 %v10852, 7
  %v10854 = vsub.s32 %v10851, %v10853
  %v10855 = vrot.slane %v10833, %v10854
  %v10857 = vunpack.c.l.s4 1966171168
  %v10858 = vunpack.c.0.s8 %v10857
  %v10859 = vlaneseq
  %v10860 = vshrl.u32 %v10859, 7
  %v10861 = vsub.s32 %v10858, %v10860
  %v10862 = vrot.slane %v10834, %v10861
  %v10863 = vcombine.low %v10841, %v10848
  %v10864 = vcombine.low %v10855, %v10862
  %v10866 = vunpack.c.l.s4 1966171168
  %v10867 = vunpack.c.0.s8 %v10866
  %v10868 = vlaneseq
  %v10869 = vshrl.u32 %v10868, 7
  %v10870 = vsub.s32 %v10867, %v10869
  %v10871 = vrot.slane %v10863, %v10870
  %v10873 = vunpack.c.l.s4 1966171168
  %v10874 = vunpack.c.0.s8 %v10873
  %v10875 = vlaneseq
  %v10876 = vshrl.u32 %v10875, 7
  %v10877 = vsub.s32 %v10874, %v10876
  %v10878 = vrot.slane %v10864, %v10877
  %v10879 = vcombine.low %v10871, %v10878
  %v10880 = vcombine.low %v10735, %v10758
  %v10881 = vcombine.low %v10759, %v10760
  %v10882 = vcombine.low %v10783, %v10784
  %v10883 = vcombine.low %v10785, %v10808
  %v10885 = vunpack.c.l.s4 1966171168
  %v10886 = vunpack.c.0.s8 %v10885
  %v10887 = vlaneseq
  %v10888 = vshrl.u32 %v10887, 7
  %v10889 = vsub.s32 %v10886, %v10888
  %v10890 = vrot.slane %v10880, %v10889
  %v10892 = vunpack.c.l.s4 1966171168
  %v10893 = vunpack.c.0.s8 %v10892
  %v10894 = vlaneseq
  %v10895 = vshrl.u32 %v10894, 7
  %v10896 = vsub.s32 %v10893, %v10895
  %v10897 = vrot.slane %v10881, %v10896
  %v10899 = vunpack.c.l.s4 1966171168
  %v10900 = vunpack.c.0.s8 %v10899
  %v10901 = vlaneseq
  %v10902 = vshrl.u32 %v10901, 7
  %v10903 = vsub.s32 %v10900, %v10902
  %v10904 = vrot.slane %v10882, %v10903
  %v10906 = vunpack.c.l.s4 1966171168
  %v10907 = vunpack.c.0.s8 %v10906
  %v10908 = vlaneseq
  %v10909 = vshrl.u32 %v10908, 7
  %v10910 = vsub.s32 %v10907, %v10909
  %v10911 = vrot.slane %v10883, %v10910
  %v10912 = vcombine.low %v10890, %v10897
  %v10913 = vcombine.low %v10904, %v10911
  %v10915 = vunpack.c.l.s4 1966171168
  %v10916 = vunpack.c.0.s8 %v10915
  %v10917 = vlaneseq
  %v10918 = vshrl.u32 %v10917, 7
  %v10919 = vsub.s32 %v10916, %v10918
  %v10920 = vrot.slane %v10912, %v10919
  %v10922 = vunpack.c.l.s4 1966171168
  %v10923 = vunpack.c.0.s8 %v10922
  %v10924 = vlaneseq
  %v10925 = vshrl.u32 %v10924, 7
  %v10926 = vsub.s32 %v10923, %v10925
  %v10927 = vrot.slane %v10913, %v10926
  %v10928 = vcombine.low %v10920, %v10927
  %v10929 = vcombine.low %v10809, %v10810
  %v10931 = vunpack.c.l.s4 1966171168
  %v10932 = vunpack.c.0.s8 %v10931
  %v10933 = vlaneseq
  %v10934 = vshrl.u32 %v10933, 7
  %v10935 = vsub.s32 %v10932, %v10934
  %v10936 = vrot.slane %v10929, %v10935
  %v10938 = vunpack.c.l.s4 1966171168
  %v10939 = vunpack.c.0.s8 %v10938
  %v10940 = vlaneseq
  %v10941 = vshrl.u32 %v10940, 7
  %v10942 = vsub.s32 %v10939, %v10941
  %v10943 = vrot.slane %v10936, %v10942
  %v10947 = vsel %vm531, %v10879, 0.0
  %10948 = vadd.xlane.f32.xlu0 %v10947
  %v10949 = vpop.xlane.xlu0 %10948
  %v10950 = vsel %vm531, %v10928, 0.0
  %10951 = vadd.xlane.f32.xlu0 %v10950
  %v10952 = vpop.xlane.xlu0 %10951
  %vm10953 = vcmask 254976
  %v10954 = vsel %vm10953, %v10943, 0.0
  %10955 = vadd.xlane.f32.xlu0 %v10954
  %v10956 = vpop.xlane.xlu0 %10955
  %v10957 = vmul.f32 %v10949, %v5497
  %v10958 = vmul.f32 %v10952, %v5497
  %v10959 = vmul.f32 %v10956, %v5497
  %v10963 = vlaneseq
  %v10964 = vshrl.u32 %v10963, 7
  %v10965 = vsub.s32 0, %v10964
  %v10966 = vrot.slane %v10957, %v10965
  %v10967 = vlaneseq
  %v10968 = vshrl.u32 %v10967, 7
  %v10969 = vsub.s32 1, %v10968
  %v10970 = vrot.slane %v10957, %v10969
  %v10971 = vlaneseq
  %v10972 = vshrl.u32 %v10971, 7
  %v10973 = vsub.s32 2, %v10972
  %v10974 = vrot.slane %v10957, %v10973
  %v10975 = vlaneseq
  %v10976 = vshrl.u32 %v10975, 7
  %v10977 = vsub.s32 3, %v10976
  %v10978 = vrot.slane %v10957, %v10977
  %v10979 = vlaneseq
  %v10980 = vshrl.u32 %v10979, 7
  %v10981 = vsub.s32 4, %v10980
  %v10982 = vrot.slane %v10957, %v10981
  %v10983 = vlaneseq
  %v10984 = vshrl.u32 %v10983, 7
  %v10985 = vsub.s32 5, %v10984
  %v10986 = vrot.slane %v10957, %v10985
  %v10987 = vlaneseq
  %v10988 = vshrl.u32 %v10987, 7
  %v10989 = vsub.s32 6, %v10988
  %v10990 = vrot.slane %v10957, %v10989
  %v10991 = vlaneseq
  %v10992 = vshrl.u32 %v10991, 7
  %v10993 = vsub.s32 7, %v10992
  %v10994 = vrot.slane %v10957, %v10993
  %v10995 = vlaneseq
  %v10996 = vshrl.u32 %v10995, 7
  %v10997 = vsub.s32 0, %v10996
  %v10998 = vrot.slane %v10958, %v10997
  %v10999 = vlaneseq
  %v11000 = vshrl.u32 %v10999, 7
  %v11001 = vsub.s32 1, %v11000
  %v11002 = vrot.slane %v10958, %v11001
  %v11003 = vlaneseq
  %v11004 = vshrl.u32 %v11003, 7
  %v11005 = vsub.s32 2, %v11004
  %v11006 = vrot.slane %v10958, %v11005
  %v11007 = vlaneseq
  %v11008 = vshrl.u32 %v11007, 7
  %v11009 = vsub.s32 3, %v11008
  %v11010 = vrot.slane %v10958, %v11009
  %v11011 = vlaneseq
  %v11012 = vshrl.u32 %v11011, 7
  %v11013 = vsub.s32 4, %v11012
  %v11014 = vrot.slane %v10958, %v11013
  %v11015 = vlaneseq
  %v11016 = vshrl.u32 %v11015, 7
  %v11017 = vsub.s32 5, %v11016
  %v11018 = vrot.slane %v10958, %v11017
  %v11019 = vlaneseq
  %v11020 = vshrl.u32 %v11019, 7
  %v11021 = vsub.s32 6, %v11020
  %v11022 = vrot.slane %v10958, %v11021
  %v11023 = vlaneseq
  %v11024 = vshrl.u32 %v11023, 7
  %v11025 = vsub.s32 7, %v11024
  %v11026 = vrot.slane %v10958, %v11025
  %v11027 = vlaneseq
  %v11028 = vshrl.u32 %v11027, 7
  %v11029 = vsub.s32 0, %v11028
  %v11030 = vrot.slane %v10959, %v11029
  %v11031 = vlaneseq
  %v11032 = vshrl.u32 %v11031, 7
  %v11033 = vsub.s32 1, %v11032
  %v11034 = vrot.slane %v10959, %v11033
  %v11053 = vsub.f32 %v10683, %v10966
  %v11054 = vsub.f32 %v10684, %v10970
  %v11055 = vsub.f32 %v10685, %v10974
  %v11056 = vsub.f32 %v10708, %v10978
  %v11057 = vsub.f32 %v10709, %v10982
  %v11058 = vsub.f32 %v10710, %v10986
  %v11059 = vsub.f32 %v10733, %v10990
  %v11060 = vsub.f32 %v10734, %v10994
  %v11061 = vsub.f32 %v10735, %v10998
  %v11062 = vsub.f32 %v10758, %v11002
  %v11063 = vsub.f32 %v10759, %v11006
  %v11064 = vsub.f32 %v10760, %v11010
  %v11065 = vsub.f32 %v10783, %v11014
  %v11066 = vsub.f32 %v10784, %v11018
  %v11067 = vsub.f32 %v10785, %v11022
  %v11068 = vsub.f32 %v10808, %v11026
  %v11069 = vsub.f32 %v10809, %v11030
  %v11070 = vsub.f32 %v10810, %v11034
  %v11071 = vmul.f32 %v11053, %v11053
  %v11072 = vmul.f32 %v11054, %v11054
  %v11073 = vmul.f32 %v11055, %v11055
  %v11074 = vmul.f32 %v11056, %v11056
  %v11075 = vmul.f32 %v11057, %v11057
  %v11076 = vmul.f32 %v11058, %v11058
  %v11077 = vmul.f32 %v11059, %v11059
  %v11078 = vmul.f32 %v11060, %v11060
  %v11079 = vmul.f32 %v11061, %v11061
  %v11080 = vmul.f32 %v11062, %v11062
  %v11081 = vmul.f32 %v11063, %v11063
  %v11082 = vmul.f32 %v11064, %v11064
  %v11083 = vmul.f32 %v11065, %v11065
  %v11084 = vmul.f32 %v11066, %v11066
  %v11085 = vmul.f32 %v11067, %v11067
  %v11086 = vmul.f32 %v11068, %v11068
  %v11087 = vmul.f32 %v11069, %v11069
  %v11088 = vmul.f32 %v11070, %v11070
  %v11107 = vcombine.low %v11071, %v11072
  %v11108 = vcombine.low %v11073, %v11074
  %v11109 = vcombine.low %v11075, %v11076
  %v11110 = vcombine.low %v11077, %v11078
  %v11112 = vunpack.c.l.s4 1966171168
  %v11113 = vunpack.c.0.s8 %v11112
  %v11114 = vlaneseq
  %v11115 = vshrl.u32 %v11114, 7
  %v11116 = vsub.s32 %v11113, %v11115
  %v11117 = vrot.slane %v11107, %v11116
  %v11119 = vunpack.c.l.s4 1966171168
  %v11120 = vunpack.c.0.s8 %v11119
  %v11121 = vlaneseq
  %v11122 = vshrl.u32 %v11121, 7
  %v11123 = vsub.s32 %v11120, %v11122
  %v11124 = vrot.slane %v11108, %v11123
  %v11126 = vunpack.c.l.s4 1966171168
  %v11127 = vunpack.c.0.s8 %v11126
  %v11128 = vlaneseq
  %v11129 = vshrl.u32 %v11128, 7
  %v11130 = vsub.s32 %v11127, %v11129
  %v11131 = vrot.slane %v11109, %v11130
  %v11133 = vunpack.c.l.s4 1966171168
  %v11134 = vunpack.c.0.s8 %v11133
  %v11135 = vlaneseq
  %v11136 = vshrl.u32 %v11135, 7
  %v11137 = vsub.s32 %v11134, %v11136
  %v11138 = vrot.slane %v11110, %v11137
  %v11139 = vcombine.low %v11117, %v11124
  %v11140 = vcombine.low %v11131, %v11138
  %v11142 = vunpack.c.l.s4 1966171168
  %v11143 = vunpack.c.0.s8 %v11142
  %v11144 = vlaneseq
  %v11145 = vshrl.u32 %v11144, 7
  %v11146 = vsub.s32 %v11143, %v11145
  %v11147 = vrot.slane %v11139, %v11146
  %v11149 = vunpack.c.l.s4 1966171168
  %v11150 = vunpack.c.0.s8 %v11149
  %v11151 = vlaneseq
  %v11152 = vshrl.u32 %v11151, 7
  %v11153 = vsub.s32 %v11150, %v11152
  %v11154 = vrot.slane %v11140, %v11153
  %v11155 = vcombine.low %v11147, %v11154
  %v11156 = vcombine.low %v11079, %v11080
  %v11157 = vcombine.low %v11081, %v11082
  %v11158 = vcombine.low %v11083, %v11084
  %v11159 = vcombine.low %v11085, %v11086
  %v11161 = vunpack.c.l.s4 1966171168
  %v11162 = vunpack.c.0.s8 %v11161
  %v11163 = vlaneseq
  %v11164 = vshrl.u32 %v11163, 7
  %v11165 = vsub.s32 %v11162, %v11164
  %v11166 = vrot.slane %v11156, %v11165
  %v11168 = vunpack.c.l.s4 1966171168
  %v11169 = vunpack.c.0.s8 %v11168
  %v11170 = vlaneseq
  %v11171 = vshrl.u32 %v11170, 7
  %v11172 = vsub.s32 %v11169, %v11171
  %v11173 = vrot.slane %v11157, %v11172
  %v11175 = vunpack.c.l.s4 1966171168
  %v11176 = vunpack.c.0.s8 %v11175
  %v11177 = vlaneseq
  %v11178 = vshrl.u32 %v11177, 7
  %v11179 = vsub.s32 %v11176, %v11178
  %v11180 = vrot.slane %v11158, %v11179
  %v11182 = vunpack.c.l.s4 1966171168
  %v11183 = vunpack.c.0.s8 %v11182
  %v11184 = vlaneseq
  %v11185 = vshrl.u32 %v11184, 7
  %v11186 = vsub.s32 %v11183, %v11185
  %v11187 = vrot.slane %v11159, %v11186
  %v11188 = vcombine.low %v11166, %v11173
  %v11189 = vcombine.low %v11180, %v11187
  %v11191 = vunpack.c.l.s4 1966171168
  %v11192 = vunpack.c.0.s8 %v11191
  %v11193 = vlaneseq
  %v11194 = vshrl.u32 %v11193, 7
  %v11195 = vsub.s32 %v11192, %v11194
  %v11196 = vrot.slane %v11188, %v11195
  %v11198 = vunpack.c.l.s4 1966171168
  %v11199 = vunpack.c.0.s8 %v11198
  %v11200 = vlaneseq
  %v11201 = vshrl.u32 %v11200, 7
  %v11202 = vsub.s32 %v11199, %v11201
  %v11203 = vrot.slane %v11189, %v11202
  %v11204 = vcombine.low %v11196, %v11203
  %v11205 = vcombine.low %v11087, %v11088
  %v11207 = vunpack.c.l.s4 1966171168
  %v11208 = vunpack.c.0.s8 %v11207
  %v11209 = vlaneseq
  %v11210 = vshrl.u32 %v11209, 7
  %v11211 = vsub.s32 %v11208, %v11210
  %v11212 = vrot.slane %v11205, %v11211
  %v11214 = vunpack.c.l.s4 1966171168
  %v11215 = vunpack.c.0.s8 %v11214
  %v11216 = vlaneseq
  %v11217 = vshrl.u32 %v11216, 7
  %v11218 = vsub.s32 %v11215, %v11217
  %v11219 = vrot.slane %v11212, %v11218
  %v11223 = vsel %vm531, %v11155, 0.0
  %11224 = vadd.xlane.f32.xlu0 %v11223
  %v11225 = vpop.xlane.xlu0 %11224
  %v11226 = vsel %vm531, %v11204, 0.0
  %11227 = vadd.xlane.f32.xlu0 %v11226
  %v11228 = vpop.xlane.xlu0 %11227
  %v11229 = vsel %vm10953, %v11219, 0.0
  %11230 = vadd.xlane.f32.xlu0 %v11229
  %v11231 = vpop.xlane.xlu0 %11230
  %v11232 = vmul.f32 %v11225, %v5497
  %v11233 = vmul.f32 %v11228, %v5497
  %v11234 = vmul.f32 %v11231, %v5497
  %v11235 = vadd.f32 %v11232, 1e-05
  %v11236 = vadd.f32 %v11233, 1e-05
  %v11237 = vadd.f32 %v11234, 1e-05
  %v11238 = vrsqrt.pop %v11235
  %v11239 = vrsqrt.pop %v11236
  %v11240 = vrsqrt.pop %v11237
  %v11244 = vlaneseq
  %v11245 = vshrl.u32 %v11244, 7
  %v11246 = vsub.s32 0, %v11245
  %v11247 = vrot.slane %v11238, %v11246
  %v11248 = vlaneseq
  %v11249 = vshrl.u32 %v11248, 7
  %v11250 = vsub.s32 1, %v11249
  %v11251 = vrot.slane %v11238, %v11250
  %v11252 = vlaneseq
  %v11253 = vshrl.u32 %v11252, 7
  %v11254 = vsub.s32 2, %v11253
  %v11255 = vrot.slane %v11238, %v11254
  %v11256 = vlaneseq
  %v11257 = vshrl.u32 %v11256, 7
  %v11258 = vsub.s32 3, %v11257
  %v11259 = vrot.slane %v11238, %v11258
  %v11260 = vlaneseq
  %v11261 = vshrl.u32 %v11260, 7
  %v11262 = vsub.s32 4, %v11261
  %v11263 = vrot.slane %v11238, %v11262
  %v11264 = vlaneseq
  %v11265 = vshrl.u32 %v11264, 7
  %v11266 = vsub.s32 5, %v11265
  %v11267 = vrot.slane %v11238, %v11266
  %v11268 = vlaneseq
  %v11269 = vshrl.u32 %v11268, 7
  %v11270 = vsub.s32 6, %v11269
  %v11271 = vrot.slane %v11238, %v11270
  %v11272 = vlaneseq
  %v11273 = vshrl.u32 %v11272, 7
  %v11274 = vsub.s32 7, %v11273
  %v11275 = vrot.slane %v11238, %v11274
  %v11276 = vlaneseq
  %v11277 = vshrl.u32 %v11276, 7
  %v11278 = vsub.s32 0, %v11277
  %v11279 = vrot.slane %v11239, %v11278
  %v11280 = vlaneseq
  %v11281 = vshrl.u32 %v11280, 7
  %v11282 = vsub.s32 1, %v11281
  %v11283 = vrot.slane %v11239, %v11282
  %v11284 = vlaneseq
  %v11285 = vshrl.u32 %v11284, 7
  %v11286 = vsub.s32 2, %v11285
  %v11287 = vrot.slane %v11239, %v11286
  %v11288 = vlaneseq
  %v11289 = vshrl.u32 %v11288, 7
  %v11290 = vsub.s32 3, %v11289
  %v11291 = vrot.slane %v11239, %v11290
  %v11292 = vlaneseq
  %v11293 = vshrl.u32 %v11292, 7
  %v11294 = vsub.s32 4, %v11293
  %v11295 = vrot.slane %v11239, %v11294
  %v11296 = vlaneseq
  %v11297 = vshrl.u32 %v11296, 7
  %v11298 = vsub.s32 5, %v11297
  %v11299 = vrot.slane %v11239, %v11298
  %v11300 = vlaneseq
  %v11301 = vshrl.u32 %v11300, 7
  %v11302 = vsub.s32 6, %v11301
  %v11303 = vrot.slane %v11239, %v11302
  %v11304 = vlaneseq
  %v11305 = vshrl.u32 %v11304, 7
  %v11306 = vsub.s32 7, %v11305
  %v11307 = vrot.slane %v11239, %v11306
  %v11308 = vlaneseq
  %v11309 = vshrl.u32 %v11308, 7
  %v11310 = vsub.s32 0, %v11309
  %v11311 = vrot.slane %v11240, %v11310
  %v11312 = vlaneseq
  %v11313 = vshrl.u32 %v11312, 7
  %v11314 = vsub.s32 1, %v11313
  %v11315 = vrot.slane %v11240, %v11314
  %v11334 = vmul.f32 %v11053, %v11247
  %v11335 = vmul.f32 %v11054, %v11251
  %v11336 = vmul.f32 %v11055, %v11255
  %v11337 = vmul.f32 %v11056, %v11259
  %v11338 = vmul.f32 %v11057, %v11263
  %v11339 = vmul.f32 %v11058, %v11267
  %v11340 = vmul.f32 %v11059, %v11271
  %v11341 = vmul.f32 %v11060, %v11275
  %v11342 = vmul.f32 %v11061, %v11279
  %v11343 = vmul.f32 %v11062, %v11283
  %v11344 = vmul.f32 %v11063, %v11287
  %v11345 = vmul.f32 %v11064, %v11291
  %v11346 = vmul.f32 %v11065, %v11295
  %v11347 = vmul.f32 %v11066, %v11299
  %v11348 = vmul.f32 %v11067, %v11303
  %v11349 = vmul.f32 %v11068, %v11307
  %v11350 = vmul.f32 %v11069, %v11311
  %v11351 = vmul.f32 %v11070, %v11315
  %v11353 = vlaneseq
  %v11354 = vshrl.u32 %v11353, 7
  %v11355 = vsub.s32 0, %v11354
  %v11356 = vrot.slane %v10829, %v11355
  %v11357 = vcombine.high %v11356, %v11356
  %v11359 = vunpack.c.l.s4 1966171168
  %v11360 = vunpack.c.0.s8 %v11359
  %v11361 = vlaneseq
  %v11362 = vshrl.u32 %v11361, 7
  %v11363 = vsub.s32 %v11360, %v11362
  %v11364 = vrot.slane %v11356, %v11363
  %v11366 = vunpack.c.l.s4 1966171168
  %v11367 = vunpack.c.0.s8 %v11366
  %v11368 = vlaneseq
  %v11369 = vshrl.u32 %v11368, 7
  %v11370 = vsub.s32 %v11367, %v11369
  %v11371 = vrot.slane %v11357, %v11370
  %v11372 = vcombine.high %v11364, %v11364
  %v11373 = vcombine.high %v11371, %v11371
  %v11375 = vunpack.c.l.s4 1966171168
  %v11376 = vunpack.c.0.s8 %v11375
  %v11377 = vlaneseq
  %v11378 = vshrl.u32 %v11377, 7
  %v11379 = vsub.s32 %v11376, %v11378
  %v11380 = vrot.slane %v11364, %v11379
  %v11382 = vunpack.c.l.s4 1966171168
  %v11383 = vunpack.c.0.s8 %v11382
  %v11384 = vlaneseq
  %v11385 = vshrl.u32 %v11384, 7
  %v11386 = vsub.s32 %v11383, %v11385
  %v11387 = vrot.slane %v11371, %v11386
  %v11389 = vunpack.c.l.s4 1966171168
  %v11390 = vunpack.c.0.s8 %v11389
  %v11391 = vlaneseq
  %v11392 = vshrl.u32 %v11391, 7
  %v11393 = vsub.s32 %v11390, %v11392
  %v11394 = vrot.slane %v11372, %v11393
  %v11396 = vunpack.c.l.s4 1966171168
  %v11397 = vunpack.c.0.s8 %v11396
  %v11398 = vlaneseq
  %v11399 = vshrl.u32 %v11398, 7
  %v11400 = vsub.s32 %v11397, %v11399
  %v11401 = vrot.slane %v11373, %v11400
  %v11402 = vcombine.high %v11380, %v11380
  %v11403 = vcombine.high %v11387, %v11387
  %v11404 = vcombine.high %v11394, %v11394
  %v11405 = vcombine.high %v11401, %v11401
  %v11414 = vmul.f32 %v11334, %v11380
  %v11415 = vmul.f32 %v11335, %v11394
  %v11416 = vmul.f32 %v11336, %v11402
  %v11417 = vmul.f32 %v11337, %v11404
  %v11418 = vmul.f32 %v11338, %v11387
  %v11419 = vmul.f32 %v11339, %v11401
  %v11420 = vmul.f32 %v11340, %v11403
  %v11421 = vmul.f32 %v11341, %v11405
  %v11422 = vmul.f32 %v11342, %v11380
  %v11423 = vmul.f32 %v11343, %v11394
  %v11424 = vmul.f32 %v11344, %v11402
  %v11425 = vmul.f32 %v11345, %v11404
  %v11426 = vmul.f32 %v11346, %v11387
  %v11427 = vmul.f32 %v11347, %v11401
  %v11428 = vmul.f32 %v11348, %v11403
  %v11429 = vmul.f32 %v11349, %v11405
  %v11430 = vmul.f32 %v11350, %v11380
  %v11431 = vmul.f32 %v11351, %v11394
  %v11433 = vlaneseq
  %v11434 = vshrl.u32 %v11433, 7
  %v11435 = vsub.s32 0, %v11434
  %v11436 = vrot.slane %v10830, %v11435
  %v11437 = vcombine.high %v11436, %v11436
  %v11439 = vunpack.c.l.s4 1966171168
  %v11440 = vunpack.c.0.s8 %v11439
  %v11441 = vlaneseq
  %v11442 = vshrl.u32 %v11441, 7
  %v11443 = vsub.s32 %v11440, %v11442
  %v11444 = vrot.slane %v11436, %v11443
  %v11446 = vunpack.c.l.s4 1966171168
  %v11447 = vunpack.c.0.s8 %v11446
  %v11448 = vlaneseq
  %v11449 = vshrl.u32 %v11448, 7
  %v11450 = vsub.s32 %v11447, %v11449
  %v11451 = vrot.slane %v11437, %v11450
  %v11452 = vcombine.high %v11444, %v11444
  %v11453 = vcombine.high %v11451, %v11451
  %v11455 = vunpack.c.l.s4 1966171168
  %v11456 = vunpack.c.0.s8 %v11455
  %v11457 = vlaneseq
  %v11458 = vshrl.u32 %v11457, 7
  %v11459 = vsub.s32 %v11456, %v11458
  %v11460 = vrot.slane %v11444, %v11459
  %v11462 = vunpack.c.l.s4 1966171168
  %v11463 = vunpack.c.0.s8 %v11462
  %v11464 = vlaneseq
  %v11465 = vshrl.u32 %v11464, 7
  %v11466 = vsub.s32 %v11463, %v11465
  %v11467 = vrot.slane %v11451, %v11466
  %v11469 = vunpack.c.l.s4 1966171168
  %v11470 = vunpack.c.0.s8 %v11469
  %v11471 = vlaneseq
  %v11472 = vshrl.u32 %v11471, 7
  %v11473 = vsub.s32 %v11470, %v11472
  %v11474 = vrot.slane %v11452, %v11473
  %v11476 = vunpack.c.l.s4 1966171168
  %v11477 = vunpack.c.0.s8 %v11476
  %v11478 = vlaneseq
  %v11479 = vshrl.u32 %v11478, 7
  %v11480 = vsub.s32 %v11477, %v11479
  %v11481 = vrot.slane %v11453, %v11480
  %v11482 = vcombine.high %v11460, %v11460
  %v11483 = vcombine.high %v11467, %v11467
  %v11484 = vcombine.high %v11474, %v11474
  %v11485 = vcombine.high %v11481, %v11481
  %v11494 = vadd.f32 %v11414, %v11460
  %v11495 = vadd.f32 %v11415, %v11474
  %v11496 = vadd.f32 %v11416, %v11482
  %v11497 = vadd.f32 %v11417, %v11484
  %v11498 = vadd.f32 %v11418, %v11467
  %v11499 = vadd.f32 %v11419, %v11481
  %v11500 = vadd.f32 %v11420, %v11483
  %v11501 = vadd.f32 %v11421, %v11485
  %v11502 = vadd.f32 %v11422, %v11460
  %v11503 = vadd.f32 %v11423, %v11474
  %v11504 = vadd.f32 %v11424, %v11482
  %v11505 = vadd.f32 %v11425, %v11484
  %v11506 = vadd.f32 %v11426, %v11467
  %v11507 = vadd.f32 %v11427, %v11481
  %v11508 = vadd.f32 %v11428, %v11483
  %v11509 = vadd.f32 %v11429, %v11485
  %v11510 = vadd.f32 %v11430, %v11460
  %v11511 = vadd.f32 %v11431, %v11474
  %v11512 = vld [vmem:[%s19] sm:$0xf]
  %v11513 = vld [vmem:[%s19 + $0x4] sm:$0xf]
  %v11514 = vld [vmem:[%s19 + $0x8] sm:$0xf]
  %v11515 = vld [vmem:[%s19 + $0xc] sm:$0xf]
  %v11516 = vld [vmem:[%s20] sm:$0x1]
  %v11535 = vcombine.low %v11494, %v11495
  %v11536 = vcombine.low %v11496, %v11497
  %v11537 = vcombine.low %v11498, %v11499
  %v11538 = vcombine.low %v11500, %v11501
  %v11540 = vunpack.c.l.s4 1966171168
  %v11541 = vunpack.c.0.s8 %v11540
  %v11542 = vlaneseq
  %v11543 = vshrl.u32 %v11542, 7
  %v11544 = vsub.s32 %v11541, %v11543
  %v11545 = vrot.slane %v11535, %v11544
  %v11547 = vunpack.c.l.s4 1966171168
  %v11548 = vunpack.c.0.s8 %v11547
  %v11549 = vlaneseq
  %v11550 = vshrl.u32 %v11549, 7
  %v11551 = vsub.s32 %v11548, %v11550
  %v11552 = vrot.slane %v11536, %v11551
  %v11554 = vunpack.c.l.s4 1966171168
  %v11555 = vunpack.c.0.s8 %v11554
  %v11556 = vlaneseq
  %v11557 = vshrl.u32 %v11556, 7
  %v11558 = vsub.s32 %v11555, %v11557
  %v11559 = vrot.slane %v11537, %v11558
  %v11561 = vunpack.c.l.s4 1966171168
  %v11562 = vunpack.c.0.s8 %v11561
  %v11563 = vlaneseq
  %v11564 = vshrl.u32 %v11563, 7
  %v11565 = vsub.s32 %v11562, %v11564
  %v11566 = vrot.slane %v11538, %v11565
  %v11567 = vcombine.low %v11545, %v11552
  %v11568 = vcombine.low %v11559, %v11566
  %v11570 = vunpack.c.l.s4 1966171168
  %v11571 = vunpack.c.0.s8 %v11570
  %v11572 = vlaneseq
  %v11573 = vshrl.u32 %v11572, 7
  %v11574 = vsub.s32 %v11571, %v11573
  %v11575 = vrot.slane %v11567, %v11574
  %v11577 = vunpack.c.l.s4 1966171168
  %v11578 = vunpack.c.0.s8 %v11577
  %v11579 = vlaneseq
  %v11580 = vshrl.u32 %v11579, 7
  %v11581 = vsub.s32 %v11578, %v11580
  %v11582 = vrot.slane %v11568, %v11581
  %v11583 = vcombine.low %v11575, %v11582
  %v11584 = vcombine.low %v11502, %v11503
  %v11585 = vcombine.low %v11504, %v11505
  %v11586 = vcombine.low %v11506, %v11507
  %v11587 = vcombine.low %v11508, %v11509
  %v11589 = vunpack.c.l.s4 1966171168
  %v11590 = vunpack.c.0.s8 %v11589
  %v11591 = vlaneseq
  %v11592 = vshrl.u32 %v11591, 7
  %v11593 = vsub.s32 %v11590, %v11592
  %v11594 = vrot.slane %v11584, %v11593
  %v11596 = vunpack.c.l.s4 1966171168
  %v11597 = vunpack.c.0.s8 %v11596
  %v11598 = vlaneseq
  %v11599 = vshrl.u32 %v11598, 7
  %v11600 = vsub.s32 %v11597, %v11599
  %v11601 = vrot.slane %v11585, %v11600
  %v11603 = vunpack.c.l.s4 1966171168
  %v11604 = vunpack.c.0.s8 %v11603
  %v11605 = vlaneseq
  %v11606 = vshrl.u32 %v11605, 7
  %v11607 = vsub.s32 %v11604, %v11606
  %v11608 = vrot.slane %v11586, %v11607
  %v11610 = vunpack.c.l.s4 1966171168
  %v11611 = vunpack.c.0.s8 %v11610
  %v11612 = vlaneseq
  %v11613 = vshrl.u32 %v11612, 7
  %v11614 = vsub.s32 %v11611, %v11613
  %v11615 = vrot.slane %v11587, %v11614
  %v11616 = vcombine.low %v11594, %v11601
  %v11617 = vcombine.low %v11608, %v11615
  %v11619 = vunpack.c.l.s4 1966171168
  %v11620 = vunpack.c.0.s8 %v11619
  %v11621 = vlaneseq
  %v11622 = vshrl.u32 %v11621, 7
  %v11623 = vsub.s32 %v11620, %v11622
  %v11624 = vrot.slane %v11616, %v11623
  %v11626 = vunpack.c.l.s4 1966171168
  %v11627 = vunpack.c.0.s8 %v11626
  %v11628 = vlaneseq
  %v11629 = vshrl.u32 %v11628, 7
  %v11630 = vsub.s32 %v11627, %v11629
  %v11631 = vrot.slane %v11617, %v11630
  %v11632 = vcombine.low %v11624, %v11631
  %v11633 = vcombine.low %v11510, %v11511
  %v11635 = vunpack.c.l.s4 1966171168
  %v11636 = vunpack.c.0.s8 %v11635
  %v11637 = vlaneseq
  %v11638 = vshrl.u32 %v11637, 7
  %v11639 = vsub.s32 %v11636, %v11638
  %v11640 = vrot.slane %v11633, %v11639
  %v11642 = vunpack.c.l.s4 1966171168
  %v11643 = vunpack.c.0.s8 %v11642
  %v11644 = vlaneseq
  %v11645 = vshrl.u32 %v11644, 7
  %v11646 = vsub.s32 %v11643, %v11645
  %v11647 = vrot.slane %v11640, %v11646
  %v11651 = vpack.c.bf16 %v11632, %v11583
  %v11652 = vpack.c.bf16 %v11647, %v11647
  %v11654 = vlaneseq
  %v11655 = vshrl.u32 %v11654, 7
  %v11656 = vsub.s32 0, %v11655
  %v11657 = vrot.slane %v11516, %v11656
  %v11663 = vunpack.c.l.b16 %v11512
  %v11664 = vunpack.c.l.b16 %v11513
  %v11665 = vunpack.c.l.b16 %v11514
  %v11666 = vunpack.c.l.b16 %v11515
  %v11667 = vpack.c.b16 %v11664, %v11663
  %v11668 = vpack.c.b16 %v11666, %v11665
  %v11672 = vsel %vm531, %v11651, 0
  %v11675 = vsel %vm531, %v11652, 0
  %11677 = vmatprep.subr.bf16.mxu0 0
  %11678 = vmatpush1.bf16.msra.mxu0 0
  %11679 = vmatprep.subr.bf16.mxu0 0
  %11680 = vmatpush1.bf16.msra.mxu0 0
  %11681 = vmatprep.subr.bf16.mxu0 0
  %11682 = vmatpush1.bf16.msra.mxu0 0
  %11683 = vmatprep.subr.bf16.mxu0 0
  %11684 = vmatpush1.bf16.msra.mxu0 0
  %11685 = vmatprep.subr.bf16.mxu0 0
  %11686 = vmatpush1.bf16.msra.mxu0 0
  %11687 = vmatprep.subr.bf16.mxu0 0
  %11688 = vmatpush1.bf16.msra.mxu0 0
  %11689 = vmatprep.subr.bf16.mxu0 0
  %11690 = vmatpush1.bf16.msra.mxu0 %v11668
  %11691 = vmatprep.subr.bf16.mxu0 0
  %11692 = vmatpush1.bf16.msra.mxu0 %v11667
  %11693 = vmatprep.subr.bf16.mxu0 0
  %11694 = vmatpush2.bf16.msra.mxu0 0
  %11695 = vmatprep.subr.bf16.mxu0 0
  %11696 = vmatpush2.bf16.msra.mxu0 0
  %11697 = vmatprep.subr.bf16.mxu0 0
  %11698 = vmatpush2.bf16.msra.mxu0 0
  %11699 = vmatprep.subr.bf16.mxu0 0
  %11700 = vmatpush2.bf16.msra.mxu0 0
  %11701 = vmatprep.subr.bf16.mxu0 0
  %11702 = vmatpush2.bf16.msra.mxu0 0
  %11703 = vmatprep.subr.bf16.mxu0 0
  %11704 = vmatpush2.bf16.msra.mxu0 0
  %11705 = vmatprep.subr.bf16.mxu0 0
  %11706 = vmatpush2.bf16.msra.mxu0 0
  %11707 = vmatprep.subr.bf16.mxu0 0
  %11708 = vmatpush2.bf16.msra.mxu0 0
  %11709 = vmatprep.mubr.bf16.mxu0 0
  %11710 = vmatmul.mubr.bf16.gmra.mxu0 %v11672
  %v11711 = vpop.f32.mrf.mxu0
  %v11712 = vadd.f32 %v11657, %v11711
  %v11713 = vpop.f32.mrf.mxu0
  %v11714 = vpop.f32.mrf.mxu0
  %v11715 = vadd.f32 %v11657, %v11714
  %v11716 = vpop.f32.mrf.mxu0
  %11717 = vmatprep.mubr.bf16.mxu0 0
  %11718 = vmatmul.mubr.bf16.gmra.mxu0 %v11675
  %v11719 = vpop.f32.mrf.mxu0
  %v11720 = vadd.f32 %v11657, %v11719
  %v11721 = vpop.f32.mrf.mxu0
  %v11722 = vpop.f32.mrf.mxu0
  %v11723 = vpop.f32.mrf.mxu0
  %11724 = vdwg.mxu0
  %v11728 = vcombine.high %v11712, %v11712
  %v11730 = vunpack.c.l.s4 1966171168
  %v11731 = vunpack.c.0.s8 %v11730
  %v11732 = vlaneseq
  %v11733 = vshrl.u32 %v11732, 7
  %v11734 = vsub.s32 %v11731, %v11733
  %v11735 = vrot.slane %v11712, %v11734
  %v11737 = vunpack.c.l.s4 1966171168
  %v11738 = vunpack.c.0.s8 %v11737
  %v11739 = vlaneseq
  %v11740 = vshrl.u32 %v11739, 7
  %v11741 = vsub.s32 %v11738, %v11740
  %v11742 = vrot.slane %v11728, %v11741
  %v11743 = vcombine.high %v11735, %v11735
  %v11744 = vcombine.high %v11742, %v11742
  %v11746 = vunpack.c.l.s4 1966171168
  %v11747 = vunpack.c.0.s8 %v11746
  %v11748 = vlaneseq
  %v11749 = vshrl.u32 %v11748, 7
  %v11750 = vsub.s32 %v11747, %v11749
  %v11751 = vrot.slane %v11735, %v11750
  %v11753 = vunpack.c.l.s4 1966171168
  %v11754 = vunpack.c.0.s8 %v11753
  %v11755 = vlaneseq
  %v11756 = vshrl.u32 %v11755, 7
  %v11757 = vsub.s32 %v11754, %v11756
  %v11758 = vrot.slane %v11742, %v11757
  %v11760 = vunpack.c.l.s4 1966171168
  %v11761 = vunpack.c.0.s8 %v11760
  %v11762 = vlaneseq
  %v11763 = vshrl.u32 %v11762, 7
  %v11764 = vsub.s32 %v11761, %v11763
  %v11765 = vrot.slane %v11743, %v11764
  %v11767 = vunpack.c.l.s4 1966171168
  %v11768 = vunpack.c.0.s8 %v11767
  %v11769 = vlaneseq
  %v11770 = vshrl.u32 %v11769, 7
  %v11771 = vsub.s32 %v11768, %v11770
  %v11772 = vrot.slane %v11744, %v11771
  %v11773 = vcombine.high %v11751, %v11751
  %v11774 = vcombine.high %v11758, %v11758
  %v11775 = vcombine.high %v11765, %v11765
  %v11776 = vcombine.high %v11772, %v11772
  %v11777 = vcombine.high %v11715, %v11715
  %v11779 = vunpack.c.l.s4 1966171168
  %v11780 = vunpack.c.0.s8 %v11779
  %v11781 = vlaneseq
  %v11782 = vshrl.u32 %v11781, 7
  %v11783 = vsub.s32 %v11780, %v11782
  %v11784 = vrot.slane %v11715, %v11783
  %v11786 = vunpack.c.l.s4 1966171168
  %v11787 = vunpack.c.0.s8 %v11786
  %v11788 = vlaneseq
  %v11789 = vshrl.u32 %v11788, 7
  %v11790 = vsub.s32 %v11787, %v11789
  %v11791 = vrot.slane %v11777, %v11790
  %v11792 = vcombine.high %v11784, %v11784
  %v11793 = vcombine.high %v11791, %v11791
  %v11795 = vunpack.c.l.s4 1966171168
  %v11796 = vunpack.c.0.s8 %v11795
  %v11797 = vlaneseq
  %v11798 = vshrl.u32 %v11797, 7
  %v11799 = vsub.s32 %v11796, %v11798
  %v11800 = vrot.slane %v11784, %v11799
  %v11802 = vunpack.c.l.s4 1966171168
  %v11803 = vunpack.c.0.s8 %v11802
  %v11804 = vlaneseq
  %v11805 = vshrl.u32 %v11804, 7
  %v11806 = vsub.s32 %v11803, %v11805
  %v11807 = vrot.slane %v11791, %v11806
  %v11809 = vunpack.c.l.s4 1966171168
  %v11810 = vunpack.c.0.s8 %v11809
  %v11811 = vlaneseq
  %v11812 = vshrl.u32 %v11811, 7
  %v11813 = vsub.s32 %v11810, %v11812
  %v11814 = vrot.slane %v11792, %v11813
  %v11816 = vunpack.c.l.s4 1966171168
  %v11817 = vunpack.c.0.s8 %v11816
  %v11818 = vlaneseq
  %v11819 = vshrl.u32 %v11818, 7
  %v11820 = vsub.s32 %v11817, %v11819
  %v11821 = vrot.slane %v11793, %v11820
  %v11822 = vcombine.high %v11800, %v11800
  %v11823 = vcombine.high %v11807, %v11807
  %v11824 = vcombine.high %v11814, %v11814
  %v11825 = vcombine.high %v11821, %v11821
  %v11827 = vunpack.c.l.s4 1966171168
  %v11828 = vunpack.c.0.s8 %v11827
  %v11829 = vlaneseq
  %v11830 = vshrl.u32 %v11829, 7
  %v11831 = vsub.s32 %v11828, %v11830
  %v11832 = vrot.slane %v11720, %v11831
  %v11833 = vcombine.high %v11832, %v11832
  %v11835 = vunpack.c.l.s4 1966171168
  %v11836 = vunpack.c.0.s8 %v11835
  %v11837 = vlaneseq
  %v11838 = vshrl.u32 %v11837, 7
  %v11839 = vsub.s32 %v11836, %v11838
  %v11840 = vrot.slane %v11832, %v11839
  %v11842 = vunpack.c.l.s4 1966171168
  %v11843 = vunpack.c.0.s8 %v11842
  %v11844 = vlaneseq
  %v11845 = vshrl.u32 %v11844, 7
  %v11846 = vsub.s32 %v11843, %v11845
  %v11847 = vrot.slane %v11833, %v11846
  %v11848 = vcombine.low %v11751, %v11765
  %v11850 = vunpack.c.l.s4 1966171168
  %v11851 = vunpack.c.0.s8 %v11850
  %v11852 = vlaneseq
  %v11853 = vshrl.u32 %v11852, 7
  %v11854 = vsub.s32 %v11851, %v11853
  %v11855 = vrot.slane %v11848, %v11854
  %v11857 = vunpack.c.l.s4 1966171168
  %v11858 = vunpack.c.0.s8 %v11857
  %v11859 = vlaneseq
  %v11860 = vshrl.u32 %v11859, 7
  %v11861 = vsub.s32 %v11858, %v11860
  %v11862 = vrot.slane %v11773, %v11861
  %v11863 = vcombine.low %v11855, %v11862
  %v11865 = vunpack.c.l.s4 1966171168
  %v11866 = vunpack.c.0.s8 %v11865
  %v11867 = vlaneseq
  %v11868 = vshrl.u32 %v11867, 7
  %v11869 = vsub.s32 %v11866, %v11868
  %v11870 = vrot.slane %v11863, %v11869
  %v11871 = vcombine.low %v11775, %v11758
  %v11873 = vunpack.c.l.s4 1966171168
  %v11874 = vunpack.c.0.s8 %v11873
  %v11875 = vlaneseq
  %v11876 = vshrl.u32 %v11875, 7
  %v11877 = vsub.s32 %v11874, %v11876
  %v11878 = vrot.slane %v11871, %v11877
  %v11880 = vunpack.c.l.s4 1966171168
  %v11881 = vunpack.c.0.s8 %v11880
  %v11882 = vlaneseq
  %v11883 = vshrl.u32 %v11882, 7
  %v11884 = vsub.s32 %v11881, %v11883
  %v11885 = vrot.slane %v11772, %v11884
  %v11886 = vcombine.low %v11878, %v11885
  %v11888 = vunpack.c.l.s4 1966171168
  %v11889 = vunpack.c.0.s8 %v11888
  %v11890 = vlaneseq
  %v11891 = vshrl.u32 %v11890, 7
  %v11892 = vsub.s32 %v11889, %v11891
  %v11893 = vrot.slane %v11886, %v11892
  %v11894 = vcombine.low %v11774, %v11776
  %v11896 = vunpack.c.l.s4 1966171168
  %v11897 = vunpack.c.0.s8 %v11896
  %v11898 = vlaneseq
  %v11899 = vshrl.u32 %v11898, 7
  %v11900 = vsub.s32 %v11897, %v11899
  %v11901 = vrot.slane %v11894, %v11900
  %v11903 = vunpack.c.l.s4 1966171168
  %v11904 = vunpack.c.0.s8 %v11903
  %v11905 = vlaneseq
  %v11906 = vshrl.u32 %v11905, 7
  %v11907 = vsub.s32 %v11904, %v11906
  %v11908 = vrot.slane %v11800, %v11907
  %v11909 = vcombine.low %v11901, %v11908
  %v11911 = vunpack.c.l.s4 1966171168
  %v11912 = vunpack.c.0.s8 %v11911
  %v11913 = vlaneseq
  %v11914 = vshrl.u32 %v11913, 7
  %v11915 = vsub.s32 %v11912, %v11914
  %v11916 = vrot.slane %v11909, %v11915
  %v11917 = vcombine.low %v11814, %v11822
  %v11919 = vunpack.c.l.s4 1966171168
  %v11920 = vunpack.c.0.s8 %v11919
  %v11921 = vlaneseq
  %v11922 = vshrl.u32 %v11921, 7
  %v11923 = vsub.s32 %v11920, %v11922
  %v11924 = vrot.slane %v11917, %v11923
  %v11926 = vunpack.c.l.s4 1966171168
  %v11927 = vunpack.c.0.s8 %v11926
  %v11928 = vlaneseq
  %v11929 = vshrl.u32 %v11928, 7
  %v11930 = vsub.s32 %v11927, %v11929
  %v11931 = vrot.slane %v11824, %v11930
  %v11932 = vcombine.low %v11924, %v11931
  %v11934 = vunpack.c.l.s4 1966171168
  %v11935 = vunpack.c.0.s8 %v11934
  %v11936 = vlaneseq
  %v11937 = vshrl.u32 %v11936, 7
  %v11938 = vsub.s32 %v11935, %v11937
  %v11939 = vrot.slane %v11932, %v11938
  %v11940 = vcombine.low %v11807, %v11821
  %v11942 = vunpack.c.l.s4 1966171168
  %v11943 = vunpack.c.0.s8 %v11942
  %v11944 = vlaneseq
  %v11945 = vshrl.u32 %v11944, 7
  %v11946 = vsub.s32 %v11943, %v11945
  %v11947 = vrot.slane %v11940, %v11946
  %v11949 = vunpack.c.l.s4 1966171168
  %v11950 = vunpack.c.0.s8 %v11949
  %v11951 = vlaneseq
  %v11952 = vshrl.u32 %v11951, 7
  %v11953 = vsub.s32 %v11950, %v11952
  %v11954 = vrot.slane %v11823, %v11953
  %v11955 = vcombine.low %v11947, %v11954
  %v11957 = vunpack.c.l.s4 1966171168
  %v11958 = vunpack.c.0.s8 %v11957
  %v11959 = vlaneseq
  %v11960 = vshrl.u32 %v11959, 7
  %v11961 = vsub.s32 %v11958, %v11960
  %v11962 = vrot.slane %v11955, %v11961
  %v11963 = vcombine.low %v11825, %v11840
  %v11965 = vunpack.c.l.s4 1966171168
  %v11966 = vunpack.c.0.s8 %v11965
  %v11967 = vlaneseq
  %v11968 = vshrl.u32 %v11967, 7
  %v11969 = vsub.s32 %v11966, %v11968
  %v11970 = vrot.slane %v11963, %v11969
  %v11972 = vunpack.c.l.s4 1966171168
  %v11973 = vunpack.c.0.s8 %v11972
  %v11974 = vlaneseq
  %v11975 = vshrl.u32 %v11974, 7
  %v11976 = vsub.s32 %v11973, %v11975
  %v11977 = vrot.slane %v11847, %v11976
  %v11978 = vcombine.low %v11970, %v11977
  %v11980 = vunpack.c.l.s4 1966171168
  %v11981 = vunpack.c.0.s8 %v11980
  %v11982 = vlaneseq
  %v11983 = vshrl.u32 %v11982, 7
  %v11984 = vsub.s32 %v11981, %v11983
  %v11985 = vrot.slane %v11978, %v11984
  %vm11992 = vcmask 256000
  %11993 = vst.msk [vmem:[%s21] sm:$0x7] %vm11992, %v11870
  %11994 = vst.msk [vmem:[%s21 + $0x4] sm:$0x7] %vm11992, %v11893
  %11995 = vst.msk [vmem:[%s21 + $0x8] sm:$0x7] %vm11992, %v11916
  %11996 = vst.msk [vmem:[%s21 + $0xc] sm:$0x7] %vm11992, %v11939
  %11997 = vst.msk [vmem:[%s21 + $0x10] sm:$0x7] %vm11992, %v11962
  %11998 = vst.msk [vmem:[%s21 + $0x14] sm:$0x7] %vm11992, %v11985
  // Predicated region
  $region86: #{tsti_forward.1} parent=0 // pred_check
    _
  $region87: #{tsti_forward.1} parent=0 // pred_check_branch
    %12000 = sbr.rel (0) target = $region89
  $region88: #{tsti_forward.1} parent=0 // pred_region
    _
  $region89: #{tsti_forward.1} parent=0 // pred_fallthru
    _
  // Predicated region
  $region90: #{tsti_forward.1} parent=0 // pred_check
    _
  $region91: #{tsti_forward.1} parent=0 // pred_check_branch
    %12002 = sbr.rel (0) target = $region93
  $region92: #{tsti_forward.1} parent=0 // pred_region
    _
  $region93: #{tsti_forward.1} parent=0 // pred_fallthru
    _

</llo_original>
